<compile_context>
chip_gen: v7x
topology: tpu7x:2x2x1
jax: 0.10.0
libtpu: 0.0.40
codegen_flags: <defaults>
</compile_context>

<pallas_src>
import math

import jax
import jax.numpy as jnp
from jax.experimental import pallas as pl
from jax.experimental.pallas import tpu as pltpu

# ---- model constants (match the PyTorch module exactly) ----
BATCH_SIZE = 100
CFG_FC = [64, 124, 64, 124, 10]
COMPRESS_SIZE = 11
IN_FEATURES = COMPRESS_SIZE * COMPRESS_SIZE  # 121
THRESH = 0.5
DECAY = 0.2
TIME_WINDOW = 4
# literal divisors from the PyTorch forward: sum / (dim * 100)
S_DIVISORS = [64 * 100, 124 * 100, 64 * 100, 124 * 100, 10 * 100]

PAD = 128  # all feature dims zero-padded to one full lane group


def scnn_kernel(x_ref,
                w1, b1, w2, b2, w3, b3, w4, b4, w5, b5,
                out_ref, s1_ref, s2_ref, s3_ref, s4_ref, s5_ref,
                pre1_ref, m1, m2, m3, m4, m5):
    w_refs = [w1, w2, w3, w4, w5]
    b_refs = [b1, b2, b3, b4, b5]
    mem_refs = [m1, m2, m3, m4, m5]       # decayed+reset membrane carry per layer
    s_refs = [s1_ref, s2_ref, s3_ref, s4_ref, s5_ref]

    # Layer-1 pre-activation is identical at every time step (its input is always x),
    # so compute it once and cache it in VMEM scratch.
    pre1_ref[...] = jnp.dot(x_ref[...], w1[...],
                            preferred_element_type=jnp.float32) + b1[...]

    # (1, 128) per-lane spike-count accumulators for layers 1..4 (tiny live state).
    acc_rows = [jnp.zeros((1, PAD), jnp.float32) for _ in range(4)]

    for step in range(TIME_WINDOW):
        layer_in = None
        for li in range(5):
            if li == 0:
                pre = pre1_ref[...]                     # hoisted: no matmul, no x re-read
            else:
                pre = jnp.dot(layer_in, w_refs[li][...],
                              preferred_element_type=jnp.float32) + b_refs[li][...]
            # LIF update:  mem_t = mem_{t-1} * decay * (1 - spike_{t-1}) + pre_t
            # mem_refs[li] holds the already decayed & reset carry from step t-1,
            # so at step 0 (carry == 0) we skip the (uninitialized) scratch read.
            mem = pre if step == 0 else mem_refs[li][...] + pre
            spike = (mem > THRESH).astype(jnp.float32)
            if step < TIME_WINDOW - 1:
                # carry for the next step; equivalent to mem*decay*(1-spike) since spike is 0/1
                mem_refs[li][...] = jnp.where(mem > THRESH, 0.0, mem * DECAY)
            if li < 4:
                acc_rows[li] = acc_rows[li] + jnp.sum(spike, axis=0, keepdims=True)
            layer_in = spike

        # h5_sumspike accumulates directly in the lane-dense output buffer
        if step == 0:
            out_ref[...] = layer_in
        else:
            out_ref[...] = out_ref[...] + layer_in

    # outputs = h5_sumspike / time_window
    h5_sum = out_ref[...]
    out_ref[...] = h5_sum * (1.0 / TIME_WINDOW)

    # s_i finished in-kernel: sublane+lane reductions to (1,1) scalars, pre-divided.
    row5 = jnp.sum(h5_sum, axis=0, keepdims=True)
    all_rows = acc_rows + [row5]
    for i in range(5):
        s_refs[i][...] = (jnp.sum(all_rows[i], axis=1, keepdims=True)
                          * (1.0 / S_DIVISORS[i]))


def init_params(key):
    """Deterministic PyTorch-style Linear init: U(-1/sqrt(fan_in), 1/sqrt(fan_in))."""
    dims = [IN_FEATURES] + CFG_FC
    params = []
    for i in range(5):
        key, kw, kb = jax.random.split(key, 3)
        bound = 1.0 / math.sqrt(dims[i])
        # stored pre-transposed: (in_features, out_features)
        w = jax.random.uniform(kw, (dims[i], dims[i + 1]), jnp.float32,
                               minval=-bound, maxval=bound)
        b = jax.random.uniform(kb, (1, dims[i + 1]), jnp.float32,
                               minval=-bound, maxval=bound)
        params.extend([w, b])
    return params


def pad_inputs(x, params):
    """Zero-pad x / weights / biases to 128 lanes (mathematically a no-op)."""
    xb = x.reshape(-1, IN_FEATURES).astype(jnp.float32)  # (B, 121)
    x_pad = jnp.zeros((xb.shape[0], PAD), jnp.float32).at[:, :IN_FEATURES].set(xb)
    dims = [IN_FEATURES] + CFG_FC
    padded = []
    for i in range(5):
        w, b = params[2 * i], params[2 * i + 1]
        wp = jnp.zeros((PAD, PAD), jnp.float32).at[:dims[i], :dims[i + 1]].set(w)
        bp = jnp.zeros((1, PAD), jnp.float32).at[:, :dims[i + 1]].set(b)
        padded.extend([wp, bp])
    return x_pad, padded


def scnn_forward(x, params):
    x_pad, padded = pad_inputs(x, params)

    vmem = lambda: pl.BlockSpec(memory_space=pltpu.MemorySpace.VMEM)
    n_matmuls = 1 + 4 * TIME_WINDOW   # layer-1 hoisted: 1 + 16 = 17
    cost = pl.CostEstimate(
        flops=2 * BATCH_SIZE * PAD * PAD * n_matmuls,
        transcendentals=0,
        bytes_accessed=(x_pad.size + sum(p.size for p in padded)
                        + BATCH_SIZE * PAD + 5) * 4,
    )

    out_shapes = (
        jax.ShapeDtypeStruct((BATCH_SIZE, PAD), jnp.float32),   # padded h5 outputs
        jax.ShapeDtypeStruct((1, 1), jnp.float32),              # s1 (scalar)
        jax.ShapeDtypeStruct((1, 1), jnp.float32),              # s2
        jax.ShapeDtypeStruct((1, 1), jnp.float32),              # s3
        jax.ShapeDtypeStruct((1, 1), jnp.float32),              # s4
        jax.ShapeDtypeStruct((1, 1), jnp.float32),              # s5
    )

    results = pl.pallas_call(
        scnn_kernel,
        out_shape=out_shapes,
        in_specs=[vmem() for _ in range(1 + 10)],
        out_specs=tuple(vmem() for _ in range(6)),
        scratch_shapes=[pltpu.VMEM((BATCH_SIZE, PAD), jnp.float32)   # cached pre1
                        ] + [pltpu.VMEM((BATCH_SIZE, PAD), jnp.float32)
                             for _ in range(5)],                     # membrane carries
        cost_estimate=cost,
    )(x_pad, *padded)

    out_pad, s_scalars = results[0], results[1:]
    outputs = out_pad[:, :CFG_FC[4]]
    s_vals = [r[0, 0] for r in s_scalars]
    return (outputs, *s_vals)


def scnn_reference(x, params):
    """Pure-JAX reference mirroring the PyTorch forward (on the same padded
    operands — zero padding is exactly the module's math)."""
    x_pad, padded = pad_inputs(x, params)
    ws = padded[0::2]
    bs = padded[1::2]
    mems = [jnp.zeros((BATCH_SIZE, PAD), jnp.float32) for _ in range(5)]
    spikes = [jnp.zeros((BATCH_SIZE, PAD), jnp.float32) for _ in range(5)]
    sums = [jnp.zeros((BATCH_SIZE, PAD), jnp.float32) for _ in range(5)]
    for _ in range(TIME_WINDOW):
        layer_in = x_pad
        for li in range(5):
            mems[li] = (mems[li] * DECAY * (1.0 - spikes[li])
                        + jnp.dot(layer_in, ws[li],
                                  preferred_element_type=jnp.float32) + bs[li])
            spikes[li] = (mems[li] > THRESH).astype(jnp.float32)
            sums[li] = sums[li] + spikes[li]
            layer_in = spikes[li]
    outputs = sums[4][:, :CFG_FC[4]] / float(TIME_WINDOW)
    s = [jnp.sum(sums[i]) / float(S_DIVISORS[i]) for i in range(5)]
    return (outputs, *s)


if __name__ == "__main__":
    key = jax.random.PRNGKey(0)
    key, kx, kp = jax.random.split(key, 3)

    # input consistent with the module: batch_size=100 rows of 11x11 "compressed" frames
    x = jax.random.uniform(kx, (BATCH_SIZE, COMPRESS_SIZE, COMPRESS_SIZE),
                           dtype=jnp.float32)
    params = init_params(kp)

    result = scnn_forward(x, params)
    result = jax.block_until_ready(result)

    # sanity-check against the pure-JAX reference
    ref = scnn_reference(x, params)
    for got, want in zip(result, ref):
        assert jnp.allclose(got, want, atol=1e-5, rtol=1e-5), (got, want)

    print("KERNEL_OK")
</pallas_src>

<mosaic_0001>
module attributes {stable_mosaic.version = 11 : i64} {
  func.func @scnn_kernel(%arg0: memref<100x128xf32, #tpu.memory_space<vmem>>, %arg1: memref<128x128xf32, #tpu.memory_space<vmem>>, %arg2: memref<1x128xf32, #tpu.memory_space<vmem>>, %arg3: memref<128x128xf32, #tpu.memory_space<vmem>>, %arg4: memref<1x128xf32, #tpu.memory_space<vmem>>, %arg5: memref<128x128xf32, #tpu.memory_space<vmem>>, %arg6: memref<1x128xf32, #tpu.memory_space<vmem>>, %arg7: memref<128x128xf32, #tpu.memory_space<vmem>>, %arg8: memref<1x128xf32, #tpu.memory_space<vmem>>, %arg9: memref<128x128xf32, #tpu.memory_space<vmem>>, %arg10: memref<1x128xf32, #tpu.memory_space<vmem>>, %arg11: memref<100x128xf32, #tpu.memory_space<vmem>>, %arg12: memref<1x1xf32, #tpu.memory_space<vmem>>, %arg13: memref<1x1xf32, #tpu.memory_space<vmem>>, %arg14: memref<1x1xf32, #tpu.memory_space<vmem>>, %arg15: memref<1x1xf32, #tpu.memory_space<vmem>>, %arg16: memref<1x1xf32, #tpu.memory_space<vmem>>, %arg17: memref<100x128xf32, #tpu.memory_space<vmem>>, %arg18: memref<100x128xf32, #tpu.memory_space<vmem>>, %arg19: memref<100x128xf32, #tpu.memory_space<vmem>>, %arg20: memref<100x128xf32, #tpu.memory_space<vmem>>, %arg21: memref<100x128xf32, #tpu.memory_space<vmem>>, %arg22: memref<100x128xf32, #tpu.memory_space<vmem>>) attributes {dimension_semantics = [], scalar_prefetch = 0 : i64, scratch_operands = 6 : i64, tpu.core_type = #tpu.core_type<tc>} {
    %c0 = arith.constant 0 : index
    %c0_0 = arith.constant 0 : index
    %0 = vector.load %arg0[%c0, %c0_0] : memref<100x128xf32, #tpu.memory_space<vmem>>, vector<100x128xf32>
    %c0_1 = arith.constant 0 : index
    %c0_2 = arith.constant 0 : index
    %1 = vector.load %arg1[%c0_1, %c0_2] : memref<128x128xf32, #tpu.memory_space<vmem>>, vector<128x128xf32>
    %cst = arith.constant dense<0.000000e+00> : vector<100x128xf32>
    %2 = tpu.matmul %0, %1, %cst {dimension_numbers = #tpu.dot_dimension_numbers<[1], [0], [0], [1], [0, 0, 1, 1], [], []>} : vector<100x128xf32>, vector<128x128xf32>, vector<100x128xf32> -> vector<100x128xf32>
    %c0_3 = arith.constant 0 : index
    %c0_4 = arith.constant 0 : index
    %3 = vector.load %arg2[%c0_3, %c0_4] : memref<1x128xf32, #tpu.memory_space<vmem>>, vector<1x128xf32>
    %4 = vector.broadcast %3 : vector<1x128xf32> to vector<100x128xf32>
    %5 = arith.addf %2, %4 : vector<100x128xf32>
    %c0_5 = arith.constant 0 : index
    %c0_6 = arith.constant 0 : index
    %6 = vector.load %arg17[%c0_5, %c0_6] : memref<100x128xf32, #tpu.memory_space<vmem>>, vector<100x128xf32>
    tpu.vector_store %arg17[%c0_5, %c0_6], %5 {strides = array<i32>} : memref<100x128xf32, #tpu.memory_space<vmem>>, vector<100x128xf32>,
    %cst_7 = arith.constant 0.000000e+00 : f32
    %7 = vector.broadcast %cst_7 : f32 to vector<1x128xf32>
    %cst_8 = arith.constant 0.000000e+00 : f32
    %8 = vector.broadcast %cst_8 : f32 to vector<1x128xf32>
    %cst_9 = arith.constant 0.000000e+00 : f32
    %9 = vector.broadcast %cst_9 : f32 to vector<1x128xf32>
    %cst_10 = arith.constant 0.000000e+00 : f32
    %10 = vector.broadcast %cst_10 : f32 to vector<1x128xf32>
    %c0_11 = arith.constant 0 : index
    %c0_12 = arith.constant 0 : index
    %11 = vector.load %arg17[%c0_11, %c0_12] : memref<100x128xf32, #tpu.memory_space<vmem>>, vector<100x128xf32>
    %cst_13 = arith.constant 5.000000e-01 : f32
    %12 = vector.broadcast %cst_13 : f32 to vector<100x128xf32>
    %13 = arith.cmpf ogt, %11, %12 : vector<100x128xf32>
    %14 = arith.extui %13 : vector<100x128xi1> to vector<100x128xi32>
    %15 = arith.sitofp %14 : vector<100x128xi32> to vector<100x128xf32>
    %cst_14 = arith.constant 5.000000e-01 : f32
    %16 = vector.broadcast %cst_14 : f32 to vector<100x128xf32>
    %17 = arith.cmpf ogt, %11, %16 : vector<100x128xf32>
    %cst_15 = arith.constant 2.000000e-01 : f32
    %18 = vector.broadcast %cst_15 : f32 to vector<100x128xf32>
    %19 = arith.mulf %11, %18 : vector<100x128xf32>
    %cst_16 = arith.constant 0.000000e+00 : f32
    %20 = vector.broadcast %cst_16 : f32 to vector<100x128xf32>
    %21 = arith.select %17, %20, %19 : vector<100x128xi1>, vector<100x128xf32>
    %c0_17 = arith.constant 0 : index
    %c0_18 = arith.constant 0 : index
    %22 = vector.load %arg18[%c0_17, %c0_18] : memref<100x128xf32, #tpu.memory_space<vmem>>, vector<100x128xf32>
    tpu.vector_store %arg18[%c0_17, %c0_18], %21 {strides = array<i32>} : memref<100x128xf32, #tpu.memory_space<vmem>>, vector<100x128xf32>,
    %cst_19 = arith.constant dense<0.000000e+00> : vector<128xf32>
    %23 = vector.multi_reduction <add>, %15, %cst_19 [0] : vector<100x128xf32> to vector<128xf32>
    %24 = vector.shape_cast %23 : vector<128xf32> to vector<1x128xf32>
    %25 = arith.addf %7, %24 : vector<1x128xf32>
    %c0_20 = arith.constant 0 : index
    %c0_21 = arith.constant 0 : index
    %26 = vector.load %arg3[%c0_20, %c0_21] : memref<128x128xf32, #tpu.memory_space<vmem>>, vector<128x128xf32>
    %cst_22 = arith.constant dense<0.000000e+00> : vector<100x128xf32>
    %27 = tpu.matmul %15, %26, %cst_22 {dimension_numbers = #tpu.dot_dimension_numbers<[1], [0], [0], [1], [0, 0, 1, 1], [], []>} : vector<100x128xf32>, vector<128x128xf32>, vector<100x128xf32> -> vector<100x128xf32>
    %c0_23 = arith.constant 0 : index
    %c0_24 = arith.constant 0 : index
    %28 = vector.load %arg4[%c0_23, %c0_24] : memref<1x128xf32, #tpu.memory_space<vmem>>, vector<1x128xf32>
    %29 = vector.broadcast %28 : vector<1x128xf32> to vector<100x128xf32>
    %30 = arith.addf %27, %29 : vector<100x128xf32>
    %cst_25 = arith.constant 5.000000e-01 : f32
    %31 = vector.broadcast %cst_25 : f32 to vector<100x128xf32>
    %32 = arith.cmpf ogt, %30, %31 : vector<100x128xf32>
    %33 = arith.extui %32 : vector<100x128xi1> to vector<100x128xi32>
    %34 = arith.sitofp %33 : vector<100x128xi32> to vector<100x128xf32>
    %cst_26 = arith.constant 5.000000e-01 : f32
    %35 = vector.broadcast %cst_26 : f32 to vector<100x128xf32>
    %36 = arith.cmpf ogt, %30, %35 : vector<100x128xf32>
    %cst_27 = arith.constant 2.000000e-01 : f32
    %37 = vector.broadcast %cst_27 : f32 to vector<100x128xf32>
    %38 = arith.mulf %30, %37 : vector<100x128xf32>
    %cst_28 = arith.constant 0.000000e+00 : f32
    %39 = vector.broadcast %cst_28 : f32 to vector<100x128xf32>
    %40 = arith.select %36, %39, %38 : vector<100x128xi1>, vector<100x128xf32>
    %c0_29 = arith.constant 0 : index
    %c0_30 = arith.constant 0 : index
    %41 = vector.load %arg19[%c0_29, %c0_30] : memref<100x128xf32, #tpu.memory_space<vmem>>, vector<100x128xf32>
    tpu.vector_store %arg19[%c0_29, %c0_30], %40 {strides = array<i32>} : memref<100x128xf32, #tpu.memory_space<vmem>>, vector<100x128xf32>,
    %cst_31 = arith.constant dense<0.000000e+00> : vector<128xf32>
    %42 = vector.multi_reduction <add>, %34, %cst_31 [0] : vector<100x128xf32> to vector<128xf32>
    %43 = vector.shape_cast %42 : vector<128xf32> to vector<1x128xf32>
    %44 = arith.addf %8, %43 : vector<1x128xf32>
    %c0_32 = arith.constant 0 : index
    %c0_33 = arith.constant 0 : index
    %45 = vector.load %arg5[%c0_32, %c0_33] : memref<128x128xf32, #tpu.memory_space<vmem>>, vector<128x128xf32>
    %cst_34 = arith.constant dense<0.000000e+00> : vector<100x128xf32>
    %46 = tpu.matmul %34, %45, %cst_34 {dimension_numbers = #tpu.dot_dimension_numbers<[1], [0], [0], [1], [0, 0, 1, 1], [], []>} : vector<100x128xf32>, vector<128x128xf32>, vector<100x128xf32> -> vector<100x128xf32>
    %c0_35 = arith.constant 0 : index
    %c0_36 = arith.constant 0 : index
    %47 = vector.load %arg6[%c0_35, %c0_36] : memref<1x128xf32, #tpu.memory_space<vmem>>, vector<1x128xf32>
    %48 = vector.broadcast %47 : vector<1x128xf32> to vector<100x128xf32>
    %49 = arith.addf %46, %48 : vector<100x128xf32>
    %cst_37 = arith.constant 5.000000e-01 : f32
    %50 = vector.broadcast %cst_37 : f32 to vector<100x128xf32>
    %51 = arith.cmpf ogt, %49, %50 : vector<100x128xf32>
    %52 = arith.extui %51 : vector<100x128xi1> to vector<100x128xi32>
    %53 = arith.sitofp %52 : vector<100x128xi32> to vector<100x128xf32>
    %cst_38 = arith.constant 5.000000e-01 : f32
    %54 = vector.broadcast %cst_38 : f32 to vector<100x128xf32>
    %55 = arith.cmpf ogt, %49, %54 : vector<100x128xf32>
    %cst_39 = arith.constant 2.000000e-01 : f32
    %56 = vector.broadcast %cst_39 : f32 to vector<100x128xf32>
    %57 = arith.mulf %49, %56 : vector<100x128xf32>
    %cst_40 = arith.constant 0.000000e+00 : f32
    %58 = vector.broadcast %cst_40 : f32 to vector<100x128xf32>
    %59 = arith.select %55, %58, %57 : vector<100x128xi1>, vector<100x128xf32>
    %c0_41 = arith.constant 0 : index
    %c0_42 = arith.constant 0 : index
    %60 = vector.load %arg20[%c0_41, %c0_42] : memref<100x128xf32, #tpu.memory_space<vmem>>, vector<100x128xf32>
    tpu.vector_store %arg20[%c0_41, %c0_42], %59 {strides = array<i32>} : memref<100x128xf32, #tpu.memory_space<vmem>>, vector<100x128xf32>,
    %cst_43 = arith.constant dense<0.000000e+00> : vector<128xf32>
    %61 = vector.multi_reduction <add>, %53, %cst_43 [0] : vector<100x128xf32> to vector<128xf32>
    %62 = vector.shape_cast %61 : vector<128xf32> to vector<1x128xf32>
    %63 = arith.addf %9, %62 : vector<1x128xf32>
    %c0_44 = arith.constant 0 : index
    %c0_45 = arith.constant 0 : index
    %64 = vector.load %arg7[%c0_44, %c0_45] : memref<128x128xf32, #tpu.memory_space<vmem>>, vector<128x128xf32>
    %cst_46 = arith.constant dense<0.000000e+00> : vector<100x128xf32>
    %65 = tpu.matmul %53, %64, %cst_46 {dimension_numbers = #tpu.dot_dimension_numbers<[1], [0], [0], [1], [0, 0, 1, 1], [], []>} : vector<100x128xf32>, vector<128x128xf32>, vector<100x128xf32> -> vector<100x128xf32>
    %c0_47 = arith.constant 0 : index
    %c0_48 = arith.constant 0 : index
    %66 = vector.load %arg8[%c0_47, %c0_48] : memref<1x128xf32, #tpu.memory_space<vmem>>, vector<1x128xf32>
    %67 = vector.broadcast %66 : vector<1x128xf32> to vector<100x128xf32>
    %68 = arith.addf %65, %67 : vector<100x128xf32>
    %cst_49 = arith.constant 5.000000e-01 : f32
    %69 = vector.broadcast %cst_49 : f32 to vector<100x128xf32>
    %70 = arith.cmpf ogt, %68, %69 : vector<100x128xf32>
    %71 = arith.extui %70 : vector<100x128xi1> to vector<100x128xi32>
    %72 = arith.sitofp %71 : vector<100x128xi32> to vector<100x128xf32>
    %cst_50 = arith.constant 5.000000e-01 : f32
    %73 = vector.broadcast %cst_50 : f32 to vector<100x128xf32>
    %74 = arith.cmpf ogt, %68, %73 : vector<100x128xf32>
    %cst_51 = arith.constant 2.000000e-01 : f32
    %75 = vector.broadcast %cst_51 : f32 to vector<100x128xf32>
    %76 = arith.mulf %68, %75 : vector<100x128xf32>
    %cst_52 = arith.constant 0.000000e+00 : f32
    %77 = vector.broadcast %cst_52 : f32 to vector<100x128xf32>
    %78 = arith.select %74, %77, %76 : vector<100x128xi1>, vector<100x128xf32>
    %c0_53 = arith.constant 0 : index
    %c0_54 = arith.constant 0 : index
    %79 = vector.load %arg21[%c0_53, %c0_54] : memref<100x128xf32, #tpu.memory_space<vmem>>, vector<100x128xf32>
    tpu.vector_store %arg21[%c0_53, %c0_54], %78 {strides = array<i32>} : memref<100x128xf32, #tpu.memory_space<vmem>>, vector<100x128xf32>,
    %cst_55 = arith.constant dense<0.000000e+00> : vector<128xf32>
    %80 = vector.multi_reduction <add>, %72, %cst_55 [0] : vector<100x128xf32> to vector<128xf32>
    %81 = vector.shape_cast %80 : vector<128xf32> to vector<1x128xf32>
    %82 = arith.addf %10, %81 : vector<1x128xf32>
    %c0_56 = arith.constant 0 : index
    %c0_57 = arith.constant 0 : index
    %83 = vector.load %arg9[%c0_56, %c0_57] : memref<128x128xf32, #tpu.memory_space<vmem>>, vector<128x128xf32>
    %cst_58 = arith.constant dense<0.000000e+00> : vector<100x128xf32>
    %84 = tpu.matmul %72, %83, %cst_58 {dimension_numbers = #tpu.dot_dimension_numbers<[1], [0], [0], [1], [0, 0, 1, 1], [], []>} : vector<100x128xf32>, vector<128x128xf32>, vector<100x128xf32> -> vector<100x128xf32>
    %c0_59 = arith.constant 0 : index
    %c0_60 = arith.constant 0 : index
    %85 = vector.load %arg10[%c0_59, %c0_60] : memref<1x128xf32, #tpu.memory_space<vmem>>, vector<1x128xf32>
    %86 = vector.broadcast %85 : vector<1x128xf32> to vector<100x128xf32>
    %87 = arith.addf %84, %86 : vector<100x128xf32>
    %cst_61 = arith.constant 5.000000e-01 : f32
    %88 = vector.broadcast %cst_61 : f32 to vector<100x128xf32>
    %89 = arith.cmpf ogt, %87, %88 : vector<100x128xf32>
    %90 = arith.extui %89 : vector<100x128xi1> to vector<100x128xi32>
    %91 = arith.sitofp %90 : vector<100x128xi32> to vector<100x128xf32>
    %cst_62 = arith.constant 5.000000e-01 : f32
    %92 = vector.broadcast %cst_62 : f32 to vector<100x128xf32>
    %93 = arith.cmpf ogt, %87, %92 : vector<100x128xf32>
    %cst_63 = arith.constant 2.000000e-01 : f32
    %94 = vector.broadcast %cst_63 : f32 to vector<100x128xf32>
    %95 = arith.mulf %87, %94 : vector<100x128xf32>
    %cst_64 = arith.constant 0.000000e+00 : f32
    %96 = vector.broadcast %cst_64 : f32 to vector<100x128xf32>
    %97 = arith.select %93, %96, %95 : vector<100x128xi1>, vector<100x128xf32>
    %c0_65 = arith.constant 0 : index
    %c0_66 = arith.constant 0 : index
    %98 = vector.load %arg22[%c0_65, %c0_66] : memref<100x128xf32, #tpu.memory_space<vmem>>, vector<100x128xf32>
    tpu.vector_store %arg22[%c0_65, %c0_66], %97 {strides = array<i32>} : memref<100x128xf32, #tpu.memory_space<vmem>>, vector<100x128xf32>,
    %c0_67 = arith.constant 0 : index
    %c0_68 = arith.constant 0 : index
    %99 = vector.load %arg11[%c0_67, %c0_68] : memref<100x128xf32, #tpu.memory_space<vmem>>, vector<100x128xf32>
    tpu.vector_store %arg11[%c0_67, %c0_68], %91 {strides = array<i32>} : memref<100x128xf32, #tpu.memory_space<vmem>>, vector<100x128xf32>,
    %c0_69 = arith.constant 0 : index
    %c0_70 = arith.constant 0 : index
    %100 = vector.load %arg17[%c0_69, %c0_70] : memref<100x128xf32, #tpu.memory_space<vmem>>, vector<100x128xf32>
    %c0_71 = arith.constant 0 : index
    %c0_72 = arith.constant 0 : index
    %101 = vector.load %arg18[%c0_71, %c0_72] : memref<100x128xf32, #tpu.memory_space<vmem>>, vector<100x128xf32>
    %102 = arith.addf %101, %100 : vector<100x128xf32>
    %cst_73 = arith.constant 5.000000e-01 : f32
    %103 = vector.broadcast %cst_73 : f32 to vector<100x128xf32>
    %104 = arith.cmpf ogt, %102, %103 : vector<100x128xf32>
    %105 = arith.extui %104 : vector<100x128xi1> to vector<100x128xi32>
    %106 = arith.sitofp %105 : vector<100x128xi32> to vector<100x128xf32>
    %cst_74 = arith.constant 5.000000e-01 : f32
    %107 = vector.broadcast %cst_74 : f32 to vector<100x128xf32>
    %108 = arith.cmpf ogt, %102, %107 : vector<100x128xf32>
    %cst_75 = arith.constant 2.000000e-01 : f32
    %109 = vector.broadcast %cst_75 : f32 to vector<100x128xf32>
    %110 = arith.mulf %102, %109 : vector<100x128xf32>
    %cst_76 = arith.constant 0.000000e+00 : f32
    %111 = vector.broadcast %cst_76 : f32 to vector<100x128xf32>
    %112 = arith.select %108, %111, %110 : vector<100x128xi1>, vector<100x128xf32>
    %c0_77 = arith.constant 0 : index
    %c0_78 = arith.constant 0 : index
    %113 = vector.load %arg18[%c0_77, %c0_78] : memref<100x128xf32, #tpu.memory_space<vmem>>, vector<100x128xf32>
    tpu.vector_store %arg18[%c0_77, %c0_78], %112 {strides = array<i32>} : memref<100x128xf32, #tpu.memory_space<vmem>>, vector<100x128xf32>,
    %cst_79 = arith.constant dense<0.000000e+00> : vector<128xf32>
    %114 = vector.multi_reduction <add>, %106, %cst_79 [0] : vector<100x128xf32> to vector<128xf32>
    %115 = vector.shape_cast %114 : vector<128xf32> to vector<1x128xf32>
    %116 = arith.addf %25, %115 : vector<1x128xf32>
    %c0_80 = arith.constant 0 : index
    %c0_81 = arith.constant 0 : index
    %117 = vector.load %arg3[%c0_80, %c0_81] : memref<128x128xf32, #tpu.memory_space<vmem>>, vector<128x128xf32>
    %cst_82 = arith.constant dense<0.000000e+00> : vector<100x128xf32>
    %118 = tpu.matmul %106, %117, %cst_82 {dimension_numbers = #tpu.dot_dimension_numbers<[1], [0], [0], [1], [0, 0, 1, 1], [], []>} : vector<100x128xf32>, vector<128x128xf32>, vector<100x128xf32> -> vector<100x128xf32>
    %c0_83 = arith.constant 0 : index
    %c0_84 = arith.constant 0 : index
    %119 = vector.load %arg4[%c0_83, %c0_84] : memref<1x128xf32, #tpu.memory_space<vmem>>, vector<1x128xf32>
    %120 = vector.broadcast %119 : vector<1x128xf32> to vector<100x128xf32>
    %121 = arith.addf %118, %120 : vector<100x128xf32>
    %c0_85 = arith.constant 0 : index
    %c0_86 = arith.constant 0 : index
    %122 = vector.load %arg19[%c0_85, %c0_86] : memref<100x128xf32, #tpu.memory_space<vmem>>, vector<100x128xf32>
    %123 = arith.addf %122, %121 : vector<100x128xf32>
    %cst_87 = arith.constant 5.000000e-01 : f32
    %124 = vector.broadcast %cst_87 : f32 to vector<100x128xf32>
    %125 = arith.cmpf ogt, %123, %124 : vector<100x128xf32>
    %126 = arith.extui %125 : vector<100x128xi1> to vector<100x128xi32>
    %127 = arith.sitofp %126 : vector<100x128xi32> to vector<100x128xf32>
    %cst_88 = arith.constant 5.000000e-01 : f32
    %128 = vector.broadcast %cst_88 : f32 to vector<100x128xf32>
    %129 = arith.cmpf ogt, %123, %128 : vector<100x128xf32>
    %cst_89 = arith.constant 2.000000e-01 : f32
    %130 = vector.broadcast %cst_89 : f32 to vector<100x128xf32>
    %131 = arith.mulf %123, %130 : vector<100x128xf32>
    %cst_90 = arith.constant 0.000000e+00 : f32
    %132 = vector.broadcast %cst_90 : f32 to vector<100x128xf32>
    %133 = arith.select %129, %132, %131 : vector<100x128xi1>, vector<100x128xf32>
    %c0_91 = arith.constant 0 : index
    %c0_92 = arith.constant 0 : index
    %134 = vector.load %arg19[%c0_91, %c0_92] : memref<100x128xf32, #tpu.memory_space<vmem>>, vector<100x128xf32>
    tpu.vector_store %arg19[%c0_91, %c0_92], %133 {strides = array<i32>} : memref<100x128xf32, #tpu.memory_space<vmem>>, vector<100x128xf32>,
    %cst_93 = arith.constant dense<0.000000e+00> : vector<128xf32>
    %135 = vector.multi_reduction <add>, %127, %cst_93 [0] : vector<100x128xf32> to vector<128xf32>
    %136 = vector.shape_cast %135 : vector<128xf32> to vector<1x128xf32>
    %137 = arith.addf %44, %136 : vector<1x128xf32>
    %c0_94 = arith.constant 0 : index
    %c0_95 = arith.constant 0 : index
    %138 = vector.load %arg5[%c0_94, %c0_95] : memref<128x128xf32, #tpu.memory_space<vmem>>, vector<128x128xf32>
    %cst_96 = arith.constant dense<0.000000e+00> : vector<100x128xf32>
    %139 = tpu.matmul %127, %138, %cst_96 {dimension_numbers = #tpu.dot_dimension_numbers<[1], [0], [0], [1], [0, 0, 1, 1], [], []>} : vector<100x128xf32>, vector<128x128xf32>, vector<100x128xf32> -> vector<100x128xf32>
    %c0_97 = arith.constant 0 : index
    %c0_98 = arith.constant 0 : index
    %140 = vector.load %arg6[%c0_97, %c0_98] : memref<1x128xf32, #tpu.memory_space<vmem>>, vector<1x128xf32>
    %141 = vector.broadcast %140 : vector<1x128xf32> to vector<100x128xf32>
    %142 = arith.addf %139, %141 : vector<100x128xf32>
    %c0_99 = arith.constant 0 : index
    %c0_100 = arith.constant 0 : index
    %143 = vector.load %arg20[%c0_99, %c0_100] : memref<100x128xf32, #tpu.memory_space<vmem>>, vector<100x128xf32>
    %144 = arith.addf %143, %142 : vector<100x128xf32>
    %cst_101 = arith.constant 5.000000e-01 : f32
    %145 = vector.broadcast %cst_101 : f32 to vector<100x128xf32>
    %146 = arith.cmpf ogt, %144, %145 : vector<100x128xf32>
    %147 = arith.extui %146 : vector<100x128xi1> to vector<100x128xi32>
    %148 = arith.sitofp %147 : vector<100x128xi32> to vector<100x128xf32>
    %cst_102 = arith.constant 5.000000e-01 : f32
    %149 = vector.broadcast %cst_102 : f32 to vector<100x128xf32>
    %150 = arith.cmpf ogt, %144, %149 : vector<100x128xf32>
    %cst_103 = arith.constant 2.000000e-01 : f32
    %151 = vector.broadcast %cst_103 : f32 to vector<100x128xf32>
    %152 = arith.mulf %144, %151 : vector<100x128xf32>
    %cst_104 = arith.constant 0.000000e+00 : f32
    %153 = vector.broadcast %cst_104 : f32 to vector<100x128xf32>
    %154 = arith.select %150, %153, %152 : vector<100x128xi1>, vector<100x128xf32>
    %c0_105 = arith.constant 0 : index
    %c0_106 = arith.constant 0 : index
    %155 = vector.load %arg20[%c0_105, %c0_106] : memref<100x128xf32, #tpu.memory_space<vmem>>, vector<100x128xf32>
    tpu.vector_store %arg20[%c0_105, %c0_106], %154 {strides = array<i32>} : memref<100x128xf32, #tpu.memory_space<vmem>>, vector<100x128xf32>,
    %cst_107 = arith.constant dense<0.000000e+00> : vector<128xf32>
    %156 = vector.multi_reduction <add>, %148, %cst_107 [0] : vector<100x128xf32> to vector<128xf32>
    %157 = vector.shape_cast %156 : vector<128xf32> to vector<1x128xf32>
    %158 = arith.addf %63, %157 : vector<1x128xf32>
    %c0_108 = arith.constant 0 : index
    %c0_109 = arith.constant 0 : index
    %159 = vector.load %arg7[%c0_108, %c0_109] : memref<128x128xf32, #tpu.memory_space<vmem>>, vector<128x128xf32>
    %cst_110 = arith.constant dense<0.000000e+00> : vector<100x128xf32>
    %160 = tpu.matmul %148, %159, %cst_110 {dimension_numbers = #tpu.dot_dimension_numbers<[1], [0], [0], [1], [0, 0, 1, 1], [], []>} : vector<100x128xf32>, vector<128x128xf32>, vector<100x128xf32> -> vector<100x128xf32>
    %c0_111 = arith.constant 0 : index
    %c0_112 = arith.constant 0 : index
    %161 = vector.load %arg8[%c0_111, %c0_112] : memref<1x128xf32, #tpu.memory_space<vmem>>, vector<1x128xf32>
    %162 = vector.broadcast %161 : vector<1x128xf32> to vector<100x128xf32>
    %163 = arith.addf %160, %162 : vector<100x128xf32>
    %c0_113 = arith.constant 0 : index
    %c0_114 = arith.constant 0 : index
    %164 = vector.load %arg21[%c0_113, %c0_114] : memref<100x128xf32, #tpu.memory_space<vmem>>, vector<100x128xf32>
    %165 = arith.addf %164, %163 : vector<100x128xf32>
    %cst_115 = arith.constant 5.000000e-01 : f32
    %166 = vector.broadcast %cst_115 : f32 to vector<100x128xf32>
    %167 = arith.cmpf ogt, %165, %166 : vector<100x128xf32>
    %168 = arith.extui %167 : vector<100x128xi1> to vector<100x128xi32>
    %169 = arith.sitofp %168 : vector<100x128xi32> to vector<100x128xf32>
    %cst_116 = arith.constant 5.000000e-01 : f32
    %170 = vector.broadcast %cst_116 : f32 to vector<100x128xf32>
    %171 = arith.cmpf ogt, %165, %170 : vector<100x128xf32>
    %cst_117 = arith.constant 2.000000e-01 : f32
    %172 = vector.broadcast %cst_117 : f32 to vector<100x128xf32>
    %173 = arith.mulf %165, %172 : vector<100x128xf32>
    %cst_118 = arith.constant 0.000000e+00 : f32
    %174 = vector.broadcast %cst_118 : f32 to vector<100x128xf32>
    %175 = arith.select %171, %174, %173 : vector<100x128xi1>, vector<100x128xf32>
    %c0_119 = arith.constant 0 : index
    %c0_120 = arith.constant 0 : index
    %176 = vector.load %arg21[%c0_119, %c0_120] : memref<100x128xf32, #tpu.memory_space<vmem>>, vector<100x128xf32>
    tpu.vector_store %arg21[%c0_119, %c0_120], %175 {strides = array<i32>} : memref<100x128xf32, #tpu.memory_space<vmem>>, vector<100x128xf32>,
    %cst_121 = arith.constant dense<0.000000e+00> : vector<128xf32>
    %177 = vector.multi_reduction <add>, %169, %cst_121 [0] : vector<100x128xf32> to vector<128xf32>
    %178 = vector.shape_cast %177 : vector<128xf32> to vector<1x128xf32>
    %179 = arith.addf %82, %178 : vector<1x128xf32>
    %c0_122 = arith.constant 0 : index
    %c0_123 = arith.constant 0 : index
    %180 = vector.load %arg9[%c0_122, %c0_123] : memref<128x128xf32, #tpu.memory_space<vmem>>, vector<128x128xf32>
    %cst_124 = arith.constant dense<0.000000e+00> : vector<100x128xf32>
    %181 = tpu.matmul %169, %180, %cst_124 {dimension_numbers = #tpu.dot_dimension_numbers<[1], [0], [0], [1], [0, 0, 1, 1], [], []>} : vector<100x128xf32>, vector<128x128xf32>, vector<100x128xf32> -> vector<100x128xf32>
    %c0_125 = arith.constant 0 : index
    %c0_126 = arith.constant 0 : index
    %182 = vector.load %arg10[%c0_125, %c0_126] : memref<1x128xf32, #tpu.memory_space<vmem>>, vector<1x128xf32>
    %183 = vector.broadcast %182 : vector<1x128xf32> to vector<100x128xf32>
    %184 = arith.addf %181, %183 : vector<100x128xf32>
    %c0_127 = arith.constant 0 : index
    %c0_128 = arith.constant 0 : index
    %185 = vector.load %arg22[%c0_127, %c0_128] : memref<100x128xf32, #tpu.memory_space<vmem>>, vector<100x128xf32>
    %186 = arith.addf %185, %184 : vector<100x128xf32>
    %cst_129 = arith.constant 5.000000e-01 : f32
    %187 = vector.broadcast %cst_129 : f32 to vector<100x128xf32>
    %188 = arith.cmpf ogt, %186, %187 : vector<100x128xf32>
    %189 = arith.extui %188 : vector<100x128xi1> to vector<100x128xi32>
    %190 = arith.sitofp %189 : vector<100x128xi32> to vector<100x128xf32>
    %cst_130 = arith.constant 5.000000e-01 : f32
    %191 = vector.broadcast %cst_130 : f32 to vector<100x128xf32>
    %192 = arith.cmpf ogt, %186, %191 : vector<100x128xf32>
    %cst_131 = arith.constant 2.000000e-01 : f32
    %193 = vector.broadcast %cst_131 : f32 to vector<100x128xf32>
    %194 = arith.mulf %186, %193 : vector<100x128xf32>
    %cst_132 = arith.constant 0.000000e+00 : f32
    %195 = vector.broadcast %cst_132 : f32 to vector<100x128xf32>
    %196 = arith.select %192, %195, %194 : vector<100x128xi1>, vector<100x128xf32>
    %c0_133 = arith.constant 0 : index
    %c0_134 = arith.constant 0 : index
    %197 = vector.load %arg22[%c0_133, %c0_134] : memref<100x128xf32, #tpu.memory_space<vmem>>, vector<100x128xf32>
    tpu.vector_store %arg22[%c0_133, %c0_134], %196 {strides = array<i32>} : memref<100x128xf32, #tpu.memory_space<vmem>>, vector<100x128xf32>,
    %c0_135 = arith.constant 0 : index
    %c0_136 = arith.constant 0 : index
    %198 = vector.load %arg11[%c0_135, %c0_136] : memref<100x128xf32, #tpu.memory_space<vmem>>, vector<100x128xf32>
    %199 = arith.addf %198, %190 : vector<100x128xf32>
    %c0_137 = arith.constant 0 : index
    %c0_138 = arith.constant 0 : index
    %200 = vector.load %arg11[%c0_137, %c0_138] : memref<100x128xf32, #tpu.memory_space<vmem>>, vector<100x128xf32>
    tpu.vector_store %arg11[%c0_137, %c0_138], %199 {strides = array<i32>} : memref<100x128xf32, #tpu.memory_space<vmem>>, vector<100x128xf32>,
    %c0_139 = arith.constant 0 : index
    %c0_140 = arith.constant 0 : index
    %201 = vector.load %arg17[%c0_139, %c0_140] : memref<100x128xf32, #tpu.memory_space<vmem>>, vector<100x128xf32>
    %c0_141 = arith.constant 0 : index
    %c0_142 = arith.constant 0 : index
    %202 = vector.load %arg18[%c0_141, %c0_142] : memref<100x128xf32, #tpu.memory_space<vmem>>, vector<100x128xf32>
    %203 = arith.addf %202, %201 : vector<100x128xf32>
    %cst_143 = arith.constant 5.000000e-01 : f32
    %204 = vector.broadcast %cst_143 : f32 to vector<100x128xf32>
    %205 = arith.cmpf ogt, %203, %204 : vector<100x128xf32>
    %206 = arith.extui %205 : vector<100x128xi1> to vector<100x128xi32>
    %207 = arith.sitofp %206 : vector<100x128xi32> to vector<100x128xf32>
    %cst_144 = arith.constant 5.000000e-01 : f32
    %208 = vector.broadcast %cst_144 : f32 to vector<100x128xf32>
    %209 = arith.cmpf ogt, %203, %208 : vector<100x128xf32>
    %cst_145 = arith.constant 2.000000e-01 : f32
    %210 = vector.broadcast %cst_145 : f32 to vector<100x128xf32>
    %211 = arith.mulf %203, %210 : vector<100x128xf32>
    %cst_146 = arith.constant 0.000000e+00 : f32
    %212 = vector.broadcast %cst_146 : f32 to vector<100x128xf32>
    %213 = arith.select %209, %212, %211 : vector<100x128xi1>, vector<100x128xf32>
    %c0_147 = arith.constant 0 : index
    %c0_148 = arith.constant 0 : index
    %214 = vector.load %arg18[%c0_147, %c0_148] : memref<100x128xf32, #tpu.memory_space<vmem>>, vector<100x128xf32>
    tpu.vector_store %arg18[%c0_147, %c0_148], %213 {strides = array<i32>} : memref<100x128xf32, #tpu.memory_space<vmem>>, vector<100x128xf32>,
    %cst_149 = arith.constant dense<0.000000e+00> : vector<128xf32>
    %215 = vector.multi_reduction <add>, %207, %cst_149 [0] : vector<100x128xf32> to vector<128xf32>
    %216 = vector.shape_cast %215 : vector<128xf32> to vector<1x128xf32>
    %217 = arith.addf %116, %216 : vector<1x128xf32>
    %c0_150 = arith.constant 0 : index
    %c0_151 = arith.constant 0 : index
    %218 = vector.load %arg3[%c0_150, %c0_151] : memref<128x128xf32, #tpu.memory_space<vmem>>, vector<128x128xf32>
    %cst_152 = arith.constant dense<0.000000e+00> : vector<100x128xf32>
    %219 = tpu.matmul %207, %218, %cst_152 {dimension_numbers = #tpu.dot_dimension_numbers<[1], [0], [0], [1], [0, 0, 1, 1], [], []>} : vector<100x128xf32>, vector<128x128xf32>, vector<100x128xf32> -> vector<100x128xf32>
    %c0_153 = arith.constant 0 : index
    %c0_154 = arith.constant 0 : index
    %220 = vector.load %arg4[%c0_153, %c0_154] : memref<1x128xf32, #tpu.memory_space<vmem>>, vector<1x128xf32>
    %221 = vector.broadcast %220 : vector<1x128xf32> to vector<100x128xf32>
    %222 = arith.addf %219, %221 : vector<100x128xf32>
    %c0_155 = arith.constant 0 : index
    %c0_156 = arith.constant 0 : index
    %223 = vector.load %arg19[%c0_155, %c0_156] : memref<100x128xf32, #tpu.memory_space<vmem>>, vector<100x128xf32>
    %224 = arith.addf %223, %222 : vector<100x128xf32>
    %cst_157 = arith.constant 5.000000e-01 : f32
    %225 = vector.broadcast %cst_157 : f32 to vector<100x128xf32>
    %226 = arith.cmpf ogt, %224, %225 : vector<100x128xf32>
    %227 = arith.extui %226 : vector<100x128xi1> to vector<100x128xi32>
    %228 = arith.sitofp %227 : vector<100x128xi32> to vector<100x128xf32>
    %cst_158 = arith.constant 5.000000e-01 : f32
    %229 = vector.broadcast %cst_158 : f32 to vector<100x128xf32>
    %230 = arith.cmpf ogt, %224, %229 : vector<100x128xf32>
    %cst_159 = arith.constant 2.000000e-01 : f32
    %231 = vector.broadcast %cst_159 : f32 to vector<100x128xf32>
    %232 = arith.mulf %224, %231 : vector<100x128xf32>
    %cst_160 = arith.constant 0.000000e+00 : f32
    %233 = vector.broadcast %cst_160 : f32 to vector<100x128xf32>
    %234 = arith.select %230, %233, %232 : vector<100x128xi1>, vector<100x128xf32>
    %c0_161 = arith.constant 0 : index
    %c0_162 = arith.constant 0 : index
    %235 = vector.load %arg19[%c0_161, %c0_162] : memref<100x128xf32, #tpu.memory_space<vmem>>, vector<100x128xf32>
    tpu.vector_store %arg19[%c0_161, %c0_162], %234 {strides = array<i32>} : memref<100x128xf32, #tpu.memory_space<vmem>>, vector<100x128xf32>,
    %cst_163 = arith.constant dense<0.000000e+00> : vector<128xf32>
    %236 = vector.multi_reduction <add>, %228, %cst_163 [0] : vector<100x128xf32> to vector<128xf32>
    %237 = vector.shape_cast %236 : vector<128xf32> to vector<1x128xf32>
    %238 = arith.addf %137, %237 : vector<1x128xf32>
    %c0_164 = arith.constant 0 : index
    %c0_165 = arith.constant 0 : index
    %239 = vector.load %arg5[%c0_164, %c0_165] : memref<128x128xf32, #tpu.memory_space<vmem>>, vector<128x128xf32>
    %cst_166 = arith.constant dense<0.000000e+00> : vector<100x128xf32>
    %240 = tpu.matmul %228, %239, %cst_166 {dimension_numbers = #tpu.dot_dimension_numbers<[1], [0], [0], [1], [0, 0, 1, 1], [], []>} : vector<100x128xf32>, vector<128x128xf32>, vector<100x128xf32> -> vector<100x128xf32>
    %c0_167 = arith.constant 0 : index
    %c0_168 = arith.constant 0 : index
    %241 = vector.load %arg6[%c0_167, %c0_168] : memref<1x128xf32, #tpu.memory_space<vmem>>, vector<1x128xf32>
    %242 = vector.broadcast %241 : vector<1x128xf32> to vector<100x128xf32>
    %243 = arith.addf %240, %242 : vector<100x128xf32>
    %c0_169 = arith.constant 0 : index
    %c0_170 = arith.constant 0 : index
    %244 = vector.load %arg20[%c0_169, %c0_170] : memref<100x128xf32, #tpu.memory_space<vmem>>, vector<100x128xf32>
    %245 = arith.addf %244, %243 : vector<100x128xf32>
    %cst_171 = arith.constant 5.000000e-01 : f32
    %246 = vector.broadcast %cst_171 : f32 to vector<100x128xf32>
    %247 = arith.cmpf ogt, %245, %246 : vector<100x128xf32>
    %248 = arith.extui %247 : vector<100x128xi1> to vector<100x128xi32>
    %249 = arith.sitofp %248 : vector<100x128xi32> to vector<100x128xf32>
    %cst_172 = arith.constant 5.000000e-01 : f32
    %250 = vector.broadcast %cst_172 : f32 to vector<100x128xf32>
    %251 = arith.cmpf ogt, %245, %250 : vector<100x128xf32>
    %cst_173 = arith.constant 2.000000e-01 : f32
    %252 = vector.broadcast %cst_173 : f32 to vector<100x128xf32>
    %253 = arith.mulf %245, %252 : vector<100x128xf32>
    %cst_174 = arith.constant 0.000000e+00 : f32
    %254 = vector.broadcast %cst_174 : f32 to vector<100x128xf32>
    %255 = arith.select %251, %254, %253 : vector<100x128xi1>, vector<100x128xf32>
    %c0_175 = arith.constant 0 : index
    %c0_176 = arith.constant 0 : index
    %256 = vector.load %arg20[%c0_175, %c0_176] : memref<100x128xf32, #tpu.memory_space<vmem>>, vector<100x128xf32>
    tpu.vector_store %arg20[%c0_175, %c0_176], %255 {strides = array<i32>} : memref<100x128xf32, #tpu.memory_space<vmem>>, vector<100x128xf32>,
    %cst_177 = arith.constant dense<0.000000e+00> : vector<128xf32>
    %257 = vector.multi_reduction <add>, %249, %cst_177 [0] : vector<100x128xf32> to vector<128xf32>
    %258 = vector.shape_cast %257 : vector<128xf32> to vector<1x128xf32>
    %259 = arith.addf %158, %258 : vector<1x128xf32>
    %c0_178 = arith.constant 0 : index
    %c0_179 = arith.constant 0 : index
    %260 = vector.load %arg7[%c0_178, %c0_179] : memref<128x128xf32, #tpu.memory_space<vmem>>, vector<128x128xf32>
    %cst_180 = arith.constant dense<0.000000e+00> : vector<100x128xf32>
    %261 = tpu.matmul %249, %260, %cst_180 {dimension_numbers = #tpu.dot_dimension_numbers<[1], [0], [0], [1], [0, 0, 1, 1], [], []>} : vector<100x128xf32>, vector<128x128xf32>, vector<100x128xf32> -> vector<100x128xf32>
    %c0_181 = arith.constant 0 : index
    %c0_182 = arith.constant 0 : index
    %262 = vector.load %arg8[%c0_181, %c0_182] : memref<1x128xf32, #tpu.memory_space<vmem>>, vector<1x128xf32>
    %263 = vector.broadcast %262 : vector<1x128xf32> to vector<100x128xf32>
    %264 = arith.addf %261, %263 : vector<100x128xf32>
    %c0_183 = arith.constant 0 : index
    %c0_184 = arith.constant 0 : index
    %265 = vector.load %arg21[%c0_183, %c0_184] : memref<100x128xf32, #tpu.memory_space<vmem>>, vector<100x128xf32>
    %266 = arith.addf %265, %264 : vector<100x128xf32>
    %cst_185 = arith.constant 5.000000e-01 : f32
    %267 = vector.broadcast %cst_185 : f32 to vector<100x128xf32>
    %268 = arith.cmpf ogt, %266, %267 : vector<100x128xf32>
    %269 = arith.extui %268 : vector<100x128xi1> to vector<100x128xi32>
    %270 = arith.sitofp %269 : vector<100x128xi32> to vector<100x128xf32>
    %cst_186 = arith.constant 5.000000e-01 : f32
    %271 = vector.broadcast %cst_186 : f32 to vector<100x128xf32>
    %272 = arith.cmpf ogt, %266, %271 : vector<100x128xf32>
    %cst_187 = arith.constant 2.000000e-01 : f32
    %273 = vector.broadcast %cst_187 : f32 to vector<100x128xf32>
    %274 = arith.mulf %266, %273 : vector<100x128xf32>
    %cst_188 = arith.constant 0.000000e+00 : f32
    %275 = vector.broadcast %cst_188 : f32 to vector<100x128xf32>
    %276 = arith.select %272, %275, %274 : vector<100x128xi1>, vector<100x128xf32>
    %c0_189 = arith.constant 0 : index
    %c0_190 = arith.constant 0 : index
    %277 = vector.load %arg21[%c0_189, %c0_190] : memref<100x128xf32, #tpu.memory_space<vmem>>, vector<100x128xf32>
    tpu.vector_store %arg21[%c0_189, %c0_190], %276 {strides = array<i32>} : memref<100x128xf32, #tpu.memory_space<vmem>>, vector<100x128xf32>,
    %cst_191 = arith.constant dense<0.000000e+00> : vector<128xf32>
    %278 = vector.multi_reduction <add>, %270, %cst_191 [0] : vector<100x128xf32> to vector<128xf32>
    %279 = vector.shape_cast %278 : vector<128xf32> to vector<1x128xf32>
    %280 = arith.addf %179, %279 : vector<1x128xf32>
    %c0_192 = arith.constant 0 : index
    %c0_193 = arith.constant 0 : index
    %281 = vector.load %arg9[%c0_192, %c0_193] : memref<128x128xf32, #tpu.memory_space<vmem>>, vector<128x128xf32>
    %cst_194 = arith.constant dense<0.000000e+00> : vector<100x128xf32>
    %282 = tpu.matmul %270, %281, %cst_194 {dimension_numbers = #tpu.dot_dimension_numbers<[1], [0], [0], [1], [0, 0, 1, 1], [], []>} : vector<100x128xf32>, vector<128x128xf32>, vector<100x128xf32> -> vector<100x128xf32>
    %c0_195 = arith.constant 0 : index
    %c0_196 = arith.constant 0 : index
    %283 = vector.load %arg10[%c0_195, %c0_196] : memref<1x128xf32, #tpu.memory_space<vmem>>, vector<1x128xf32>
    %284 = vector.broadcast %283 : vector<1x128xf32> to vector<100x128xf32>
    %285 = arith.addf %282, %284 : vector<100x128xf32>
    %c0_197 = arith.constant 0 : index
    %c0_198 = arith.constant 0 : index
    %286 = vector.load %arg22[%c0_197, %c0_198] : memref<100x128xf32, #tpu.memory_space<vmem>>, vector<100x128xf32>
    %287 = arith.addf %286, %285 : vector<100x128xf32>
    %cst_199 = arith.constant 5.000000e-01 : f32
    %288 = vector.broadcast %cst_199 : f32 to vector<100x128xf32>
    %289 = arith.cmpf ogt, %287, %288 : vector<100x128xf32>
    %290 = arith.extui %289 : vector<100x128xi1> to vector<100x128xi32>
    %291 = arith.sitofp %290 : vector<100x128xi32> to vector<100x128xf32>
    %cst_200 = arith.constant 5.000000e-01 : f32
    %292 = vector.broadcast %cst_200 : f32 to vector<100x128xf32>
    %293 = arith.cmpf ogt, %287, %292 : vector<100x128xf32>
    %cst_201 = arith.constant 2.000000e-01 : f32
    %294 = vector.broadcast %cst_201 : f32 to vector<100x128xf32>
    %295 = arith.mulf %287, %294 : vector<100x128xf32>
    %cst_202 = arith.constant 0.000000e+00 : f32
    %296 = vector.broadcast %cst_202 : f32 to vector<100x128xf32>
    %297 = arith.select %293, %296, %295 : vector<100x128xi1>, vector<100x128xf32>
    %c0_203 = arith.constant 0 : index
    %c0_204 = arith.constant 0 : index
    %298 = vector.load %arg22[%c0_203, %c0_204] : memref<100x128xf32, #tpu.memory_space<vmem>>, vector<100x128xf32>
    tpu.vector_store %arg22[%c0_203, %c0_204], %297 {strides = array<i32>} : memref<100x128xf32, #tpu.memory_space<vmem>>, vector<100x128xf32>,
    %c0_205 = arith.constant 0 : index
    %c0_206 = arith.constant 0 : index
    %299 = vector.load %arg11[%c0_205, %c0_206] : memref<100x128xf32, #tpu.memory_space<vmem>>, vector<100x128xf32>
    %300 = arith.addf %299, %291 : vector<100x128xf32>
    %c0_207 = arith.constant 0 : index
    %c0_208 = arith.constant 0 : index
    %301 = vector.load %arg11[%c0_207, %c0_208] : memref<100x128xf32, #tpu.memory_space<vmem>>, vector<100x128xf32>
    tpu.vector_store %arg11[%c0_207, %c0_208], %300 {strides = array<i32>} : memref<100x128xf32, #tpu.memory_space<vmem>>, vector<100x128xf32>,
    %c0_209 = arith.constant 0 : index
    %c0_210 = arith.constant 0 : index
    %302 = vector.load %arg17[%c0_209, %c0_210] : memref<100x128xf32, #tpu.memory_space<vmem>>, vector<100x128xf32>
    %c0_211 = arith.constant 0 : index
    %c0_212 = arith.constant 0 : index
    %303 = vector.load %arg18[%c0_211, %c0_212] : memref<100x128xf32, #tpu.memory_space<vmem>>, vector<100x128xf32>
    %304 = arith.addf %303, %302 : vector<100x128xf32>
    %cst_213 = arith.constant 5.000000e-01 : f32
    %305 = vector.broadcast %cst_213 : f32 to vector<100x128xf32>
    %306 = arith.cmpf ogt, %304, %305 : vector<100x128xf32>
    %307 = arith.extui %306 : vector<100x128xi1> to vector<100x128xi32>
    %308 = arith.sitofp %307 : vector<100x128xi32> to vector<100x128xf32>
    %cst_214 = arith.constant dense<0.000000e+00> : vector<128xf32>
    %309 = vector.multi_reduction <add>, %308, %cst_214 [0] : vector<100x128xf32> to vector<128xf32>
    %310 = vector.shape_cast %309 : vector<128xf32> to vector<1x128xf32>
    %311 = arith.addf %217, %310 : vector<1x128xf32>
    %c0_215 = arith.constant 0 : index
    %c0_216 = arith.constant 0 : index
    %312 = vector.load %arg3[%c0_215, %c0_216] : memref<128x128xf32, #tpu.memory_space<vmem>>, vector<128x128xf32>
    %cst_217 = arith.constant dense<0.000000e+00> : vector<100x128xf32>
    %313 = tpu.matmul %308, %312, %cst_217 {dimension_numbers = #tpu.dot_dimension_numbers<[1], [0], [0], [1], [0, 0, 1, 1], [], []>} : vector<100x128xf32>, vector<128x128xf32>, vector<100x128xf32> -> vector<100x128xf32>
    %c0_218 = arith.constant 0 : index
    %c0_219 = arith.constant 0 : index
    %314 = vector.load %arg4[%c0_218, %c0_219] : memref<1x128xf32, #tpu.memory_space<vmem>>, vector<1x128xf32>
    %315 = vector.broadcast %314 : vector<1x128xf32> to vector<100x128xf32>
    %316 = arith.addf %313, %315 : vector<100x128xf32>
    %c0_220 = arith.constant 0 : index
    %c0_221 = arith.constant 0 : index
    %317 = vector.load %arg19[%c0_220, %c0_221] : memref<100x128xf32, #tpu.memory_space<vmem>>, vector<100x128xf32>
    %318 = arith.addf %317, %316 : vector<100x128xf32>
    %cst_222 = arith.constant 5.000000e-01 : f32
    %319 = vector.broadcast %cst_222 : f32 to vector<100x128xf32>
    %320 = arith.cmpf ogt, %318, %319 : vector<100x128xf32>
    %321 = arith.extui %320 : vector<100x128xi1> to vector<100x128xi32>
    %322 = arith.sitofp %321 : vector<100x128xi32> to vector<100x128xf32>
    %cst_223 = arith.constant dense<0.000000e+00> : vector<128xf32>
    %323 = vector.multi_reduction <add>, %322, %cst_223 [0] : vector<100x128xf32> to vector<128xf32>
    %324 = vector.shape_cast %323 : vector<128xf32> to vector<1x128xf32>
    %325 = arith.addf %238, %324 : vector<1x128xf32>
    %c0_224 = arith.constant 0 : index
    %c0_225 = arith.constant 0 : index
    %326 = vector.load %arg5[%c0_224, %c0_225] : memref<128x128xf32, #tpu.memory_space<vmem>>, vector<128x128xf32>
    %cst_226 = arith.constant dense<0.000000e+00> : vector<100x128xf32>
    %327 = tpu.matmul %322, %326, %cst_226 {dimension_numbers = #tpu.dot_dimension_numbers<[1], [0], [0], [1], [0, 0, 1, 1], [], []>} : vector<100x128xf32>, vector<128x128xf32>, vector<100x128xf32> -> vector<100x128xf32>
    %c0_227 = arith.constant 0 : index
    %c0_228 = arith.constant 0 : index
    %328 = vector.load %arg6[%c0_227, %c0_228] : memref<1x128xf32, #tpu.memory_space<vmem>>, vector<1x128xf32>
    %329 = vector.broadcast %328 : vector<1x128xf32> to vector<100x128xf32>
    %330 = arith.addf %327, %329 : vector<100x128xf32>
    %c0_229 = arith.constant 0 : index
    %c0_230 = arith.constant 0 : index
    %331 = vector.load %arg20[%c0_229, %c0_230] : memref<100x128xf32, #tpu.memory_space<vmem>>, vector<100x128xf32>
    %332 = arith.addf %331, %330 : vector<100x128xf32>
    %cst_231 = arith.constant 5.000000e-01 : f32
    %333 = vector.broadcast %cst_231 : f32 to vector<100x128xf32>
    %334 = arith.cmpf ogt, %332, %333 : vector<100x128xf32>
    %335 = arith.extui %334 : vector<100x128xi1> to vector<100x128xi32>
    %336 = arith.sitofp %335 : vector<100x128xi32> to vector<100x128xf32>
    %cst_232 = arith.constant dense<0.000000e+00> : vector<128xf32>
    %337 = vector.multi_reduction <add>, %336, %cst_232 [0] : vector<100x128xf32> to vector<128xf32>
    %338 = vector.shape_cast %337 : vector<128xf32> to vector<1x128xf32>
    %339 = arith.addf %259, %338 : vector<1x128xf32>
    %c0_233 = arith.constant 0 : index
    %c0_234 = arith.constant 0 : index
    %340 = vector.load %arg7[%c0_233, %c0_234] : memref<128x128xf32, #tpu.memory_space<vmem>>, vector<128x128xf32>
    %cst_235 = arith.constant dense<0.000000e+00> : vector<100x128xf32>
    %341 = tpu.matmul %336, %340, %cst_235 {dimension_numbers = #tpu.dot_dimension_numbers<[1], [0], [0], [1], [0, 0, 1, 1], [], []>} : vector<100x128xf32>, vector<128x128xf32>, vector<100x128xf32> -> vector<100x128xf32>
    %c0_236 = arith.constant 0 : index
    %c0_237 = arith.constant 0 : index
    %342 = vector.load %arg8[%c0_236, %c0_237] : memref<1x128xf32, #tpu.memory_space<vmem>>, vector<1x128xf32>
    %343 = vector.broadcast %342 : vector<1x128xf32> to vector<100x128xf32>
    %344 = arith.addf %341, %343 : vector<100x128xf32>
    %c0_238 = arith.constant 0 : index
    %c0_239 = arith.constant 0 : index
    %345 = vector.load %arg21[%c0_238, %c0_239] : memref<100x128xf32, #tpu.memory_space<vmem>>, vector<100x128xf32>
    %346 = arith.addf %345, %344 : vector<100x128xf32>
    %cst_240 = arith.constant 5.000000e-01 : f32
    %347 = vector.broadcast %cst_240 : f32 to vector<100x128xf32>
    %348 = arith.cmpf ogt, %346, %347 : vector<100x128xf32>
    %349 = arith.extui %348 : vector<100x128xi1> to vector<100x128xi32>
    %350 = arith.sitofp %349 : vector<100x128xi32> to vector<100x128xf32>
    %cst_241 = arith.constant dense<0.000000e+00> : vector<128xf32>
    %351 = vector.multi_reduction <add>, %350, %cst_241 [0] : vector<100x128xf32> to vector<128xf32>
    %352 = vector.shape_cast %351 : vector<128xf32> to vector<1x128xf32>
    %353 = arith.addf %280, %352 : vector<1x128xf32>
    %c0_242 = arith.constant 0 : index
    %c0_243 = arith.constant 0 : index
    %354 = vector.load %arg9[%c0_242, %c0_243] : memref<128x128xf32, #tpu.memory_space<vmem>>, vector<128x128xf32>
    %cst_244 = arith.constant dense<0.000000e+00> : vector<100x128xf32>
    %355 = tpu.matmul %350, %354, %cst_244 {dimension_numbers = #tpu.dot_dimension_numbers<[1], [0], [0], [1], [0, 0, 1, 1], [], []>} : vector<100x128xf32>, vector<128x128xf32>, vector<100x128xf32> -> vector<100x128xf32>
    %c0_245 = arith.constant 0 : index
    %c0_246 = arith.constant 0 : index
    %356 = vector.load %arg10[%c0_245, %c0_246] : memref<1x128xf32, #tpu.memory_space<vmem>>, vector<1x128xf32>
    %357 = vector.broadcast %356 : vector<1x128xf32> to vector<100x128xf32>
    %358 = arith.addf %355, %357 : vector<100x128xf32>
    %c0_247 = arith.constant 0 : index
    %c0_248 = arith.constant 0 : index
    %359 = vector.load %arg22[%c0_247, %c0_248] : memref<100x128xf32, #tpu.memory_space<vmem>>, vector<100x128xf32>
    %360 = arith.addf %359, %358 : vector<100x128xf32>
    %cst_249 = arith.constant 5.000000e-01 : f32
    %361 = vector.broadcast %cst_249 : f32 to vector<100x128xf32>
    %362 = arith.cmpf ogt, %360, %361 : vector<100x128xf32>
    %363 = arith.extui %362 : vector<100x128xi1> to vector<100x128xi32>
    %364 = arith.sitofp %363 : vector<100x128xi32> to vector<100x128xf32>
    %c0_250 = arith.constant 0 : index
    %c0_251 = arith.constant 0 : index
    %365 = vector.load %arg11[%c0_250, %c0_251] : memref<100x128xf32, #tpu.memory_space<vmem>>, vector<100x128xf32>
    %366 = arith.addf %365, %364 : vector<100x128xf32>
    %c0_252 = arith.constant 0 : index
    %c0_253 = arith.constant 0 : index
    %367 = vector.load %arg11[%c0_252, %c0_253] : memref<100x128xf32, #tpu.memory_space<vmem>>, vector<100x128xf32>
    tpu.vector_store %arg11[%c0_252, %c0_253], %366 {strides = array<i32>} : memref<100x128xf32, #tpu.memory_space<vmem>>, vector<100x128xf32>,
    %c0_254 = arith.constant 0 : index
    %c0_255 = arith.constant 0 : index
    %368 = vector.load %arg11[%c0_254, %c0_255] : memref<100x128xf32, #tpu.memory_space<vmem>>, vector<100x128xf32>
    %cst_256 = arith.constant 2.500000e-01 : f32
    %369 = vector.broadcast %cst_256 : f32 to vector<100x128xf32>
    %370 = arith.mulf %368, %369 : vector<100x128xf32>
    %c0_257 = arith.constant 0 : index
    %c0_258 = arith.constant 0 : index
    %371 = vector.load %arg11[%c0_257, %c0_258] : memref<100x128xf32, #tpu.memory_space<vmem>>, vector<100x128xf32>
    tpu.vector_store %arg11[%c0_257, %c0_258], %370 {strides = array<i32>} : memref<100x128xf32, #tpu.memory_space<vmem>>, vector<100x128xf32>,
    %cst_259 = arith.constant dense<0.000000e+00> : vector<128xf32>
    %372 = vector.multi_reduction <add>, %368, %cst_259 [0] : vector<100x128xf32> to vector<128xf32>
    %373 = vector.shape_cast %372 : vector<128xf32> to vector<1x128xf32>
    %cst_260 = arith.constant dense<0.000000e+00> : vector<1xf32>
    %374 = vector.multi_reduction <add>, %311, %cst_260 [1] : vector<1x128xf32> to vector<1xf32>
    %375 = vector.shape_cast %374 : vector<1xf32> to vector<1x1xf32>
    %cst_261 = arith.constant 1.562500e-04 : f32
    %376 = vector.broadcast %cst_261 : f32 to vector<1x1xf32>
    %377 = arith.mulf %375, %376 : vector<1x1xf32>
    %c0_262 = arith.constant 0 : index
    %c0_263 = arith.constant 0 : index
    %378 = vector.load %arg12[%c0_262, %c0_263] : memref<1x1xf32, #tpu.memory_space<vmem>>, vector<1x1xf32>
    tpu.vector_store %arg12[%c0_262, %c0_263], %377 {strides = array<i32>} : memref<1x1xf32, #tpu.memory_space<vmem>>, vector<1x1xf32>,
    %cst_264 = arith.constant dense<0.000000e+00> : vector<1xf32>
    %379 = vector.multi_reduction <add>, %325, %cst_264 [1] : vector<1x128xf32> to vector<1xf32>
    %380 = vector.shape_cast %379 : vector<1xf32> to vector<1x1xf32>
    %cst_265 = arith.constant 8.06451644E-5 : f32
    %381 = vector.broadcast %cst_265 : f32 to vector<1x1xf32>
    %382 = arith.mulf %380, %381 : vector<1x1xf32>
    %c0_266 = arith.constant 0 : index
    %c0_267 = arith.constant 0 : index
    %383 = vector.load %arg13[%c0_266, %c0_267] : memref<1x1xf32, #tpu.memory_space<vmem>>, vector<1x1xf32>
    tpu.vector_store %arg13[%c0_266, %c0_267], %382 {strides = array<i32>} : memref<1x1xf32, #tpu.memory_space<vmem>>, vector<1x1xf32>,
    %cst_268 = arith.constant dense<0.000000e+00> : vector<1xf32>
    %384 = vector.multi_reduction <add>, %339, %cst_268 [1] : vector<1x128xf32> to vector<1xf32>
    %385 = vector.shape_cast %384 : vector<1xf32> to vector<1x1xf32>
    %cst_269 = arith.constant 1.562500e-04 : f32
    %386 = vector.broadcast %cst_269 : f32 to vector<1x1xf32>
    %387 = arith.mulf %385, %386 : vector<1x1xf32>
    %c0_270 = arith.constant 0 : index
    %c0_271 = arith.constant 0 : index
    %388 = vector.load %arg14[%c0_270, %c0_271] : memref<1x1xf32, #tpu.memory_space<vmem>>, vector<1x1xf32>
    tpu.vector_store %arg14[%c0_270, %c0_271], %387 {strides = array<i32>} : memref<1x1xf32, #tpu.memory_space<vmem>>, vector<1x1xf32>,
    %cst_272 = arith.constant dense<0.000000e+00> : vector<1xf32>
    %389 = vector.multi_reduction <add>, %353, %cst_272 [1] : vector<1x128xf32> to vector<1xf32>
    %390 = vector.shape_cast %389 : vector<1xf32> to vector<1x1xf32>
    %cst_273 = arith.constant 8.06451644E-5 : f32
    %391 = vector.broadcast %cst_273 : f32 to vector<1x1xf32>
    %392 = arith.mulf %390, %391 : vector<1x1xf32>
    %c0_274 = arith.constant 0 : index
    %c0_275 = arith.constant 0 : index
    %393 = vector.load %arg15[%c0_274, %c0_275] : memref<1x1xf32, #tpu.memory_space<vmem>>, vector<1x1xf32>
    tpu.vector_store %arg15[%c0_274, %c0_275], %392 {strides = array<i32>} : memref<1x1xf32, #tpu.memory_space<vmem>>, vector<1x1xf32>,
    %cst_276 = arith.constant dense<0.000000e+00> : vector<1xf32>
    %394 = vector.multi_reduction <add>, %373, %cst_276 [1] : vector<1x128xf32> to vector<1xf32>
    %395 = vector.shape_cast %394 : vector<1xf32> to vector<1x1xf32>
    %cst_277 = arith.constant 1.000000e-03 : f32
    %396 = vector.broadcast %cst_277 : f32 to vector<1x1xf32>
    %397 = arith.mulf %395, %396 : vector<1x1xf32>
    %c0_278 = arith.constant 0 : index
    %c0_279 = arith.constant 0 : index
    %398 = vector.load %arg16[%c0_278, %c0_279] : memref<1x1xf32, #tpu.memory_space<vmem>>, vector<1x1xf32>
    tpu.vector_store %arg16[%c0_278, %c0_279], %397 {strides = array<i32>} : memref<1x1xf32, #tpu.memory_space<vmem>>, vector<1x1xf32>,
    return
  }
}

</mosaic_0001>

<llo_original>
// kernel: tpu_custom_call.1
$region0: #{tpu_custom_call.1}
  #allocation0 [shape = 'u32[]', space=smem, size = 0x4, offset = 0x4, fixed_abs, tag = 'smem constant byte address 0x4 - core index']
  #allocation1 [shape = 'u32[144,128]{1,0:T(1,128)}', space=vmem, size = 0x12000, scoped, tag = 'internal scratch']
  #allocation2 [shape = 'f32[100,128]{1,0:T(8,128)}', space=vmem, size = 0xd000, scoped, tag = 'scratch operand']
  #allocation3 [shape = 'f32[100,128]{1,0:T(8,128)}', space=vmem, size = 0xd000, scoped, tag = 'scratch operand']
  #allocation4 [shape = 'f32[100,128]{1,0:T(8,128)}', space=vmem, size = 0xd000, scoped, tag = 'scratch operand']
  #allocation5 [shape = 'f32[100,128]{1,0:T(8,128)}', space=vmem, size = 0xd000, scoped, tag = 'scratch operand']
  #allocation6 [shape = 'f32[100,128]{1,0:T(8,128)}', space=vmem, size = 0xd000, scoped, tag = 'scratch operand']
  #allocation7 [shape = 'f32[100,128]{1,0:T(8,128)}', space=vmem, size = 0xd000, scoped, tag = 'scratch operand']
  %s0 = inlined_call_operand.hbm [shape: f32[100,128], index: 0, kind: input, shape index: {}]
  %s1 = inlined_call_operand.hbm [shape: f32[128,128], index: 1, kind: input, shape index: {}]
  %s2 = inlined_call_operand.vmem [shape: f32[1,128], index: 2, kind: input, shape index: {}]
  %s3 = inlined_call_operand.hbm [shape: f32[128,128], index: 3, kind: input, shape index: {}]
  %s4 = inlined_call_operand.vmem [shape: f32[1,128], index: 4, kind: input, shape index: {}]
  %s5 = inlined_call_operand.hbm [shape: f32[128,128], index: 5, kind: input, shape index: {}]
  %s6 = inlined_call_operand.vmem [shape: f32[1,128], index: 6, kind: input, shape index: {}]
  %s7 = inlined_call_operand.hbm [shape: f32[128,128], index: 7, kind: input, shape index: {}]
  %s8 = inlined_call_operand.vmem [shape: f32[1,128], index: 8, kind: input, shape index: {}]
  %s9 = inlined_call_operand.hbm [shape: f32[128,128], index: 9, kind: input, shape index: {}]
  %s10 = inlined_call_operand.vmem [shape: f32[1,128], index: 10, kind: input, shape index: {}]
  %s11 = inlined_call_operand.hbm [shape: f32[100,128], index: 11, kind: output, shape index: {0}]
  %s12 = inlined_call_operand.hbm [shape: f32[1,1], index: 12, kind: output, shape index: {1}]
  %s13 = inlined_call_operand.hbm [shape: f32[1,1], index: 13, kind: output, shape index: {2}]
  %s14 = inlined_call_operand.hbm [shape: f32[1,1], index: 14, kind: output, shape index: {3}]
  %s15 = inlined_call_operand.hbm [shape: f32[1,1], index: 15, kind: output, shape index: {4}]
  %s16 = inlined_call_operand.hbm [shape: f32[1,1], index: 16, kind: output, shape index: {5}]
  %17 = xla_tuple %s11, %s12, %s13, %s14, %s15, %s16
  %s18 = sld [smem:[#allocation0]]
  $region118: #{tpu_custom_call.1} parent=0
    _
  %s20 = ssub.s32 1, %s18
  %s21 = scalar_select 0, %s20, %s18
  $region1: #{tpu_custom_call.1} parent=0
    #allocation8 [shape = 'u8[53248]{0}', space=vmem, size = 0xd000, scoped, tag = 'input window, operand 0, single buffered']
    #allocation9 [shape = 's32[1]{0}', space=sflag, size = 0x4, scoped, tag = 'scoped memory for tpu_custom_call.1']
    #allocation10 [shape = 's32[1]{0}', space=sflag, size = 0x4, scoped, tag = 'scoped memory for tpu_custom_call.1']
    #allocation11 [shape = 'u8[65536]{0}', space=vmem, size = 0x10000, scoped, tag = 'input window, operand 1, single buffered']
    #allocation12 [shape = 's32[1]{0}', space=sflag, size = 0x4, scoped, tag = 'scoped memory for tpu_custom_call.1']
    #allocation13 [shape = 'u8[65536]{0}', space=vmem, size = 0x10000, scoped, tag = 'input window, operand 3, single buffered']
    #allocation14 [shape = 'u8[65536]{0}', space=vmem, size = 0x10000, scoped, tag = 'input window, operand 5, single buffered']
    #allocation15 [shape = 's32[1]{0}', space=sflag, size = 0x4, scoped, tag = 'scoped memory for tpu_custom_call.1']
    #allocation16 [shape = 'u8[65536]{0}', space=vmem, size = 0x10000, scoped, tag = 'input window, operand 7, single buffered']
    #allocation17 [shape = 'u8[65536]{0}', space=vmem, size = 0x10000, scoped, tag = 'input window, operand 9, single buffered']
    #allocation18 [shape = 's32[1]{0}', space=sflag, size = 0x4, scoped, tag = 'scoped memory for tpu_custom_call.1']
    #allocation19 [shape = 'u8[53248]{0}', space=vmem, size = 0xd000, scoped, tag = 'output window, operand 0, single buffered']
    #allocation20 [shape = 'u8[512]{0}', space=vmem, size = 0x400, scoped, tag = 'output window, operand 1, single buffered']
    #allocation21 [shape = 's32[1]{0}', space=sflag, size = 0x4, scoped, tag = 'scoped memory for tpu_custom_call.1']
    #allocation22 [shape = 'u8[512]{0}', space=vmem, size = 0x400, scoped, tag = 'output window, operand 2, single buffered']
    #allocation23 [shape = 'u8[512]{0}', space=vmem, size = 0x400, scoped, tag = 'output window, operand 3, single buffered']
    #allocation24 [shape = 's32[1]{0}', space=sflag, size = 0x4, scoped, tag = 'scoped memory for tpu_custom_call.1']
    #allocation25 [shape = 'u8[512]{0}', space=vmem, size = 0x400, scoped, tag = 'output window, operand 4, single buffered']
    #allocation26 [shape = 'u8[512]{0}', space=vmem, size = 0x400, scoped, tag = 'output window, operand 5, single buffered']
    #allocation27 [shape = 's32[1]{0}', space=sflag, size = 0x4, scoped, tag = 'scoped memory for tpu_custom_call.1']
    %22 = vsyncpa [#allocation9], 0
    %23 = vsyncpa [#allocation12], 0
    %24 = vsyncpa [#allocation15], 0
    %25 = vsyncpa [#allocation18], 0
    %26 = vsyncpa [#allocation10], 0
    %27 = vsyncpa [#allocation21], 0
    %28 = vsyncpa [#allocation24], 0
    %29 = vsyncpa [#allocation27], 0
    // Predicated region
    $region2: #{tpu_custom_call.1} parent=1 // pred_check
      _
    $region3: #{tpu_custom_call.1} parent=1 // pred_check_branch
      %31 = sbr.rel (0) target = $region5
    $region4: #{tpu_custom_call.1} parent=1 // pred_region
      %s33 = ssub.s32 1664, 1664
      %34 = vsyncadd [#allocation9], %s33
      %s35 = sshll.u32 [#allocation8], 4
      %s36 = int_to_ptr.vmem [resolvable:$true] %s35
      %41 = dma.hbm_to_vmem [thread:$0]  %s0, 1664, %s36, [#allocation9], 128, 128, 8
    $region5: #{tpu_custom_call.1} parent=1 // pred_fallthru
      _
    // Predicated region
    $region6: #{tpu_custom_call.1} parent=1 // pred_check
      _
    $region7: #{tpu_custom_call.1} parent=1 // pred_check_branch
      %43 = sbr.rel (0) target = $region9
    $region8: #{tpu_custom_call.1} parent=1 // pred_region
      %s45 = ssub.s32 2048, 2048
      %46 = vsyncadd [#allocation12], %s45
      %s47 = sshll.u32 [#allocation11], 4
      %s48 = int_to_ptr.vmem [resolvable:$true] %s47
      %53 = dma.hbm_to_vmem [thread:$0]  %s1, 2048, %s48, [#allocation12], 128, 128, 8
    $region9: #{tpu_custom_call.1} parent=1 // pred_fallthru
      _
    // Predicated region
    $region10: #{tpu_custom_call.1} parent=1 // pred_check
      _
    $region11: #{tpu_custom_call.1} parent=1 // pred_check_branch
      %55 = sbr.rel (0) target = $region13
    $region12: #{tpu_custom_call.1} parent=1 // pred_region
      _
    $region13: #{tpu_custom_call.1} parent=1 // pred_fallthru
      _
    // Predicated region
    $region14: #{tpu_custom_call.1} parent=1 // pred_check
      _
    $region15: #{tpu_custom_call.1} parent=1 // pred_check_branch
      %57 = sbr.rel (0) target = $region17
    $region16: #{tpu_custom_call.1} parent=1 // pred_region
      %s59 = ssub.s32 2048, 2048
      %60 = vsyncadd [#allocation12], %s59
      %s61 = sshll.u32 [#allocation13], 4
      %s62 = int_to_ptr.vmem [resolvable:$true] %s61
      %67 = dma.hbm_to_vmem [thread:$0]  %s3, 2048, %s62, [#allocation12], 128, 128, 8
    $region17: #{tpu_custom_call.1} parent=1 // pred_fallthru
      _
    // Predicated region
    $region18: #{tpu_custom_call.1} parent=1 // pred_check
      _
    $region19: #{tpu_custom_call.1} parent=1 // pred_check_branch
      %69 = sbr.rel (0) target = $region21
    $region20: #{tpu_custom_call.1} parent=1 // pred_region
      _
    $region21: #{tpu_custom_call.1} parent=1 // pred_fallthru
      _
    // Predicated region
    $region22: #{tpu_custom_call.1} parent=1 // pred_check
      _
    $region23: #{tpu_custom_call.1} parent=1 // pred_check_branch
      %71 = sbr.rel (0) target = $region25
    $region24: #{tpu_custom_call.1} parent=1 // pred_region
      %s73 = ssub.s32 2048, 2048
      %74 = vsyncadd [#allocation15], %s73
      %s75 = sshll.u32 [#allocation14], 4
      %s76 = int_to_ptr.vmem [resolvable:$true] %s75
      %81 = dma.hbm_to_vmem [thread:$0]  %s5, 2048, %s76, [#allocation15], 128, 128, 8
    $region25: #{tpu_custom_call.1} parent=1 // pred_fallthru
      _
    // Predicated region
    $region26: #{tpu_custom_call.1} parent=1 // pred_check
      _
    $region27: #{tpu_custom_call.1} parent=1 // pred_check_branch
      %83 = sbr.rel (0) target = $region29
    $region28: #{tpu_custom_call.1} parent=1 // pred_region
      _
    $region29: #{tpu_custom_call.1} parent=1 // pred_fallthru
      _
    // Predicated region
    $region30: #{tpu_custom_call.1} parent=1 // pred_check
      _
    $region31: #{tpu_custom_call.1} parent=1 // pred_check_branch
      %85 = sbr.rel (0) target = $region33
    $region32: #{tpu_custom_call.1} parent=1 // pred_region
      %s87 = ssub.s32 2048, 2048
      %88 = vsyncadd [#allocation15], %s87
      %s89 = sshll.u32 [#allocation16], 4
      %s90 = int_to_ptr.vmem [resolvable:$true] %s89
      %95 = dma.hbm_to_vmem [thread:$0]  %s7, 2048, %s90, [#allocation15], 128, 128, 8
    $region33: #{tpu_custom_call.1} parent=1 // pred_fallthru
      _
    // Predicated region
    $region34: #{tpu_custom_call.1} parent=1 // pred_check
      _
    $region35: #{tpu_custom_call.1} parent=1 // pred_check_branch
      %97 = sbr.rel (0) target = $region37
    $region36: #{tpu_custom_call.1} parent=1 // pred_region
      _
    $region37: #{tpu_custom_call.1} parent=1 // pred_fallthru
      _
    // Predicated region
    $region38: #{tpu_custom_call.1} parent=1 // pred_check
      _
    $region39: #{tpu_custom_call.1} parent=1 // pred_check_branch
      %99 = sbr.rel (0) target = $region41
    $region40: #{tpu_custom_call.1} parent=1 // pred_region
      %s101 = ssub.s32 2048, 2048
      %102 = vsyncadd [#allocation18], %s101
      %s103 = sshll.u32 [#allocation17], 4
      %s104 = int_to_ptr.vmem [resolvable:$true] %s103
      %109 = dma.hbm_to_vmem [thread:$0]  %s9, 2048, %s104, [#allocation18], 128, 128, 8
    $region41: #{tpu_custom_call.1} parent=1 // pred_fallthru
      _
    // Predicated region
    $region42: #{tpu_custom_call.1} parent=1 // pred_check
      _
    $region43: #{tpu_custom_call.1} parent=1 // pred_check_branch
      %111 = sbr.rel (0) target = $region45
    $region44: #{tpu_custom_call.1} parent=1 // pred_region
      _
    $region45: #{tpu_custom_call.1} parent=1 // pred_fallthru
      _
    // Predicated region
    $region46: #{tpu_custom_call.1} parent=1 // pred_check
      _
    $region47: #{tpu_custom_call.1} parent=1 // pred_check_branch
      %113 = sbr.rel (0) target = $region49
    $region48: #{tpu_custom_call.1} parent=1 // pred_region
      %114 = dma.done [#allocation9], 1664
    $region49: #{tpu_custom_call.1} parent=1 // pred_fallthru
      _
    // Predicated region
    $region50: #{tpu_custom_call.1} parent=1 // pred_check
      _
    $region51: #{tpu_custom_call.1} parent=1 // pred_check_branch
      %116 = sbr.rel (0) target = $region53
    $region52: #{tpu_custom_call.1} parent=1 // pred_region
      %117 = dma.done [#allocation12], 2048
    $region53: #{tpu_custom_call.1} parent=1 // pred_fallthru
      _
    // Predicated region
    $region54: #{tpu_custom_call.1} parent=1 // pred_check
      _
    $region55: #{tpu_custom_call.1} parent=1 // pred_check_branch
      %119 = sbr.rel (0) target = $region57
    $region56: #{tpu_custom_call.1} parent=1 // pred_region
      %120 = dma.done [#allocation12], 2048
    $region57: #{tpu_custom_call.1} parent=1 // pred_fallthru
      _
    // Predicated region
    $region58: #{tpu_custom_call.1} parent=1 // pred_check
      _
    $region59: #{tpu_custom_call.1} parent=1 // pred_check_branch
      %122 = sbr.rel (0) target = $region61
    $region60: #{tpu_custom_call.1} parent=1 // pred_region
      %123 = dma.done [#allocation15], 2048
    $region61: #{tpu_custom_call.1} parent=1 // pred_fallthru
      _
    // Predicated region
    $region62: #{tpu_custom_call.1} parent=1 // pred_check
      _
    $region63: #{tpu_custom_call.1} parent=1 // pred_check_branch
      %125 = sbr.rel (0) target = $region65
    $region64: #{tpu_custom_call.1} parent=1 // pred_region
      %126 = dma.done [#allocation15], 2048
    $region65: #{tpu_custom_call.1} parent=1 // pred_fallthru
      _
    // Predicated region
    $region66: #{tpu_custom_call.1} parent=1 // pred_check
      _
    $region67: #{tpu_custom_call.1} parent=1 // pred_check_branch
      %128 = sbr.rel (0) target = $region69
    $region68: #{tpu_custom_call.1} parent=1 // pred_region
      %129 = dma.done [#allocation18], 2048
    $region69: #{tpu_custom_call.1} parent=1 // pred_fallthru
      _
    %v130 = vld [vmem:[#allocation8] sm:$0xff]
    %v131 = vld [vmem:[#allocation8 + $0x8] sm:$0xff]
    %v132 = vld [vmem:[#allocation8 + $0x10] sm:$0xff]
    %v133 = vld [vmem:[#allocation8 + $0x18] sm:$0xff]
    %v134 = vld [vmem:[#allocation8 + $0x20] sm:$0xff]
    %v135 = vld [vmem:[#allocation8 + $0x28] sm:$0xff]
    %v136 = vld [vmem:[#allocation8 + $0x30] sm:$0xff]
    %v137 = vld [vmem:[#allocation8 + $0x38] sm:$0xff]
    %v138 = vld [vmem:[#allocation8 + $0x40] sm:$0xff]
    %v139 = vld [vmem:[#allocation8 + $0x48] sm:$0xff]
    %v140 = vld [vmem:[#allocation8 + $0x50] sm:$0xff]
    %v141 = vld [vmem:[#allocation8 + $0x58] sm:$0xff]
    %v142 = vld [vmem:[#allocation8 + $0x60] sm:$0xf]
    %v143 = vld [vmem:[#allocation11] sm:$0xff]
    %v144 = vld [vmem:[#allocation11 + $0x8] sm:$0xff]
    %v145 = vld [vmem:[#allocation11 + $0x10] sm:$0xff]
    %v146 = vld [vmem:[#allocation11 + $0x18] sm:$0xff]
    %v147 = vld [vmem:[#allocation11 + $0x20] sm:$0xff]
    %v148 = vld [vmem:[#allocation11 + $0x28] sm:$0xff]
    %v149 = vld [vmem:[#allocation11 + $0x30] sm:$0xff]
    %v150 = vld [vmem:[#allocation11 + $0x38] sm:$0xff]
    %v151 = vld [vmem:[#allocation11 + $0x40] sm:$0xff]
    %v152 = vld [vmem:[#allocation11 + $0x48] sm:$0xff]
    %v153 = vld [vmem:[#allocation11 + $0x50] sm:$0xff]
    %v154 = vld [vmem:[#allocation11 + $0x58] sm:$0xff]
    %v155 = vld [vmem:[#allocation11 + $0x60] sm:$0xff]
    %v156 = vld [vmem:[#allocation11 + $0x68] sm:$0xff]
    %v157 = vld [vmem:[#allocation11 + $0x70] sm:$0xff]
    %v158 = vld [vmem:[#allocation11 + $0x78] sm:$0xff]
    %v159 = vld [vmem:[%s2] sm:$0x1]
    %v161 = vlaneseq
    %v162 = vshrl.u32 %v161, 7
    %v163 = vsub.s32 0, %v162
    %v164 = vrot.slane %v159, %v163
    %166 = vmatprep.subr.mxu0 0.0
    %167 = vmatpush1.msra.mxu0 %v143
    %168 = vmatprep.subr.mxu0 0.0
    %169 = vmatpush1.msra.mxu0 %v144
    %170 = vmatprep.subr.mxu0 0.0
    %171 = vmatpush1.msra.mxu0 %v145
    %172 = vmatprep.subr.mxu0 0.0
    %173 = vmatpush1.msra.mxu0 %v146
    %174 = vmatprep.subr.mxu0 0.0
    %175 = vmatpush1.msra.mxu0 %v147
    %176 = vmatprep.subr.mxu0 0.0
    %177 = vmatpush1.msra.mxu0 %v148
    %178 = vmatprep.subr.mxu0 0.0
    %179 = vmatpush1.msra.mxu0 %v149
    %180 = vmatprep.subr.mxu0 0.0
    %181 = vmatpush1.msra.mxu0 %v150
    %182 = vmatprep.subr.mxu0 0.0
    %183 = vmatpush1.msra.mxu0 %v151
    %184 = vmatprep.subr.mxu0 0.0
    %185 = vmatpush1.msra.mxu0 %v152
    %186 = vmatprep.subr.mxu0 0.0
    %187 = vmatpush1.msra.mxu0 %v153
    %188 = vmatprep.subr.mxu0 0.0
    %189 = vmatpush1.msra.mxu0 %v154
    %190 = vmatprep.subr.mxu0 0.0
    %191 = vmatpush1.msra.mxu0 %v155
    %192 = vmatprep.subr.mxu0 0.0
    %193 = vmatpush1.msra.mxu0 %v156
    %194 = vmatprep.subr.mxu0 0.0
    %195 = vmatpush1.msra.mxu0 %v157
    %196 = vmatprep.subr.mxu0 0.0
    %197 = vmatpush1.msra.mxu0 %v158
    %198 = vmatprep.subr.mxu0 0.0
    %199 = vmatpush1.msra.mxu0 0.0
    %200 = vmatprep.subr.mxu0 0.0
    %201 = vmatpush1.msra.mxu0 0.0
    %202 = vmatprep.subr.mxu0 0.0
    %203 = vmatpush1.msra.mxu0 0.0
    %204 = vmatprep.subr.mxu0 0.0
    %205 = vmatpush1.msra.mxu0 0.0
    %206 = vmatprep.subr.mxu0 0.0
    %207 = vmatpush1.msra.mxu0 0.0
    %208 = vmatprep.subr.mxu0 0.0
    %209 = vmatpush1.msra.mxu0 0.0
    %210 = vmatprep.subr.mxu0 0.0
    %211 = vmatpush1.msra.mxu0 0.0
    %212 = vmatprep.subr.mxu0 0.0
    %213 = vmatpush1.msra.mxu0 0.0
    %214 = vmatprep.subr.mxu0 0.0
    %215 = vmatpush1.msra.mxu0 0.0
    %216 = vmatprep.subr.mxu0 0.0
    %217 = vmatpush1.msra.mxu0 0.0
    %218 = vmatprep.subr.mxu0 0.0
    %219 = vmatpush1.msra.mxu0 0.0
    %220 = vmatprep.subr.mxu0 0.0
    %221 = vmatpush1.msra.mxu0 0.0
    %222 = vmatprep.subr.mxu0 0.0
    %223 = vmatpush1.msra.mxu0 0.0
    %224 = vmatprep.subr.mxu0 0.0
    %225 = vmatpush1.msra.mxu0 0.0
    %226 = vmatprep.subr.mxu0 0.0
    %227 = vmatpush1.msra.mxu0 0.0
    %228 = vmatprep.subr.mxu0 0.0
    %229 = vmatpush1.msra.mxu0 0.0
    %230 = vmatprep.mubr.f32.mxu0 0.0
    %231 = vmatmul.mubr.f32.gmra.mrb[0].mxu0 %v130
    %v232 = vpop.f32.mrb[0].mxu0
    %v233 = vadd.f32 %v164, %v232
    %v234 = vpop.f32.mrb[0].mxu0
    %235 = vmatprep.mubr.f32.mxu0 0.0
    %236 = vmatmul.mubr.f32.gmra.mrb[0].mxu0 %v131
    %v237 = vpop.f32.mrb[0].mxu0
    %v238 = vadd.f32 %v164, %v237
    %v239 = vpop.f32.mrb[0].mxu0
    %240 = vmatprep.mubr.f32.mxu0 0.0
    %241 = vmatmul.mubr.f32.gmra.mrb[0].mxu0 %v132
    %v242 = vpop.f32.mrb[0].mxu0
    %v243 = vadd.f32 %v164, %v242
    %v244 = vpop.f32.mrb[0].mxu0
    %245 = vmatprep.mubr.f32.mxu0 0.0
    %246 = vmatmul.mubr.f32.gmra.mrb[0].mxu0 %v133
    %v247 = vpop.f32.mrb[0].mxu0
    %v248 = vadd.f32 %v164, %v247
    %v249 = vpop.f32.mrb[0].mxu0
    %250 = vmatprep.mubr.f32.mxu0 0.0
    %251 = vmatmul.mubr.f32.gmra.mrb[0].mxu0 %v134
    %v252 = vpop.f32.mrb[0].mxu0
    %v253 = vadd.f32 %v164, %v252
    %v254 = vpop.f32.mrb[0].mxu0
    %255 = vmatprep.mubr.f32.mxu0 0.0
    %256 = vmatmul.mubr.f32.gmra.mrb[0].mxu0 %v135
    %v257 = vpop.f32.mrb[0].mxu0
    %v258 = vadd.f32 %v164, %v257
    %v259 = vpop.f32.mrb[0].mxu0
    %260 = vmatprep.mubr.f32.mxu0 0.0
    %261 = vmatmul.mubr.f32.gmra.mrb[0].mxu0 %v136
    %v262 = vpop.f32.mrb[0].mxu0
    %v263 = vadd.f32 %v164, %v262
    %v264 = vpop.f32.mrb[0].mxu0
    %265 = vmatprep.mubr.f32.mxu0 0.0
    %266 = vmatmul.mubr.f32.gmra.mrb[0].mxu0 %v137
    %v267 = vpop.f32.mrb[0].mxu0
    %v268 = vadd.f32 %v164, %v267
    %v269 = vpop.f32.mrb[0].mxu0
    %270 = vmatprep.mubr.f32.mxu0 0.0
    %271 = vmatmul.mubr.f32.gmra.mrb[0].mxu0 %v138
    %v272 = vpop.f32.mrb[0].mxu0
    %v273 = vadd.f32 %v164, %v272
    %v274 = vpop.f32.mrb[0].mxu0
    %275 = vmatprep.mubr.f32.mxu0 0.0
    %276 = vmatmul.mubr.f32.gmra.mrb[0].mxu0 %v139
    %v277 = vpop.f32.mrb[0].mxu0
    %v278 = vadd.f32 %v164, %v277
    %v279 = vpop.f32.mrb[0].mxu0
    %280 = vmatprep.mubr.f32.mxu0 0.0
    %281 = vmatmul.mubr.f32.gmra.mrb[0].mxu0 %v140
    %v282 = vpop.f32.mrb[0].mxu0
    %v283 = vadd.f32 %v164, %v282
    %v284 = vpop.f32.mrb[0].mxu0
    %285 = vmatprep.mubr.f32.mxu0 0.0
    %286 = vmatmul.mubr.f32.gmra.mrb[0].mxu0 %v141
    %v287 = vpop.f32.mrb[0].mxu0
    %v288 = vadd.f32 %v164, %v287
    %v289 = vpop.f32.mrb[0].mxu0
    %290 = vmatprep.mubr.f32.mxu0 0.0
    %291 = vmatmul.mubr.f32.gmra.mrb[0].mxu0 %v142
    %v292 = vpop.f32.mrb[0].mxu0
    %v293 = vadd.f32 %v164, %v292
    %v294 = vpop.f32.mrb[0].mxu0
    %295 = vdwg.mxu0
    %296 = vst [vmem:[#allocation2] sm:$0xff] %v233
    %297 = vst [vmem:[#allocation2 + $0x8] sm:$0xff] %v238
    %298 = vst [vmem:[#allocation2 + $0x10] sm:$0xff] %v243
    %299 = vst [vmem:[#allocation2 + $0x18] sm:$0xff] %v248
    %300 = vst [vmem:[#allocation2 + $0x20] sm:$0xff] %v253
    %301 = vst [vmem:[#allocation2 + $0x28] sm:$0xff] %v258
    %302 = vst [vmem:[#allocation2 + $0x30] sm:$0xff] %v263
    %303 = vst [vmem:[#allocation2 + $0x38] sm:$0xff] %v268
    %304 = vst [vmem:[#allocation2 + $0x40] sm:$0xff] %v273
    %305 = vst [vmem:[#allocation2 + $0x48] sm:$0xff] %v278
    %306 = vst [vmem:[#allocation2 + $0x50] sm:$0xff] %v283
    %307 = vst [vmem:[#allocation2 + $0x58] sm:$0xff] %v288
    %308 = vst [vmem:[#allocation2 + $0x60] sm:$0xf] %v293
    %v309 = vld [vmem:[#allocation2] sm:$0xff]
    %v310 = vld [vmem:[#allocation2 + $0x8] sm:$0xff]
    %v311 = vld [vmem:[#allocation2 + $0x10] sm:$0xff]
    %v312 = vld [vmem:[#allocation2 + $0x18] sm:$0xff]
    %v313 = vld [vmem:[#allocation2 + $0x20] sm:$0xff]
    %v314 = vld [vmem:[#allocation2 + $0x28] sm:$0xff]
    %v315 = vld [vmem:[#allocation2 + $0x30] sm:$0xff]
    %v316 = vld [vmem:[#allocation2 + $0x38] sm:$0xff]
    %v317 = vld [vmem:[#allocation2 + $0x40] sm:$0xff]
    %v318 = vld [vmem:[#allocation2 + $0x48] sm:$0xff]
    %v319 = vld [vmem:[#allocation2 + $0x50] sm:$0xff]
    %v320 = vld [vmem:[#allocation2 + $0x58] sm:$0xff]
    %v321 = vld [vmem:[#allocation2 + $0x60] sm:$0xf]
    %vm322 = vcmp.gt.f32.partialorder %v309, 0.5
    %vm323 = vcmp.gt.f32.partialorder %v310, 0.5
    %vm324 = vcmp.gt.f32.partialorder %v311, 0.5
    %vm325 = vcmp.gt.f32.partialorder %v312, 0.5
    %vm326 = vcmp.gt.f32.partialorder %v313, 0.5
    %vm327 = vcmp.gt.f32.partialorder %v314, 0.5
    %vm328 = vcmp.gt.f32.partialorder %v315, 0.5
    %vm329 = vcmp.gt.f32.partialorder %v316, 0.5
    %vm330 = vcmp.gt.f32.partialorder %v317, 0.5
    %vm331 = vcmp.gt.f32.partialorder %v318, 0.5
    %vm332 = vcmp.gt.f32.partialorder %v319, 0.5
    %vm333 = vcmp.gt.f32.partialorder %v320, 0.5
    %vm334 = vcmp.gt.f32.partialorder %v321, 0.5
    %v335 = vsel %vm322, 1, 0
    %v336 = vsel %vm323, 1, 0
    %v337 = vsel %vm324, 1, 0
    %v338 = vsel %vm325, 1, 0
    %v339 = vsel %vm326, 1, 0
    %v340 = vsel %vm327, 1, 0
    %v341 = vsel %vm328, 1, 0
    %v342 = vsel %vm329, 1, 0
    %v343 = vsel %vm330, 1, 0
    %v344 = vsel %vm331, 1, 0
    %v345 = vsel %vm332, 1, 0
    %v346 = vsel %vm333, 1, 0
    %v347 = vsel %vm334, 1, 0
    %v348 = vcvt.s32.f32 %v335
    %v349 = vcvt.s32.f32 %v336
    %v350 = vcvt.s32.f32 %v337
    %v351 = vcvt.s32.f32 %v338
    %v352 = vcvt.s32.f32 %v339
    %v353 = vcvt.s32.f32 %v340
    %v354 = vcvt.s32.f32 %v341
    %v355 = vcvt.s32.f32 %v342
    %v356 = vcvt.s32.f32 %v343
    %v357 = vcvt.s32.f32 %v344
    %v358 = vcvt.s32.f32 %v345
    %v359 = vcvt.s32.f32 %v346
    %v360 = vcvt.s32.f32 %v347
    %v361 = vmul.f32 %v309, 0.2
    %v362 = vmul.f32 %v310, 0.2
    %v363 = vmul.f32 %v311, 0.2
    %v364 = vmul.f32 %v312, 0.2
    %v365 = vmul.f32 %v313, 0.2
    %v366 = vmul.f32 %v314, 0.2
    %v367 = vmul.f32 %v315, 0.2
    %v368 = vmul.f32 %v316, 0.2
    %v369 = vmul.f32 %v317, 0.2
    %v370 = vmul.f32 %v318, 0.2
    %v371 = vmul.f32 %v319, 0.2
    %v372 = vmul.f32 %v320, 0.2
    %v373 = vmul.f32 %v321, 0.2
    %v374 = vsel %vm322, 0.0, %v361
    %v375 = vsel %vm323, 0.0, %v362
    %v376 = vsel %vm324, 0.0, %v363
    %v377 = vsel %vm325, 0.0, %v364
    %v378 = vsel %vm326, 0.0, %v365
    %v379 = vsel %vm327, 0.0, %v366
    %v380 = vsel %vm328, 0.0, %v367
    %v381 = vsel %vm329, 0.0, %v368
    %v382 = vsel %vm330, 0.0, %v369
    %v383 = vsel %vm331, 0.0, %v370
    %v384 = vsel %vm332, 0.0, %v371
    %v385 = vsel %vm333, 0.0, %v372
    %v386 = vsel %vm334, 0.0, %v373
    %387 = vst [vmem:[#allocation3] sm:$0xff] %v374
    %388 = vst [vmem:[#allocation3 + $0x8] sm:$0xff] %v375
    %389 = vst [vmem:[#allocation3 + $0x10] sm:$0xff] %v376
    %390 = vst [vmem:[#allocation3 + $0x18] sm:$0xff] %v377
    %391 = vst [vmem:[#allocation3 + $0x20] sm:$0xff] %v378
    %392 = vst [vmem:[#allocation3 + $0x28] sm:$0xff] %v379
    %393 = vst [vmem:[#allocation3 + $0x30] sm:$0xff] %v380
    %394 = vst [vmem:[#allocation3 + $0x38] sm:$0xff] %v381
    %395 = vst [vmem:[#allocation3 + $0x40] sm:$0xff] %v382
    %396 = vst [vmem:[#allocation3 + $0x48] sm:$0xff] %v383
    %397 = vst [vmem:[#allocation3 + $0x50] sm:$0xff] %v384
    %398 = vst [vmem:[#allocation3 + $0x58] sm:$0xff] %v385
    %399 = vst [vmem:[#allocation3 + $0x60] sm:$0xf] %v386
    %v400 = vadd.f32 %v348, %v349
    %v401 = vadd.f32 %v400, %v350
    %v402 = vadd.f32 %v401, %v351
    %v403 = vadd.f32 %v402, %v352
    %v404 = vadd.f32 %v403, %v353
    %v405 = vadd.f32 %v404, %v354
    %v406 = vadd.f32 %v405, %v355
    %v407 = vadd.f32 %v406, %v356
    %v408 = vadd.f32 %v407, %v357
    %v409 = vadd.f32 %v408, %v358
    %v410 = vadd.f32 %v409, %v359
    %vm411 = vcmask 1043456
    %v412 = vsel %vm411, %v360, 0.0
    %v413 = vadd.f32 %v410, %v412
    %v414 = vrot.slane %v413, 4
    %v415 = vadd.f32 %v413, %v414
    %v416 = vrot.slane %v415, 2
    %v417 = vadd.f32 %v415, %v416
    %v418 = vrot.slane %v417, 1
    %v419 = vadd.f32 %v417, %v418
    %v420 = vadd.f32 %v419, 0.0
    %v421 = vld [vmem:[#allocation13] sm:$0xff]
    %v422 = vld [vmem:[#allocation13 + $0x8] sm:$0xff]
    %v423 = vld [vmem:[#allocation13 + $0x10] sm:$0xff]
    %v424 = vld [vmem:[#allocation13 + $0x18] sm:$0xff]
    %v425 = vld [vmem:[#allocation13 + $0x20] sm:$0xff]
    %v426 = vld [vmem:[#allocation13 + $0x28] sm:$0xff]
    %v427 = vld [vmem:[#allocation13 + $0x30] sm:$0xff]
    %v428 = vld [vmem:[#allocation13 + $0x38] sm:$0xff]
    %v429 = vld [vmem:[#allocation13 + $0x40] sm:$0xff]
    %v430 = vld [vmem:[#allocation13 + $0x48] sm:$0xff]
    %v431 = vld [vmem:[#allocation13 + $0x50] sm:$0xff]
    %v432 = vld [vmem:[#allocation13 + $0x58] sm:$0xff]
    %v433 = vld [vmem:[#allocation13 + $0x60] sm:$0xff]
    %v434 = vld [vmem:[#allocation13 + $0x68] sm:$0xff]
    %v435 = vld [vmem:[#allocation13 + $0x70] sm:$0xff]
    %v436 = vld [vmem:[#allocation13 + $0x78] sm:$0xff]
    %v437 = vld [vmem:[%s4] sm:$0x1]
    %v439 = vlaneseq
    %v440 = vshrl.u32 %v439, 7
    %v441 = vsub.s32 0, %v440
    %v442 = vrot.slane %v437, %v441
    %444 = vmatprep.subr.mxu0 0.0
    %445 = vmatpush1.msra.mxu0 %v421
    %446 = vmatprep.subr.mxu0 0.0
    %447 = vmatpush1.msra.mxu0 %v422
    %448 = vmatprep.subr.mxu0 0.0
    %449 = vmatpush1.msra.mxu0 %v423
    %450 = vmatprep.subr.mxu0 0.0
    %451 = vmatpush1.msra.mxu0 %v424
    %452 = vmatprep.subr.mxu0 0.0
    %453 = vmatpush1.msra.mxu0 %v425
    %454 = vmatprep.subr.mxu0 0.0
    %455 = vmatpush1.msra.mxu0 %v426
    %456 = vmatprep.subr.mxu0 0.0
    %457 = vmatpush1.msra.mxu0 %v427
    %458 = vmatprep.subr.mxu0 0.0
    %459 = vmatpush1.msra.mxu0 %v428
    %460 = vmatprep.subr.mxu0 0.0
    %461 = vmatpush1.msra.mxu0 %v429
    %462 = vmatprep.subr.mxu0 0.0
    %463 = vmatpush1.msra.mxu0 %v430
    %464 = vmatprep.subr.mxu0 0.0
    %465 = vmatpush1.msra.mxu0 %v431
    %466 = vmatprep.subr.mxu0 0.0
    %467 = vmatpush1.msra.mxu0 %v432
    %468 = vmatprep.subr.mxu0 0.0
    %469 = vmatpush1.msra.mxu0 %v433
    %470 = vmatprep.subr.mxu0 0.0
    %471 = vmatpush1.msra.mxu0 %v434
    %472 = vmatprep.subr.mxu0 0.0
    %473 = vmatpush1.msra.mxu0 %v435
    %474 = vmatprep.subr.mxu0 0.0
    %475 = vmatpush1.msra.mxu0 %v436
    %476 = vmatprep.subr.mxu0 0.0
    %477 = vmatpush1.msra.mxu0 0.0
    %478 = vmatprep.subr.mxu0 0.0
    %479 = vmatpush1.msra.mxu0 0.0
    %480 = vmatprep.subr.mxu0 0.0
    %481 = vmatpush1.msra.mxu0 0.0
    %482 = vmatprep.subr.mxu0 0.0
    %483 = vmatpush1.msra.mxu0 0.0
    %484 = vmatprep.subr.mxu0 0.0
    %485 = vmatpush1.msra.mxu0 0.0
    %486 = vmatprep.subr.mxu0 0.0
    %487 = vmatpush1.msra.mxu0 0.0
    %488 = vmatprep.subr.mxu0 0.0
    %489 = vmatpush1.msra.mxu0 0.0
    %490 = vmatprep.subr.mxu0 0.0
    %491 = vmatpush1.msra.mxu0 0.0
    %492 = vmatprep.subr.mxu0 0.0
    %493 = vmatpush1.msra.mxu0 0.0
    %494 = vmatprep.subr.mxu0 0.0
    %495 = vmatpush1.msra.mxu0 0.0
    %496 = vmatprep.subr.mxu0 0.0
    %497 = vmatpush1.msra.mxu0 0.0
    %498 = vmatprep.subr.mxu0 0.0
    %499 = vmatpush1.msra.mxu0 0.0
    %500 = vmatprep.subr.mxu0 0.0
    %501 = vmatpush1.msra.mxu0 0.0
    %502 = vmatprep.subr.mxu0 0.0
    %503 = vmatpush1.msra.mxu0 0.0
    %504 = vmatprep.subr.mxu0 0.0
    %505 = vmatpush1.msra.mxu0 0.0
    %506 = vmatprep.subr.mxu0 0.0
    %507 = vmatpush1.msra.mxu0 0.0
    %508 = vmatprep.mubr.f32.mxu0 0.0
    %509 = vmatmul.mubr.f32.gmra.mrb[0].mxu0 %v348
    %v510 = vpop.f32.mrb[0].mxu0
    %v511 = vadd.f32 %v442, %v510
    %v512 = vpop.f32.mrb[0].mxu0
    %513 = vmatprep.mubr.f32.mxu0 0.0
    %514 = vmatmul.mubr.f32.gmra.mrb[0].mxu0 %v349
    %v515 = vpop.f32.mrb[0].mxu0
    %v516 = vadd.f32 %v442, %v515
    %v517 = vpop.f32.mrb[0].mxu0
    %518 = vmatprep.mubr.f32.mxu0 0.0
    %519 = vmatmul.mubr.f32.gmra.mrb[0].mxu0 %v350
    %v520 = vpop.f32.mrb[0].mxu0
    %v521 = vadd.f32 %v442, %v520
    %v522 = vpop.f32.mrb[0].mxu0
    %523 = vmatprep.mubr.f32.mxu0 0.0
    %524 = vmatmul.mubr.f32.gmra.mrb[0].mxu0 %v351
    %v525 = vpop.f32.mrb[0].mxu0
    %v526 = vadd.f32 %v442, %v525
    %v527 = vpop.f32.mrb[0].mxu0
    %528 = vmatprep.mubr.f32.mxu0 0.0
    %529 = vmatmul.mubr.f32.gmra.mrb[0].mxu0 %v352
    %v530 = vpop.f32.mrb[0].mxu0
    %v531 = vadd.f32 %v442, %v530
    %v532 = vpop.f32.mrb[0].mxu0
    %533 = vmatprep.mubr.f32.mxu0 0.0
    %534 = vmatmul.mubr.f32.gmra.mrb[0].mxu0 %v353
    %v535 = vpop.f32.mrb[0].mxu0
    %v536 = vadd.f32 %v442, %v535
    %v537 = vpop.f32.mrb[0].mxu0
    %538 = vmatprep.mubr.f32.mxu0 0.0
    %539 = vmatmul.mubr.f32.gmra.mrb[0].mxu0 %v354
    %v540 = vpop.f32.mrb[0].mxu0
    %v541 = vadd.f32 %v442, %v540
    %v542 = vpop.f32.mrb[0].mxu0
    %543 = vmatprep.mubr.f32.mxu0 0.0
    %544 = vmatmul.mubr.f32.gmra.mrb[0].mxu0 %v355
    %v545 = vpop.f32.mrb[0].mxu0
    %v546 = vadd.f32 %v442, %v545
    %v547 = vpop.f32.mrb[0].mxu0
    %548 = vmatprep.mubr.f32.mxu0 0.0
    %549 = vmatmul.mubr.f32.gmra.mrb[0].mxu0 %v356
    %v550 = vpop.f32.mrb[0].mxu0
    %v551 = vadd.f32 %v442, %v550
    %v552 = vpop.f32.mrb[0].mxu0
    %553 = vmatprep.mubr.f32.mxu0 0.0
    %554 = vmatmul.mubr.f32.gmra.mrb[0].mxu0 %v357
    %v555 = vpop.f32.mrb[0].mxu0
    %v556 = vadd.f32 %v442, %v555
    %v557 = vpop.f32.mrb[0].mxu0
    %558 = vmatprep.mubr.f32.mxu0 0.0
    %559 = vmatmul.mubr.f32.gmra.mrb[0].mxu0 %v358
    %v560 = vpop.f32.mrb[0].mxu0
    %v561 = vadd.f32 %v442, %v560
    %v562 = vpop.f32.mrb[0].mxu0
    %563 = vmatprep.mubr.f32.mxu0 0.0
    %564 = vmatmul.mubr.f32.gmra.mrb[0].mxu0 %v359
    %v565 = vpop.f32.mrb[0].mxu0
    %v566 = vadd.f32 %v442, %v565
    %v567 = vpop.f32.mrb[0].mxu0
    %568 = vmatprep.mubr.f32.mxu0 0.0
    %569 = vmatmul.mubr.f32.gmra.mrb[0].mxu0 %v360
    %v570 = vpop.f32.mrb[0].mxu0
    %v571 = vadd.f32 %v442, %v570
    %v572 = vpop.f32.mrb[0].mxu0
    %573 = vdwg.mxu0
    %vm574 = vcmp.gt.f32.partialorder %v511, 0.5
    %vm575 = vcmp.gt.f32.partialorder %v516, 0.5
    %vm576 = vcmp.gt.f32.partialorder %v521, 0.5
    %vm577 = vcmp.gt.f32.partialorder %v526, 0.5
    %vm578 = vcmp.gt.f32.partialorder %v531, 0.5
    %vm579 = vcmp.gt.f32.partialorder %v536, 0.5
    %vm580 = vcmp.gt.f32.partialorder %v541, 0.5
    %vm581 = vcmp.gt.f32.partialorder %v546, 0.5
    %vm582 = vcmp.gt.f32.partialorder %v551, 0.5
    %vm583 = vcmp.gt.f32.partialorder %v556, 0.5
    %vm584 = vcmp.gt.f32.partialorder %v561, 0.5
    %vm585 = vcmp.gt.f32.partialorder %v566, 0.5
    %vm586 = vcmp.gt.f32.partialorder %v571, 0.5
    %v587 = vsel %vm574, 1, 0
    %v588 = vsel %vm575, 1, 0
    %v589 = vsel %vm576, 1, 0
    %v590 = vsel %vm577, 1, 0
    %v591 = vsel %vm578, 1, 0
    %v592 = vsel %vm579, 1, 0
    %v593 = vsel %vm580, 1, 0
    %v594 = vsel %vm581, 1, 0
    %v595 = vsel %vm582, 1, 0
    %v596 = vsel %vm583, 1, 0
    %v597 = vsel %vm584, 1, 0
    %v598 = vsel %vm585, 1, 0
    %v599 = vsel %vm586, 1, 0
    %v600 = vcvt.s32.f32 %v587
    %v601 = vcvt.s32.f32 %v588
    %v602 = vcvt.s32.f32 %v589
    %v603 = vcvt.s32.f32 %v590
    %v604 = vcvt.s32.f32 %v591
    %v605 = vcvt.s32.f32 %v592
    %v606 = vcvt.s32.f32 %v593
    %v607 = vcvt.s32.f32 %v594
    %v608 = vcvt.s32.f32 %v595
    %v609 = vcvt.s32.f32 %v596
    %v610 = vcvt.s32.f32 %v597
    %v611 = vcvt.s32.f32 %v598
    %v612 = vcvt.s32.f32 %v599
    %v613 = vmul.f32 %v511, 0.2
    %v614 = vmul.f32 %v516, 0.2
    %v615 = vmul.f32 %v521, 0.2
    %v616 = vmul.f32 %v526, 0.2
    %v617 = vmul.f32 %v531, 0.2
    %v618 = vmul.f32 %v536, 0.2
    %v619 = vmul.f32 %v541, 0.2
    %v620 = vmul.f32 %v546, 0.2
    %v621 = vmul.f32 %v551, 0.2
    %v622 = vmul.f32 %v556, 0.2
    %v623 = vmul.f32 %v561, 0.2
    %v624 = vmul.f32 %v566, 0.2
    %v625 = vmul.f32 %v571, 0.2
    %v626 = vsel %vm574, 0.0, %v613
    %v627 = vsel %vm575, 0.0, %v614
    %v628 = vsel %vm576, 0.0, %v615
    %v629 = vsel %vm577, 0.0, %v616
    %v630 = vsel %vm578, 0.0, %v617
    %v631 = vsel %vm579, 0.0, %v618
    %v632 = vsel %vm580, 0.0, %v619
    %v633 = vsel %vm581, 0.0, %v620
    %v634 = vsel %vm582, 0.0, %v621
    %v635 = vsel %vm583, 0.0, %v622
    %v636 = vsel %vm584, 0.0, %v623
    %v637 = vsel %vm585, 0.0, %v624
    %v638 = vsel %vm586, 0.0, %v625
    %639 = vst [vmem:[#allocation4] sm:$0xff] %v626
    %640 = vst [vmem:[#allocation4 + $0x8] sm:$0xff] %v627
    %641 = vst [vmem:[#allocation4 + $0x10] sm:$0xff] %v628
    %642 = vst [vmem:[#allocation4 + $0x18] sm:$0xff] %v629
    %643 = vst [vmem:[#allocation4 + $0x20] sm:$0xff] %v630
    %644 = vst [vmem:[#allocation4 + $0x28] sm:$0xff] %v631
    %645 = vst [vmem:[#allocation4 + $0x30] sm:$0xff] %v632
    %646 = vst [vmem:[#allocation4 + $0x38] sm:$0xff] %v633
    %647 = vst [vmem:[#allocation4 + $0x40] sm:$0xff] %v634
    %648 = vst [vmem:[#allocation4 + $0x48] sm:$0xff] %v635
    %649 = vst [vmem:[#allocation4 + $0x50] sm:$0xff] %v636
    %650 = vst [vmem:[#allocation4 + $0x58] sm:$0xff] %v637
    %651 = vst [vmem:[#allocation4 + $0x60] sm:$0xf] %v638
    %v652 = vadd.f32 %v600, %v601
    %v653 = vadd.f32 %v652, %v602
    %v654 = vadd.f32 %v653, %v603
    %v655 = vadd.f32 %v654, %v604
    %v656 = vadd.f32 %v655, %v605
    %v657 = vadd.f32 %v656, %v606
    %v658 = vadd.f32 %v657, %v607
    %v659 = vadd.f32 %v658, %v608
    %v660 = vadd.f32 %v659, %v609
    %v661 = vadd.f32 %v660, %v610
    %v662 = vadd.f32 %v661, %v611
    %v663 = vsel %vm411, %v612, 0.0
    %v664 = vadd.f32 %v662, %v663
    %v665 = vrot.slane %v664, 4
    %v666 = vadd.f32 %v664, %v665
    %v667 = vrot.slane %v666, 2
    %v668 = vadd.f32 %v666, %v667
    %v669 = vrot.slane %v668, 1
    %v670 = vadd.f32 %v668, %v669
    %v671 = vadd.f32 %v670, 0.0
    %v672 = vld [vmem:[#allocation14] sm:$0xff]
    %v673 = vld [vmem:[#allocation14 + $0x8] sm:$0xff]
    %v674 = vld [vmem:[#allocation14 + $0x10] sm:$0xff]
    %v675 = vld [vmem:[#allocation14 + $0x18] sm:$0xff]
    %v676 = vld [vmem:[#allocation14 + $0x20] sm:$0xff]
    %v677 = vld [vmem:[#allocation14 + $0x28] sm:$0xff]
    %v678 = vld [vmem:[#allocation14 + $0x30] sm:$0xff]
    %v679 = vld [vmem:[#allocation14 + $0x38] sm:$0xff]
    %v680 = vld [vmem:[#allocation14 + $0x40] sm:$0xff]
    %v681 = vld [vmem:[#allocation14 + $0x48] sm:$0xff]
    %v682 = vld [vmem:[#allocation14 + $0x50] sm:$0xff]
    %v683 = vld [vmem:[#allocation14 + $0x58] sm:$0xff]
    %v684 = vld [vmem:[#allocation14 + $0x60] sm:$0xff]
    %v685 = vld [vmem:[#allocation14 + $0x68] sm:$0xff]
    %v686 = vld [vmem:[#allocation14 + $0x70] sm:$0xff]
    %v687 = vld [vmem:[#allocation14 + $0x78] sm:$0xff]
    %v688 = vld [vmem:[%s6] sm:$0x1]
    %v690 = vlaneseq
    %v691 = vshrl.u32 %v690, 7
    %v692 = vsub.s32 0, %v691
    %v693 = vrot.slane %v688, %v692
    %695 = vmatprep.subr.mxu0 0.0
    %696 = vmatpush1.msra.mxu0 %v672
    %697 = vmatprep.subr.mxu0 0.0
    %698 = vmatpush1.msra.mxu0 %v673
    %699 = vmatprep.subr.mxu0 0.0
    %700 = vmatpush1.msra.mxu0 %v674
    %701 = vmatprep.subr.mxu0 0.0
    %702 = vmatpush1.msra.mxu0 %v675
    %703 = vmatprep.subr.mxu0 0.0
    %704 = vmatpush1.msra.mxu0 %v676
    %705 = vmatprep.subr.mxu0 0.0
    %706 = vmatpush1.msra.mxu0 %v677
    %707 = vmatprep.subr.mxu0 0.0
    %708 = vmatpush1.msra.mxu0 %v678
    %709 = vmatprep.subr.mxu0 0.0
    %710 = vmatpush1.msra.mxu0 %v679
    %711 = vmatprep.subr.mxu0 0.0
    %712 = vmatpush1.msra.mxu0 %v680
    %713 = vmatprep.subr.mxu0 0.0
    %714 = vmatpush1.msra.mxu0 %v681
    %715 = vmatprep.subr.mxu0 0.0
    %716 = vmatpush1.msra.mxu0 %v682
    %717 = vmatprep.subr.mxu0 0.0
    %718 = vmatpush1.msra.mxu0 %v683
    %719 = vmatprep.subr.mxu0 0.0
    %720 = vmatpush1.msra.mxu0 %v684
    %721 = vmatprep.subr.mxu0 0.0
    %722 = vmatpush1.msra.mxu0 %v685
    %723 = vmatprep.subr.mxu0 0.0
    %724 = vmatpush1.msra.mxu0 %v686
    %725 = vmatprep.subr.mxu0 0.0
    %726 = vmatpush1.msra.mxu0 %v687
    %727 = vmatprep.subr.mxu0 0.0
    %728 = vmatpush1.msra.mxu0 0.0
    %729 = vmatprep.subr.mxu0 0.0
    %730 = vmatpush1.msra.mxu0 0.0
    %731 = vmatprep.subr.mxu0 0.0
    %732 = vmatpush1.msra.mxu0 0.0
    %733 = vmatprep.subr.mxu0 0.0
    %734 = vmatpush1.msra.mxu0 0.0
    %735 = vmatprep.subr.mxu0 0.0
    %736 = vmatpush1.msra.mxu0 0.0
    %737 = vmatprep.subr.mxu0 0.0
    %738 = vmatpush1.msra.mxu0 0.0
    %739 = vmatprep.subr.mxu0 0.0
    %740 = vmatpush1.msra.mxu0 0.0
    %741 = vmatprep.subr.mxu0 0.0
    %742 = vmatpush1.msra.mxu0 0.0
    %743 = vmatprep.subr.mxu0 0.0
    %744 = vmatpush1.msra.mxu0 0.0
    %745 = vmatprep.subr.mxu0 0.0
    %746 = vmatpush1.msra.mxu0 0.0
    %747 = vmatprep.subr.mxu0 0.0
    %748 = vmatpush1.msra.mxu0 0.0
    %749 = vmatprep.subr.mxu0 0.0
    %750 = vmatpush1.msra.mxu0 0.0
    %751 = vmatprep.subr.mxu0 0.0
    %752 = vmatpush1.msra.mxu0 0.0
    %753 = vmatprep.subr.mxu0 0.0
    %754 = vmatpush1.msra.mxu0 0.0
    %755 = vmatprep.subr.mxu0 0.0
    %756 = vmatpush1.msra.mxu0 0.0
    %757 = vmatprep.subr.mxu0 0.0
    %758 = vmatpush1.msra.mxu0 0.0
    %759 = vmatprep.mubr.f32.mxu0 0.0
    %760 = vmatmul.mubr.f32.gmra.mrb[0].mxu0 %v600
    %v761 = vpop.f32.mrb[0].mxu0
    %v762 = vadd.f32 %v693, %v761
    %v763 = vpop.f32.mrb[0].mxu0
    %764 = vmatprep.mubr.f32.mxu0 0.0
    %765 = vmatmul.mubr.f32.gmra.mrb[0].mxu0 %v601
    %v766 = vpop.f32.mrb[0].mxu0
    %v767 = vadd.f32 %v693, %v766
    %v768 = vpop.f32.mrb[0].mxu0
    %769 = vmatprep.mubr.f32.mxu0 0.0
    %770 = vmatmul.mubr.f32.gmra.mrb[0].mxu0 %v602
    %v771 = vpop.f32.mrb[0].mxu0
    %v772 = vadd.f32 %v693, %v771
    %v773 = vpop.f32.mrb[0].mxu0
    %774 = vmatprep.mubr.f32.mxu0 0.0
    %775 = vmatmul.mubr.f32.gmra.mrb[0].mxu0 %v603
    %v776 = vpop.f32.mrb[0].mxu0
    %v777 = vadd.f32 %v693, %v776
    %v778 = vpop.f32.mrb[0].mxu0
    %779 = vmatprep.mubr.f32.mxu0 0.0
    %780 = vmatmul.mubr.f32.gmra.mrb[0].mxu0 %v604
    %v781 = vpop.f32.mrb[0].mxu0
    %v782 = vadd.f32 %v693, %v781
    %v783 = vpop.f32.mrb[0].mxu0
    %784 = vmatprep.mubr.f32.mxu0 0.0
    %785 = vmatmul.mubr.f32.gmra.mrb[0].mxu0 %v605
    %v786 = vpop.f32.mrb[0].mxu0
    %v787 = vadd.f32 %v693, %v786
    %v788 = vpop.f32.mrb[0].mxu0
    %789 = vmatprep.mubr.f32.mxu0 0.0
    %790 = vmatmul.mubr.f32.gmra.mrb[0].mxu0 %v606
    %v791 = vpop.f32.mrb[0].mxu0
    %v792 = vadd.f32 %v693, %v791
    %v793 = vpop.f32.mrb[0].mxu0
    %794 = vmatprep.mubr.f32.mxu0 0.0
    %795 = vmatmul.mubr.f32.gmra.mrb[0].mxu0 %v607
    %v796 = vpop.f32.mrb[0].mxu0
    %v797 = vadd.f32 %v693, %v796
    %v798 = vpop.f32.mrb[0].mxu0
    %799 = vmatprep.mubr.f32.mxu0 0.0
    %800 = vmatmul.mubr.f32.gmra.mrb[0].mxu0 %v608
    %v801 = vpop.f32.mrb[0].mxu0
    %v802 = vadd.f32 %v693, %v801
    %v803 = vpop.f32.mrb[0].mxu0
    %804 = vmatprep.mubr.f32.mxu0 0.0
    %805 = vmatmul.mubr.f32.gmra.mrb[0].mxu0 %v609
    %v806 = vpop.f32.mrb[0].mxu0
    %v807 = vadd.f32 %v693, %v806
    %v808 = vpop.f32.mrb[0].mxu0
    %809 = vmatprep.mubr.f32.mxu0 0.0
    %810 = vmatmul.mubr.f32.gmra.mrb[0].mxu0 %v610
    %v811 = vpop.f32.mrb[0].mxu0
    %v812 = vadd.f32 %v693, %v811
    %v813 = vpop.f32.mrb[0].mxu0
    %814 = vmatprep.mubr.f32.mxu0 0.0
    %815 = vmatmul.mubr.f32.gmra.mrb[0].mxu0 %v611
    %v816 = vpop.f32.mrb[0].mxu0
    %v817 = vadd.f32 %v693, %v816
    %v818 = vpop.f32.mrb[0].mxu0
    %819 = vmatprep.mubr.f32.mxu0 0.0
    %820 = vmatmul.mubr.f32.gmra.mrb[0].mxu0 %v612
    %v821 = vpop.f32.mrb[0].mxu0
    %v822 = vadd.f32 %v693, %v821
    %v823 = vpop.f32.mrb[0].mxu0
    %824 = vdwg.mxu0
    %vm825 = vcmp.gt.f32.partialorder %v762, 0.5
    %vm826 = vcmp.gt.f32.partialorder %v767, 0.5
    %vm827 = vcmp.gt.f32.partialorder %v772, 0.5
    %vm828 = vcmp.gt.f32.partialorder %v777, 0.5
    %vm829 = vcmp.gt.f32.partialorder %v782, 0.5
    %vm830 = vcmp.gt.f32.partialorder %v787, 0.5
    %vm831 = vcmp.gt.f32.partialorder %v792, 0.5
    %vm832 = vcmp.gt.f32.partialorder %v797, 0.5
    %vm833 = vcmp.gt.f32.partialorder %v802, 0.5
    %vm834 = vcmp.gt.f32.partialorder %v807, 0.5
    %vm835 = vcmp.gt.f32.partialorder %v812, 0.5
    %vm836 = vcmp.gt.f32.partialorder %v817, 0.5
    %vm837 = vcmp.gt.f32.partialorder %v822, 0.5
    %v838 = vsel %vm825, 1, 0
    %v839 = vsel %vm826, 1, 0
    %v840 = vsel %vm827, 1, 0
    %v841 = vsel %vm828, 1, 0
    %v842 = vsel %vm829, 1, 0
    %v843 = vsel %vm830, 1, 0
    %v844 = vsel %vm831, 1, 0
    %v845 = vsel %vm832, 1, 0
    %v846 = vsel %vm833, 1, 0
    %v847 = vsel %vm834, 1, 0
    %v848 = vsel %vm835, 1, 0
    %v849 = vsel %vm836, 1, 0
    %v850 = vsel %vm837, 1, 0
    %v851 = vcvt.s32.f32 %v838
    %v852 = vcvt.s32.f32 %v839
    %v853 = vcvt.s32.f32 %v840
    %v854 = vcvt.s32.f32 %v841
    %v855 = vcvt.s32.f32 %v842
    %v856 = vcvt.s32.f32 %v843
    %v857 = vcvt.s32.f32 %v844
    %v858 = vcvt.s32.f32 %v845
    %v859 = vcvt.s32.f32 %v846
    %v860 = vcvt.s32.f32 %v847
    %v861 = vcvt.s32.f32 %v848
    %v862 = vcvt.s32.f32 %v849
    %v863 = vcvt.s32.f32 %v850
    %v864 = vmul.f32 %v762, 0.2
    %v865 = vmul.f32 %v767, 0.2
    %v866 = vmul.f32 %v772, 0.2
    %v867 = vmul.f32 %v777, 0.2
    %v868 = vmul.f32 %v782, 0.2
    %v869 = vmul.f32 %v787, 0.2
    %v870 = vmul.f32 %v792, 0.2
    %v871 = vmul.f32 %v797, 0.2
    %v872 = vmul.f32 %v802, 0.2
    %v873 = vmul.f32 %v807, 0.2
    %v874 = vmul.f32 %v812, 0.2
    %v875 = vmul.f32 %v817, 0.2
    %v876 = vmul.f32 %v822, 0.2
    %v877 = vsel %vm825, 0.0, %v864
    %v878 = vsel %vm826, 0.0, %v865
    %v879 = vsel %vm827, 0.0, %v866
    %v880 = vsel %vm828, 0.0, %v867
    %v881 = vsel %vm829, 0.0, %v868
    %v882 = vsel %vm830, 0.0, %v869
    %v883 = vsel %vm831, 0.0, %v870
    %v884 = vsel %vm832, 0.0, %v871
    %v885 = vsel %vm833, 0.0, %v872
    %v886 = vsel %vm834, 0.0, %v873
    %v887 = vsel %vm835, 0.0, %v874
    %v888 = vsel %vm836, 0.0, %v875
    %v889 = vsel %vm837, 0.0, %v876
    %890 = vst [vmem:[#allocation5] sm:$0xff] %v877
    %891 = vst [vmem:[#allocation5 + $0x8] sm:$0xff] %v878
    %892 = vst [vmem:[#allocation5 + $0x10] sm:$0xff] %v879
    %893 = vst [vmem:[#allocation5 + $0x18] sm:$0xff] %v880
    %894 = vst [vmem:[#allocation5 + $0x20] sm:$0xff] %v881
    %895 = vst [vmem:[#allocation5 + $0x28] sm:$0xff] %v882
    %896 = vst [vmem:[#allocation5 + $0x30] sm:$0xff] %v883
    %897 = vst [vmem:[#allocation5 + $0x38] sm:$0xff] %v884
    %898 = vst [vmem:[#allocation5 + $0x40] sm:$0xff] %v885
    %899 = vst [vmem:[#allocation5 + $0x48] sm:$0xff] %v886
    %900 = vst [vmem:[#allocation5 + $0x50] sm:$0xff] %v887
    %901 = vst [vmem:[#allocation5 + $0x58] sm:$0xff] %v888
    %902 = vst [vmem:[#allocation5 + $0x60] sm:$0xf] %v889
    %v903 = vadd.f32 %v851, %v852
    %v904 = vadd.f32 %v903, %v853
    %v905 = vadd.f32 %v904, %v854
    %v906 = vadd.f32 %v905, %v855
    %v907 = vadd.f32 %v906, %v856
    %v908 = vadd.f32 %v907, %v857
    %v909 = vadd.f32 %v908, %v858
    %v910 = vadd.f32 %v909, %v859
    %v911 = vadd.f32 %v910, %v860
    %v912 = vadd.f32 %v911, %v861
    %v913 = vadd.f32 %v912, %v862
    %v914 = vsel %vm411, %v863, 0.0
    %v915 = vadd.f32 %v913, %v914
    %v916 = vrot.slane %v915, 4
    %v917 = vadd.f32 %v915, %v916
    %v918 = vrot.slane %v917, 2
    %v919 = vadd.f32 %v917, %v918
    %v920 = vrot.slane %v919, 1
    %v921 = vadd.f32 %v919, %v920
    %v922 = vadd.f32 %v921, 0.0
    %v923 = vld [vmem:[#allocation16] sm:$0xff]
    %v924 = vld [vmem:[#allocation16 + $0x8] sm:$0xff]
    %v925 = vld [vmem:[#allocation16 + $0x10] sm:$0xff]
    %v926 = vld [vmem:[#allocation16 + $0x18] sm:$0xff]
    %v927 = vld [vmem:[#allocation16 + $0x20] sm:$0xff]
    %v928 = vld [vmem:[#allocation16 + $0x28] sm:$0xff]
    %v929 = vld [vmem:[#allocation16 + $0x30] sm:$0xff]
    %v930 = vld [vmem:[#allocation16 + $0x38] sm:$0xff]
    %v931 = vld [vmem:[#allocation16 + $0x40] sm:$0xff]
    %v932 = vld [vmem:[#allocation16 + $0x48] sm:$0xff]
    %v933 = vld [vmem:[#allocation16 + $0x50] sm:$0xff]
    %v934 = vld [vmem:[#allocation16 + $0x58] sm:$0xff]
    %v935 = vld [vmem:[#allocation16 + $0x60] sm:$0xff]
    %v936 = vld [vmem:[#allocation16 + $0x68] sm:$0xff]
    %v937 = vld [vmem:[#allocation16 + $0x70] sm:$0xff]
    %v938 = vld [vmem:[#allocation16 + $0x78] sm:$0xff]
    %v939 = vld [vmem:[%s8] sm:$0x1]
    %v941 = vlaneseq
    %v942 = vshrl.u32 %v941, 7
    %v943 = vsub.s32 0, %v942
    %v944 = vrot.slane %v939, %v943
    %946 = vmatprep.subr.mxu0 0.0
    %947 = vmatpush1.msra.mxu0 %v923
    %948 = vmatprep.subr.mxu0 0.0
    %949 = vmatpush1.msra.mxu0 %v924
    %950 = vmatprep.subr.mxu0 0.0
    %951 = vmatpush1.msra.mxu0 %v925
    %952 = vmatprep.subr.mxu0 0.0
    %953 = vmatpush1.msra.mxu0 %v926
    %954 = vmatprep.subr.mxu0 0.0
    %955 = vmatpush1.msra.mxu0 %v927
    %956 = vmatprep.subr.mxu0 0.0
    %957 = vmatpush1.msra.mxu0 %v928
    %958 = vmatprep.subr.mxu0 0.0
    %959 = vmatpush1.msra.mxu0 %v929
    %960 = vmatprep.subr.mxu0 0.0
    %961 = vmatpush1.msra.mxu0 %v930
    %962 = vmatprep.subr.mxu0 0.0
    %963 = vmatpush1.msra.mxu0 %v931
    %964 = vmatprep.subr.mxu0 0.0
    %965 = vmatpush1.msra.mxu0 %v932
    %966 = vmatprep.subr.mxu0 0.0
    %967 = vmatpush1.msra.mxu0 %v933
    %968 = vmatprep.subr.mxu0 0.0
    %969 = vmatpush1.msra.mxu0 %v934
    %970 = vmatprep.subr.mxu0 0.0
    %971 = vmatpush1.msra.mxu0 %v935
    %972 = vmatprep.subr.mxu0 0.0
    %973 = vmatpush1.msra.mxu0 %v936
    %974 = vmatprep.subr.mxu0 0.0
    %975 = vmatpush1.msra.mxu0 %v937
    %976 = vmatprep.subr.mxu0 0.0
    %977 = vmatpush1.msra.mxu0 %v938
    %978 = vmatprep.subr.mxu0 0.0
    %979 = vmatpush1.msra.mxu0 0.0
    %980 = vmatprep.subr.mxu0 0.0
    %981 = vmatpush1.msra.mxu0 0.0
    %982 = vmatprep.subr.mxu0 0.0
    %983 = vmatpush1.msra.mxu0 0.0
    %984 = vmatprep.subr.mxu0 0.0
    %985 = vmatpush1.msra.mxu0 0.0
    %986 = vmatprep.subr.mxu0 0.0
    %987 = vmatpush1.msra.mxu0 0.0
    %988 = vmatprep.subr.mxu0 0.0
    %989 = vmatpush1.msra.mxu0 0.0
    %990 = vmatprep.subr.mxu0 0.0
    %991 = vmatpush1.msra.mxu0 0.0
    %992 = vmatprep.subr.mxu0 0.0
    %993 = vmatpush1.msra.mxu0 0.0
    %994 = vmatprep.subr.mxu0 0.0
    %995 = vmatpush1.msra.mxu0 0.0
    %996 = vmatprep.subr.mxu0 0.0
    %997 = vmatpush1.msra.mxu0 0.0
    %998 = vmatprep.subr.mxu0 0.0
    %999 = vmatpush1.msra.mxu0 0.0
    %1000 = vmatprep.subr.mxu0 0.0
    %1001 = vmatpush1.msra.mxu0 0.0
    %1002 = vmatprep.subr.mxu0 0.0
    %1003 = vmatpush1.msra.mxu0 0.0
    %1004 = vmatprep.subr.mxu0 0.0
    %1005 = vmatpush1.msra.mxu0 0.0
    %1006 = vmatprep.subr.mxu0 0.0
    %1007 = vmatpush1.msra.mxu0 0.0
    %1008 = vmatprep.subr.mxu0 0.0
    %1009 = vmatpush1.msra.mxu0 0.0
    %1010 = vmatprep.mubr.f32.mxu0 0.0
    %1011 = vmatmul.mubr.f32.gmra.mrb[0].mxu0 %v851
    %v1012 = vpop.f32.mrb[0].mxu0
    %v1013 = vadd.f32 %v944, %v1012
    %v1014 = vpop.f32.mrb[0].mxu0
    %1015 = vmatprep.mubr.f32.mxu0 0.0
    %1016 = vmatmul.mubr.f32.gmra.mrb[0].mxu0 %v852
    %v1017 = vpop.f32.mrb[0].mxu0
    %v1018 = vadd.f32 %v944, %v1017
    %v1019 = vpop.f32.mrb[0].mxu0
    %1020 = vmatprep.mubr.f32.mxu0 0.0
    %1021 = vmatmul.mubr.f32.gmra.mrb[0].mxu0 %v853
    %v1022 = vpop.f32.mrb[0].mxu0
    %v1023 = vadd.f32 %v944, %v1022
    %v1024 = vpop.f32.mrb[0].mxu0
    %1025 = vmatprep.mubr.f32.mxu0 0.0
    %1026 = vmatmul.mubr.f32.gmra.mrb[0].mxu0 %v854
    %v1027 = vpop.f32.mrb[0].mxu0
    %v1028 = vadd.f32 %v944, %v1027
    %v1029 = vpop.f32.mrb[0].mxu0
    %1030 = vmatprep.mubr.f32.mxu0 0.0
    %1031 = vmatmul.mubr.f32.gmra.mrb[0].mxu0 %v855
    %v1032 = vpop.f32.mrb[0].mxu0
    %v1033 = vadd.f32 %v944, %v1032
    %v1034 = vpop.f32.mrb[0].mxu0
    %1035 = vmatprep.mubr.f32.mxu0 0.0
    %1036 = vmatmul.mubr.f32.gmra.mrb[0].mxu0 %v856
    %v1037 = vpop.f32.mrb[0].mxu0
    %v1038 = vadd.f32 %v944, %v1037
    %v1039 = vpop.f32.mrb[0].mxu0
    %1040 = vmatprep.mubr.f32.mxu0 0.0
    %1041 = vmatmul.mubr.f32.gmra.mrb[0].mxu0 %v857
    %v1042 = vpop.f32.mrb[0].mxu0
    %v1043 = vadd.f32 %v944, %v1042
    %v1044 = vpop.f32.mrb[0].mxu0
    %1045 = vmatprep.mubr.f32.mxu0 0.0
    %1046 = vmatmul.mubr.f32.gmra.mrb[0].mxu0 %v858
    %v1047 = vpop.f32.mrb[0].mxu0
    %v1048 = vadd.f32 %v944, %v1047
    %v1049 = vpop.f32.mrb[0].mxu0
    %1050 = vmatprep.mubr.f32.mxu0 0.0
    %1051 = vmatmul.mubr.f32.gmra.mrb[0].mxu0 %v859
    %v1052 = vpop.f32.mrb[0].mxu0
    %v1053 = vadd.f32 %v944, %v1052
    %v1054 = vpop.f32.mrb[0].mxu0
    %1055 = vmatprep.mubr.f32.mxu0 0.0
    %1056 = vmatmul.mubr.f32.gmra.mrb[0].mxu0 %v860
    %v1057 = vpop.f32.mrb[0].mxu0
    %v1058 = vadd.f32 %v944, %v1057
    %v1059 = vpop.f32.mrb[0].mxu0
    %1060 = vmatprep.mubr.f32.mxu0 0.0
    %1061 = vmatmul.mubr.f32.gmra.mrb[0].mxu0 %v861
    %v1062 = vpop.f32.mrb[0].mxu0
    %v1063 = vadd.f32 %v944, %v1062
    %v1064 = vpop.f32.mrb[0].mxu0
    %1065 = vmatprep.mubr.f32.mxu0 0.0
    %1066 = vmatmul.mubr.f32.gmra.mrb[0].mxu0 %v862
    %v1067 = vpop.f32.mrb[0].mxu0
    %v1068 = vadd.f32 %v944, %v1067
    %v1069 = vpop.f32.mrb[0].mxu0
    %1070 = vmatprep.mubr.f32.mxu0 0.0
    %1071 = vmatmul.mubr.f32.gmra.mrb[0].mxu0 %v863
    %v1072 = vpop.f32.mrb[0].mxu0
    %v1073 = vadd.f32 %v944, %v1072
    %v1074 = vpop.f32.mrb[0].mxu0
    %1075 = vdwg.mxu0
    %vm1076 = vcmp.gt.f32.partialorder %v1013, 0.5
    %vm1077 = vcmp.gt.f32.partialorder %v1018, 0.5
    %vm1078 = vcmp.gt.f32.partialorder %v1023, 0.5
    %vm1079 = vcmp.gt.f32.partialorder %v1028, 0.5
    %vm1080 = vcmp.gt.f32.partialorder %v1033, 0.5
    %vm1081 = vcmp.gt.f32.partialorder %v1038, 0.5
    %vm1082 = vcmp.gt.f32.partialorder %v1043, 0.5
    %vm1083 = vcmp.gt.f32.partialorder %v1048, 0.5
    %vm1084 = vcmp.gt.f32.partialorder %v1053, 0.5
    %vm1085 = vcmp.gt.f32.partialorder %v1058, 0.5
    %vm1086 = vcmp.gt.f32.partialorder %v1063, 0.5
    %vm1087 = vcmp.gt.f32.partialorder %v1068, 0.5
    %vm1088 = vcmp.gt.f32.partialorder %v1073, 0.5
    %v1089 = vsel %vm1076, 1, 0
    %v1090 = vsel %vm1077, 1, 0
    %v1091 = vsel %vm1078, 1, 0
    %v1092 = vsel %vm1079, 1, 0
    %v1093 = vsel %vm1080, 1, 0
    %v1094 = vsel %vm1081, 1, 0
    %v1095 = vsel %vm1082, 1, 0
    %v1096 = vsel %vm1083, 1, 0
    %v1097 = vsel %vm1084, 1, 0
    %v1098 = vsel %vm1085, 1, 0
    %v1099 = vsel %vm1086, 1, 0
    %v1100 = vsel %vm1087, 1, 0
    %v1101 = vsel %vm1088, 1, 0
    %v1102 = vcvt.s32.f32 %v1089
    %v1103 = vcvt.s32.f32 %v1090
    %v1104 = vcvt.s32.f32 %v1091
    %v1105 = vcvt.s32.f32 %v1092
    %v1106 = vcvt.s32.f32 %v1093
    %v1107 = vcvt.s32.f32 %v1094
    %v1108 = vcvt.s32.f32 %v1095
    %v1109 = vcvt.s32.f32 %v1096
    %v1110 = vcvt.s32.f32 %v1097
    %v1111 = vcvt.s32.f32 %v1098
    %v1112 = vcvt.s32.f32 %v1099
    %v1113 = vcvt.s32.f32 %v1100
    %v1114 = vcvt.s32.f32 %v1101
    %v1115 = vmul.f32 %v1013, 0.2
    %v1116 = vmul.f32 %v1018, 0.2
    %v1117 = vmul.f32 %v1023, 0.2
    %v1118 = vmul.f32 %v1028, 0.2
    %v1119 = vmul.f32 %v1033, 0.2
    %v1120 = vmul.f32 %v1038, 0.2
    %v1121 = vmul.f32 %v1043, 0.2
    %v1122 = vmul.f32 %v1048, 0.2
    %v1123 = vmul.f32 %v1053, 0.2
    %v1124 = vmul.f32 %v1058, 0.2
    %v1125 = vmul.f32 %v1063, 0.2
    %v1126 = vmul.f32 %v1068, 0.2
    %v1127 = vmul.f32 %v1073, 0.2
    %v1128 = vsel %vm1076, 0.0, %v1115
    %v1129 = vsel %vm1077, 0.0, %v1116
    %v1130 = vsel %vm1078, 0.0, %v1117
    %v1131 = vsel %vm1079, 0.0, %v1118
    %v1132 = vsel %vm1080, 0.0, %v1119
    %v1133 = vsel %vm1081, 0.0, %v1120
    %v1134 = vsel %vm1082, 0.0, %v1121
    %v1135 = vsel %vm1083, 0.0, %v1122
    %v1136 = vsel %vm1084, 0.0, %v1123
    %v1137 = vsel %vm1085, 0.0, %v1124
    %v1138 = vsel %vm1086, 0.0, %v1125
    %v1139 = vsel %vm1087, 0.0, %v1126
    %v1140 = vsel %vm1088, 0.0, %v1127
    %1141 = vst [vmem:[#allocation6] sm:$0xff] %v1128
    %1142 = vst [vmem:[#allocation6 + $0x8] sm:$0xff] %v1129
    %1143 = vst [vmem:[#allocation6 + $0x10] sm:$0xff] %v1130
    %1144 = vst [vmem:[#allocation6 + $0x18] sm:$0xff] %v1131
    %1145 = vst [vmem:[#allocation6 + $0x20] sm:$0xff] %v1132
    %1146 = vst [vmem:[#allocation6 + $0x28] sm:$0xff] %v1133
    %1147 = vst [vmem:[#allocation6 + $0x30] sm:$0xff] %v1134
    %1148 = vst [vmem:[#allocation6 + $0x38] sm:$0xff] %v1135
    %1149 = vst [vmem:[#allocation6 + $0x40] sm:$0xff] %v1136
    %1150 = vst [vmem:[#allocation6 + $0x48] sm:$0xff] %v1137
    %1151 = vst [vmem:[#allocation6 + $0x50] sm:$0xff] %v1138
    %1152 = vst [vmem:[#allocation6 + $0x58] sm:$0xff] %v1139
    %1153 = vst [vmem:[#allocation6 + $0x60] sm:$0xf] %v1140
    %v1154 = vadd.f32 %v1102, %v1103
    %v1155 = vadd.f32 %v1154, %v1104
    %v1156 = vadd.f32 %v1155, %v1105
    %v1157 = vadd.f32 %v1156, %v1106
    %v1158 = vadd.f32 %v1157, %v1107
    %v1159 = vadd.f32 %v1158, %v1108
    %v1160 = vadd.f32 %v1159, %v1109
    %v1161 = vadd.f32 %v1160, %v1110
    %v1162 = vadd.f32 %v1161, %v1111
    %v1163 = vadd.f32 %v1162, %v1112
    %v1164 = vadd.f32 %v1163, %v1113
    %v1165 = vsel %vm411, %v1114, 0.0
    %v1166 = vadd.f32 %v1164, %v1165
    %v1167 = vrot.slane %v1166, 4
    %v1168 = vadd.f32 %v1166, %v1167
    %v1169 = vrot.slane %v1168, 2
    %v1170 = vadd.f32 %v1168, %v1169
    %v1171 = vrot.slane %v1170, 1
    %v1172 = vadd.f32 %v1170, %v1171
    %v1173 = vadd.f32 %v1172, 0.0
    %v1174 = vld [vmem:[#allocation17] sm:$0xff]
    %v1175 = vld [vmem:[#allocation17 + $0x8] sm:$0xff]
    %v1176 = vld [vmem:[#allocation17 + $0x10] sm:$0xff]
    %v1177 = vld [vmem:[#allocation17 + $0x18] sm:$0xff]
    %v1178 = vld [vmem:[#allocation17 + $0x20] sm:$0xff]
    %v1179 = vld [vmem:[#allocation17 + $0x28] sm:$0xff]
    %v1180 = vld [vmem:[#allocation17 + $0x30] sm:$0xff]
    %v1181 = vld [vmem:[#allocation17 + $0x38] sm:$0xff]
    %v1182 = vld [vmem:[#allocation17 + $0x40] sm:$0xff]
    %v1183 = vld [vmem:[#allocation17 + $0x48] sm:$0xff]
    %v1184 = vld [vmem:[#allocation17 + $0x50] sm:$0xff]
    %v1185 = vld [vmem:[#allocation17 + $0x58] sm:$0xff]
    %v1186 = vld [vmem:[#allocation17 + $0x60] sm:$0xff]
    %v1187 = vld [vmem:[#allocation17 + $0x68] sm:$0xff]
    %v1188 = vld [vmem:[#allocation17 + $0x70] sm:$0xff]
    %v1189 = vld [vmem:[#allocation17 + $0x78] sm:$0xff]
    %v1190 = vld [vmem:[%s10] sm:$0x1]
    %v1192 = vlaneseq
    %v1193 = vshrl.u32 %v1192, 7
    %v1194 = vsub.s32 0, %v1193
    %v1195 = vrot.slane %v1190, %v1194
    %1197 = vmatprep.subr.mxu0 0.0
    %1198 = vmatpush1.msra.mxu0 %v1174
    %1199 = vmatprep.subr.mxu0 0.0
    %1200 = vmatpush1.msra.mxu0 %v1175
    %1201 = vmatprep.subr.mxu0 0.0
    %1202 = vmatpush1.msra.mxu0 %v1176
    %1203 = vmatprep.subr.mxu0 0.0
    %1204 = vmatpush1.msra.mxu0 %v1177
    %1205 = vmatprep.subr.mxu0 0.0
    %1206 = vmatpush1.msra.mxu0 %v1178
    %1207 = vmatprep.subr.mxu0 0.0
    %1208 = vmatpush1.msra.mxu0 %v1179
    %1209 = vmatprep.subr.mxu0 0.0
    %1210 = vmatpush1.msra.mxu0 %v1180
    %1211 = vmatprep.subr.mxu0 0.0
    %1212 = vmatpush1.msra.mxu0 %v1181
    %1213 = vmatprep.subr.mxu0 0.0
    %1214 = vmatpush1.msra.mxu0 %v1182
    %1215 = vmatprep.subr.mxu0 0.0
    %1216 = vmatpush1.msra.mxu0 %v1183
    %1217 = vmatprep.subr.mxu0 0.0
    %1218 = vmatpush1.msra.mxu0 %v1184
    %1219 = vmatprep.subr.mxu0 0.0
    %1220 = vmatpush1.msra.mxu0 %v1185
    %1221 = vmatprep.subr.mxu0 0.0
    %1222 = vmatpush1.msra.mxu0 %v1186
    %1223 = vmatprep.subr.mxu0 0.0
    %1224 = vmatpush1.msra.mxu0 %v1187
    %1225 = vmatprep.subr.mxu0 0.0
    %1226 = vmatpush1.msra.mxu0 %v1188
    %1227 = vmatprep.subr.mxu0 0.0
    %1228 = vmatpush1.msra.mxu0 %v1189
    %1229 = vmatprep.subr.mxu0 0.0
    %1230 = vmatpush1.msra.mxu0 0.0
    %1231 = vmatprep.subr.mxu0 0.0
    %1232 = vmatpush1.msra.mxu0 0.0
    %1233 = vmatprep.subr.mxu0 0.0
    %1234 = vmatpush1.msra.mxu0 0.0
    %1235 = vmatprep.subr.mxu0 0.0
    %1236 = vmatpush1.msra.mxu0 0.0
    %1237 = vmatprep.subr.mxu0 0.0
    %1238 = vmatpush1.msra.mxu0 0.0
    %1239 = vmatprep.subr.mxu0 0.0
    %1240 = vmatpush1.msra.mxu0 0.0
    %1241 = vmatprep.subr.mxu0 0.0
    %1242 = vmatpush1.msra.mxu0 0.0
    %1243 = vmatprep.subr.mxu0 0.0
    %1244 = vmatpush1.msra.mxu0 0.0
    %1245 = vmatprep.subr.mxu0 0.0
    %1246 = vmatpush1.msra.mxu0 0.0
    %1247 = vmatprep.subr.mxu0 0.0
    %1248 = vmatpush1.msra.mxu0 0.0
    %1249 = vmatprep.subr.mxu0 0.0
    %1250 = vmatpush1.msra.mxu0 0.0
    %1251 = vmatprep.subr.mxu0 0.0
    %1252 = vmatpush1.msra.mxu0 0.0
    %1253 = vmatprep.subr.mxu0 0.0
    %1254 = vmatpush1.msra.mxu0 0.0
    %1255 = vmatprep.subr.mxu0 0.0
    %1256 = vmatpush1.msra.mxu0 0.0
    %1257 = vmatprep.subr.mxu0 0.0
    %1258 = vmatpush1.msra.mxu0 0.0
    %1259 = vmatprep.subr.mxu0 0.0
    %1260 = vmatpush1.msra.mxu0 0.0
    %1261 = vmatprep.mubr.f32.mxu0 0.0
    %1262 = vmatmul.mubr.f32.gmra.mrb[0].mxu0 %v1102
    %v1263 = vpop.f32.mrb[0].mxu0
    %v1264 = vadd.f32 %v1195, %v1263
    %v1265 = vpop.f32.mrb[0].mxu0
    %1266 = vmatprep.mubr.f32.mxu0 0.0
    %1267 = vmatmul.mubr.f32.gmra.mrb[0].mxu0 %v1103
    %v1268 = vpop.f32.mrb[0].mxu0
    %v1269 = vadd.f32 %v1195, %v1268
    %v1270 = vpop.f32.mrb[0].mxu0
    %1271 = vmatprep.mubr.f32.mxu0 0.0
    %1272 = vmatmul.mubr.f32.gmra.mrb[0].mxu0 %v1104
    %v1273 = vpop.f32.mrb[0].mxu0
    %v1274 = vadd.f32 %v1195, %v1273
    %v1275 = vpop.f32.mrb[0].mxu0
    %1276 = vmatprep.mubr.f32.mxu0 0.0
    %1277 = vmatmul.mubr.f32.gmra.mrb[0].mxu0 %v1105
    %v1278 = vpop.f32.mrb[0].mxu0
    %v1279 = vadd.f32 %v1195, %v1278
    %v1280 = vpop.f32.mrb[0].mxu0
    %1281 = vmatprep.mubr.f32.mxu0 0.0
    %1282 = vmatmul.mubr.f32.gmra.mrb[0].mxu0 %v1106
    %v1283 = vpop.f32.mrb[0].mxu0
    %v1284 = vadd.f32 %v1195, %v1283
    %v1285 = vpop.f32.mrb[0].mxu0
    %1286 = vmatprep.mubr.f32.mxu0 0.0
    %1287 = vmatmul.mubr.f32.gmra.mrb[0].mxu0 %v1107
    %v1288 = vpop.f32.mrb[0].mxu0
    %v1289 = vadd.f32 %v1195, %v1288
    %v1290 = vpop.f32.mrb[0].mxu0
    %1291 = vmatprep.mubr.f32.mxu0 0.0
    %1292 = vmatmul.mubr.f32.gmra.mrb[0].mxu0 %v1108
    %v1293 = vpop.f32.mrb[0].mxu0
    %v1294 = vadd.f32 %v1195, %v1293
    %v1295 = vpop.f32.mrb[0].mxu0
    %1296 = vmatprep.mubr.f32.mxu0 0.0
    %1297 = vmatmul.mubr.f32.gmra.mrb[0].mxu0 %v1109
    %v1298 = vpop.f32.mrb[0].mxu0
    %v1299 = vadd.f32 %v1195, %v1298
    %v1300 = vpop.f32.mrb[0].mxu0
    %1301 = vmatprep.mubr.f32.mxu0 0.0
    %1302 = vmatmul.mubr.f32.gmra.mrb[0].mxu0 %v1110
    %v1303 = vpop.f32.mrb[0].mxu0
    %v1304 = vadd.f32 %v1195, %v1303
    %v1305 = vpop.f32.mrb[0].mxu0
    %1306 = vmatprep.mubr.f32.mxu0 0.0
    %1307 = vmatmul.mubr.f32.gmra.mrb[0].mxu0 %v1111
    %v1308 = vpop.f32.mrb[0].mxu0
    %v1309 = vadd.f32 %v1195, %v1308
    %v1310 = vpop.f32.mrb[0].mxu0
    %1311 = vmatprep.mubr.f32.mxu0 0.0
    %1312 = vmatmul.mubr.f32.gmra.mrb[0].mxu0 %v1112
    %v1313 = vpop.f32.mrb[0].mxu0
    %v1314 = vadd.f32 %v1195, %v1313
    %v1315 = vpop.f32.mrb[0].mxu0
    %1316 = vmatprep.mubr.f32.mxu0 0.0
    %1317 = vmatmul.mubr.f32.gmra.mrb[0].mxu0 %v1113
    %v1318 = vpop.f32.mrb[0].mxu0
    %v1319 = vadd.f32 %v1195, %v1318
    %v1320 = vpop.f32.mrb[0].mxu0
    %1321 = vmatprep.mubr.f32.mxu0 0.0
    %1322 = vmatmul.mubr.f32.gmra.mrb[0].mxu0 %v1114
    %v1323 = vpop.f32.mrb[0].mxu0
    %v1324 = vadd.f32 %v1195, %v1323
    %v1325 = vpop.f32.mrb[0].mxu0
    %1326 = vdwg.mxu0
    %vm1327 = vcmp.gt.f32.partialorder %v1264, 0.5
    %vm1328 = vcmp.gt.f32.partialorder %v1269, 0.5
    %vm1329 = vcmp.gt.f32.partialorder %v1274, 0.5
    %vm1330 = vcmp.gt.f32.partialorder %v1279, 0.5
    %vm1331 = vcmp.gt.f32.partialorder %v1284, 0.5
    %vm1332 = vcmp.gt.f32.partialorder %v1289, 0.5
    %vm1333 = vcmp.gt.f32.partialorder %v1294, 0.5
    %vm1334 = vcmp.gt.f32.partialorder %v1299, 0.5
    %vm1335 = vcmp.gt.f32.partialorder %v1304, 0.5
    %vm1336 = vcmp.gt.f32.partialorder %v1309, 0.5
    %vm1337 = vcmp.gt.f32.partialorder %v1314, 0.5
    %vm1338 = vcmp.gt.f32.partialorder %v1319, 0.5
    %vm1339 = vcmp.gt.f32.partialorder %v1324, 0.5
    %v1340 = vsel %vm1327, 1, 0
    %v1341 = vsel %vm1328, 1, 0
    %v1342 = vsel %vm1329, 1, 0
    %v1343 = vsel %vm1330, 1, 0
    %v1344 = vsel %vm1331, 1, 0
    %v1345 = vsel %vm1332, 1, 0
    %v1346 = vsel %vm1333, 1, 0
    %v1347 = vsel %vm1334, 1, 0
    %v1348 = vsel %vm1335, 1, 0
    %v1349 = vsel %vm1336, 1, 0
    %v1350 = vsel %vm1337, 1, 0
    %v1351 = vsel %vm1338, 1, 0
    %v1352 = vsel %vm1339, 1, 0
    %v1353 = vcvt.s32.f32 %v1340
    %v1354 = vcvt.s32.f32 %v1341
    %v1355 = vcvt.s32.f32 %v1342
    %v1356 = vcvt.s32.f32 %v1343
    %v1357 = vcvt.s32.f32 %v1344
    %v1358 = vcvt.s32.f32 %v1345
    %v1359 = vcvt.s32.f32 %v1346
    %v1360 = vcvt.s32.f32 %v1347
    %v1361 = vcvt.s32.f32 %v1348
    %v1362 = vcvt.s32.f32 %v1349
    %v1363 = vcvt.s32.f32 %v1350
    %v1364 = vcvt.s32.f32 %v1351
    %v1365 = vcvt.s32.f32 %v1352
    %v1366 = vmul.f32 %v1264, 0.2
    %v1367 = vmul.f32 %v1269, 0.2
    %v1368 = vmul.f32 %v1274, 0.2
    %v1369 = vmul.f32 %v1279, 0.2
    %v1370 = vmul.f32 %v1284, 0.2
    %v1371 = vmul.f32 %v1289, 0.2
    %v1372 = vmul.f32 %v1294, 0.2
    %v1373 = vmul.f32 %v1299, 0.2
    %v1374 = vmul.f32 %v1304, 0.2
    %v1375 = vmul.f32 %v1309, 0.2
    %v1376 = vmul.f32 %v1314, 0.2
    %v1377 = vmul.f32 %v1319, 0.2
    %v1378 = vmul.f32 %v1324, 0.2
    %v1379 = vsel %vm1327, 0.0, %v1366
    %v1380 = vsel %vm1328, 0.0, %v1367
    %v1381 = vsel %vm1329, 0.0, %v1368
    %v1382 = vsel %vm1330, 0.0, %v1369
    %v1383 = vsel %vm1331, 0.0, %v1370
    %v1384 = vsel %vm1332, 0.0, %v1371
    %v1385 = vsel %vm1333, 0.0, %v1372
    %v1386 = vsel %vm1334, 0.0, %v1373
    %v1387 = vsel %vm1335, 0.0, %v1374
    %v1388 = vsel %vm1336, 0.0, %v1375
    %v1389 = vsel %vm1337, 0.0, %v1376
    %v1390 = vsel %vm1338, 0.0, %v1377
    %v1391 = vsel %vm1339, 0.0, %v1378
    %1392 = vst [vmem:[#allocation7] sm:$0xff] %v1379
    %1393 = vst [vmem:[#allocation7 + $0x8] sm:$0xff] %v1380
    %1394 = vst [vmem:[#allocation7 + $0x10] sm:$0xff] %v1381
    %1395 = vst [vmem:[#allocation7 + $0x18] sm:$0xff] %v1382
    %1396 = vst [vmem:[#allocation7 + $0x20] sm:$0xff] %v1383
    %1397 = vst [vmem:[#allocation7 + $0x28] sm:$0xff] %v1384
    %1398 = vst [vmem:[#allocation7 + $0x30] sm:$0xff] %v1385
    %1399 = vst [vmem:[#allocation7 + $0x38] sm:$0xff] %v1386
    %1400 = vst [vmem:[#allocation7 + $0x40] sm:$0xff] %v1387
    %1401 = vst [vmem:[#allocation7 + $0x48] sm:$0xff] %v1388
    %1402 = vst [vmem:[#allocation7 + $0x50] sm:$0xff] %v1389
    %1403 = vst [vmem:[#allocation7 + $0x58] sm:$0xff] %v1390
    %1404 = vst [vmem:[#allocation7 + $0x60] sm:$0xf] %v1391
    %1405 = vst [vmem:[#allocation19] sm:$0xff] %v1353
    %1406 = vst [vmem:[#allocation19 + $0x8] sm:$0xff] %v1354
    %1407 = vst [vmem:[#allocation19 + $0x10] sm:$0xff] %v1355
    %1408 = vst [vmem:[#allocation19 + $0x18] sm:$0xff] %v1356
    %1409 = vst [vmem:[#allocation19 + $0x20] sm:$0xff] %v1357
    %1410 = vst [vmem:[#allocation19 + $0x28] sm:$0xff] %v1358
    %1411 = vst [vmem:[#allocation19 + $0x30] sm:$0xff] %v1359
    %1412 = vst [vmem:[#allocation19 + $0x38] sm:$0xff] %v1360
    %1413 = vst [vmem:[#allocation19 + $0x40] sm:$0xff] %v1361
    %1414 = vst [vmem:[#allocation19 + $0x48] sm:$0xff] %v1362
    %1415 = vst [vmem:[#allocation19 + $0x50] sm:$0xff] %v1363
    %1416 = vst [vmem:[#allocation19 + $0x58] sm:$0xff] %v1364
    %1417 = vst [vmem:[#allocation19 + $0x60] sm:$0xf] %v1365
    %v1418 = vld [vmem:[#allocation2] sm:$0xff]
    %v1419 = vld [vmem:[#allocation2 + $0x8] sm:$0xff]
    %v1420 = vld [vmem:[#allocation2 + $0x10] sm:$0xff]
    %v1421 = vld [vmem:[#allocation2 + $0x18] sm:$0xff]
    %v1422 = vld [vmem:[#allocation2 + $0x20] sm:$0xff]
    %v1423 = vld [vmem:[#allocation2 + $0x28] sm:$0xff]
    %v1424 = vld [vmem:[#allocation2 + $0x30] sm:$0xff]
    %v1425 = vld [vmem:[#allocation2 + $0x38] sm:$0xff]
    %v1426 = vld [vmem:[#allocation2 + $0x40] sm:$0xff]
    %v1427 = vld [vmem:[#allocation2 + $0x48] sm:$0xff]
    %v1428 = vld [vmem:[#allocation2 + $0x50] sm:$0xff]
    %v1429 = vld [vmem:[#allocation2 + $0x58] sm:$0xff]
    %v1430 = vld [vmem:[#allocation2 + $0x60] sm:$0xf]
    %v1431 = vld [vmem:[#allocation3] sm:$0xff]
    %v1432 = vld [vmem:[#allocation3 + $0x8] sm:$0xff]
    %v1433 = vld [vmem:[#allocation3 + $0x10] sm:$0xff]
    %v1434 = vld [vmem:[#allocation3 + $0x18] sm:$0xff]
    %v1435 = vld [vmem:[#allocation3 + $0x20] sm:$0xff]
    %v1436 = vld [vmem:[#allocation3 + $0x28] sm:$0xff]
    %v1437 = vld [vmem:[#allocation3 + $0x30] sm:$0xff]
    %v1438 = vld [vmem:[#allocation3 + $0x38] sm:$0xff]
    %v1439 = vld [vmem:[#allocation3 + $0x40] sm:$0xff]
    %v1440 = vld [vmem:[#allocation3 + $0x48] sm:$0xff]
    %v1441 = vld [vmem:[#allocation3 + $0x50] sm:$0xff]
    %v1442 = vld [vmem:[#allocation3 + $0x58] sm:$0xff]
    %v1443 = vld [vmem:[#allocation3 + $0x60] sm:$0xf]
    %v1444 = vadd.f32 %v1431, %v1418
    %v1445 = vadd.f32 %v1432, %v1419
    %v1446 = vadd.f32 %v1433, %v1420
    %v1447 = vadd.f32 %v1434, %v1421
    %v1448 = vadd.f32 %v1435, %v1422
    %v1449 = vadd.f32 %v1436, %v1423
    %v1450 = vadd.f32 %v1437, %v1424
    %v1451 = vadd.f32 %v1438, %v1425
    %v1452 = vadd.f32 %v1439, %v1426
    %v1453 = vadd.f32 %v1440, %v1427
    %v1454 = vadd.f32 %v1441, %v1428
    %v1455 = vadd.f32 %v1442, %v1429
    %v1456 = vadd.f32 %v1443, %v1430
    %vm1457 = vcmp.gt.f32.partialorder %v1444, 0.5
    %vm1458 = vcmp.gt.f32.partialorder %v1445, 0.5
    %vm1459 = vcmp.gt.f32.partialorder %v1446, 0.5
    %vm1460 = vcmp.gt.f32.partialorder %v1447, 0.5
    %vm1461 = vcmp.gt.f32.partialorder %v1448, 0.5
    %vm1462 = vcmp.gt.f32.partialorder %v1449, 0.5
    %vm1463 = vcmp.gt.f32.partialorder %v1450, 0.5
    %vm1464 = vcmp.gt.f32.partialorder %v1451, 0.5
    %vm1465 = vcmp.gt.f32.partialorder %v1452, 0.5
    %vm1466 = vcmp.gt.f32.partialorder %v1453, 0.5
    %vm1467 = vcmp.gt.f32.partialorder %v1454, 0.5
    %vm1468 = vcmp.gt.f32.partialorder %v1455, 0.5
    %vm1469 = vcmp.gt.f32.partialorder %v1456, 0.5
    %v1470 = vsel %vm1457, 1, 0
    %v1471 = vsel %vm1458, 1, 0
    %v1472 = vsel %vm1459, 1, 0
    %v1473 = vsel %vm1460, 1, 0
    %v1474 = vsel %vm1461, 1, 0
    %v1475 = vsel %vm1462, 1, 0
    %v1476 = vsel %vm1463, 1, 0
    %v1477 = vsel %vm1464, 1, 0
    %v1478 = vsel %vm1465, 1, 0
    %v1479 = vsel %vm1466, 1, 0
    %v1480 = vsel %vm1467, 1, 0
    %v1481 = vsel %vm1468, 1, 0
    %v1482 = vsel %vm1469, 1, 0
    %v1483 = vcvt.s32.f32 %v1470
    %v1484 = vcvt.s32.f32 %v1471
    %v1485 = vcvt.s32.f32 %v1472
    %v1486 = vcvt.s32.f32 %v1473
    %v1487 = vcvt.s32.f32 %v1474
    %v1488 = vcvt.s32.f32 %v1475
    %v1489 = vcvt.s32.f32 %v1476
    %v1490 = vcvt.s32.f32 %v1477
    %v1491 = vcvt.s32.f32 %v1478
    %v1492 = vcvt.s32.f32 %v1479
    %v1493 = vcvt.s32.f32 %v1480
    %v1494 = vcvt.s32.f32 %v1481
    %v1495 = vcvt.s32.f32 %v1482
    %v1496 = vmul.f32 %v1444, 0.2
    %v1497 = vmul.f32 %v1445, 0.2
    %v1498 = vmul.f32 %v1446, 0.2
    %v1499 = vmul.f32 %v1447, 0.2
    %v1500 = vmul.f32 %v1448, 0.2
    %v1501 = vmul.f32 %v1449, 0.2
    %v1502 = vmul.f32 %v1450, 0.2
    %v1503 = vmul.f32 %v1451, 0.2
    %v1504 = vmul.f32 %v1452, 0.2
    %v1505 = vmul.f32 %v1453, 0.2
    %v1506 = vmul.f32 %v1454, 0.2
    %v1507 = vmul.f32 %v1455, 0.2
    %v1508 = vmul.f32 %v1456, 0.2
    %v1509 = vsel %vm1457, 0.0, %v1496
    %v1510 = vsel %vm1458, 0.0, %v1497
    %v1511 = vsel %vm1459, 0.0, %v1498
    %v1512 = vsel %vm1460, 0.0, %v1499
    %v1513 = vsel %vm1461, 0.0, %v1500
    %v1514 = vsel %vm1462, 0.0, %v1501
    %v1515 = vsel %vm1463, 0.0, %v1502
    %v1516 = vsel %vm1464, 0.0, %v1503
    %v1517 = vsel %vm1465, 0.0, %v1504
    %v1518 = vsel %vm1466, 0.0, %v1505
    %v1519 = vsel %vm1467, 0.0, %v1506
    %v1520 = vsel %vm1468, 0.0, %v1507
    %v1521 = vsel %vm1469, 0.0, %v1508
    %1522 = vst [vmem:[#allocation3] sm:$0xff] %v1509
    %1523 = vst [vmem:[#allocation3 + $0x8] sm:$0xff] %v1510
    %1524 = vst [vmem:[#allocation3 + $0x10] sm:$0xff] %v1511
    %1525 = vst [vmem:[#allocation3 + $0x18] sm:$0xff] %v1512
    %1526 = vst [vmem:[#allocation3 + $0x20] sm:$0xff] %v1513
    %1527 = vst [vmem:[#allocation3 + $0x28] sm:$0xff] %v1514
    %1528 = vst [vmem:[#allocation3 + $0x30] sm:$0xff] %v1515
    %1529 = vst [vmem:[#allocation3 + $0x38] sm:$0xff] %v1516
    %1530 = vst [vmem:[#allocation3 + $0x40] sm:$0xff] %v1517
    %1531 = vst [vmem:[#allocation3 + $0x48] sm:$0xff] %v1518
    %1532 = vst [vmem:[#allocation3 + $0x50] sm:$0xff] %v1519
    %1533 = vst [vmem:[#allocation3 + $0x58] sm:$0xff] %v1520
    %1534 = vst [vmem:[#allocation3 + $0x60] sm:$0xf] %v1521
    %v1535 = vadd.f32 %v1483, %v1484
    %v1536 = vadd.f32 %v1535, %v1485
    %v1537 = vadd.f32 %v1536, %v1486
    %v1538 = vadd.f32 %v1537, %v1487
    %v1539 = vadd.f32 %v1538, %v1488
    %v1540 = vadd.f32 %v1539, %v1489
    %v1541 = vadd.f32 %v1540, %v1490
    %v1542 = vadd.f32 %v1541, %v1491
    %v1543 = vadd.f32 %v1542, %v1492
    %v1544 = vadd.f32 %v1543, %v1493
    %v1545 = vadd.f32 %v1544, %v1494
    %v1546 = vsel %vm411, %v1495, 0.0
    %v1547 = vadd.f32 %v1545, %v1546
    %v1548 = vrot.slane %v1547, 4
    %v1549 = vadd.f32 %v1547, %v1548
    %v1550 = vrot.slane %v1549, 2
    %v1551 = vadd.f32 %v1549, %v1550
    %v1552 = vrot.slane %v1551, 1
    %v1553 = vadd.f32 %v1551, %v1552
    %v1554 = vadd.f32 %v420, %v1553
    %v1555 = vld [vmem:[#allocation13] sm:$0xff]
    %v1556 = vld [vmem:[#allocation13 + $0x8] sm:$0xff]
    %v1557 = vld [vmem:[#allocation13 + $0x10] sm:$0xff]
    %v1558 = vld [vmem:[#allocation13 + $0x18] sm:$0xff]
    %v1559 = vld [vmem:[#allocation13 + $0x20] sm:$0xff]
    %v1560 = vld [vmem:[#allocation13 + $0x28] sm:$0xff]
    %v1561 = vld [vmem:[#allocation13 + $0x30] sm:$0xff]
    %v1562 = vld [vmem:[#allocation13 + $0x38] sm:$0xff]
    %v1563 = vld [vmem:[#allocation13 + $0x40] sm:$0xff]
    %v1564 = vld [vmem:[#allocation13 + $0x48] sm:$0xff]
    %v1565 = vld [vmem:[#allocation13 + $0x50] sm:$0xff]
    %v1566 = vld [vmem:[#allocation13 + $0x58] sm:$0xff]
    %v1567 = vld [vmem:[#allocation13 + $0x60] sm:$0xff]
    %v1568 = vld [vmem:[#allocation13 + $0x68] sm:$0xff]
    %v1569 = vld [vmem:[#allocation13 + $0x70] sm:$0xff]
    %v1570 = vld [vmem:[#allocation13 + $0x78] sm:$0xff]
    %v1571 = vld [vmem:[%s4] sm:$0x1]
    %v1573 = vlaneseq
    %v1574 = vshrl.u32 %v1573, 7
    %v1575 = vsub.s32 0, %v1574
    %v1576 = vrot.slane %v1571, %v1575
    %1578 = vmatprep.subr.mxu0 0.0
    %1579 = vmatpush1.msra.mxu0 %v1555
    %1580 = vmatprep.subr.mxu0 0.0
    %1581 = vmatpush1.msra.mxu0 %v1556
    %1582 = vmatprep.subr.mxu0 0.0
    %1583 = vmatpush1.msra.mxu0 %v1557
    %1584 = vmatprep.subr.mxu0 0.0
    %1585 = vmatpush1.msra.mxu0 %v1558
    %1586 = vmatprep.subr.mxu0 0.0
    %1587 = vmatpush1.msra.mxu0 %v1559
    %1588 = vmatprep.subr.mxu0 0.0
    %1589 = vmatpush1.msra.mxu0 %v1560
    %1590 = vmatprep.subr.mxu0 0.0
    %1591 = vmatpush1.msra.mxu0 %v1561
    %1592 = vmatprep.subr.mxu0 0.0
    %1593 = vmatpush1.msra.mxu0 %v1562
    %1594 = vmatprep.subr.mxu0 0.0
    %1595 = vmatpush1.msra.mxu0 %v1563
    %1596 = vmatprep.subr.mxu0 0.0
    %1597 = vmatpush1.msra.mxu0 %v1564
    %1598 = vmatprep.subr.mxu0 0.0
    %1599 = vmatpush1.msra.mxu0 %v1565
    %1600 = vmatprep.subr.mxu0 0.0
    %1601 = vmatpush1.msra.mxu0 %v1566
    %1602 = vmatprep.subr.mxu0 0.0
    %1603 = vmatpush1.msra.mxu0 %v1567
    %1604 = vmatprep.subr.mxu0 0.0
    %1605 = vmatpush1.msra.mxu0 %v1568
    %1606 = vmatprep.subr.mxu0 0.0
    %1607 = vmatpush1.msra.mxu0 %v1569
    %1608 = vmatprep.subr.mxu0 0.0
    %1609 = vmatpush1.msra.mxu0 %v1570
    %1610 = vmatprep.subr.mxu0 0.0
    %1611 = vmatpush1.msra.mxu0 0.0
    %1612 = vmatprep.subr.mxu0 0.0
    %1613 = vmatpush1.msra.mxu0 0.0
    %1614 = vmatprep.subr.mxu0 0.0
    %1615 = vmatpush1.msra.mxu0 0.0
    %1616 = vmatprep.subr.mxu0 0.0
    %1617 = vmatpush1.msra.mxu0 0.0
    %1618 = vmatprep.subr.mxu0 0.0
    %1619 = vmatpush1.msra.mxu0 0.0
    %1620 = vmatprep.subr.mxu0 0.0
    %1621 = vmatpush1.msra.mxu0 0.0
    %1622 = vmatprep.subr.mxu0 0.0
    %1623 = vmatpush1.msra.mxu0 0.0
    %1624 = vmatprep.subr.mxu0 0.0
    %1625 = vmatpush1.msra.mxu0 0.0
    %1626 = vmatprep.subr.mxu0 0.0
    %1627 = vmatpush1.msra.mxu0 0.0
    %1628 = vmatprep.subr.mxu0 0.0
    %1629 = vmatpush1.msra.mxu0 0.0
    %1630 = vmatprep.subr.mxu0 0.0
    %1631 = vmatpush1.msra.mxu0 0.0
    %1632 = vmatprep.subr.mxu0 0.0
    %1633 = vmatpush1.msra.mxu0 0.0
    %1634 = vmatprep.subr.mxu0 0.0
    %1635 = vmatpush1.msra.mxu0 0.0
    %1636 = vmatprep.subr.mxu0 0.0
    %1637 = vmatpush1.msra.mxu0 0.0
    %1638 = vmatprep.subr.mxu0 0.0
    %1639 = vmatpush1.msra.mxu0 0.0
    %1640 = vmatprep.subr.mxu0 0.0
    %1641 = vmatpush1.msra.mxu0 0.0
    %1642 = vmatprep.mubr.f32.mxu0 0.0
    %1643 = vmatmul.mubr.f32.gmra.mrb[0].mxu0 %v1483
    %v1644 = vpop.f32.mrb[0].mxu0
    %v1645 = vadd.f32 %v1576, %v1644
    %v1646 = vpop.f32.mrb[0].mxu0
    %1647 = vmatprep.mubr.f32.mxu0 0.0
    %1648 = vmatmul.mubr.f32.gmra.mrb[0].mxu0 %v1484
    %v1649 = vpop.f32.mrb[0].mxu0
    %v1650 = vadd.f32 %v1576, %v1649
    %v1651 = vpop.f32.mrb[0].mxu0
    %1652 = vmatprep.mubr.f32.mxu0 0.0
    %1653 = vmatmul.mubr.f32.gmra.mrb[0].mxu0 %v1485
    %v1654 = vpop.f32.mrb[0].mxu0
    %v1655 = vadd.f32 %v1576, %v1654
    %v1656 = vpop.f32.mrb[0].mxu0
    %1657 = vmatprep.mubr.f32.mxu0 0.0
    %1658 = vmatmul.mubr.f32.gmra.mrb[0].mxu0 %v1486
    %v1659 = vpop.f32.mrb[0].mxu0
    %v1660 = vadd.f32 %v1576, %v1659
    %v1661 = vpop.f32.mrb[0].mxu0
    %1662 = vmatprep.mubr.f32.mxu0 0.0
    %1663 = vmatmul.mubr.f32.gmra.mrb[0].mxu0 %v1487
    %v1664 = vpop.f32.mrb[0].mxu0
    %v1665 = vadd.f32 %v1576, %v1664
    %v1666 = vpop.f32.mrb[0].mxu0
    %1667 = vmatprep.mubr.f32.mxu0 0.0
    %1668 = vmatmul.mubr.f32.gmra.mrb[0].mxu0 %v1488
    %v1669 = vpop.f32.mrb[0].mxu0
    %v1670 = vadd.f32 %v1576, %v1669
    %v1671 = vpop.f32.mrb[0].mxu0
    %1672 = vmatprep.mubr.f32.mxu0 0.0
    %1673 = vmatmul.mubr.f32.gmra.mrb[0].mxu0 %v1489
    %v1674 = vpop.f32.mrb[0].mxu0
    %v1675 = vadd.f32 %v1576, %v1674
    %v1676 = vpop.f32.mrb[0].mxu0
    %1677 = vmatprep.mubr.f32.mxu0 0.0
    %1678 = vmatmul.mubr.f32.gmra.mrb[0].mxu0 %v1490
    %v1679 = vpop.f32.mrb[0].mxu0
    %v1680 = vadd.f32 %v1576, %v1679
    %v1681 = vpop.f32.mrb[0].mxu0
    %1682 = vmatprep.mubr.f32.mxu0 0.0
    %1683 = vmatmul.mubr.f32.gmra.mrb[0].mxu0 %v1491
    %v1684 = vpop.f32.mrb[0].mxu0
    %v1685 = vadd.f32 %v1576, %v1684
    %v1686 = vpop.f32.mrb[0].mxu0
    %1687 = vmatprep.mubr.f32.mxu0 0.0
    %1688 = vmatmul.mubr.f32.gmra.mrb[0].mxu0 %v1492
    %v1689 = vpop.f32.mrb[0].mxu0
    %v1690 = vadd.f32 %v1576, %v1689
    %v1691 = vpop.f32.mrb[0].mxu0
    %1692 = vmatprep.mubr.f32.mxu0 0.0
    %1693 = vmatmul.mubr.f32.gmra.mrb[0].mxu0 %v1493
    %v1694 = vpop.f32.mrb[0].mxu0
    %v1695 = vadd.f32 %v1576, %v1694
    %v1696 = vpop.f32.mrb[0].mxu0
    %1697 = vmatprep.mubr.f32.mxu0 0.0
    %1698 = vmatmul.mubr.f32.gmra.mrb[0].mxu0 %v1494
    %v1699 = vpop.f32.mrb[0].mxu0
    %v1700 = vadd.f32 %v1576, %v1699
    %v1701 = vpop.f32.mrb[0].mxu0
    %1702 = vmatprep.mubr.f32.mxu0 0.0
    %1703 = vmatmul.mubr.f32.gmra.mrb[0].mxu0 %v1495
    %v1704 = vpop.f32.mrb[0].mxu0
    %v1705 = vadd.f32 %v1576, %v1704
    %v1706 = vpop.f32.mrb[0].mxu0
    %1707 = vdwg.mxu0
    %v1708 = vld [vmem:[#allocation4] sm:$0xff]
    %v1709 = vld [vmem:[#allocation4 + $0x8] sm:$0xff]
    %v1710 = vld [vmem:[#allocation4 + $0x10] sm:$0xff]
    %v1711 = vld [vmem:[#allocation4 + $0x18] sm:$0xff]
    %v1712 = vld [vmem:[#allocation4 + $0x20] sm:$0xff]
    %v1713 = vld [vmem:[#allocation4 + $0x28] sm:$0xff]
    %v1714 = vld [vmem:[#allocation4 + $0x30] sm:$0xff]
    %v1715 = vld [vmem:[#allocation4 + $0x38] sm:$0xff]
    %v1716 = vld [vmem:[#allocation4 + $0x40] sm:$0xff]
    %v1717 = vld [vmem:[#allocation4 + $0x48] sm:$0xff]
    %v1718 = vld [vmem:[#allocation4 + $0x50] sm:$0xff]
    %v1719 = vld [vmem:[#allocation4 + $0x58] sm:$0xff]
    %v1720 = vld [vmem:[#allocation4 + $0x60] sm:$0xf]
    %v1721 = vadd.f32 %v1708, %v1645
    %v1722 = vadd.f32 %v1709, %v1650
    %v1723 = vadd.f32 %v1710, %v1655
    %v1724 = vadd.f32 %v1711, %v1660
    %v1725 = vadd.f32 %v1712, %v1665
    %v1726 = vadd.f32 %v1713, %v1670
    %v1727 = vadd.f32 %v1714, %v1675
    %v1728 = vadd.f32 %v1715, %v1680
    %v1729 = vadd.f32 %v1716, %v1685
    %v1730 = vadd.f32 %v1717, %v1690
    %v1731 = vadd.f32 %v1718, %v1695
    %v1732 = vadd.f32 %v1719, %v1700
    %v1733 = vadd.f32 %v1720, %v1705
    %vm1734 = vcmp.gt.f32.partialorder %v1721, 0.5
    %vm1735 = vcmp.gt.f32.partialorder %v1722, 0.5
    %vm1736 = vcmp.gt.f32.partialorder %v1723, 0.5
    %vm1737 = vcmp.gt.f32.partialorder %v1724, 0.5
    %vm1738 = vcmp.gt.f32.partialorder %v1725, 0.5
    %vm1739 = vcmp.gt.f32.partialorder %v1726, 0.5
    %vm1740 = vcmp.gt.f32.partialorder %v1727, 0.5
    %vm1741 = vcmp.gt.f32.partialorder %v1728, 0.5
    %vm1742 = vcmp.gt.f32.partialorder %v1729, 0.5
    %vm1743 = vcmp.gt.f32.partialorder %v1730, 0.5
    %vm1744 = vcmp.gt.f32.partialorder %v1731, 0.5
    %vm1745 = vcmp.gt.f32.partialorder %v1732, 0.5
    %vm1746 = vcmp.gt.f32.partialorder %v1733, 0.5
    %v1747 = vsel %vm1734, 1, 0
    %v1748 = vsel %vm1735, 1, 0
    %v1749 = vsel %vm1736, 1, 0
    %v1750 = vsel %vm1737, 1, 0
    %v1751 = vsel %vm1738, 1, 0
    %v1752 = vsel %vm1739, 1, 0
    %v1753 = vsel %vm1740, 1, 0
    %v1754 = vsel %vm1741, 1, 0
    %v1755 = vsel %vm1742, 1, 0
    %v1756 = vsel %vm1743, 1, 0
    %v1757 = vsel %vm1744, 1, 0
    %v1758 = vsel %vm1745, 1, 0
    %v1759 = vsel %vm1746, 1, 0
    %v1760 = vcvt.s32.f32 %v1747
    %v1761 = vcvt.s32.f32 %v1748
    %v1762 = vcvt.s32.f32 %v1749
    %v1763 = vcvt.s32.f32 %v1750
    %v1764 = vcvt.s32.f32 %v1751
    %v1765 = vcvt.s32.f32 %v1752
    %v1766 = vcvt.s32.f32 %v1753
    %v1767 = vcvt.s32.f32 %v1754
    %v1768 = vcvt.s32.f32 %v1755
    %v1769 = vcvt.s32.f32 %v1756
    %v1770 = vcvt.s32.f32 %v1757
    %v1771 = vcvt.s32.f32 %v1758
    %v1772 = vcvt.s32.f32 %v1759
    %v1773 = vmul.f32 %v1721, 0.2
    %v1774 = vmul.f32 %v1722, 0.2
    %v1775 = vmul.f32 %v1723, 0.2
    %v1776 = vmul.f32 %v1724, 0.2
    %v1777 = vmul.f32 %v1725, 0.2
    %v1778 = vmul.f32 %v1726, 0.2
    %v1779 = vmul.f32 %v1727, 0.2
    %v1780 = vmul.f32 %v1728, 0.2
    %v1781 = vmul.f32 %v1729, 0.2
    %v1782 = vmul.f32 %v1730, 0.2
    %v1783 = vmul.f32 %v1731, 0.2
    %v1784 = vmul.f32 %v1732, 0.2
    %v1785 = vmul.f32 %v1733, 0.2
    %v1786 = vsel %vm1734, 0.0, %v1773
    %v1787 = vsel %vm1735, 0.0, %v1774
    %v1788 = vsel %vm1736, 0.0, %v1775
    %v1789 = vsel %vm1737, 0.0, %v1776
    %v1790 = vsel %vm1738, 0.0, %v1777
    %v1791 = vsel %vm1739, 0.0, %v1778
    %v1792 = vsel %vm1740, 0.0, %v1779
    %v1793 = vsel %vm1741, 0.0, %v1780
    %v1794 = vsel %vm1742, 0.0, %v1781
    %v1795 = vsel %vm1743, 0.0, %v1782
    %v1796 = vsel %vm1744, 0.0, %v1783
    %v1797 = vsel %vm1745, 0.0, %v1784
    %v1798 = vsel %vm1746, 0.0, %v1785
    %1799 = vst [vmem:[#allocation4] sm:$0xff] %v1786
    %1800 = vst [vmem:[#allocation4 + $0x8] sm:$0xff] %v1787
    %1801 = vst [vmem:[#allocation4 + $0x10] sm:$0xff] %v1788
    %1802 = vst [vmem:[#allocation4 + $0x18] sm:$0xff] %v1789
    %1803 = vst [vmem:[#allocation4 + $0x20] sm:$0xff] %v1790
    %1804 = vst [vmem:[#allocation4 + $0x28] sm:$0xff] %v1791
    %1805 = vst [vmem:[#allocation4 + $0x30] sm:$0xff] %v1792
    %1806 = vst [vmem:[#allocation4 + $0x38] sm:$0xff] %v1793
    %1807 = vst [vmem:[#allocation4 + $0x40] sm:$0xff] %v1794
    %1808 = vst [vmem:[#allocation4 + $0x48] sm:$0xff] %v1795
    %1809 = vst [vmem:[#allocation4 + $0x50] sm:$0xff] %v1796
    %1810 = vst [vmem:[#allocation4 + $0x58] sm:$0xff] %v1797
    %1811 = vst [vmem:[#allocation4 + $0x60] sm:$0xf] %v1798
    %v1812 = vadd.f32 %v1760, %v1761
    %v1813 = vadd.f32 %v1812, %v1762
    %v1814 = vadd.f32 %v1813, %v1763
    %v1815 = vadd.f32 %v1814, %v1764
    %v1816 = vadd.f32 %v1815, %v1765
    %v1817 = vadd.f32 %v1816, %v1766
    %v1818 = vadd.f32 %v1817, %v1767
    %v1819 = vadd.f32 %v1818, %v1768
    %v1820 = vadd.f32 %v1819, %v1769
    %v1821 = vadd.f32 %v1820, %v1770
    %v1822 = vadd.f32 %v1821, %v1771
    %v1823 = vsel %vm411, %v1772, 0.0
    %v1824 = vadd.f32 %v1822, %v1823
    %v1825 = vrot.slane %v1824, 4
    %v1826 = vadd.f32 %v1824, %v1825
    %v1827 = vrot.slane %v1826, 2
    %v1828 = vadd.f32 %v1826, %v1827
    %v1829 = vrot.slane %v1828, 1
    %v1830 = vadd.f32 %v1828, %v1829
    %v1831 = vadd.f32 %v671, %v1830
    %v1832 = vld [vmem:[#allocation14] sm:$0xff]
    %v1833 = vld [vmem:[#allocation14 + $0x8] sm:$0xff]
    %v1834 = vld [vmem:[#allocation14 + $0x10] sm:$0xff]
    %v1835 = vld [vmem:[#allocation14 + $0x18] sm:$0xff]
    %v1836 = vld [vmem:[#allocation14 + $0x20] sm:$0xff]
    %v1837 = vld [vmem:[#allocation14 + $0x28] sm:$0xff]
    %v1838 = vld [vmem:[#allocation14 + $0x30] sm:$0xff]
    %v1839 = vld [vmem:[#allocation14 + $0x38] sm:$0xff]
    %v1840 = vld [vmem:[#allocation14 + $0x40] sm:$0xff]
    %v1841 = vld [vmem:[#allocation14 + $0x48] sm:$0xff]
    %v1842 = vld [vmem:[#allocation14 + $0x50] sm:$0xff]
    %v1843 = vld [vmem:[#allocation14 + $0x58] sm:$0xff]
    %v1844 = vld [vmem:[#allocation14 + $0x60] sm:$0xff]
    %v1845 = vld [vmem:[#allocation14 + $0x68] sm:$0xff]
    %v1846 = vld [vmem:[#allocation14 + $0x70] sm:$0xff]
    %v1847 = vld [vmem:[#allocation14 + $0x78] sm:$0xff]
    %v1848 = vld [vmem:[%s6] sm:$0x1]
    %v1850 = vlaneseq
    %v1851 = vshrl.u32 %v1850, 7
    %v1852 = vsub.s32 0, %v1851
    %v1853 = vrot.slane %v1848, %v1852
    %1855 = vmatprep.subr.mxu0 0.0
    %1856 = vmatpush1.msra.mxu0 %v1832
    %1857 = vmatprep.subr.mxu0 0.0
    %1858 = vmatpush1.msra.mxu0 %v1833
    %1859 = vmatprep.subr.mxu0 0.0
    %1860 = vmatpush1.msra.mxu0 %v1834
    %1861 = vmatprep.subr.mxu0 0.0
    %1862 = vmatpush1.msra.mxu0 %v1835
    %1863 = vmatprep.subr.mxu0 0.0
    %1864 = vmatpush1.msra.mxu0 %v1836
    %1865 = vmatprep.subr.mxu0 0.0
    %1866 = vmatpush1.msra.mxu0 %v1837
    %1867 = vmatprep.subr.mxu0 0.0
    %1868 = vmatpush1.msra.mxu0 %v1838
    %1869 = vmatprep.subr.mxu0 0.0
    %1870 = vmatpush1.msra.mxu0 %v1839
    %1871 = vmatprep.subr.mxu0 0.0
    %1872 = vmatpush1.msra.mxu0 %v1840
    %1873 = vmatprep.subr.mxu0 0.0
    %1874 = vmatpush1.msra.mxu0 %v1841
    %1875 = vmatprep.subr.mxu0 0.0
    %1876 = vmatpush1.msra.mxu0 %v1842
    %1877 = vmatprep.subr.mxu0 0.0
    %1878 = vmatpush1.msra.mxu0 %v1843
    %1879 = vmatprep.subr.mxu0 0.0
    %1880 = vmatpush1.msra.mxu0 %v1844
    %1881 = vmatprep.subr.mxu0 0.0
    %1882 = vmatpush1.msra.mxu0 %v1845
    %1883 = vmatprep.subr.mxu0 0.0
    %1884 = vmatpush1.msra.mxu0 %v1846
    %1885 = vmatprep.subr.mxu0 0.0
    %1886 = vmatpush1.msra.mxu0 %v1847
    %1887 = vmatprep.subr.mxu0 0.0
    %1888 = vmatpush1.msra.mxu0 0.0
    %1889 = vmatprep.subr.mxu0 0.0
    %1890 = vmatpush1.msra.mxu0 0.0
    %1891 = vmatprep.subr.mxu0 0.0
    %1892 = vmatpush1.msra.mxu0 0.0
    %1893 = vmatprep.subr.mxu0 0.0
    %1894 = vmatpush1.msra.mxu0 0.0
    %1895 = vmatprep.subr.mxu0 0.0
    %1896 = vmatpush1.msra.mxu0 0.0
    %1897 = vmatprep.subr.mxu0 0.0
    %1898 = vmatpush1.msra.mxu0 0.0
    %1899 = vmatprep.subr.mxu0 0.0
    %1900 = vmatpush1.msra.mxu0 0.0
    %1901 = vmatprep.subr.mxu0 0.0
    %1902 = vmatpush1.msra.mxu0 0.0
    %1903 = vmatprep.subr.mxu0 0.0
    %1904 = vmatpush1.msra.mxu0 0.0
    %1905 = vmatprep.subr.mxu0 0.0
    %1906 = vmatpush1.msra.mxu0 0.0
    %1907 = vmatprep.subr.mxu0 0.0
    %1908 = vmatpush1.msra.mxu0 0.0
    %1909 = vmatprep.subr.mxu0 0.0
    %1910 = vmatpush1.msra.mxu0 0.0
    %1911 = vmatprep.subr.mxu0 0.0
    %1912 = vmatpush1.msra.mxu0 0.0
    %1913 = vmatprep.subr.mxu0 0.0
    %1914 = vmatpush1.msra.mxu0 0.0
    %1915 = vmatprep.subr.mxu0 0.0
    %1916 = vmatpush1.msra.mxu0 0.0
    %1917 = vmatprep.subr.mxu0 0.0
    %1918 = vmatpush1.msra.mxu0 0.0
    %1919 = vmatprep.mubr.f32.mxu0 0.0
    %1920 = vmatmul.mubr.f32.gmra.mrb[0].mxu0 %v1760
    %v1921 = vpop.f32.mrb[0].mxu0
    %v1922 = vadd.f32 %v1853, %v1921
    %v1923 = vpop.f32.mrb[0].mxu0
    %1924 = vmatprep.mubr.f32.mxu0 0.0
    %1925 = vmatmul.mubr.f32.gmra.mrb[0].mxu0 %v1761
    %v1926 = vpop.f32.mrb[0].mxu0
    %v1927 = vadd.f32 %v1853, %v1926
    %v1928 = vpop.f32.mrb[0].mxu0
    %1929 = vmatprep.mubr.f32.mxu0 0.0
    %1930 = vmatmul.mubr.f32.gmra.mrb[0].mxu0 %v1762
    %v1931 = vpop.f32.mrb[0].mxu0
    %v1932 = vadd.f32 %v1853, %v1931
    %v1933 = vpop.f32.mrb[0].mxu0
    %1934 = vmatprep.mubr.f32.mxu0 0.0
    %1935 = vmatmul.mubr.f32.gmra.mrb[0].mxu0 %v1763
    %v1936 = vpop.f32.mrb[0].mxu0
    %v1937 = vadd.f32 %v1853, %v1936
    %v1938 = vpop.f32.mrb[0].mxu0
    %1939 = vmatprep.mubr.f32.mxu0 0.0
    %1940 = vmatmul.mubr.f32.gmra.mrb[0].mxu0 %v1764
    %v1941 = vpop.f32.mrb[0].mxu0
    %v1942 = vadd.f32 %v1853, %v1941
    %v1943 = vpop.f32.mrb[0].mxu0
    %1944 = vmatprep.mubr.f32.mxu0 0.0
    %1945 = vmatmul.mubr.f32.gmra.mrb[0].mxu0 %v1765
    %v1946 = vpop.f32.mrb[0].mxu0
    %v1947 = vadd.f32 %v1853, %v1946
    %v1948 = vpop.f32.mrb[0].mxu0
    %1949 = vmatprep.mubr.f32.mxu0 0.0
    %1950 = vmatmul.mubr.f32.gmra.mrb[0].mxu0 %v1766
    %v1951 = vpop.f32.mrb[0].mxu0
    %v1952 = vadd.f32 %v1853, %v1951
    %v1953 = vpop.f32.mrb[0].mxu0
    %1954 = vmatprep.mubr.f32.mxu0 0.0
    %1955 = vmatmul.mubr.f32.gmra.mrb[0].mxu0 %v1767
    %v1956 = vpop.f32.mrb[0].mxu0
    %v1957 = vadd.f32 %v1853, %v1956
    %v1958 = vpop.f32.mrb[0].mxu0
    %1959 = vmatprep.mubr.f32.mxu0 0.0
    %1960 = vmatmul.mubr.f32.gmra.mrb[0].mxu0 %v1768
    %v1961 = vpop.f32.mrb[0].mxu0
    %v1962 = vadd.f32 %v1853, %v1961
    %v1963 = vpop.f32.mrb[0].mxu0
    %1964 = vmatprep.mubr.f32.mxu0 0.0
    %1965 = vmatmul.mubr.f32.gmra.mrb[0].mxu0 %v1769
    %v1966 = vpop.f32.mrb[0].mxu0
    %v1967 = vadd.f32 %v1853, %v1966
    %v1968 = vpop.f32.mrb[0].mxu0
    %1969 = vmatprep.mubr.f32.mxu0 0.0
    %1970 = vmatmul.mubr.f32.gmra.mrb[0].mxu0 %v1770
    %v1971 = vpop.f32.mrb[0].mxu0
    %v1972 = vadd.f32 %v1853, %v1971
    %v1973 = vpop.f32.mrb[0].mxu0
    %1974 = vmatprep.mubr.f32.mxu0 0.0
    %1975 = vmatmul.mubr.f32.gmra.mrb[0].mxu0 %v1771
    %v1976 = vpop.f32.mrb[0].mxu0
    %v1977 = vadd.f32 %v1853, %v1976
    %v1978 = vpop.f32.mrb[0].mxu0
    %1979 = vmatprep.mubr.f32.mxu0 0.0
    %1980 = vmatmul.mubr.f32.gmra.mrb[0].mxu0 %v1772
    %v1981 = vpop.f32.mrb[0].mxu0
    %v1982 = vadd.f32 %v1853, %v1981
    %v1983 = vpop.f32.mrb[0].mxu0
    %1984 = vdwg.mxu0
    %v1985 = vld [vmem:[#allocation5] sm:$0xff]
    %v1986 = vld [vmem:[#allocation5 + $0x8] sm:$0xff]
    %v1987 = vld [vmem:[#allocation5 + $0x10] sm:$0xff]
    %v1988 = vld [vmem:[#allocation5 + $0x18] sm:$0xff]
    %v1989 = vld [vmem:[#allocation5 + $0x20] sm:$0xff]
    %v1990 = vld [vmem:[#allocation5 + $0x28] sm:$0xff]
    %v1991 = vld [vmem:[#allocation5 + $0x30] sm:$0xff]
    %v1992 = vld [vmem:[#allocation5 + $0x38] sm:$0xff]
    %v1993 = vld [vmem:[#allocation5 + $0x40] sm:$0xff]
    %v1994 = vld [vmem:[#allocation5 + $0x48] sm:$0xff]
    %v1995 = vld [vmem:[#allocation5 + $0x50] sm:$0xff]
    %v1996 = vld [vmem:[#allocation5 + $0x58] sm:$0xff]
    %v1997 = vld [vmem:[#allocation5 + $0x60] sm:$0xf]
    %v1998 = vadd.f32 %v1985, %v1922
    %v1999 = vadd.f32 %v1986, %v1927
    %v2000 = vadd.f32 %v1987, %v1932
    %v2001 = vadd.f32 %v1988, %v1937
    %v2002 = vadd.f32 %v1989, %v1942
    %v2003 = vadd.f32 %v1990, %v1947
    %v2004 = vadd.f32 %v1991, %v1952
    %v2005 = vadd.f32 %v1992, %v1957
    %v2006 = vadd.f32 %v1993, %v1962
    %v2007 = vadd.f32 %v1994, %v1967
    %v2008 = vadd.f32 %v1995, %v1972
    %v2009 = vadd.f32 %v1996, %v1977
    %v2010 = vadd.f32 %v1997, %v1982
    %vm2011 = vcmp.gt.f32.partialorder %v1998, 0.5
    %vm2012 = vcmp.gt.f32.partialorder %v1999, 0.5
    %vm2013 = vcmp.gt.f32.partialorder %v2000, 0.5
    %vm2014 = vcmp.gt.f32.partialorder %v2001, 0.5
    %vm2015 = vcmp.gt.f32.partialorder %v2002, 0.5
    %vm2016 = vcmp.gt.f32.partialorder %v2003, 0.5
    %vm2017 = vcmp.gt.f32.partialorder %v2004, 0.5
    %vm2018 = vcmp.gt.f32.partialorder %v2005, 0.5
    %vm2019 = vcmp.gt.f32.partialorder %v2006, 0.5
    %vm2020 = vcmp.gt.f32.partialorder %v2007, 0.5
    %vm2021 = vcmp.gt.f32.partialorder %v2008, 0.5
    %vm2022 = vcmp.gt.f32.partialorder %v2009, 0.5
    %vm2023 = vcmp.gt.f32.partialorder %v2010, 0.5
    %v2024 = vsel %vm2011, 1, 0
    %v2025 = vsel %vm2012, 1, 0
    %v2026 = vsel %vm2013, 1, 0
    %v2027 = vsel %vm2014, 1, 0
    %v2028 = vsel %vm2015, 1, 0
    %v2029 = vsel %vm2016, 1, 0
    %v2030 = vsel %vm2017, 1, 0
    %v2031 = vsel %vm2018, 1, 0
    %v2032 = vsel %vm2019, 1, 0
    %v2033 = vsel %vm2020, 1, 0
    %v2034 = vsel %vm2021, 1, 0
    %v2035 = vsel %vm2022, 1, 0
    %v2036 = vsel %vm2023, 1, 0
    %v2037 = vcvt.s32.f32 %v2024
    %v2038 = vcvt.s32.f32 %v2025
    %v2039 = vcvt.s32.f32 %v2026
    %v2040 = vcvt.s32.f32 %v2027
    %v2041 = vcvt.s32.f32 %v2028
    %v2042 = vcvt.s32.f32 %v2029
    %v2043 = vcvt.s32.f32 %v2030
    %v2044 = vcvt.s32.f32 %v2031
    %v2045 = vcvt.s32.f32 %v2032
    %v2046 = vcvt.s32.f32 %v2033
    %v2047 = vcvt.s32.f32 %v2034
    %v2048 = vcvt.s32.f32 %v2035
    %v2049 = vcvt.s32.f32 %v2036
    %v2050 = vmul.f32 %v1998, 0.2
    %v2051 = vmul.f32 %v1999, 0.2
    %v2052 = vmul.f32 %v2000, 0.2
    %v2053 = vmul.f32 %v2001, 0.2
    %v2054 = vmul.f32 %v2002, 0.2
    %v2055 = vmul.f32 %v2003, 0.2
    %v2056 = vmul.f32 %v2004, 0.2
    %v2057 = vmul.f32 %v2005, 0.2
    %v2058 = vmul.f32 %v2006, 0.2
    %v2059 = vmul.f32 %v2007, 0.2
    %v2060 = vmul.f32 %v2008, 0.2
    %v2061 = vmul.f32 %v2009, 0.2
    %v2062 = vmul.f32 %v2010, 0.2
    %v2063 = vsel %vm2011, 0.0, %v2050
    %v2064 = vsel %vm2012, 0.0, %v2051
    %v2065 = vsel %vm2013, 0.0, %v2052
    %v2066 = vsel %vm2014, 0.0, %v2053
    %v2067 = vsel %vm2015, 0.0, %v2054
    %v2068 = vsel %vm2016, 0.0, %v2055
    %v2069 = vsel %vm2017, 0.0, %v2056
    %v2070 = vsel %vm2018, 0.0, %v2057
    %v2071 = vsel %vm2019, 0.0, %v2058
    %v2072 = vsel %vm2020, 0.0, %v2059
    %v2073 = vsel %vm2021, 0.0, %v2060
    %v2074 = vsel %vm2022, 0.0, %v2061
    %v2075 = vsel %vm2023, 0.0, %v2062
    %2076 = vst [vmem:[#allocation5] sm:$0xff] %v2063
    %2077 = vst [vmem:[#allocation5 + $0x8] sm:$0xff] %v2064
    %2078 = vst [vmem:[#allocation5 + $0x10] sm:$0xff] %v2065
    %2079 = vst [vmem:[#allocation5 + $0x18] sm:$0xff] %v2066
    %2080 = vst [vmem:[#allocation5 + $0x20] sm:$0xff] %v2067
    %2081 = vst [vmem:[#allocation5 + $0x28] sm:$0xff] %v2068
    %2082 = vst [vmem:[#allocation5 + $0x30] sm:$0xff] %v2069
    %2083 = vst [vmem:[#allocation5 + $0x38] sm:$0xff] %v2070
    %2084 = vst [vmem:[#allocation5 + $0x40] sm:$0xff] %v2071
    %2085 = vst [vmem:[#allocation5 + $0x48] sm:$0xff] %v2072
    %2086 = vst [vmem:[#allocation5 + $0x50] sm:$0xff] %v2073
    %2087 = vst [vmem:[#allocation5 + $0x58] sm:$0xff] %v2074
    %2088 = vst [vmem:[#allocation5 + $0x60] sm:$0xf] %v2075
    %v2089 = vadd.f32 %v2037, %v2038
    %v2090 = vadd.f32 %v2089, %v2039
    %v2091 = vadd.f32 %v2090, %v2040
    %v2092 = vadd.f32 %v2091, %v2041
    %v2093 = vadd.f32 %v2092, %v2042
    %v2094 = vadd.f32 %v2093, %v2043
    %v2095 = vadd.f32 %v2094, %v2044
    %v2096 = vadd.f32 %v2095, %v2045
    %v2097 = vadd.f32 %v2096, %v2046
    %v2098 = vadd.f32 %v2097, %v2047
    %v2099 = vadd.f32 %v2098, %v2048
    %v2100 = vsel %vm411, %v2049, 0.0
    %v2101 = vadd.f32 %v2099, %v2100
    %v2102 = vrot.slane %v2101, 4
    %v2103 = vadd.f32 %v2101, %v2102
    %v2104 = vrot.slane %v2103, 2
    %v2105 = vadd.f32 %v2103, %v2104
    %v2106 = vrot.slane %v2105, 1
    %v2107 = vadd.f32 %v2105, %v2106
    %v2108 = vadd.f32 %v922, %v2107
    %v2109 = vld [vmem:[#allocation16] sm:$0xff]
    %v2110 = vld [vmem:[#allocation16 + $0x8] sm:$0xff]
    %v2111 = vld [vmem:[#allocation16 + $0x10] sm:$0xff]
    %v2112 = vld [vmem:[#allocation16 + $0x18] sm:$0xff]
    %v2113 = vld [vmem:[#allocation16 + $0x20] sm:$0xff]
    %v2114 = vld [vmem:[#allocation16 + $0x28] sm:$0xff]
    %v2115 = vld [vmem:[#allocation16 + $0x30] sm:$0xff]
    %v2116 = vld [vmem:[#allocation16 + $0x38] sm:$0xff]
    %v2117 = vld [vmem:[#allocation16 + $0x40] sm:$0xff]
    %v2118 = vld [vmem:[#allocation16 + $0x48] sm:$0xff]
    %v2119 = vld [vmem:[#allocation16 + $0x50] sm:$0xff]
    %v2120 = vld [vmem:[#allocation16 + $0x58] sm:$0xff]
    %v2121 = vld [vmem:[#allocation16 + $0x60] sm:$0xff]
    %v2122 = vld [vmem:[#allocation16 + $0x68] sm:$0xff]
    %v2123 = vld [vmem:[#allocation16 + $0x70] sm:$0xff]
    %v2124 = vld [vmem:[#allocation16 + $0x78] sm:$0xff]
    %v2125 = vld [vmem:[%s8] sm:$0x1]
    %v2127 = vlaneseq
    %v2128 = vshrl.u32 %v2127, 7
    %v2129 = vsub.s32 0, %v2128
    %v2130 = vrot.slane %v2125, %v2129
    %2132 = vmatprep.subr.mxu0 0.0
    %2133 = vmatpush1.msra.mxu0 %v2109
    %2134 = vmatprep.subr.mxu0 0.0
    %2135 = vmatpush1.msra.mxu0 %v2110
    %2136 = vmatprep.subr.mxu0 0.0
    %2137 = vmatpush1.msra.mxu0 %v2111
    %2138 = vmatprep.subr.mxu0 0.0
    %2139 = vmatpush1.msra.mxu0 %v2112
    %2140 = vmatprep.subr.mxu0 0.0
    %2141 = vmatpush1.msra.mxu0 %v2113
    %2142 = vmatprep.subr.mxu0 0.0
    %2143 = vmatpush1.msra.mxu0 %v2114
    %2144 = vmatprep.subr.mxu0 0.0
    %2145 = vmatpush1.msra.mxu0 %v2115
    %2146 = vmatprep.subr.mxu0 0.0
    %2147 = vmatpush1.msra.mxu0 %v2116
    %2148 = vmatprep.subr.mxu0 0.0
    %2149 = vmatpush1.msra.mxu0 %v2117
    %2150 = vmatprep.subr.mxu0 0.0
    %2151 = vmatpush1.msra.mxu0 %v2118
    %2152 = vmatprep.subr.mxu0 0.0
    %2153 = vmatpush1.msra.mxu0 %v2119
    %2154 = vmatprep.subr.mxu0 0.0
    %2155 = vmatpush1.msra.mxu0 %v2120
    %2156 = vmatprep.subr.mxu0 0.0
    %2157 = vmatpush1.msra.mxu0 %v2121
    %2158 = vmatprep.subr.mxu0 0.0
    %2159 = vmatpush1.msra.mxu0 %v2122
    %2160 = vmatprep.subr.mxu0 0.0
    %2161 = vmatpush1.msra.mxu0 %v2123
    %2162 = vmatprep.subr.mxu0 0.0
    %2163 = vmatpush1.msra.mxu0 %v2124
    %2164 = vmatprep.subr.mxu0 0.0
    %2165 = vmatpush1.msra.mxu0 0.0
    %2166 = vmatprep.subr.mxu0 0.0
    %2167 = vmatpush1.msra.mxu0 0.0
    %2168 = vmatprep.subr.mxu0 0.0
    %2169 = vmatpush1.msra.mxu0 0.0
    %2170 = vmatprep.subr.mxu0 0.0
    %2171 = vmatpush1.msra.mxu0 0.0
    %2172 = vmatprep.subr.mxu0 0.0
    %2173 = vmatpush1.msra.mxu0 0.0
    %2174 = vmatprep.subr.mxu0 0.0
    %2175 = vmatpush1.msra.mxu0 0.0
    %2176 = vmatprep.subr.mxu0 0.0
    %2177 = vmatpush1.msra.mxu0 0.0
    %2178 = vmatprep.subr.mxu0 0.0
    %2179 = vmatpush1.msra.mxu0 0.0
    %2180 = vmatprep.subr.mxu0 0.0
    %2181 = vmatpush1.msra.mxu0 0.0
    %2182 = vmatprep.subr.mxu0 0.0
    %2183 = vmatpush1.msra.mxu0 0.0
    %2184 = vmatprep.subr.mxu0 0.0
    %2185 = vmatpush1.msra.mxu0 0.0
    %2186 = vmatprep.subr.mxu0 0.0
    %2187 = vmatpush1.msra.mxu0 0.0
    %2188 = vmatprep.subr.mxu0 0.0
    %2189 = vmatpush1.msra.mxu0 0.0
    %2190 = vmatprep.subr.mxu0 0.0
    %2191 = vmatpush1.msra.mxu0 0.0
    %2192 = vmatprep.subr.mxu0 0.0
    %2193 = vmatpush1.msra.mxu0 0.0
    %2194 = vmatprep.subr.mxu0 0.0
    %2195 = vmatpush1.msra.mxu0 0.0
    %2196 = vmatprep.mubr.f32.mxu0 0.0
    %2197 = vmatmul.mubr.f32.gmra.mrb[0].mxu0 %v2037
    %v2198 = vpop.f32.mrb[0].mxu0
    %v2199 = vadd.f32 %v2130, %v2198
    %v2200 = vpop.f32.mrb[0].mxu0
    %2201 = vmatprep.mubr.f32.mxu0 0.0
    %2202 = vmatmul.mubr.f32.gmra.mrb[0].mxu0 %v2038
    %v2203 = vpop.f32.mrb[0].mxu0
    %v2204 = vadd.f32 %v2130, %v2203
    %v2205 = vpop.f32.mrb[0].mxu0
    %2206 = vmatprep.mubr.f32.mxu0 0.0
    %2207 = vmatmul.mubr.f32.gmra.mrb[0].mxu0 %v2039
    %v2208 = vpop.f32.mrb[0].mxu0
    %v2209 = vadd.f32 %v2130, %v2208
    %v2210 = vpop.f32.mrb[0].mxu0
    %2211 = vmatprep.mubr.f32.mxu0 0.0
    %2212 = vmatmul.mubr.f32.gmra.mrb[0].mxu0 %v2040
    %v2213 = vpop.f32.mrb[0].mxu0
    %v2214 = vadd.f32 %v2130, %v2213
    %v2215 = vpop.f32.mrb[0].mxu0
    %2216 = vmatprep.mubr.f32.mxu0 0.0
    %2217 = vmatmul.mubr.f32.gmra.mrb[0].mxu0 %v2041
    %v2218 = vpop.f32.mrb[0].mxu0
    %v2219 = vadd.f32 %v2130, %v2218
    %v2220 = vpop.f32.mrb[0].mxu0
    %2221 = vmatprep.mubr.f32.mxu0 0.0
    %2222 = vmatmul.mubr.f32.gmra.mrb[0].mxu0 %v2042
    %v2223 = vpop.f32.mrb[0].mxu0
    %v2224 = vadd.f32 %v2130, %v2223
    %v2225 = vpop.f32.mrb[0].mxu0
    %2226 = vmatprep.mubr.f32.mxu0 0.0
    %2227 = vmatmul.mubr.f32.gmra.mrb[0].mxu0 %v2043
    %v2228 = vpop.f32.mrb[0].mxu0
    %v2229 = vadd.f32 %v2130, %v2228
    %v2230 = vpop.f32.mrb[0].mxu0
    %2231 = vmatprep.mubr.f32.mxu0 0.0
    %2232 = vmatmul.mubr.f32.gmra.mrb[0].mxu0 %v2044
    %v2233 = vpop.f32.mrb[0].mxu0
    %v2234 = vadd.f32 %v2130, %v2233
    %v2235 = vpop.f32.mrb[0].mxu0
    %2236 = vmatprep.mubr.f32.mxu0 0.0
    %2237 = vmatmul.mubr.f32.gmra.mrb[0].mxu0 %v2045
    %v2238 = vpop.f32.mrb[0].mxu0
    %v2239 = vadd.f32 %v2130, %v2238
    %v2240 = vpop.f32.mrb[0].mxu0
    %2241 = vmatprep.mubr.f32.mxu0 0.0
    %2242 = vmatmul.mubr.f32.gmra.mrb[0].mxu0 %v2046
    %v2243 = vpop.f32.mrb[0].mxu0
    %v2244 = vadd.f32 %v2130, %v2243
    %v2245 = vpop.f32.mrb[0].mxu0
    %2246 = vmatprep.mubr.f32.mxu0 0.0
    %2247 = vmatmul.mubr.f32.gmra.mrb[0].mxu0 %v2047
    %v2248 = vpop.f32.mrb[0].mxu0
    %v2249 = vadd.f32 %v2130, %v2248
    %v2250 = vpop.f32.mrb[0].mxu0
    %2251 = vmatprep.mubr.f32.mxu0 0.0
    %2252 = vmatmul.mubr.f32.gmra.mrb[0].mxu0 %v2048
    %v2253 = vpop.f32.mrb[0].mxu0
    %v2254 = vadd.f32 %v2130, %v2253
    %v2255 = vpop.f32.mrb[0].mxu0
    %2256 = vmatprep.mubr.f32.mxu0 0.0
    %2257 = vmatmul.mubr.f32.gmra.mrb[0].mxu0 %v2049
    %v2258 = vpop.f32.mrb[0].mxu0
    %v2259 = vadd.f32 %v2130, %v2258
    %v2260 = vpop.f32.mrb[0].mxu0
    %2261 = vdwg.mxu0
    %v2262 = vld [vmem:[#allocation6] sm:$0xff]
    %v2263 = vld [vmem:[#allocation6 + $0x8] sm:$0xff]
    %v2264 = vld [vmem:[#allocation6 + $0x10] sm:$0xff]
    %v2265 = vld [vmem:[#allocation6 + $0x18] sm:$0xff]
    %v2266 = vld [vmem:[#allocation6 + $0x20] sm:$0xff]
    %v2267 = vld [vmem:[#allocation6 + $0x28] sm:$0xff]
    %v2268 = vld [vmem:[#allocation6 + $0x30] sm:$0xff]
    %v2269 = vld [vmem:[#allocation6 + $0x38] sm:$0xff]
    %v2270 = vld [vmem:[#allocation6 + $0x40] sm:$0xff]
    %v2271 = vld [vmem:[#allocation6 + $0x48] sm:$0xff]
    %v2272 = vld [vmem:[#allocation6 + $0x50] sm:$0xff]
    %v2273 = vld [vmem:[#allocation6 + $0x58] sm:$0xff]
    %v2274 = vld [vmem:[#allocation6 + $0x60] sm:$0xf]
    %v2275 = vadd.f32 %v2262, %v2199
    %v2276 = vadd.f32 %v2263, %v2204
    %v2277 = vadd.f32 %v2264, %v2209
    %v2278 = vadd.f32 %v2265, %v2214
    %v2279 = vadd.f32 %v2266, %v2219
    %v2280 = vadd.f32 %v2267, %v2224
    %v2281 = vadd.f32 %v2268, %v2229
    %v2282 = vadd.f32 %v2269, %v2234
    %v2283 = vadd.f32 %v2270, %v2239
    %v2284 = vadd.f32 %v2271, %v2244
    %v2285 = vadd.f32 %v2272, %v2249
    %v2286 = vadd.f32 %v2273, %v2254
    %v2287 = vadd.f32 %v2274, %v2259
    %vm2288 = vcmp.gt.f32.partialorder %v2275, 0.5
    %vm2289 = vcmp.gt.f32.partialorder %v2276, 0.5
    %vm2290 = vcmp.gt.f32.partialorder %v2277, 0.5
    %vm2291 = vcmp.gt.f32.partialorder %v2278, 0.5
    %vm2292 = vcmp.gt.f32.partialorder %v2279, 0.5
    %vm2293 = vcmp.gt.f32.partialorder %v2280, 0.5
    %vm2294 = vcmp.gt.f32.partialorder %v2281, 0.5
    %vm2295 = vcmp.gt.f32.partialorder %v2282, 0.5
    %vm2296 = vcmp.gt.f32.partialorder %v2283, 0.5
    %vm2297 = vcmp.gt.f32.partialorder %v2284, 0.5
    %vm2298 = vcmp.gt.f32.partialorder %v2285, 0.5
    %vm2299 = vcmp.gt.f32.partialorder %v2286, 0.5
    %vm2300 = vcmp.gt.f32.partialorder %v2287, 0.5
    %v2301 = vsel %vm2288, 1, 0
    %v2302 = vsel %vm2289, 1, 0
    %v2303 = vsel %vm2290, 1, 0
    %v2304 = vsel %vm2291, 1, 0
    %v2305 = vsel %vm2292, 1, 0
    %v2306 = vsel %vm2293, 1, 0
    %v2307 = vsel %vm2294, 1, 0
    %v2308 = vsel %vm2295, 1, 0
    %v2309 = vsel %vm2296, 1, 0
    %v2310 = vsel %vm2297, 1, 0
    %v2311 = vsel %vm2298, 1, 0
    %v2312 = vsel %vm2299, 1, 0
    %v2313 = vsel %vm2300, 1, 0
    %v2314 = vcvt.s32.f32 %v2301
    %v2315 = vcvt.s32.f32 %v2302
    %v2316 = vcvt.s32.f32 %v2303
    %v2317 = vcvt.s32.f32 %v2304
    %v2318 = vcvt.s32.f32 %v2305
    %v2319 = vcvt.s32.f32 %v2306
    %v2320 = vcvt.s32.f32 %v2307
    %v2321 = vcvt.s32.f32 %v2308
    %v2322 = vcvt.s32.f32 %v2309
    %v2323 = vcvt.s32.f32 %v2310
    %v2324 = vcvt.s32.f32 %v2311
    %v2325 = vcvt.s32.f32 %v2312
    %v2326 = vcvt.s32.f32 %v2313
    %v2327 = vmul.f32 %v2275, 0.2
    %v2328 = vmul.f32 %v2276, 0.2
    %v2329 = vmul.f32 %v2277, 0.2
    %v2330 = vmul.f32 %v2278, 0.2
    %v2331 = vmul.f32 %v2279, 0.2
    %v2332 = vmul.f32 %v2280, 0.2
    %v2333 = vmul.f32 %v2281, 0.2
    %v2334 = vmul.f32 %v2282, 0.2
    %v2335 = vmul.f32 %v2283, 0.2
    %v2336 = vmul.f32 %v2284, 0.2
    %v2337 = vmul.f32 %v2285, 0.2
    %v2338 = vmul.f32 %v2286, 0.2
    %v2339 = vmul.f32 %v2287, 0.2
    %v2340 = vsel %vm2288, 0.0, %v2327
    %v2341 = vsel %vm2289, 0.0, %v2328
    %v2342 = vsel %vm2290, 0.0, %v2329
    %v2343 = vsel %vm2291, 0.0, %v2330
    %v2344 = vsel %vm2292, 0.0, %v2331
    %v2345 = vsel %vm2293, 0.0, %v2332
    %v2346 = vsel %vm2294, 0.0, %v2333
    %v2347 = vsel %vm2295, 0.0, %v2334
    %v2348 = vsel %vm2296, 0.0, %v2335
    %v2349 = vsel %vm2297, 0.0, %v2336
    %v2350 = vsel %vm2298, 0.0, %v2337
    %v2351 = vsel %vm2299, 0.0, %v2338
    %v2352 = vsel %vm2300, 0.0, %v2339
    %2353 = vst [vmem:[#allocation6] sm:$0xff] %v2340
    %2354 = vst [vmem:[#allocation6 + $0x8] sm:$0xff] %v2341
    %2355 = vst [vmem:[#allocation6 + $0x10] sm:$0xff] %v2342
    %2356 = vst [vmem:[#allocation6 + $0x18] sm:$0xff] %v2343
    %2357 = vst [vmem:[#allocation6 + $0x20] sm:$0xff] %v2344
    %2358 = vst [vmem:[#allocation6 + $0x28] sm:$0xff] %v2345
    %2359 = vst [vmem:[#allocation6 + $0x30] sm:$0xff] %v2346
    %2360 = vst [vmem:[#allocation6 + $0x38] sm:$0xff] %v2347
    %2361 = vst [vmem:[#allocation6 + $0x40] sm:$0xff] %v2348
    %2362 = vst [vmem:[#allocation6 + $0x48] sm:$0xff] %v2349
    %2363 = vst [vmem:[#allocation6 + $0x50] sm:$0xff] %v2350
    %2364 = vst [vmem:[#allocation6 + $0x58] sm:$0xff] %v2351
    %2365 = vst [vmem:[#allocation6 + $0x60] sm:$0xf] %v2352
    %v2366 = vadd.f32 %v2314, %v2315
    %v2367 = vadd.f32 %v2366, %v2316
    %v2368 = vadd.f32 %v2367, %v2317
    %v2369 = vadd.f32 %v2368, %v2318
    %v2370 = vadd.f32 %v2369, %v2319
    %v2371 = vadd.f32 %v2370, %v2320
    %v2372 = vadd.f32 %v2371, %v2321
    %v2373 = vadd.f32 %v2372, %v2322
    %v2374 = vadd.f32 %v2373, %v2323
    %v2375 = vadd.f32 %v2374, %v2324
    %v2376 = vadd.f32 %v2375, %v2325
    %v2377 = vsel %vm411, %v2326, 0.0
    %v2378 = vadd.f32 %v2376, %v2377
    %v2379 = vrot.slane %v2378, 4
    %v2380 = vadd.f32 %v2378, %v2379
    %v2381 = vrot.slane %v2380, 2
    %v2382 = vadd.f32 %v2380, %v2381
    %v2383 = vrot.slane %v2382, 1
    %v2384 = vadd.f32 %v2382, %v2383
    %v2385 = vadd.f32 %v1173, %v2384
    %v2386 = vld [vmem:[#allocation17] sm:$0xff]
    %v2387 = vld [vmem:[#allocation17 + $0x8] sm:$0xff]
    %v2388 = vld [vmem:[#allocation17 + $0x10] sm:$0xff]
    %v2389 = vld [vmem:[#allocation17 + $0x18] sm:$0xff]
    %v2390 = vld [vmem:[#allocation17 + $0x20] sm:$0xff]
    %v2391 = vld [vmem:[#allocation17 + $0x28] sm:$0xff]
    %v2392 = vld [vmem:[#allocation17 + $0x30] sm:$0xff]
    %v2393 = vld [vmem:[#allocation17 + $0x38] sm:$0xff]
    %v2394 = vld [vmem:[#allocation17 + $0x40] sm:$0xff]
    %v2395 = vld [vmem:[#allocation17 + $0x48] sm:$0xff]
    %v2396 = vld [vmem:[#allocation17 + $0x50] sm:$0xff]
    %v2397 = vld [vmem:[#allocation17 + $0x58] sm:$0xff]
    %v2398 = vld [vmem:[#allocation17 + $0x60] sm:$0xff]
    %v2399 = vld [vmem:[#allocation17 + $0x68] sm:$0xff]
    %v2400 = vld [vmem:[#allocation17 + $0x70] sm:$0xff]
    %v2401 = vld [vmem:[#allocation17 + $0x78] sm:$0xff]
    %v2402 = vld [vmem:[%s10] sm:$0x1]
    %v2404 = vlaneseq
    %v2405 = vshrl.u32 %v2404, 7
    %v2406 = vsub.s32 0, %v2405
    %v2407 = vrot.slane %v2402, %v2406
    %2409 = vmatprep.subr.mxu0 0.0
    %2410 = vmatpush1.msra.mxu0 %v2386
    %2411 = vmatprep.subr.mxu0 0.0
    %2412 = vmatpush1.msra.mxu0 %v2387
    %2413 = vmatprep.subr.mxu0 0.0
    %2414 = vmatpush1.msra.mxu0 %v2388
    %2415 = vmatprep.subr.mxu0 0.0
    %2416 = vmatpush1.msra.mxu0 %v2389
    %2417 = vmatprep.subr.mxu0 0.0
    %2418 = vmatpush1.msra.mxu0 %v2390
    %2419 = vmatprep.subr.mxu0 0.0
    %2420 = vmatpush1.msra.mxu0 %v2391
    %2421 = vmatprep.subr.mxu0 0.0
    %2422 = vmatpush1.msra.mxu0 %v2392
    %2423 = vmatprep.subr.mxu0 0.0
    %2424 = vmatpush1.msra.mxu0 %v2393
    %2425 = vmatprep.subr.mxu0 0.0
    %2426 = vmatpush1.msra.mxu0 %v2394
    %2427 = vmatprep.subr.mxu0 0.0
    %2428 = vmatpush1.msra.mxu0 %v2395
    %2429 = vmatprep.subr.mxu0 0.0
    %2430 = vmatpush1.msra.mxu0 %v2396
    %2431 = vmatprep.subr.mxu0 0.0
    %2432 = vmatpush1.msra.mxu0 %v2397
    %2433 = vmatprep.subr.mxu0 0.0
    %2434 = vmatpush1.msra.mxu0 %v2398
    %2435 = vmatprep.subr.mxu0 0.0
    %2436 = vmatpush1.msra.mxu0 %v2399
    %2437 = vmatprep.subr.mxu0 0.0
    %2438 = vmatpush1.msra.mxu0 %v2400
    %2439 = vmatprep.subr.mxu0 0.0
    %2440 = vmatpush1.msra.mxu0 %v2401
    %2441 = vmatprep.subr.mxu0 0.0
    %2442 = vmatpush1.msra.mxu0 0.0
    %2443 = vmatprep.subr.mxu0 0.0
    %2444 = vmatpush1.msra.mxu0 0.0
    %2445 = vmatprep.subr.mxu0 0.0
    %2446 = vmatpush1.msra.mxu0 0.0
    %2447 = vmatprep.subr.mxu0 0.0
    %2448 = vmatpush1.msra.mxu0 0.0
    %2449 = vmatprep.subr.mxu0 0.0
    %2450 = vmatpush1.msra.mxu0 0.0
    %2451 = vmatprep.subr.mxu0 0.0
    %2452 = vmatpush1.msra.mxu0 0.0
    %2453 = vmatprep.subr.mxu0 0.0
    %2454 = vmatpush1.msra.mxu0 0.0
    %2455 = vmatprep.subr.mxu0 0.0
    %2456 = vmatpush1.msra.mxu0 0.0
    %2457 = vmatprep.subr.mxu0 0.0
    %2458 = vmatpush1.msra.mxu0 0.0
    %2459 = vmatprep.subr.mxu0 0.0
    %2460 = vmatpush1.msra.mxu0 0.0
    %2461 = vmatprep.subr.mxu0 0.0
    %2462 = vmatpush1.msra.mxu0 0.0
    %2463 = vmatprep.subr.mxu0 0.0
    %2464 = vmatpush1.msra.mxu0 0.0
    %2465 = vmatprep.subr.mxu0 0.0
    %2466 = vmatpush1.msra.mxu0 0.0
    %2467 = vmatprep.subr.mxu0 0.0
    %2468 = vmatpush1.msra.mxu0 0.0
    %2469 = vmatprep.subr.mxu0 0.0
    %2470 = vmatpush1.msra.mxu0 0.0
    %2471 = vmatprep.subr.mxu0 0.0
    %2472 = vmatpush1.msra.mxu0 0.0
    %2473 = vmatprep.mubr.f32.mxu0 0.0
    %2474 = vmatmul.mubr.f32.gmra.mrb[0].mxu0 %v2314
    %v2475 = vpop.f32.mrb[0].mxu0
    %v2476 = vadd.f32 %v2407, %v2475
    %v2477 = vpop.f32.mrb[0].mxu0
    %2478 = vmatprep.mubr.f32.mxu0 0.0
    %2479 = vmatmul.mubr.f32.gmra.mrb[0].mxu0 %v2315
    %v2480 = vpop.f32.mrb[0].mxu0
    %v2481 = vadd.f32 %v2407, %v2480
    %v2482 = vpop.f32.mrb[0].mxu0
    %2483 = vmatprep.mubr.f32.mxu0 0.0
    %2484 = vmatmul.mubr.f32.gmra.mrb[0].mxu0 %v2316
    %v2485 = vpop.f32.mrb[0].mxu0
    %v2486 = vadd.f32 %v2407, %v2485
    %v2487 = vpop.f32.mrb[0].mxu0
    %2488 = vmatprep.mubr.f32.mxu0 0.0
    %2489 = vmatmul.mubr.f32.gmra.mrb[0].mxu0 %v2317
    %v2490 = vpop.f32.mrb[0].mxu0
    %v2491 = vadd.f32 %v2407, %v2490
    %v2492 = vpop.f32.mrb[0].mxu0
    %2493 = vmatprep.mubr.f32.mxu0 0.0
    %2494 = vmatmul.mubr.f32.gmra.mrb[0].mxu0 %v2318
    %v2495 = vpop.f32.mrb[0].mxu0
    %v2496 = vadd.f32 %v2407, %v2495
    %v2497 = vpop.f32.mrb[0].mxu0
    %2498 = vmatprep.mubr.f32.mxu0 0.0
    %2499 = vmatmul.mubr.f32.gmra.mrb[0].mxu0 %v2319
    %v2500 = vpop.f32.mrb[0].mxu0
    %v2501 = vadd.f32 %v2407, %v2500
    %v2502 = vpop.f32.mrb[0].mxu0
    %2503 = vmatprep.mubr.f32.mxu0 0.0
    %2504 = vmatmul.mubr.f32.gmra.mrb[0].mxu0 %v2320
    %v2505 = vpop.f32.mrb[0].mxu0
    %v2506 = vadd.f32 %v2407, %v2505
    %v2507 = vpop.f32.mrb[0].mxu0
    %2508 = vmatprep.mubr.f32.mxu0 0.0
    %2509 = vmatmul.mubr.f32.gmra.mrb[0].mxu0 %v2321
    %v2510 = vpop.f32.mrb[0].mxu0
    %v2511 = vadd.f32 %v2407, %v2510
    %v2512 = vpop.f32.mrb[0].mxu0
    %2513 = vmatprep.mubr.f32.mxu0 0.0
    %2514 = vmatmul.mubr.f32.gmra.mrb[0].mxu0 %v2322
    %v2515 = vpop.f32.mrb[0].mxu0
    %v2516 = vadd.f32 %v2407, %v2515
    %v2517 = vpop.f32.mrb[0].mxu0
    %2518 = vmatprep.mubr.f32.mxu0 0.0
    %2519 = vmatmul.mubr.f32.gmra.mrb[0].mxu0 %v2323
    %v2520 = vpop.f32.mrb[0].mxu0
    %v2521 = vadd.f32 %v2407, %v2520
    %v2522 = vpop.f32.mrb[0].mxu0
    %2523 = vmatprep.mubr.f32.mxu0 0.0
    %2524 = vmatmul.mubr.f32.gmra.mrb[0].mxu0 %v2324
    %v2525 = vpop.f32.mrb[0].mxu0
    %v2526 = vadd.f32 %v2407, %v2525
    %v2527 = vpop.f32.mrb[0].mxu0
    %2528 = vmatprep.mubr.f32.mxu0 0.0
    %2529 = vmatmul.mubr.f32.gmra.mrb[0].mxu0 %v2325
    %v2530 = vpop.f32.mrb[0].mxu0
    %v2531 = vadd.f32 %v2407, %v2530
    %v2532 = vpop.f32.mrb[0].mxu0
    %2533 = vmatprep.mubr.f32.mxu0 0.0
    %2534 = vmatmul.mubr.f32.gmra.mrb[0].mxu0 %v2326
    %v2535 = vpop.f32.mrb[0].mxu0
    %v2536 = vadd.f32 %v2407, %v2535
    %v2537 = vpop.f32.mrb[0].mxu0
    %2538 = vdwg.mxu0
    %v2539 = vld [vmem:[#allocation7] sm:$0xff]
    %v2540 = vld [vmem:[#allocation7 + $0x8] sm:$0xff]
    %v2541 = vld [vmem:[#allocation7 + $0x10] sm:$0xff]
    %v2542 = vld [vmem:[#allocation7 + $0x18] sm:$0xff]
    %v2543 = vld [vmem:[#allocation7 + $0x20] sm:$0xff]
    %v2544 = vld [vmem:[#allocation7 + $0x28] sm:$0xff]
    %v2545 = vld [vmem:[#allocation7 + $0x30] sm:$0xff]
    %v2546 = vld [vmem:[#allocation7 + $0x38] sm:$0xff]
    %v2547 = vld [vmem:[#allocation7 + $0x40] sm:$0xff]
    %v2548 = vld [vmem:[#allocation7 + $0x48] sm:$0xff]
    %v2549 = vld [vmem:[#allocation7 + $0x50] sm:$0xff]
    %v2550 = vld [vmem:[#allocation7 + $0x58] sm:$0xff]
    %v2551 = vld [vmem:[#allocation7 + $0x60] sm:$0xf]
    %v2552 = vadd.f32 %v2539, %v2476
    %v2553 = vadd.f32 %v2540, %v2481
    %v2554 = vadd.f32 %v2541, %v2486
    %v2555 = vadd.f32 %v2542, %v2491
    %v2556 = vadd.f32 %v2543, %v2496
    %v2557 = vadd.f32 %v2544, %v2501
    %v2558 = vadd.f32 %v2545, %v2506
    %v2559 = vadd.f32 %v2546, %v2511
    %v2560 = vadd.f32 %v2547, %v2516
    %v2561 = vadd.f32 %v2548, %v2521
    %v2562 = vadd.f32 %v2549, %v2526
    %v2563 = vadd.f32 %v2550, %v2531
    %v2564 = vadd.f32 %v2551, %v2536
    %vm2565 = vcmp.gt.f32.partialorder %v2552, 0.5
    %vm2566 = vcmp.gt.f32.partialorder %v2553, 0.5
    %vm2567 = vcmp.gt.f32.partialorder %v2554, 0.5
    %vm2568 = vcmp.gt.f32.partialorder %v2555, 0.5
    %vm2569 = vcmp.gt.f32.partialorder %v2556, 0.5
    %vm2570 = vcmp.gt.f32.partialorder %v2557, 0.5
    %vm2571 = vcmp.gt.f32.partialorder %v2558, 0.5
    %vm2572 = vcmp.gt.f32.partialorder %v2559, 0.5
    %vm2573 = vcmp.gt.f32.partialorder %v2560, 0.5
    %vm2574 = vcmp.gt.f32.partialorder %v2561, 0.5
    %vm2575 = vcmp.gt.f32.partialorder %v2562, 0.5
    %vm2576 = vcmp.gt.f32.partialorder %v2563, 0.5
    %vm2577 = vcmp.gt.f32.partialorder %v2564, 0.5
    %v2578 = vsel %vm2565, 1, 0
    %v2579 = vsel %vm2566, 1, 0
    %v2580 = vsel %vm2567, 1, 0
    %v2581 = vsel %vm2568, 1, 0
    %v2582 = vsel %vm2569, 1, 0
    %v2583 = vsel %vm2570, 1, 0
    %v2584 = vsel %vm2571, 1, 0
    %v2585 = vsel %vm2572, 1, 0
    %v2586 = vsel %vm2573, 1, 0
    %v2587 = vsel %vm2574, 1, 0
    %v2588 = vsel %vm2575, 1, 0
    %v2589 = vsel %vm2576, 1, 0
    %v2590 = vsel %vm2577, 1, 0
    %v2591 = vcvt.s32.f32 %v2578
    %v2592 = vcvt.s32.f32 %v2579
    %v2593 = vcvt.s32.f32 %v2580
    %v2594 = vcvt.s32.f32 %v2581
    %v2595 = vcvt.s32.f32 %v2582
    %v2596 = vcvt.s32.f32 %v2583
    %v2597 = vcvt.s32.f32 %v2584
    %v2598 = vcvt.s32.f32 %v2585
    %v2599 = vcvt.s32.f32 %v2586
    %v2600 = vcvt.s32.f32 %v2587
    %v2601 = vcvt.s32.f32 %v2588
    %v2602 = vcvt.s32.f32 %v2589
    %v2603 = vcvt.s32.f32 %v2590
    %v2604 = vmul.f32 %v2552, 0.2
    %v2605 = vmul.f32 %v2553, 0.2
    %v2606 = vmul.f32 %v2554, 0.2
    %v2607 = vmul.f32 %v2555, 0.2
    %v2608 = vmul.f32 %v2556, 0.2
    %v2609 = vmul.f32 %v2557, 0.2
    %v2610 = vmul.f32 %v2558, 0.2
    %v2611 = vmul.f32 %v2559, 0.2
    %v2612 = vmul.f32 %v2560, 0.2
    %v2613 = vmul.f32 %v2561, 0.2
    %v2614 = vmul.f32 %v2562, 0.2
    %v2615 = vmul.f32 %v2563, 0.2
    %v2616 = vmul.f32 %v2564, 0.2
    %v2617 = vsel %vm2565, 0.0, %v2604
    %v2618 = vsel %vm2566, 0.0, %v2605
    %v2619 = vsel %vm2567, 0.0, %v2606
    %v2620 = vsel %vm2568, 0.0, %v2607
    %v2621 = vsel %vm2569, 0.0, %v2608
    %v2622 = vsel %vm2570, 0.0, %v2609
    %v2623 = vsel %vm2571, 0.0, %v2610
    %v2624 = vsel %vm2572, 0.0, %v2611
    %v2625 = vsel %vm2573, 0.0, %v2612
    %v2626 = vsel %vm2574, 0.0, %v2613
    %v2627 = vsel %vm2575, 0.0, %v2614
    %v2628 = vsel %vm2576, 0.0, %v2615
    %v2629 = vsel %vm2577, 0.0, %v2616
    %2630 = vst [vmem:[#allocation7] sm:$0xff] %v2617
    %2631 = vst [vmem:[#allocation7 + $0x8] sm:$0xff] %v2618
    %2632 = vst [vmem:[#allocation7 + $0x10] sm:$0xff] %v2619
    %2633 = vst [vmem:[#allocation7 + $0x18] sm:$0xff] %v2620
    %2634 = vst [vmem:[#allocation7 + $0x20] sm:$0xff] %v2621
    %2635 = vst [vmem:[#allocation7 + $0x28] sm:$0xff] %v2622
    %2636 = vst [vmem:[#allocation7 + $0x30] sm:$0xff] %v2623
    %2637 = vst [vmem:[#allocation7 + $0x38] sm:$0xff] %v2624
    %2638 = vst [vmem:[#allocation7 + $0x40] sm:$0xff] %v2625
    %2639 = vst [vmem:[#allocation7 + $0x48] sm:$0xff] %v2626
    %2640 = vst [vmem:[#allocation7 + $0x50] sm:$0xff] %v2627
    %2641 = vst [vmem:[#allocation7 + $0x58] sm:$0xff] %v2628
    %2642 = vst [vmem:[#allocation7 + $0x60] sm:$0xf] %v2629
    %v2643 = vld [vmem:[#allocation19] sm:$0xff]
    %v2644 = vld [vmem:[#allocation19 + $0x8] sm:$0xff]
    %v2645 = vld [vmem:[#allocation19 + $0x10] sm:$0xff]
    %v2646 = vld [vmem:[#allocation19 + $0x18] sm:$0xff]
    %v2647 = vld [vmem:[#allocation19 + $0x20] sm:$0xff]
    %v2648 = vld [vmem:[#allocation19 + $0x28] sm:$0xff]
    %v2649 = vld [vmem:[#allocation19 + $0x30] sm:$0xff]
    %v2650 = vld [vmem:[#allocation19 + $0x38] sm:$0xff]
    %v2651 = vld [vmem:[#allocation19 + $0x40] sm:$0xff]
    %v2652 = vld [vmem:[#allocation19 + $0x48] sm:$0xff]
    %v2653 = vld [vmem:[#allocation19 + $0x50] sm:$0xff]
    %v2654 = vld [vmem:[#allocation19 + $0x58] sm:$0xff]
    %v2655 = vld [vmem:[#allocation19 + $0x60] sm:$0xf]
    %v2656 = vadd.f32 %v2643, %v2591
    %v2657 = vadd.f32 %v2644, %v2592
    %v2658 = vadd.f32 %v2645, %v2593
    %v2659 = vadd.f32 %v2646, %v2594
    %v2660 = vadd.f32 %v2647, %v2595
    %v2661 = vadd.f32 %v2648, %v2596
    %v2662 = vadd.f32 %v2649, %v2597
    %v2663 = vadd.f32 %v2650, %v2598
    %v2664 = vadd.f32 %v2651, %v2599
    %v2665 = vadd.f32 %v2652, %v2600
    %v2666 = vadd.f32 %v2653, %v2601
    %v2667 = vadd.f32 %v2654, %v2602
    %v2668 = vadd.f32 %v2655, %v2603
    %2669 = vst [vmem:[#allocation19] sm:$0xff] %v2656
    %2670 = vst [vmem:[#allocation19 + $0x8] sm:$0xff] %v2657
    %2671 = vst [vmem:[#allocation19 + $0x10] sm:$0xff] %v2658
    %2672 = vst [vmem:[#allocation19 + $0x18] sm:$0xff] %v2659
    %2673 = vst [vmem:[#allocation19 + $0x20] sm:$0xff] %v2660
    %2674 = vst [vmem:[#allocation19 + $0x28] sm:$0xff] %v2661
    %2675 = vst [vmem:[#allocation19 + $0x30] sm:$0xff] %v2662
    %2676 = vst [vmem:[#allocation19 + $0x38] sm:$0xff] %v2663
    %2677 = vst [vmem:[#allocation19 + $0x40] sm:$0xff] %v2664
    %2678 = vst [vmem:[#allocation19 + $0x48] sm:$0xff] %v2665
    %2679 = vst [vmem:[#allocation19 + $0x50] sm:$0xff] %v2666
    %2680 = vst [vmem:[#allocation19 + $0x58] sm:$0xff] %v2667
    %2681 = vst [vmem:[#allocation19 + $0x60] sm:$0xf] %v2668
    %v2682 = vld [vmem:[#allocation2] sm:$0xff]
    %v2683 = vld [vmem:[#allocation2 + $0x8] sm:$0xff]
    %v2684 = vld [vmem:[#allocation2 + $0x10] sm:$0xff]
    %v2685 = vld [vmem:[#allocation2 + $0x18] sm:$0xff]
    %v2686 = vld [vmem:[#allocation2 + $0x20] sm:$0xff]
    %v2687 = vld [vmem:[#allocation2 + $0x28] sm:$0xff]
    %v2688 = vld [vmem:[#allocation2 + $0x30] sm:$0xff]
    %v2689 = vld [vmem:[#allocation2 + $0x38] sm:$0xff]
    %v2690 = vld [vmem:[#allocation2 + $0x40] sm:$0xff]
    %v2691 = vld [vmem:[#allocation2 + $0x48] sm:$0xff]
    %v2692 = vld [vmem:[#allocation2 + $0x50] sm:$0xff]
    %v2693 = vld [vmem:[#allocation2 + $0x58] sm:$0xff]
    %v2694 = vld [vmem:[#allocation2 + $0x60] sm:$0xf]
    %v2695 = vld [vmem:[#allocation3] sm:$0xff]
    %v2696 = vld [vmem:[#allocation3 + $0x8] sm:$0xff]
    %v2697 = vld [vmem:[#allocation3 + $0x10] sm:$0xff]
    %v2698 = vld [vmem:[#allocation3 + $0x18] sm:$0xff]
    %v2699 = vld [vmem:[#allocation3 + $0x20] sm:$0xff]
    %v2700 = vld [vmem:[#allocation3 + $0x28] sm:$0xff]
    %v2701 = vld [vmem:[#allocation3 + $0x30] sm:$0xff]
    %v2702 = vld [vmem:[#allocation3 + $0x38] sm:$0xff]
    %v2703 = vld [vmem:[#allocation3 + $0x40] sm:$0xff]
    %v2704 = vld [vmem:[#allocation3 + $0x48] sm:$0xff]
    %v2705 = vld [vmem:[#allocation3 + $0x50] sm:$0xff]
    %v2706 = vld [vmem:[#allocation3 + $0x58] sm:$0xff]
    %v2707 = vld [vmem:[#allocation3 + $0x60] sm:$0xf]
    %v2708 = vadd.f32 %v2695, %v2682
    %v2709 = vadd.f32 %v2696, %v2683
    %v2710 = vadd.f32 %v2697, %v2684
    %v2711 = vadd.f32 %v2698, %v2685
    %v2712 = vadd.f32 %v2699, %v2686
    %v2713 = vadd.f32 %v2700, %v2687
    %v2714 = vadd.f32 %v2701, %v2688
    %v2715 = vadd.f32 %v2702, %v2689
    %v2716 = vadd.f32 %v2703, %v2690
    %v2717 = vadd.f32 %v2704, %v2691
    %v2718 = vadd.f32 %v2705, %v2692
    %v2719 = vadd.f32 %v2706, %v2693
    %v2720 = vadd.f32 %v2707, %v2694
    %vm2721 = vcmp.gt.f32.partialorder %v2708, 0.5
    %vm2722 = vcmp.gt.f32.partialorder %v2709, 0.5
    %vm2723 = vcmp.gt.f32.partialorder %v2710, 0.5
    %vm2724 = vcmp.gt.f32.partialorder %v2711, 0.5
    %vm2725 = vcmp.gt.f32.partialorder %v2712, 0.5
    %vm2726 = vcmp.gt.f32.partialorder %v2713, 0.5
    %vm2727 = vcmp.gt.f32.partialorder %v2714, 0.5
    %vm2728 = vcmp.gt.f32.partialorder %v2715, 0.5
    %vm2729 = vcmp.gt.f32.partialorder %v2716, 0.5
    %vm2730 = vcmp.gt.f32.partialorder %v2717, 0.5
    %vm2731 = vcmp.gt.f32.partialorder %v2718, 0.5
    %vm2732 = vcmp.gt.f32.partialorder %v2719, 0.5
    %vm2733 = vcmp.gt.f32.partialorder %v2720, 0.5
    %v2734 = vsel %vm2721, 1, 0
    %v2735 = vsel %vm2722, 1, 0
    %v2736 = vsel %vm2723, 1, 0
    %v2737 = vsel %vm2724, 1, 0
    %v2738 = vsel %vm2725, 1, 0
    %v2739 = vsel %vm2726, 1, 0
    %v2740 = vsel %vm2727, 1, 0
    %v2741 = vsel %vm2728, 1, 0
    %v2742 = vsel %vm2729, 1, 0
    %v2743 = vsel %vm2730, 1, 0
    %v2744 = vsel %vm2731, 1, 0
    %v2745 = vsel %vm2732, 1, 0
    %v2746 = vsel %vm2733, 1, 0
    %v2747 = vcvt.s32.f32 %v2734
    %v2748 = vcvt.s32.f32 %v2735
    %v2749 = vcvt.s32.f32 %v2736
    %v2750 = vcvt.s32.f32 %v2737
    %v2751 = vcvt.s32.f32 %v2738
    %v2752 = vcvt.s32.f32 %v2739
    %v2753 = vcvt.s32.f32 %v2740
    %v2754 = vcvt.s32.f32 %v2741
    %v2755 = vcvt.s32.f32 %v2742
    %v2756 = vcvt.s32.f32 %v2743
    %v2757 = vcvt.s32.f32 %v2744
    %v2758 = vcvt.s32.f32 %v2745
    %v2759 = vcvt.s32.f32 %v2746
    %v2760 = vmul.f32 %v2708, 0.2
    %v2761 = vmul.f32 %v2709, 0.2
    %v2762 = vmul.f32 %v2710, 0.2
    %v2763 = vmul.f32 %v2711, 0.2
    %v2764 = vmul.f32 %v2712, 0.2
    %v2765 = vmul.f32 %v2713, 0.2
    %v2766 = vmul.f32 %v2714, 0.2
    %v2767 = vmul.f32 %v2715, 0.2
    %v2768 = vmul.f32 %v2716, 0.2
    %v2769 = vmul.f32 %v2717, 0.2
    %v2770 = vmul.f32 %v2718, 0.2
    %v2771 = vmul.f32 %v2719, 0.2
    %v2772 = vmul.f32 %v2720, 0.2
    %v2773 = vsel %vm2721, 0.0, %v2760
    %v2774 = vsel %vm2722, 0.0, %v2761
    %v2775 = vsel %vm2723, 0.0, %v2762
    %v2776 = vsel %vm2724, 0.0, %v2763
    %v2777 = vsel %vm2725, 0.0, %v2764
    %v2778 = vsel %vm2726, 0.0, %v2765
    %v2779 = vsel %vm2727, 0.0, %v2766
    %v2780 = vsel %vm2728, 0.0, %v2767
    %v2781 = vsel %vm2729, 0.0, %v2768
    %v2782 = vsel %vm2730, 0.0, %v2769
    %v2783 = vsel %vm2731, 0.0, %v2770
    %v2784 = vsel %vm2732, 0.0, %v2771
    %v2785 = vsel %vm2733, 0.0, %v2772
    %2786 = vst [vmem:[#allocation3] sm:$0xff] %v2773
    %2787 = vst [vmem:[#allocation3 + $0x8] sm:$0xff] %v2774
    %2788 = vst [vmem:[#allocation3 + $0x10] sm:$0xff] %v2775
    %2789 = vst [vmem:[#allocation3 + $0x18] sm:$0xff] %v2776
    %2790 = vst [vmem:[#allocation3 + $0x20] sm:$0xff] %v2777
    %2791 = vst [vmem:[#allocation3 + $0x28] sm:$0xff] %v2778
    %2792 = vst [vmem:[#allocation3 + $0x30] sm:$0xff] %v2779
    %2793 = vst [vmem:[#allocation3 + $0x38] sm:$0xff] %v2780
    %2794 = vst [vmem:[#allocation3 + $0x40] sm:$0xff] %v2781
    %2795 = vst [vmem:[#allocation3 + $0x48] sm:$0xff] %v2782
    %2796 = vst [vmem:[#allocation3 + $0x50] sm:$0xff] %v2783
    %2797 = vst [vmem:[#allocation3 + $0x58] sm:$0xff] %v2784
    %2798 = vst [vmem:[#allocation3 + $0x60] sm:$0xf] %v2785
    %v2799 = vadd.f32 %v2747, %v2748
    %v2800 = vadd.f32 %v2799, %v2749
    %v2801 = vadd.f32 %v2800, %v2750
    %v2802 = vadd.f32 %v2801, %v2751
    %v2803 = vadd.f32 %v2802, %v2752
    %v2804 = vadd.f32 %v2803, %v2753
    %v2805 = vadd.f32 %v2804, %v2754
    %v2806 = vadd.f32 %v2805, %v2755
    %v2807 = vadd.f32 %v2806, %v2756
    %v2808 = vadd.f32 %v2807, %v2757
    %v2809 = vadd.f32 %v2808, %v2758
    %v2810 = vsel %vm411, %v2759, 0.0
    %v2811 = vadd.f32 %v2809, %v2810
    %v2812 = vrot.slane %v2811, 4
    %v2813 = vadd.f32 %v2811, %v2812
    %v2814 = vrot.slane %v2813, 2
    %v2815 = vadd.f32 %v2813, %v2814
    %v2816 = vrot.slane %v2815, 1
    %v2817 = vadd.f32 %v2815, %v2816
    %v2818 = vadd.f32 %v1554, %v2817
    %v2819 = vld [vmem:[#allocation13] sm:$0xff]
    %v2820 = vld [vmem:[#allocation13 + $0x8] sm:$0xff]
    %v2821 = vld [vmem:[#allocation13 + $0x10] sm:$0xff]
    %v2822 = vld [vmem:[#allocation13 + $0x18] sm:$0xff]
    %v2823 = vld [vmem:[#allocation13 + $0x20] sm:$0xff]
    %v2824 = vld [vmem:[#allocation13 + $0x28] sm:$0xff]
    %v2825 = vld [vmem:[#allocation13 + $0x30] sm:$0xff]
    %v2826 = vld [vmem:[#allocation13 + $0x38] sm:$0xff]
    %v2827 = vld [vmem:[#allocation13 + $0x40] sm:$0xff]
    %v2828 = vld [vmem:[#allocation13 + $0x48] sm:$0xff]
    %v2829 = vld [vmem:[#allocation13 + $0x50] sm:$0xff]
    %v2830 = vld [vmem:[#allocation13 + $0x58] sm:$0xff]
    %v2831 = vld [vmem:[#allocation13 + $0x60] sm:$0xff]
    %v2832 = vld [vmem:[#allocation13 + $0x68] sm:$0xff]
    %v2833 = vld [vmem:[#allocation13 + $0x70] sm:$0xff]
    %v2834 = vld [vmem:[#allocation13 + $0x78] sm:$0xff]
    %v2835 = vld [vmem:[%s4] sm:$0x1]
    %v2837 = vlaneseq
    %v2838 = vshrl.u32 %v2837, 7
    %v2839 = vsub.s32 0, %v2838
    %v2840 = vrot.slane %v2835, %v2839
    %2842 = vmatprep.subr.mxu0 0.0
    %2843 = vmatpush1.msra.mxu0 %v2819
    %2844 = vmatprep.subr.mxu0 0.0
    %2845 = vmatpush1.msra.mxu0 %v2820
    %2846 = vmatprep.subr.mxu0 0.0
    %2847 = vmatpush1.msra.mxu0 %v2821
    %2848 = vmatprep.subr.mxu0 0.0
    %2849 = vmatpush1.msra.mxu0 %v2822
    %2850 = vmatprep.subr.mxu0 0.0
    %2851 = vmatpush1.msra.mxu0 %v2823
    %2852 = vmatprep.subr.mxu0 0.0
    %2853 = vmatpush1.msra.mxu0 %v2824
    %2854 = vmatprep.subr.mxu0 0.0
    %2855 = vmatpush1.msra.mxu0 %v2825
    %2856 = vmatprep.subr.mxu0 0.0
    %2857 = vmatpush1.msra.mxu0 %v2826
    %2858 = vmatprep.subr.mxu0 0.0
    %2859 = vmatpush1.msra.mxu0 %v2827
    %2860 = vmatprep.subr.mxu0 0.0
    %2861 = vmatpush1.msra.mxu0 %v2828
    %2862 = vmatprep.subr.mxu0 0.0
    %2863 = vmatpush1.msra.mxu0 %v2829
    %2864 = vmatprep.subr.mxu0 0.0
    %2865 = vmatpush1.msra.mxu0 %v2830
    %2866 = vmatprep.subr.mxu0 0.0
    %2867 = vmatpush1.msra.mxu0 %v2831
    %2868 = vmatprep.subr.mxu0 0.0
    %2869 = vmatpush1.msra.mxu0 %v2832
    %2870 = vmatprep.subr.mxu0 0.0
    %2871 = vmatpush1.msra.mxu0 %v2833
    %2872 = vmatprep.subr.mxu0 0.0
    %2873 = vmatpush1.msra.mxu0 %v2834
    %2874 = vmatprep.subr.mxu0 0.0
    %2875 = vmatpush1.msra.mxu0 0.0
    %2876 = vmatprep.subr.mxu0 0.0
    %2877 = vmatpush1.msra.mxu0 0.0
    %2878 = vmatprep.subr.mxu0 0.0
    %2879 = vmatpush1.msra.mxu0 0.0
    %2880 = vmatprep.subr.mxu0 0.0
    %2881 = vmatpush1.msra.mxu0 0.0
    %2882 = vmatprep.subr.mxu0 0.0
    %2883 = vmatpush1.msra.mxu0 0.0
    %2884 = vmatprep.subr.mxu0 0.0
    %2885 = vmatpush1.msra.mxu0 0.0
    %2886 = vmatprep.subr.mxu0 0.0
    %2887 = vmatpush1.msra.mxu0 0.0
    %2888 = vmatprep.subr.mxu0 0.0
    %2889 = vmatpush1.msra.mxu0 0.0
    %2890 = vmatprep.subr.mxu0 0.0
    %2891 = vmatpush1.msra.mxu0 0.0
    %2892 = vmatprep.subr.mxu0 0.0
    %2893 = vmatpush1.msra.mxu0 0.0
    %2894 = vmatprep.subr.mxu0 0.0
    %2895 = vmatpush1.msra.mxu0 0.0
    %2896 = vmatprep.subr.mxu0 0.0
    %2897 = vmatpush1.msra.mxu0 0.0
    %2898 = vmatprep.subr.mxu0 0.0
    %2899 = vmatpush1.msra.mxu0 0.0
    %2900 = vmatprep.subr.mxu0 0.0
    %2901 = vmatpush1.msra.mxu0 0.0
    %2902 = vmatprep.subr.mxu0 0.0
    %2903 = vmatpush1.msra.mxu0 0.0
    %2904 = vmatprep.subr.mxu0 0.0
    %2905 = vmatpush1.msra.mxu0 0.0
    %2906 = vmatprep.mubr.f32.mxu0 0.0
    %2907 = vmatmul.mubr.f32.gmra.mrb[0].mxu0 %v2747
    %v2908 = vpop.f32.mrb[0].mxu0
    %v2909 = vadd.f32 %v2840, %v2908
    %v2910 = vpop.f32.mrb[0].mxu0
    %2911 = vmatprep.mubr.f32.mxu0 0.0
    %2912 = vmatmul.mubr.f32.gmra.mrb[0].mxu0 %v2748
    %v2913 = vpop.f32.mrb[0].mxu0
    %v2914 = vadd.f32 %v2840, %v2913
    %v2915 = vpop.f32.mrb[0].mxu0
    %2916 = vmatprep.mubr.f32.mxu0 0.0
    %2917 = vmatmul.mubr.f32.gmra.mrb[0].mxu0 %v2749
    %v2918 = vpop.f32.mrb[0].mxu0
    %v2919 = vadd.f32 %v2840, %v2918
    %v2920 = vpop.f32.mrb[0].mxu0
    %2921 = vmatprep.mubr.f32.mxu0 0.0
    %2922 = vmatmul.mubr.f32.gmra.mrb[0].mxu0 %v2750
    %v2923 = vpop.f32.mrb[0].mxu0
    %v2924 = vadd.f32 %v2840, %v2923
    %v2925 = vpop.f32.mrb[0].mxu0
    %2926 = vmatprep.mubr.f32.mxu0 0.0
    %2927 = vmatmul.mubr.f32.gmra.mrb[0].mxu0 %v2751
    %v2928 = vpop.f32.mrb[0].mxu0
    %v2929 = vadd.f32 %v2840, %v2928
    %v2930 = vpop.f32.mrb[0].mxu0
    %2931 = vmatprep.mubr.f32.mxu0 0.0
    %2932 = vmatmul.mubr.f32.gmra.mrb[0].mxu0 %v2752
    %v2933 = vpop.f32.mrb[0].mxu0
    %v2934 = vadd.f32 %v2840, %v2933
    %v2935 = vpop.f32.mrb[0].mxu0
    %2936 = vmatprep.mubr.f32.mxu0 0.0
    %2937 = vmatmul.mubr.f32.gmra.mrb[0].mxu0 %v2753
    %v2938 = vpop.f32.mrb[0].mxu0
    %v2939 = vadd.f32 %v2840, %v2938
    %v2940 = vpop.f32.mrb[0].mxu0
    %2941 = vmatprep.mubr.f32.mxu0 0.0
    %2942 = vmatmul.mubr.f32.gmra.mrb[0].mxu0 %v2754
    %v2943 = vpop.f32.mrb[0].mxu0
    %v2944 = vadd.f32 %v2840, %v2943
    %v2945 = vpop.f32.mrb[0].mxu0
    %2946 = vmatprep.mubr.f32.mxu0 0.0
    %2947 = vmatmul.mubr.f32.gmra.mrb[0].mxu0 %v2755
    %v2948 = vpop.f32.mrb[0].mxu0
    %v2949 = vadd.f32 %v2840, %v2948
    %v2950 = vpop.f32.mrb[0].mxu0
    %2951 = vmatprep.mubr.f32.mxu0 0.0
    %2952 = vmatmul.mubr.f32.gmra.mrb[0].mxu0 %v2756
    %v2953 = vpop.f32.mrb[0].mxu0
    %v2954 = vadd.f32 %v2840, %v2953
    %v2955 = vpop.f32.mrb[0].mxu0
    %2956 = vmatprep.mubr.f32.mxu0 0.0
    %2957 = vmatmul.mubr.f32.gmra.mrb[0].mxu0 %v2757
    %v2958 = vpop.f32.mrb[0].mxu0
    %v2959 = vadd.f32 %v2840, %v2958
    %v2960 = vpop.f32.mrb[0].mxu0
    %2961 = vmatprep.mubr.f32.mxu0 0.0
    %2962 = vmatmul.mubr.f32.gmra.mrb[0].mxu0 %v2758
    %v2963 = vpop.f32.mrb[0].mxu0
    %v2964 = vadd.f32 %v2840, %v2963
    %v2965 = vpop.f32.mrb[0].mxu0
    %2966 = vmatprep.mubr.f32.mxu0 0.0
    %2967 = vmatmul.mubr.f32.gmra.mrb[0].mxu0 %v2759
    %v2968 = vpop.f32.mrb[0].mxu0
    %v2969 = vadd.f32 %v2840, %v2968
    %v2970 = vpop.f32.mrb[0].mxu0
    %2971 = vdwg.mxu0
    %v2972 = vld [vmem:[#allocation4] sm:$0xff]
    %v2973 = vld [vmem:[#allocation4 + $0x8] sm:$0xff]
    %v2974 = vld [vmem:[#allocation4 + $0x10] sm:$0xff]
    %v2975 = vld [vmem:[#allocation4 + $0x18] sm:$0xff]
    %v2976 = vld [vmem:[#allocation4 + $0x20] sm:$0xff]
    %v2977 = vld [vmem:[#allocation4 + $0x28] sm:$0xff]
    %v2978 = vld [vmem:[#allocation4 + $0x30] sm:$0xff]
    %v2979 = vld [vmem:[#allocation4 + $0x38] sm:$0xff]
    %v2980 = vld [vmem:[#allocation4 + $0x40] sm:$0xff]
    %v2981 = vld [vmem:[#allocation4 + $0x48] sm:$0xff]
    %v2982 = vld [vmem:[#allocation4 + $0x50] sm:$0xff]
    %v2983 = vld [vmem:[#allocation4 + $0x58] sm:$0xff]
    %v2984 = vld [vmem:[#allocation4 + $0x60] sm:$0xf]
    %v2985 = vadd.f32 %v2972, %v2909
    %v2986 = vadd.f32 %v2973, %v2914
    %v2987 = vadd.f32 %v2974, %v2919
    %v2988 = vadd.f32 %v2975, %v2924
    %v2989 = vadd.f32 %v2976, %v2929
    %v2990 = vadd.f32 %v2977, %v2934
    %v2991 = vadd.f32 %v2978, %v2939
    %v2992 = vadd.f32 %v2979, %v2944
    %v2993 = vadd.f32 %v2980, %v2949
    %v2994 = vadd.f32 %v2981, %v2954
    %v2995 = vadd.f32 %v2982, %v2959
    %v2996 = vadd.f32 %v2983, %v2964
    %v2997 = vadd.f32 %v2984, %v2969
    %vm2998 = vcmp.gt.f32.partialorder %v2985, 0.5
    %vm2999 = vcmp.gt.f32.partialorder %v2986, 0.5
    %vm3000 = vcmp.gt.f32.partialorder %v2987, 0.5
    %vm3001 = vcmp.gt.f32.partialorder %v2988, 0.5
    %vm3002 = vcmp.gt.f32.partialorder %v2989, 0.5
    %vm3003 = vcmp.gt.f32.partialorder %v2990, 0.5
    %vm3004 = vcmp.gt.f32.partialorder %v2991, 0.5
    %vm3005 = vcmp.gt.f32.partialorder %v2992, 0.5
    %vm3006 = vcmp.gt.f32.partialorder %v2993, 0.5
    %vm3007 = vcmp.gt.f32.partialorder %v2994, 0.5
    %vm3008 = vcmp.gt.f32.partialorder %v2995, 0.5
    %vm3009 = vcmp.gt.f32.partialorder %v2996, 0.5
    %vm3010 = vcmp.gt.f32.partialorder %v2997, 0.5
    %v3011 = vsel %vm2998, 1, 0
    %v3012 = vsel %vm2999, 1, 0
    %v3013 = vsel %vm3000, 1, 0
    %v3014 = vsel %vm3001, 1, 0
    %v3015 = vsel %vm3002, 1, 0
    %v3016 = vsel %vm3003, 1, 0
    %v3017 = vsel %vm3004, 1, 0
    %v3018 = vsel %vm3005, 1, 0
    %v3019 = vsel %vm3006, 1, 0
    %v3020 = vsel %vm3007, 1, 0
    %v3021 = vsel %vm3008, 1, 0
    %v3022 = vsel %vm3009, 1, 0
    %v3023 = vsel %vm3010, 1, 0
    %v3024 = vcvt.s32.f32 %v3011
    %v3025 = vcvt.s32.f32 %v3012
    %v3026 = vcvt.s32.f32 %v3013
    %v3027 = vcvt.s32.f32 %v3014
    %v3028 = vcvt.s32.f32 %v3015
    %v3029 = vcvt.s32.f32 %v3016
    %v3030 = vcvt.s32.f32 %v3017
    %v3031 = vcvt.s32.f32 %v3018
    %v3032 = vcvt.s32.f32 %v3019
    %v3033 = vcvt.s32.f32 %v3020
    %v3034 = vcvt.s32.f32 %v3021
    %v3035 = vcvt.s32.f32 %v3022
    %v3036 = vcvt.s32.f32 %v3023
    %v3037 = vmul.f32 %v2985, 0.2
    %v3038 = vmul.f32 %v2986, 0.2
    %v3039 = vmul.f32 %v2987, 0.2
    %v3040 = vmul.f32 %v2988, 0.2
    %v3041 = vmul.f32 %v2989, 0.2
    %v3042 = vmul.f32 %v2990, 0.2
    %v3043 = vmul.f32 %v2991, 0.2
    %v3044 = vmul.f32 %v2992, 0.2
    %v3045 = vmul.f32 %v2993, 0.2
    %v3046 = vmul.f32 %v2994, 0.2
    %v3047 = vmul.f32 %v2995, 0.2
    %v3048 = vmul.f32 %v2996, 0.2
    %v3049 = vmul.f32 %v2997, 0.2
    %v3050 = vsel %vm2998, 0.0, %v3037
    %v3051 = vsel %vm2999, 0.0, %v3038
    %v3052 = vsel %vm3000, 0.0, %v3039
    %v3053 = vsel %vm3001, 0.0, %v3040
    %v3054 = vsel %vm3002, 0.0, %v3041
    %v3055 = vsel %vm3003, 0.0, %v3042
    %v3056 = vsel %vm3004, 0.0, %v3043
    %v3057 = vsel %vm3005, 0.0, %v3044
    %v3058 = vsel %vm3006, 0.0, %v3045
    %v3059 = vsel %vm3007, 0.0, %v3046
    %v3060 = vsel %vm3008, 0.0, %v3047
    %v3061 = vsel %vm3009, 0.0, %v3048
    %v3062 = vsel %vm3010, 0.0, %v3049
    %3063 = vst [vmem:[#allocation4] sm:$0xff] %v3050
    %3064 = vst [vmem:[#allocation4 + $0x8] sm:$0xff] %v3051
    %3065 = vst [vmem:[#allocation4 + $0x10] sm:$0xff] %v3052
    %3066 = vst [vmem:[#allocation4 + $0x18] sm:$0xff] %v3053
    %3067 = vst [vmem:[#allocation4 + $0x20] sm:$0xff] %v3054
    %3068 = vst [vmem:[#allocation4 + $0x28] sm:$0xff] %v3055
    %3069 = vst [vmem:[#allocation4 + $0x30] sm:$0xff] %v3056
    %3070 = vst [vmem:[#allocation4 + $0x38] sm:$0xff] %v3057
    %3071 = vst [vmem:[#allocation4 + $0x40] sm:$0xff] %v3058
    %3072 = vst [vmem:[#allocation4 + $0x48] sm:$0xff] %v3059
    %3073 = vst [vmem:[#allocation4 + $0x50] sm:$0xff] %v3060
    %3074 = vst [vmem:[#allocation4 + $0x58] sm:$0xff] %v3061
    %3075 = vst [vmem:[#allocation4 + $0x60] sm:$0xf] %v3062
    %v3076 = vadd.f32 %v3024, %v3025
    %v3077 = vadd.f32 %v3076, %v3026
    %v3078 = vadd.f32 %v3077, %v3027
    %v3079 = vadd.f32 %v3078, %v3028
    %v3080 = vadd.f32 %v3079, %v3029
    %v3081 = vadd.f32 %v3080, %v3030
    %v3082 = vadd.f32 %v3081, %v3031
    %v3083 = vadd.f32 %v3082, %v3032
    %v3084 = vadd.f32 %v3083, %v3033
    %v3085 = vadd.f32 %v3084, %v3034
    %v3086 = vadd.f32 %v3085, %v3035
    %v3087 = vsel %vm411, %v3036, 0.0
    %v3088 = vadd.f32 %v3086, %v3087
    %v3089 = vrot.slane %v3088, 4
    %v3090 = vadd.f32 %v3088, %v3089
    %v3091 = vrot.slane %v3090, 2
    %v3092 = vadd.f32 %v3090, %v3091
    %v3093 = vrot.slane %v3092, 1
    %v3094 = vadd.f32 %v3092, %v3093
    %v3095 = vadd.f32 %v1831, %v3094
    %v3096 = vld [vmem:[#allocation14] sm:$0xff]
    %v3097 = vld [vmem:[#allocation14 + $0x8] sm:$0xff]
    %v3098 = vld [vmem:[#allocation14 + $0x10] sm:$0xff]
    %v3099 = vld [vmem:[#allocation14 + $0x18] sm:$0xff]
    %v3100 = vld [vmem:[#allocation14 + $0x20] sm:$0xff]
    %v3101 = vld [vmem:[#allocation14 + $0x28] sm:$0xff]
    %v3102 = vld [vmem:[#allocation14 + $0x30] sm:$0xff]
    %v3103 = vld [vmem:[#allocation14 + $0x38] sm:$0xff]
    %v3104 = vld [vmem:[#allocation14 + $0x40] sm:$0xff]
    %v3105 = vld [vmem:[#allocation14 + $0x48] sm:$0xff]
    %v3106 = vld [vmem:[#allocation14 + $0x50] sm:$0xff]
    %v3107 = vld [vmem:[#allocation14 + $0x58] sm:$0xff]
    %v3108 = vld [vmem:[#allocation14 + $0x60] sm:$0xff]
    %v3109 = vld [vmem:[#allocation14 + $0x68] sm:$0xff]
    %v3110 = vld [vmem:[#allocation14 + $0x70] sm:$0xff]
    %v3111 = vld [vmem:[#allocation14 + $0x78] sm:$0xff]
    %v3112 = vld [vmem:[%s6] sm:$0x1]
    %v3114 = vlaneseq
    %v3115 = vshrl.u32 %v3114, 7
    %v3116 = vsub.s32 0, %v3115
    %v3117 = vrot.slane %v3112, %v3116
    %3119 = vmatprep.subr.mxu0 0.0
    %3120 = vmatpush1.msra.mxu0 %v3096
    %3121 = vmatprep.subr.mxu0 0.0
    %3122 = vmatpush1.msra.mxu0 %v3097
    %3123 = vmatprep.subr.mxu0 0.0
    %3124 = vmatpush1.msra.mxu0 %v3098
    %3125 = vmatprep.subr.mxu0 0.0
    %3126 = vmatpush1.msra.mxu0 %v3099
    %3127 = vmatprep.subr.mxu0 0.0
    %3128 = vmatpush1.msra.mxu0 %v3100
    %3129 = vmatprep.subr.mxu0 0.0
    %3130 = vmatpush1.msra.mxu0 %v3101
    %3131 = vmatprep.subr.mxu0 0.0
    %3132 = vmatpush1.msra.mxu0 %v3102
    %3133 = vmatprep.subr.mxu0 0.0
    %3134 = vmatpush1.msra.mxu0 %v3103
    %3135 = vmatprep.subr.mxu0 0.0
    %3136 = vmatpush1.msra.mxu0 %v3104
    %3137 = vmatprep.subr.mxu0 0.0
    %3138 = vmatpush1.msra.mxu0 %v3105
    %3139 = vmatprep.subr.mxu0 0.0
    %3140 = vmatpush1.msra.mxu0 %v3106
    %3141 = vmatprep.subr.mxu0 0.0
    %3142 = vmatpush1.msra.mxu0 %v3107
    %3143 = vmatprep.subr.mxu0 0.0
    %3144 = vmatpush1.msra.mxu0 %v3108
    %3145 = vmatprep.subr.mxu0 0.0
    %3146 = vmatpush1.msra.mxu0 %v3109
    %3147 = vmatprep.subr.mxu0 0.0
    %3148 = vmatpush1.msra.mxu0 %v3110
    %3149 = vmatprep.subr.mxu0 0.0
    %3150 = vmatpush1.msra.mxu0 %v3111
    %3151 = vmatprep.subr.mxu0 0.0
    %3152 = vmatpush1.msra.mxu0 0.0
    %3153 = vmatprep.subr.mxu0 0.0
    %3154 = vmatpush1.msra.mxu0 0.0
    %3155 = vmatprep.subr.mxu0 0.0
    %3156 = vmatpush1.msra.mxu0 0.0
    %3157 = vmatprep.subr.mxu0 0.0
    %3158 = vmatpush1.msra.mxu0 0.0
    %3159 = vmatprep.subr.mxu0 0.0
    %3160 = vmatpush1.msra.mxu0 0.0
    %3161 = vmatprep.subr.mxu0 0.0
    %3162 = vmatpush1.msra.mxu0 0.0
    %3163 = vmatprep.subr.mxu0 0.0
    %3164 = vmatpush1.msra.mxu0 0.0
    %3165 = vmatprep.subr.mxu0 0.0
    %3166 = vmatpush1.msra.mxu0 0.0
    %3167 = vmatprep.subr.mxu0 0.0
    %3168 = vmatpush1.msra.mxu0 0.0
    %3169 = vmatprep.subr.mxu0 0.0
    %3170 = vmatpush1.msra.mxu0 0.0
    %3171 = vmatprep.subr.mxu0 0.0
    %3172 = vmatpush1.msra.mxu0 0.0
    %3173 = vmatprep.subr.mxu0 0.0
    %3174 = vmatpush1.msra.mxu0 0.0
    %3175 = vmatprep.subr.mxu0 0.0
    %3176 = vmatpush1.msra.mxu0 0.0
    %3177 = vmatprep.subr.mxu0 0.0
    %3178 = vmatpush1.msra.mxu0 0.0
    %3179 = vmatprep.subr.mxu0 0.0
    %3180 = vmatpush1.msra.mxu0 0.0
    %3181 = vmatprep.subr.mxu0 0.0
    %3182 = vmatpush1.msra.mxu0 0.0
    %3183 = vmatprep.mubr.f32.mxu0 0.0
    %3184 = vmatmul.mubr.f32.gmra.mrb[0].mxu0 %v3024
    %v3185 = vpop.f32.mrb[0].mxu0
    %v3186 = vadd.f32 %v3117, %v3185
    %v3187 = vpop.f32.mrb[0].mxu0
    %3188 = vmatprep.mubr.f32.mxu0 0.0
    %3189 = vmatmul.mubr.f32.gmra.mrb[0].mxu0 %v3025
    %v3190 = vpop.f32.mrb[0].mxu0
    %v3191 = vadd.f32 %v3117, %v3190
    %v3192 = vpop.f32.mrb[0].mxu0
    %3193 = vmatprep.mubr.f32.mxu0 0.0
    %3194 = vmatmul.mubr.f32.gmra.mrb[0].mxu0 %v3026
    %v3195 = vpop.f32.mrb[0].mxu0
    %v3196 = vadd.f32 %v3117, %v3195
    %v3197 = vpop.f32.mrb[0].mxu0
    %3198 = vmatprep.mubr.f32.mxu0 0.0
    %3199 = vmatmul.mubr.f32.gmra.mrb[0].mxu0 %v3027
    %v3200 = vpop.f32.mrb[0].mxu0
    %v3201 = vadd.f32 %v3117, %v3200
    %v3202 = vpop.f32.mrb[0].mxu0
    %3203 = vmatprep.mubr.f32.mxu0 0.0
    %3204 = vmatmul.mubr.f32.gmra.mrb[0].mxu0 %v3028
    %v3205 = vpop.f32.mrb[0].mxu0
    %v3206 = vadd.f32 %v3117, %v3205
    %v3207 = vpop.f32.mrb[0].mxu0
    %3208 = vmatprep.mubr.f32.mxu0 0.0
    %3209 = vmatmul.mubr.f32.gmra.mrb[0].mxu0 %v3029
    %v3210 = vpop.f32.mrb[0].mxu0
    %v3211 = vadd.f32 %v3117, %v3210
    %v3212 = vpop.f32.mrb[0].mxu0
    %3213 = vmatprep.mubr.f32.mxu0 0.0
    %3214 = vmatmul.mubr.f32.gmra.mrb[0].mxu0 %v3030
    %v3215 = vpop.f32.mrb[0].mxu0
    %v3216 = vadd.f32 %v3117, %v3215
    %v3217 = vpop.f32.mrb[0].mxu0
    %3218 = vmatprep.mubr.f32.mxu0 0.0
    %3219 = vmatmul.mubr.f32.gmra.mrb[0].mxu0 %v3031
    %v3220 = vpop.f32.mrb[0].mxu0
    %v3221 = vadd.f32 %v3117, %v3220
    %v3222 = vpop.f32.mrb[0].mxu0
    %3223 = vmatprep.mubr.f32.mxu0 0.0
    %3224 = vmatmul.mubr.f32.gmra.mrb[0].mxu0 %v3032
    %v3225 = vpop.f32.mrb[0].mxu0
    %v3226 = vadd.f32 %v3117, %v3225
    %v3227 = vpop.f32.mrb[0].mxu0
    %3228 = vmatprep.mubr.f32.mxu0 0.0
    %3229 = vmatmul.mubr.f32.gmra.mrb[0].mxu0 %v3033
    %v3230 = vpop.f32.mrb[0].mxu0
    %v3231 = vadd.f32 %v3117, %v3230
    %v3232 = vpop.f32.mrb[0].mxu0
    %3233 = vmatprep.mubr.f32.mxu0 0.0
    %3234 = vmatmul.mubr.f32.gmra.mrb[0].mxu0 %v3034
    %v3235 = vpop.f32.mrb[0].mxu0
    %v3236 = vadd.f32 %v3117, %v3235
    %v3237 = vpop.f32.mrb[0].mxu0
    %3238 = vmatprep.mubr.f32.mxu0 0.0
    %3239 = vmatmul.mubr.f32.gmra.mrb[0].mxu0 %v3035
    %v3240 = vpop.f32.mrb[0].mxu0
    %v3241 = vadd.f32 %v3117, %v3240
    %v3242 = vpop.f32.mrb[0].mxu0
    %3243 = vmatprep.mubr.f32.mxu0 0.0
    %3244 = vmatmul.mubr.f32.gmra.mrb[0].mxu0 %v3036
    %v3245 = vpop.f32.mrb[0].mxu0
    %v3246 = vadd.f32 %v3117, %v3245
    %v3247 = vpop.f32.mrb[0].mxu0
    %3248 = vdwg.mxu0
    %v3249 = vld [vmem:[#allocation5] sm:$0xff]
    %v3250 = vld [vmem:[#allocation5 + $0x8] sm:$0xff]
    %v3251 = vld [vmem:[#allocation5 + $0x10] sm:$0xff]
    %v3252 = vld [vmem:[#allocation5 + $0x18] sm:$0xff]
    %v3253 = vld [vmem:[#allocation5 + $0x20] sm:$0xff]
    %v3254 = vld [vmem:[#allocation5 + $0x28] sm:$0xff]
    %v3255 = vld [vmem:[#allocation5 + $0x30] sm:$0xff]
    %v3256 = vld [vmem:[#allocation5 + $0x38] sm:$0xff]
    %v3257 = vld [vmem:[#allocation5 + $0x40] sm:$0xff]
    %v3258 = vld [vmem:[#allocation5 + $0x48] sm:$0xff]
    %v3259 = vld [vmem:[#allocation5 + $0x50] sm:$0xff]
    %v3260 = vld [vmem:[#allocation5 + $0x58] sm:$0xff]
    %v3261 = vld [vmem:[#allocation5 + $0x60] sm:$0xf]
    %v3262 = vadd.f32 %v3249, %v3186
    %v3263 = vadd.f32 %v3250, %v3191
    %v3264 = vadd.f32 %v3251, %v3196
    %v3265 = vadd.f32 %v3252, %v3201
    %v3266 = vadd.f32 %v3253, %v3206
    %v3267 = vadd.f32 %v3254, %v3211
    %v3268 = vadd.f32 %v3255, %v3216
    %v3269 = vadd.f32 %v3256, %v3221
    %v3270 = vadd.f32 %v3257, %v3226
    %v3271 = vadd.f32 %v3258, %v3231
    %v3272 = vadd.f32 %v3259, %v3236
    %v3273 = vadd.f32 %v3260, %v3241
    %v3274 = vadd.f32 %v3261, %v3246
    %vm3275 = vcmp.gt.f32.partialorder %v3262, 0.5
    %vm3276 = vcmp.gt.f32.partialorder %v3263, 0.5
    %vm3277 = vcmp.gt.f32.partialorder %v3264, 0.5
    %vm3278 = vcmp.gt.f32.partialorder %v3265, 0.5
    %vm3279 = vcmp.gt.f32.partialorder %v3266, 0.5
    %vm3280 = vcmp.gt.f32.partialorder %v3267, 0.5
    %vm3281 = vcmp.gt.f32.partialorder %v3268, 0.5
    %vm3282 = vcmp.gt.f32.partialorder %v3269, 0.5
    %vm3283 = vcmp.gt.f32.partialorder %v3270, 0.5
    %vm3284 = vcmp.gt.f32.partialorder %v3271, 0.5
    %vm3285 = vcmp.gt.f32.partialorder %v3272, 0.5
    %vm3286 = vcmp.gt.f32.partialorder %v3273, 0.5
    %vm3287 = vcmp.gt.f32.partialorder %v3274, 0.5
    %v3288 = vsel %vm3275, 1, 0
    %v3289 = vsel %vm3276, 1, 0
    %v3290 = vsel %vm3277, 1, 0
    %v3291 = vsel %vm3278, 1, 0
    %v3292 = vsel %vm3279, 1, 0
    %v3293 = vsel %vm3280, 1, 0
    %v3294 = vsel %vm3281, 1, 0
    %v3295 = vsel %vm3282, 1, 0
    %v3296 = vsel %vm3283, 1, 0
    %v3297 = vsel %vm3284, 1, 0
    %v3298 = vsel %vm3285, 1, 0
    %v3299 = vsel %vm3286, 1, 0
    %v3300 = vsel %vm3287, 1, 0
    %v3301 = vcvt.s32.f32 %v3288
    %v3302 = vcvt.s32.f32 %v3289
    %v3303 = vcvt.s32.f32 %v3290
    %v3304 = vcvt.s32.f32 %v3291
    %v3305 = vcvt.s32.f32 %v3292
    %v3306 = vcvt.s32.f32 %v3293
    %v3307 = vcvt.s32.f32 %v3294
    %v3308 = vcvt.s32.f32 %v3295
    %v3309 = vcvt.s32.f32 %v3296
    %v3310 = vcvt.s32.f32 %v3297
    %v3311 = vcvt.s32.f32 %v3298
    %v3312 = vcvt.s32.f32 %v3299
    %v3313 = vcvt.s32.f32 %v3300
    %v3314 = vmul.f32 %v3262, 0.2
    %v3315 = vmul.f32 %v3263, 0.2
    %v3316 = vmul.f32 %v3264, 0.2
    %v3317 = vmul.f32 %v3265, 0.2
    %v3318 = vmul.f32 %v3266, 0.2
    %v3319 = vmul.f32 %v3267, 0.2
    %v3320 = vmul.f32 %v3268, 0.2
    %v3321 = vmul.f32 %v3269, 0.2
    %v3322 = vmul.f32 %v3270, 0.2
    %v3323 = vmul.f32 %v3271, 0.2
    %v3324 = vmul.f32 %v3272, 0.2
    %v3325 = vmul.f32 %v3273, 0.2
    %v3326 = vmul.f32 %v3274, 0.2
    %v3327 = vsel %vm3275, 0.0, %v3314
    %v3328 = vsel %vm3276, 0.0, %v3315
    %v3329 = vsel %vm3277, 0.0, %v3316
    %v3330 = vsel %vm3278, 0.0, %v3317
    %v3331 = vsel %vm3279, 0.0, %v3318
    %v3332 = vsel %vm3280, 0.0, %v3319
    %v3333 = vsel %vm3281, 0.0, %v3320
    %v3334 = vsel %vm3282, 0.0, %v3321
    %v3335 = vsel %vm3283, 0.0, %v3322
    %v3336 = vsel %vm3284, 0.0, %v3323
    %v3337 = vsel %vm3285, 0.0, %v3324
    %v3338 = vsel %vm3286, 0.0, %v3325
    %v3339 = vsel %vm3287, 0.0, %v3326
    %3340 = vst [vmem:[#allocation5] sm:$0xff] %v3327
    %3341 = vst [vmem:[#allocation5 + $0x8] sm:$0xff] %v3328
    %3342 = vst [vmem:[#allocation5 + $0x10] sm:$0xff] %v3329
    %3343 = vst [vmem:[#allocation5 + $0x18] sm:$0xff] %v3330
    %3344 = vst [vmem:[#allocation5 + $0x20] sm:$0xff] %v3331
    %3345 = vst [vmem:[#allocation5 + $0x28] sm:$0xff] %v3332
    %3346 = vst [vmem:[#allocation5 + $0x30] sm:$0xff] %v3333
    %3347 = vst [vmem:[#allocation5 + $0x38] sm:$0xff] %v3334
    %3348 = vst [vmem:[#allocation5 + $0x40] sm:$0xff] %v3335
    %3349 = vst [vmem:[#allocation5 + $0x48] sm:$0xff] %v3336
    %3350 = vst [vmem:[#allocation5 + $0x50] sm:$0xff] %v3337
    %3351 = vst [vmem:[#allocation5 + $0x58] sm:$0xff] %v3338
    %3352 = vst [vmem:[#allocation5 + $0x60] sm:$0xf] %v3339
    %v3353 = vadd.f32 %v3301, %v3302
    %v3354 = vadd.f32 %v3353, %v3303
    %v3355 = vadd.f32 %v3354, %v3304
    %v3356 = vadd.f32 %v3355, %v3305
    %v3357 = vadd.f32 %v3356, %v3306
    %v3358 = vadd.f32 %v3357, %v3307
    %v3359 = vadd.f32 %v3358, %v3308
    %v3360 = vadd.f32 %v3359, %v3309
    %v3361 = vadd.f32 %v3360, %v3310
    %v3362 = vadd.f32 %v3361, %v3311
    %v3363 = vadd.f32 %v3362, %v3312
    %v3364 = vsel %vm411, %v3313, 0.0
    %v3365 = vadd.f32 %v3363, %v3364
    %v3366 = vrot.slane %v3365, 4
    %v3367 = vadd.f32 %v3365, %v3366
    %v3368 = vrot.slane %v3367, 2
    %v3369 = vadd.f32 %v3367, %v3368
    %v3370 = vrot.slane %v3369, 1
    %v3371 = vadd.f32 %v3369, %v3370
    %v3372 = vadd.f32 %v2108, %v3371
    %v3373 = vld [vmem:[#allocation16] sm:$0xff]
    %v3374 = vld [vmem:[#allocation16 + $0x8] sm:$0xff]
    %v3375 = vld [vmem:[#allocation16 + $0x10] sm:$0xff]
    %v3376 = vld [vmem:[#allocation16 + $0x18] sm:$0xff]
    %v3377 = vld [vmem:[#allocation16 + $0x20] sm:$0xff]
    %v3378 = vld [vmem:[#allocation16 + $0x28] sm:$0xff]
    %v3379 = vld [vmem:[#allocation16 + $0x30] sm:$0xff]
    %v3380 = vld [vmem:[#allocation16 + $0x38] sm:$0xff]
    %v3381 = vld [vmem:[#allocation16 + $0x40] sm:$0xff]
    %v3382 = vld [vmem:[#allocation16 + $0x48] sm:$0xff]
    %v3383 = vld [vmem:[#allocation16 + $0x50] sm:$0xff]
    %v3384 = vld [vmem:[#allocation16 + $0x58] sm:$0xff]
    %v3385 = vld [vmem:[#allocation16 + $0x60] sm:$0xff]
    %v3386 = vld [vmem:[#allocation16 + $0x68] sm:$0xff]
    %v3387 = vld [vmem:[#allocation16 + $0x70] sm:$0xff]
    %v3388 = vld [vmem:[#allocation16 + $0x78] sm:$0xff]
    %v3389 = vld [vmem:[%s8] sm:$0x1]
    %v3391 = vlaneseq
    %v3392 = vshrl.u32 %v3391, 7
    %v3393 = vsub.s32 0, %v3392
    %v3394 = vrot.slane %v3389, %v3393
    %3396 = vmatprep.subr.mxu0 0.0
    %3397 = vmatpush1.msra.mxu0 %v3373
    %3398 = vmatprep.subr.mxu0 0.0
    %3399 = vmatpush1.msra.mxu0 %v3374
    %3400 = vmatprep.subr.mxu0 0.0
    %3401 = vmatpush1.msra.mxu0 %v3375
    %3402 = vmatprep.subr.mxu0 0.0
    %3403 = vmatpush1.msra.mxu0 %v3376
    %3404 = vmatprep.subr.mxu0 0.0
    %3405 = vmatpush1.msra.mxu0 %v3377
    %3406 = vmatprep.subr.mxu0 0.0
    %3407 = vmatpush1.msra.mxu0 %v3378
    %3408 = vmatprep.subr.mxu0 0.0
    %3409 = vmatpush1.msra.mxu0 %v3379
    %3410 = vmatprep.subr.mxu0 0.0
    %3411 = vmatpush1.msra.mxu0 %v3380
    %3412 = vmatprep.subr.mxu0 0.0
    %3413 = vmatpush1.msra.mxu0 %v3381
    %3414 = vmatprep.subr.mxu0 0.0
    %3415 = vmatpush1.msra.mxu0 %v3382
    %3416 = vmatprep.subr.mxu0 0.0
    %3417 = vmatpush1.msra.mxu0 %v3383
    %3418 = vmatprep.subr.mxu0 0.0
    %3419 = vmatpush1.msra.mxu0 %v3384
    %3420 = vmatprep.subr.mxu0 0.0
    %3421 = vmatpush1.msra.mxu0 %v3385
    %3422 = vmatprep.subr.mxu0 0.0
    %3423 = vmatpush1.msra.mxu0 %v3386
    %3424 = vmatprep.subr.mxu0 0.0
    %3425 = vmatpush1.msra.mxu0 %v3387
    %3426 = vmatprep.subr.mxu0 0.0
    %3427 = vmatpush1.msra.mxu0 %v3388
    %3428 = vmatprep.subr.mxu0 0.0
    %3429 = vmatpush1.msra.mxu0 0.0
    %3430 = vmatprep.subr.mxu0 0.0
    %3431 = vmatpush1.msra.mxu0 0.0
    %3432 = vmatprep.subr.mxu0 0.0
    %3433 = vmatpush1.msra.mxu0 0.0
    %3434 = vmatprep.subr.mxu0 0.0
    %3435 = vmatpush1.msra.mxu0 0.0
    %3436 = vmatprep.subr.mxu0 0.0
    %3437 = vmatpush1.msra.mxu0 0.0
    %3438 = vmatprep.subr.mxu0 0.0
    %3439 = vmatpush1.msra.mxu0 0.0
    %3440 = vmatprep.subr.mxu0 0.0
    %3441 = vmatpush1.msra.mxu0 0.0
    %3442 = vmatprep.subr.mxu0 0.0
    %3443 = vmatpush1.msra.mxu0 0.0
    %3444 = vmatprep.subr.mxu0 0.0
    %3445 = vmatpush1.msra.mxu0 0.0
    %3446 = vmatprep.subr.mxu0 0.0
    %3447 = vmatpush1.msra.mxu0 0.0
    %3448 = vmatprep.subr.mxu0 0.0
    %3449 = vmatpush1.msra.mxu0 0.0
    %3450 = vmatprep.subr.mxu0 0.0
    %3451 = vmatpush1.msra.mxu0 0.0
    %3452 = vmatprep.subr.mxu0 0.0
    %3453 = vmatpush1.msra.mxu0 0.0
    %3454 = vmatprep.subr.mxu0 0.0
    %3455 = vmatpush1.msra.mxu0 0.0
    %3456 = vmatprep.subr.mxu0 0.0
    %3457 = vmatpush1.msra.mxu0 0.0
    %3458 = vmatprep.subr.mxu0 0.0
    %3459 = vmatpush1.msra.mxu0 0.0
    %3460 = vmatprep.mubr.f32.mxu0 0.0
    %3461 = vmatmul.mubr.f32.gmra.mrb[0].mxu0 %v3301
    %v3462 = vpop.f32.mrb[0].mxu0
    %v3463 = vadd.f32 %v3394, %v3462
    %v3464 = vpop.f32.mrb[0].mxu0
    %3465 = vmatprep.mubr.f32.mxu0 0.0
    %3466 = vmatmul.mubr.f32.gmra.mrb[0].mxu0 %v3302
    %v3467 = vpop.f32.mrb[0].mxu0
    %v3468 = vadd.f32 %v3394, %v3467
    %v3469 = vpop.f32.mrb[0].mxu0
    %3470 = vmatprep.mubr.f32.mxu0 0.0
    %3471 = vmatmul.mubr.f32.gmra.mrb[0].mxu0 %v3303
    %v3472 = vpop.f32.mrb[0].mxu0
    %v3473 = vadd.f32 %v3394, %v3472
    %v3474 = vpop.f32.mrb[0].mxu0
    %3475 = vmatprep.mubr.f32.mxu0 0.0
    %3476 = vmatmul.mubr.f32.gmra.mrb[0].mxu0 %v3304
    %v3477 = vpop.f32.mrb[0].mxu0
    %v3478 = vadd.f32 %v3394, %v3477
    %v3479 = vpop.f32.mrb[0].mxu0
    %3480 = vmatprep.mubr.f32.mxu0 0.0
    %3481 = vmatmul.mubr.f32.gmra.mrb[0].mxu0 %v3305
    %v3482 = vpop.f32.mrb[0].mxu0
    %v3483 = vadd.f32 %v3394, %v3482
    %v3484 = vpop.f32.mrb[0].mxu0
    %3485 = vmatprep.mubr.f32.mxu0 0.0
    %3486 = vmatmul.mubr.f32.gmra.mrb[0].mxu0 %v3306
    %v3487 = vpop.f32.mrb[0].mxu0
    %v3488 = vadd.f32 %v3394, %v3487
    %v3489 = vpop.f32.mrb[0].mxu0
    %3490 = vmatprep.mubr.f32.mxu0 0.0
    %3491 = vmatmul.mubr.f32.gmra.mrb[0].mxu0 %v3307
    %v3492 = vpop.f32.mrb[0].mxu0
    %v3493 = vadd.f32 %v3394, %v3492
    %v3494 = vpop.f32.mrb[0].mxu0
    %3495 = vmatprep.mubr.f32.mxu0 0.0
    %3496 = vmatmul.mubr.f32.gmra.mrb[0].mxu0 %v3308
    %v3497 = vpop.f32.mrb[0].mxu0
    %v3498 = vadd.f32 %v3394, %v3497
    %v3499 = vpop.f32.mrb[0].mxu0
    %3500 = vmatprep.mubr.f32.mxu0 0.0
    %3501 = vmatmul.mubr.f32.gmra.mrb[0].mxu0 %v3309
    %v3502 = vpop.f32.mrb[0].mxu0
    %v3503 = vadd.f32 %v3394, %v3502
    %v3504 = vpop.f32.mrb[0].mxu0
    %3505 = vmatprep.mubr.f32.mxu0 0.0
    %3506 = vmatmul.mubr.f32.gmra.mrb[0].mxu0 %v3310
    %v3507 = vpop.f32.mrb[0].mxu0
    %v3508 = vadd.f32 %v3394, %v3507
    %v3509 = vpop.f32.mrb[0].mxu0
    %3510 = vmatprep.mubr.f32.mxu0 0.0
    %3511 = vmatmul.mubr.f32.gmra.mrb[0].mxu0 %v3311
    %v3512 = vpop.f32.mrb[0].mxu0
    %v3513 = vadd.f32 %v3394, %v3512
    %v3514 = vpop.f32.mrb[0].mxu0
    %3515 = vmatprep.mubr.f32.mxu0 0.0
    %3516 = vmatmul.mubr.f32.gmra.mrb[0].mxu0 %v3312
    %v3517 = vpop.f32.mrb[0].mxu0
    %v3518 = vadd.f32 %v3394, %v3517
    %v3519 = vpop.f32.mrb[0].mxu0
    %3520 = vmatprep.mubr.f32.mxu0 0.0
    %3521 = vmatmul.mubr.f32.gmra.mrb[0].mxu0 %v3313
    %v3522 = vpop.f32.mrb[0].mxu0
    %v3523 = vadd.f32 %v3394, %v3522
    %v3524 = vpop.f32.mrb[0].mxu0
    %3525 = vdwg.mxu0
    %v3526 = vld [vmem:[#allocation6] sm:$0xff]
    %v3527 = vld [vmem:[#allocation6 + $0x8] sm:$0xff]
    %v3528 = vld [vmem:[#allocation6 + $0x10] sm:$0xff]
    %v3529 = vld [vmem:[#allocation6 + $0x18] sm:$0xff]
    %v3530 = vld [vmem:[#allocation6 + $0x20] sm:$0xff]
    %v3531 = vld [vmem:[#allocation6 + $0x28] sm:$0xff]
    %v3532 = vld [vmem:[#allocation6 + $0x30] sm:$0xff]
    %v3533 = vld [vmem:[#allocation6 + $0x38] sm:$0xff]
    %v3534 = vld [vmem:[#allocation6 + $0x40] sm:$0xff]
    %v3535 = vld [vmem:[#allocation6 + $0x48] sm:$0xff]
    %v3536 = vld [vmem:[#allocation6 + $0x50] sm:$0xff]
    %v3537 = vld [vmem:[#allocation6 + $0x58] sm:$0xff]
    %v3538 = vld [vmem:[#allocation6 + $0x60] sm:$0xf]
    %v3539 = vadd.f32 %v3526, %v3463
    %v3540 = vadd.f32 %v3527, %v3468
    %v3541 = vadd.f32 %v3528, %v3473
    %v3542 = vadd.f32 %v3529, %v3478
    %v3543 = vadd.f32 %v3530, %v3483
    %v3544 = vadd.f32 %v3531, %v3488
    %v3545 = vadd.f32 %v3532, %v3493
    %v3546 = vadd.f32 %v3533, %v3498
    %v3547 = vadd.f32 %v3534, %v3503
    %v3548 = vadd.f32 %v3535, %v3508
    %v3549 = vadd.f32 %v3536, %v3513
    %v3550 = vadd.f32 %v3537, %v3518
    %v3551 = vadd.f32 %v3538, %v3523
    %vm3552 = vcmp.gt.f32.partialorder %v3539, 0.5
    %vm3553 = vcmp.gt.f32.partialorder %v3540, 0.5
    %vm3554 = vcmp.gt.f32.partialorder %v3541, 0.5
    %vm3555 = vcmp.gt.f32.partialorder %v3542, 0.5
    %vm3556 = vcmp.gt.f32.partialorder %v3543, 0.5
    %vm3557 = vcmp.gt.f32.partialorder %v3544, 0.5
    %vm3558 = vcmp.gt.f32.partialorder %v3545, 0.5
    %vm3559 = vcmp.gt.f32.partialorder %v3546, 0.5
    %vm3560 = vcmp.gt.f32.partialorder %v3547, 0.5
    %vm3561 = vcmp.gt.f32.partialorder %v3548, 0.5
    %vm3562 = vcmp.gt.f32.partialorder %v3549, 0.5
    %vm3563 = vcmp.gt.f32.partialorder %v3550, 0.5
    %vm3564 = vcmp.gt.f32.partialorder %v3551, 0.5
    %v3565 = vsel %vm3552, 1, 0
    %v3566 = vsel %vm3553, 1, 0
    %v3567 = vsel %vm3554, 1, 0
    %v3568 = vsel %vm3555, 1, 0
    %v3569 = vsel %vm3556, 1, 0
    %v3570 = vsel %vm3557, 1, 0
    %v3571 = vsel %vm3558, 1, 0
    %v3572 = vsel %vm3559, 1, 0
    %v3573 = vsel %vm3560, 1, 0
    %v3574 = vsel %vm3561, 1, 0
    %v3575 = vsel %vm3562, 1, 0
    %v3576 = vsel %vm3563, 1, 0
    %v3577 = vsel %vm3564, 1, 0
    %v3578 = vcvt.s32.f32 %v3565
    %v3579 = vcvt.s32.f32 %v3566
    %v3580 = vcvt.s32.f32 %v3567
    %v3581 = vcvt.s32.f32 %v3568
    %v3582 = vcvt.s32.f32 %v3569
    %v3583 = vcvt.s32.f32 %v3570
    %v3584 = vcvt.s32.f32 %v3571
    %v3585 = vcvt.s32.f32 %v3572
    %v3586 = vcvt.s32.f32 %v3573
    %v3587 = vcvt.s32.f32 %v3574
    %v3588 = vcvt.s32.f32 %v3575
    %v3589 = vcvt.s32.f32 %v3576
    %v3590 = vcvt.s32.f32 %v3577
    %v3591 = vmul.f32 %v3539, 0.2
    %v3592 = vmul.f32 %v3540, 0.2
    %v3593 = vmul.f32 %v3541, 0.2
    %v3594 = vmul.f32 %v3542, 0.2
    %v3595 = vmul.f32 %v3543, 0.2
    %v3596 = vmul.f32 %v3544, 0.2
    %v3597 = vmul.f32 %v3545, 0.2
    %v3598 = vmul.f32 %v3546, 0.2
    %v3599 = vmul.f32 %v3547, 0.2
    %v3600 = vmul.f32 %v3548, 0.2
    %v3601 = vmul.f32 %v3549, 0.2
    %v3602 = vmul.f32 %v3550, 0.2
    %v3603 = vmul.f32 %v3551, 0.2
    %v3604 = vsel %vm3552, 0.0, %v3591
    %v3605 = vsel %vm3553, 0.0, %v3592
    %v3606 = vsel %vm3554, 0.0, %v3593
    %v3607 = vsel %vm3555, 0.0, %v3594
    %v3608 = vsel %vm3556, 0.0, %v3595
    %v3609 = vsel %vm3557, 0.0, %v3596
    %v3610 = vsel %vm3558, 0.0, %v3597
    %v3611 = vsel %vm3559, 0.0, %v3598
    %v3612 = vsel %vm3560, 0.0, %v3599
    %v3613 = vsel %vm3561, 0.0, %v3600
    %v3614 = vsel %vm3562, 0.0, %v3601
    %v3615 = vsel %vm3563, 0.0, %v3602
    %v3616 = vsel %vm3564, 0.0, %v3603
    %3617 = vst [vmem:[#allocation6] sm:$0xff] %v3604
    %3618 = vst [vmem:[#allocation6 + $0x8] sm:$0xff] %v3605
    %3619 = vst [vmem:[#allocation6 + $0x10] sm:$0xff] %v3606
    %3620 = vst [vmem:[#allocation6 + $0x18] sm:$0xff] %v3607
    %3621 = vst [vmem:[#allocation6 + $0x20] sm:$0xff] %v3608
    %3622 = vst [vmem:[#allocation6 + $0x28] sm:$0xff] %v3609
    %3623 = vst [vmem:[#allocation6 + $0x30] sm:$0xff] %v3610
    %3624 = vst [vmem:[#allocation6 + $0x38] sm:$0xff] %v3611
    %3625 = vst [vmem:[#allocation6 + $0x40] sm:$0xff] %v3612
    %3626 = vst [vmem:[#allocation6 + $0x48] sm:$0xff] %v3613
    %3627 = vst [vmem:[#allocation6 + $0x50] sm:$0xff] %v3614
    %3628 = vst [vmem:[#allocation6 + $0x58] sm:$0xff] %v3615
    %3629 = vst [vmem:[#allocation6 + $0x60] sm:$0xf] %v3616
    %v3630 = vadd.f32 %v3578, %v3579
    %v3631 = vadd.f32 %v3630, %v3580
    %v3632 = vadd.f32 %v3631, %v3581
    %v3633 = vadd.f32 %v3632, %v3582
    %v3634 = vadd.f32 %v3633, %v3583
    %v3635 = vadd.f32 %v3634, %v3584
    %v3636 = vadd.f32 %v3635, %v3585
    %v3637 = vadd.f32 %v3636, %v3586
    %v3638 = vadd.f32 %v3637, %v3587
    %v3639 = vadd.f32 %v3638, %v3588
    %v3640 = vadd.f32 %v3639, %v3589
    %v3641 = vsel %vm411, %v3590, 0.0
    %v3642 = vadd.f32 %v3640, %v3641
    %v3643 = vrot.slane %v3642, 4
    %v3644 = vadd.f32 %v3642, %v3643
    %v3645 = vrot.slane %v3644, 2
    %v3646 = vadd.f32 %v3644, %v3645
    %v3647 = vrot.slane %v3646, 1
    %v3648 = vadd.f32 %v3646, %v3647
    %v3649 = vadd.f32 %v2385, %v3648
    %v3650 = vld [vmem:[#allocation17] sm:$0xff]
    %v3651 = vld [vmem:[#allocation17 + $0x8] sm:$0xff]
    %v3652 = vld [vmem:[#allocation17 + $0x10] sm:$0xff]
    %v3653 = vld [vmem:[#allocation17 + $0x18] sm:$0xff]
    %v3654 = vld [vmem:[#allocation17 + $0x20] sm:$0xff]
    %v3655 = vld [vmem:[#allocation17 + $0x28] sm:$0xff]
    %v3656 = vld [vmem:[#allocation17 + $0x30] sm:$0xff]
    %v3657 = vld [vmem:[#allocation17 + $0x38] sm:$0xff]
    %v3658 = vld [vmem:[#allocation17 + $0x40] sm:$0xff]
    %v3659 = vld [vmem:[#allocation17 + $0x48] sm:$0xff]
    %v3660 = vld [vmem:[#allocation17 + $0x50] sm:$0xff]
    %v3661 = vld [vmem:[#allocation17 + $0x58] sm:$0xff]
    %v3662 = vld [vmem:[#allocation17 + $0x60] sm:$0xff]
    %v3663 = vld [vmem:[#allocation17 + $0x68] sm:$0xff]
    %v3664 = vld [vmem:[#allocation17 + $0x70] sm:$0xff]
    %v3665 = vld [vmem:[#allocation17 + $0x78] sm:$0xff]
    %v3666 = vld [vmem:[%s10] sm:$0x1]
    %v3668 = vlaneseq
    %v3669 = vshrl.u32 %v3668, 7
    %v3670 = vsub.s32 0, %v3669
    %v3671 = vrot.slane %v3666, %v3670
    %3673 = vmatprep.subr.mxu0 0.0
    %3674 = vmatpush1.msra.mxu0 %v3650
    %3675 = vmatprep.subr.mxu0 0.0
    %3676 = vmatpush1.msra.mxu0 %v3651
    %3677 = vmatprep.subr.mxu0 0.0
    %3678 = vmatpush1.msra.mxu0 %v3652
    %3679 = vmatprep.subr.mxu0 0.0
    %3680 = vmatpush1.msra.mxu0 %v3653
    %3681 = vmatprep.subr.mxu0 0.0
    %3682 = vmatpush1.msra.mxu0 %v3654
    %3683 = vmatprep.subr.mxu0 0.0
    %3684 = vmatpush1.msra.mxu0 %v3655
    %3685 = vmatprep.subr.mxu0 0.0
    %3686 = vmatpush1.msra.mxu0 %v3656
    %3687 = vmatprep.subr.mxu0 0.0
    %3688 = vmatpush1.msra.mxu0 %v3657
    %3689 = vmatprep.subr.mxu0 0.0
    %3690 = vmatpush1.msra.mxu0 %v3658
    %3691 = vmatprep.subr.mxu0 0.0
    %3692 = vmatpush1.msra.mxu0 %v3659
    %3693 = vmatprep.subr.mxu0 0.0
    %3694 = vmatpush1.msra.mxu0 %v3660
    %3695 = vmatprep.subr.mxu0 0.0
    %3696 = vmatpush1.msra.mxu0 %v3661
    %3697 = vmatprep.subr.mxu0 0.0
    %3698 = vmatpush1.msra.mxu0 %v3662
    %3699 = vmatprep.subr.mxu0 0.0
    %3700 = vmatpush1.msra.mxu0 %v3663
    %3701 = vmatprep.subr.mxu0 0.0
    %3702 = vmatpush1.msra.mxu0 %v3664
    %3703 = vmatprep.subr.mxu0 0.0
    %3704 = vmatpush1.msra.mxu0 %v3665
    %3705 = vmatprep.subr.mxu0 0.0
    %3706 = vmatpush1.msra.mxu0 0.0
    %3707 = vmatprep.subr.mxu0 0.0
    %3708 = vmatpush1.msra.mxu0 0.0
    %3709 = vmatprep.subr.mxu0 0.0
    %3710 = vmatpush1.msra.mxu0 0.0
    %3711 = vmatprep.subr.mxu0 0.0
    %3712 = vmatpush1.msra.mxu0 0.0
    %3713 = vmatprep.subr.mxu0 0.0
    %3714 = vmatpush1.msra.mxu0 0.0
    %3715 = vmatprep.subr.mxu0 0.0
    %3716 = vmatpush1.msra.mxu0 0.0
    %3717 = vmatprep.subr.mxu0 0.0
    %3718 = vmatpush1.msra.mxu0 0.0
    %3719 = vmatprep.subr.mxu0 0.0
    %3720 = vmatpush1.msra.mxu0 0.0
    %3721 = vmatprep.subr.mxu0 0.0
    %3722 = vmatpush1.msra.mxu0 0.0
    %3723 = vmatprep.subr.mxu0 0.0
    %3724 = vmatpush1.msra.mxu0 0.0
    %3725 = vmatprep.subr.mxu0 0.0
    %3726 = vmatpush1.msra.mxu0 0.0
    %3727 = vmatprep.subr.mxu0 0.0
    %3728 = vmatpush1.msra.mxu0 0.0
    %3729 = vmatprep.subr.mxu0 0.0
    %3730 = vmatpush1.msra.mxu0 0.0
    %3731 = vmatprep.subr.mxu0 0.0
    %3732 = vmatpush1.msra.mxu0 0.0
    %3733 = vmatprep.subr.mxu0 0.0
    %3734 = vmatpush1.msra.mxu0 0.0
    %3735 = vmatprep.subr.mxu0 0.0
    %3736 = vmatpush1.msra.mxu0 0.0
    %3737 = vmatprep.mubr.f32.mxu0 0.0
    %3738 = vmatmul.mubr.f32.gmra.mrb[0].mxu0 %v3578
    %v3739 = vpop.f32.mrb[0].mxu0
    %v3740 = vadd.f32 %v3671, %v3739
    %v3741 = vpop.f32.mrb[0].mxu0
    %3742 = vmatprep.mubr.f32.mxu0 0.0
    %3743 = vmatmul.mubr.f32.gmra.mrb[0].mxu0 %v3579
    %v3744 = vpop.f32.mrb[0].mxu0
    %v3745 = vadd.f32 %v3671, %v3744
    %v3746 = vpop.f32.mrb[0].mxu0
    %3747 = vmatprep.mubr.f32.mxu0 0.0
    %3748 = vmatmul.mubr.f32.gmra.mrb[0].mxu0 %v3580
    %v3749 = vpop.f32.mrb[0].mxu0
    %v3750 = vadd.f32 %v3671, %v3749
    %v3751 = vpop.f32.mrb[0].mxu0
    %3752 = vmatprep.mubr.f32.mxu0 0.0
    %3753 = vmatmul.mubr.f32.gmra.mrb[0].mxu0 %v3581
    %v3754 = vpop.f32.mrb[0].mxu0
    %v3755 = vadd.f32 %v3671, %v3754
    %v3756 = vpop.f32.mrb[0].mxu0
    %3757 = vmatprep.mubr.f32.mxu0 0.0
    %3758 = vmatmul.mubr.f32.gmra.mrb[0].mxu0 %v3582
    %v3759 = vpop.f32.mrb[0].mxu0
    %v3760 = vadd.f32 %v3671, %v3759
    %v3761 = vpop.f32.mrb[0].mxu0
    %3762 = vmatprep.mubr.f32.mxu0 0.0
    %3763 = vmatmul.mubr.f32.gmra.mrb[0].mxu0 %v3583
    %v3764 = vpop.f32.mrb[0].mxu0
    %v3765 = vadd.f32 %v3671, %v3764
    %v3766 = vpop.f32.mrb[0].mxu0
    %3767 = vmatprep.mubr.f32.mxu0 0.0
    %3768 = vmatmul.mubr.f32.gmra.mrb[0].mxu0 %v3584
    %v3769 = vpop.f32.mrb[0].mxu0
    %v3770 = vadd.f32 %v3671, %v3769
    %v3771 = vpop.f32.mrb[0].mxu0
    %3772 = vmatprep.mubr.f32.mxu0 0.0
    %3773 = vmatmul.mubr.f32.gmra.mrb[0].mxu0 %v3585
    %v3774 = vpop.f32.mrb[0].mxu0
    %v3775 = vadd.f32 %v3671, %v3774
    %v3776 = vpop.f32.mrb[0].mxu0
    %3777 = vmatprep.mubr.f32.mxu0 0.0
    %3778 = vmatmul.mubr.f32.gmra.mrb[0].mxu0 %v3586
    %v3779 = vpop.f32.mrb[0].mxu0
    %v3780 = vadd.f32 %v3671, %v3779
    %v3781 = vpop.f32.mrb[0].mxu0
    %3782 = vmatprep.mubr.f32.mxu0 0.0
    %3783 = vmatmul.mubr.f32.gmra.mrb[0].mxu0 %v3587
    %v3784 = vpop.f32.mrb[0].mxu0
    %v3785 = vadd.f32 %v3671, %v3784
    %v3786 = vpop.f32.mrb[0].mxu0
    %3787 = vmatprep.mubr.f32.mxu0 0.0
    %3788 = vmatmul.mubr.f32.gmra.mrb[0].mxu0 %v3588
    %v3789 = vpop.f32.mrb[0].mxu0
    %v3790 = vadd.f32 %v3671, %v3789
    %v3791 = vpop.f32.mrb[0].mxu0
    %3792 = vmatprep.mubr.f32.mxu0 0.0
    %3793 = vmatmul.mubr.f32.gmra.mrb[0].mxu0 %v3589
    %v3794 = vpop.f32.mrb[0].mxu0
    %v3795 = vadd.f32 %v3671, %v3794
    %v3796 = vpop.f32.mrb[0].mxu0
    %3797 = vmatprep.mubr.f32.mxu0 0.0
    %3798 = vmatmul.mubr.f32.gmra.mrb[0].mxu0 %v3590
    %v3799 = vpop.f32.mrb[0].mxu0
    %v3800 = vadd.f32 %v3671, %v3799
    %v3801 = vpop.f32.mrb[0].mxu0
    %3802 = vdwg.mxu0
    %v3803 = vld [vmem:[#allocation7] sm:$0xff]
    %v3804 = vld [vmem:[#allocation7 + $0x8] sm:$0xff]
    %v3805 = vld [vmem:[#allocation7 + $0x10] sm:$0xff]
    %v3806 = vld [vmem:[#allocation7 + $0x18] sm:$0xff]
    %v3807 = vld [vmem:[#allocation7 + $0x20] sm:$0xff]
    %v3808 = vld [vmem:[#allocation7 + $0x28] sm:$0xff]
    %v3809 = vld [vmem:[#allocation7 + $0x30] sm:$0xff]
    %v3810 = vld [vmem:[#allocation7 + $0x38] sm:$0xff]
    %v3811 = vld [vmem:[#allocation7 + $0x40] sm:$0xff]
    %v3812 = vld [vmem:[#allocation7 + $0x48] sm:$0xff]
    %v3813 = vld [vmem:[#allocation7 + $0x50] sm:$0xff]
    %v3814 = vld [vmem:[#allocation7 + $0x58] sm:$0xff]
    %v3815 = vld [vmem:[#allocation7 + $0x60] sm:$0xf]
    %v3816 = vadd.f32 %v3803, %v3740
    %v3817 = vadd.f32 %v3804, %v3745
    %v3818 = vadd.f32 %v3805, %v3750
    %v3819 = vadd.f32 %v3806, %v3755
    %v3820 = vadd.f32 %v3807, %v3760
    %v3821 = vadd.f32 %v3808, %v3765
    %v3822 = vadd.f32 %v3809, %v3770
    %v3823 = vadd.f32 %v3810, %v3775
    %v3824 = vadd.f32 %v3811, %v3780
    %v3825 = vadd.f32 %v3812, %v3785
    %v3826 = vadd.f32 %v3813, %v3790
    %v3827 = vadd.f32 %v3814, %v3795
    %v3828 = vadd.f32 %v3815, %v3800
    %vm3829 = vcmp.gt.f32.partialorder %v3816, 0.5
    %vm3830 = vcmp.gt.f32.partialorder %v3817, 0.5
    %vm3831 = vcmp.gt.f32.partialorder %v3818, 0.5
    %vm3832 = vcmp.gt.f32.partialorder %v3819, 0.5
    %vm3833 = vcmp.gt.f32.partialorder %v3820, 0.5
    %vm3834 = vcmp.gt.f32.partialorder %v3821, 0.5
    %vm3835 = vcmp.gt.f32.partialorder %v3822, 0.5
    %vm3836 = vcmp.gt.f32.partialorder %v3823, 0.5
    %vm3837 = vcmp.gt.f32.partialorder %v3824, 0.5
    %vm3838 = vcmp.gt.f32.partialorder %v3825, 0.5
    %vm3839 = vcmp.gt.f32.partialorder %v3826, 0.5
    %vm3840 = vcmp.gt.f32.partialorder %v3827, 0.5
    %vm3841 = vcmp.gt.f32.partialorder %v3828, 0.5
    %v3842 = vsel %vm3829, 1, 0
    %v3843 = vsel %vm3830, 1, 0
    %v3844 = vsel %vm3831, 1, 0
    %v3845 = vsel %vm3832, 1, 0
    %v3846 = vsel %vm3833, 1, 0
    %v3847 = vsel %vm3834, 1, 0
    %v3848 = vsel %vm3835, 1, 0
    %v3849 = vsel %vm3836, 1, 0
    %v3850 = vsel %vm3837, 1, 0
    %v3851 = vsel %vm3838, 1, 0
    %v3852 = vsel %vm3839, 1, 0
    %v3853 = vsel %vm3840, 1, 0
    %v3854 = vsel %vm3841, 1, 0
    %v3855 = vcvt.s32.f32 %v3842
    %v3856 = vcvt.s32.f32 %v3843
    %v3857 = vcvt.s32.f32 %v3844
    %v3858 = vcvt.s32.f32 %v3845
    %v3859 = vcvt.s32.f32 %v3846
    %v3860 = vcvt.s32.f32 %v3847
    %v3861 = vcvt.s32.f32 %v3848
    %v3862 = vcvt.s32.f32 %v3849
    %v3863 = vcvt.s32.f32 %v3850
    %v3864 = vcvt.s32.f32 %v3851
    %v3865 = vcvt.s32.f32 %v3852
    %v3866 = vcvt.s32.f32 %v3853
    %v3867 = vcvt.s32.f32 %v3854
    %v3868 = vmul.f32 %v3816, 0.2
    %v3869 = vmul.f32 %v3817, 0.2
    %v3870 = vmul.f32 %v3818, 0.2
    %v3871 = vmul.f32 %v3819, 0.2
    %v3872 = vmul.f32 %v3820, 0.2
    %v3873 = vmul.f32 %v3821, 0.2
    %v3874 = vmul.f32 %v3822, 0.2
    %v3875 = vmul.f32 %v3823, 0.2
    %v3876 = vmul.f32 %v3824, 0.2
    %v3877 = vmul.f32 %v3825, 0.2
    %v3878 = vmul.f32 %v3826, 0.2
    %v3879 = vmul.f32 %v3827, 0.2
    %v3880 = vmul.f32 %v3828, 0.2
    %v3881 = vsel %vm3829, 0.0, %v3868
    %v3882 = vsel %vm3830, 0.0, %v3869
    %v3883 = vsel %vm3831, 0.0, %v3870
    %v3884 = vsel %vm3832, 0.0, %v3871
    %v3885 = vsel %vm3833, 0.0, %v3872
    %v3886 = vsel %vm3834, 0.0, %v3873
    %v3887 = vsel %vm3835, 0.0, %v3874
    %v3888 = vsel %vm3836, 0.0, %v3875
    %v3889 = vsel %vm3837, 0.0, %v3876
    %v3890 = vsel %vm3838, 0.0, %v3877
    %v3891 = vsel %vm3839, 0.0, %v3878
    %v3892 = vsel %vm3840, 0.0, %v3879
    %v3893 = vsel %vm3841, 0.0, %v3880
    %3894 = vst [vmem:[#allocation7] sm:$0xff] %v3881
    %3895 = vst [vmem:[#allocation7 + $0x8] sm:$0xff] %v3882
    %3896 = vst [vmem:[#allocation7 + $0x10] sm:$0xff] %v3883
    %3897 = vst [vmem:[#allocation7 + $0x18] sm:$0xff] %v3884
    %3898 = vst [vmem:[#allocation7 + $0x20] sm:$0xff] %v3885
    %3899 = vst [vmem:[#allocation7 + $0x28] sm:$0xff] %v3886
    %3900 = vst [vmem:[#allocation7 + $0x30] sm:$0xff] %v3887
    %3901 = vst [vmem:[#allocation7 + $0x38] sm:$0xff] %v3888
    %3902 = vst [vmem:[#allocation7 + $0x40] sm:$0xff] %v3889
    %3903 = vst [vmem:[#allocation7 + $0x48] sm:$0xff] %v3890
    %3904 = vst [vmem:[#allocation7 + $0x50] sm:$0xff] %v3891
    %3905 = vst [vmem:[#allocation7 + $0x58] sm:$0xff] %v3892
    %3906 = vst [vmem:[#allocation7 + $0x60] sm:$0xf] %v3893
    %v3907 = vld [vmem:[#allocation19] sm:$0xff]
    %v3908 = vld [vmem:[#allocation19 + $0x8] sm:$0xff]
    %v3909 = vld [vmem:[#allocation19 + $0x10] sm:$0xff]
    %v3910 = vld [vmem:[#allocation19 + $0x18] sm:$0xff]
    %v3911 = vld [vmem:[#allocation19 + $0x20] sm:$0xff]
    %v3912 = vld [vmem:[#allocation19 + $0x28] sm:$0xff]
    %v3913 = vld [vmem:[#allocation19 + $0x30] sm:$0xff]
    %v3914 = vld [vmem:[#allocation19 + $0x38] sm:$0xff]
    %v3915 = vld [vmem:[#allocation19 + $0x40] sm:$0xff]
    %v3916 = vld [vmem:[#allocation19 + $0x48] sm:$0xff]
    %v3917 = vld [vmem:[#allocation19 + $0x50] sm:$0xff]
    %v3918 = vld [vmem:[#allocation19 + $0x58] sm:$0xff]
    %v3919 = vld [vmem:[#allocation19 + $0x60] sm:$0xf]
    %v3920 = vadd.f32 %v3907, %v3855
    %v3921 = vadd.f32 %v3908, %v3856
    %v3922 = vadd.f32 %v3909, %v3857
    %v3923 = vadd.f32 %v3910, %v3858
    %v3924 = vadd.f32 %v3911, %v3859
    %v3925 = vadd.f32 %v3912, %v3860
    %v3926 = vadd.f32 %v3913, %v3861
    %v3927 = vadd.f32 %v3914, %v3862
    %v3928 = vadd.f32 %v3915, %v3863
    %v3929 = vadd.f32 %v3916, %v3864
    %v3930 = vadd.f32 %v3917, %v3865
    %v3931 = vadd.f32 %v3918, %v3866
    %v3932 = vadd.f32 %v3919, %v3867
    %3933 = vst [vmem:[#allocation19] sm:$0xff] %v3920
    %3934 = vst [vmem:[#allocation19 + $0x8] sm:$0xff] %v3921
    %3935 = vst [vmem:[#allocation19 + $0x10] sm:$0xff] %v3922
    %3936 = vst [vmem:[#allocation19 + $0x18] sm:$0xff] %v3923
    %3937 = vst [vmem:[#allocation19 + $0x20] sm:$0xff] %v3924
    %3938 = vst [vmem:[#allocation19 + $0x28] sm:$0xff] %v3925
    %3939 = vst [vmem:[#allocation19 + $0x30] sm:$0xff] %v3926
    %3940 = vst [vmem:[#allocation19 + $0x38] sm:$0xff] %v3927
    %3941 = vst [vmem:[#allocation19 + $0x40] sm:$0xff] %v3928
    %3942 = vst [vmem:[#allocation19 + $0x48] sm:$0xff] %v3929
    %3943 = vst [vmem:[#allocation19 + $0x50] sm:$0xff] %v3930
    %3944 = vst [vmem:[#allocation19 + $0x58] sm:$0xff] %v3931
    %3945 = vst [vmem:[#allocation19 + $0x60] sm:$0xf] %v3932
    %v3946 = vld [vmem:[#allocation2] sm:$0xff]
    %v3947 = vld [vmem:[#allocation2 + $0x8] sm:$0xff]
    %v3948 = vld [vmem:[#allocation2 + $0x10] sm:$0xff]
    %v3949 = vld [vmem:[#allocation2 + $0x18] sm:$0xff]
    %v3950 = vld [vmem:[#allocation2 + $0x20] sm:$0xff]
    %v3951 = vld [vmem:[#allocation2 + $0x28] sm:$0xff]
    %v3952 = vld [vmem:[#allocation2 + $0x30] sm:$0xff]
    %v3953 = vld [vmem:[#allocation2 + $0x38] sm:$0xff]
    %v3954 = vld [vmem:[#allocation2 + $0x40] sm:$0xff]
    %v3955 = vld [vmem:[#allocation2 + $0x48] sm:$0xff]
    %v3956 = vld [vmem:[#allocation2 + $0x50] sm:$0xff]
    %v3957 = vld [vmem:[#allocation2 + $0x58] sm:$0xff]
    %v3958 = vld [vmem:[#allocation2 + $0x60] sm:$0xf]
    %v3959 = vld [vmem:[#allocation3] sm:$0xff]
    %v3960 = vld [vmem:[#allocation3 + $0x8] sm:$0xff]
    %v3961 = vld [vmem:[#allocation3 + $0x10] sm:$0xff]
    %v3962 = vld [vmem:[#allocation3 + $0x18] sm:$0xff]
    %v3963 = vld [vmem:[#allocation3 + $0x20] sm:$0xff]
    %v3964 = vld [vmem:[#allocation3 + $0x28] sm:$0xff]
    %v3965 = vld [vmem:[#allocation3 + $0x30] sm:$0xff]
    %v3966 = vld [vmem:[#allocation3 + $0x38] sm:$0xff]
    %v3967 = vld [vmem:[#allocation3 + $0x40] sm:$0xff]
    %v3968 = vld [vmem:[#allocation3 + $0x48] sm:$0xff]
    %v3969 = vld [vmem:[#allocation3 + $0x50] sm:$0xff]
    %v3970 = vld [vmem:[#allocation3 + $0x58] sm:$0xff]
    %v3971 = vld [vmem:[#allocation3 + $0x60] sm:$0xf]
    %v3972 = vadd.f32 %v3959, %v3946
    %v3973 = vadd.f32 %v3960, %v3947
    %v3974 = vadd.f32 %v3961, %v3948
    %v3975 = vadd.f32 %v3962, %v3949
    %v3976 = vadd.f32 %v3963, %v3950
    %v3977 = vadd.f32 %v3964, %v3951
    %v3978 = vadd.f32 %v3965, %v3952
    %v3979 = vadd.f32 %v3966, %v3953
    %v3980 = vadd.f32 %v3967, %v3954
    %v3981 = vadd.f32 %v3968, %v3955
    %v3982 = vadd.f32 %v3969, %v3956
    %v3983 = vadd.f32 %v3970, %v3957
    %v3984 = vadd.f32 %v3971, %v3958
    %vm3985 = vcmp.gt.f32.partialorder %v3972, 0.5
    %vm3986 = vcmp.gt.f32.partialorder %v3973, 0.5
    %vm3987 = vcmp.gt.f32.partialorder %v3974, 0.5
    %vm3988 = vcmp.gt.f32.partialorder %v3975, 0.5
    %vm3989 = vcmp.gt.f32.partialorder %v3976, 0.5
    %vm3990 = vcmp.gt.f32.partialorder %v3977, 0.5
    %vm3991 = vcmp.gt.f32.partialorder %v3978, 0.5
    %vm3992 = vcmp.gt.f32.partialorder %v3979, 0.5
    %vm3993 = vcmp.gt.f32.partialorder %v3980, 0.5
    %vm3994 = vcmp.gt.f32.partialorder %v3981, 0.5
    %vm3995 = vcmp.gt.f32.partialorder %v3982, 0.5
    %vm3996 = vcmp.gt.f32.partialorder %v3983, 0.5
    %vm3997 = vcmp.gt.f32.partialorder %v3984, 0.5
    %v3998 = vsel %vm3985, 1, 0
    %v3999 = vsel %vm3986, 1, 0
    %v4000 = vsel %vm3987, 1, 0
    %v4001 = vsel %vm3988, 1, 0
    %v4002 = vsel %vm3989, 1, 0
    %v4003 = vsel %vm3990, 1, 0
    %v4004 = vsel %vm3991, 1, 0
    %v4005 = vsel %vm3992, 1, 0
    %v4006 = vsel %vm3993, 1, 0
    %v4007 = vsel %vm3994, 1, 0
    %v4008 = vsel %vm3995, 1, 0
    %v4009 = vsel %vm3996, 1, 0
    %v4010 = vsel %vm3997, 1, 0
    %v4011 = vcvt.s32.f32 %v3998
    %v4012 = vcvt.s32.f32 %v3999
    %v4013 = vcvt.s32.f32 %v4000
    %v4014 = vcvt.s32.f32 %v4001
    %v4015 = vcvt.s32.f32 %v4002
    %v4016 = vcvt.s32.f32 %v4003
    %v4017 = vcvt.s32.f32 %v4004
    %v4018 = vcvt.s32.f32 %v4005
    %v4019 = vcvt.s32.f32 %v4006
    %v4020 = vcvt.s32.f32 %v4007
    %v4021 = vcvt.s32.f32 %v4008
    %v4022 = vcvt.s32.f32 %v4009
    %v4023 = vcvt.s32.f32 %v4010
    %v4024 = vadd.f32 %v4011, %v4012
    %v4025 = vadd.f32 %v4024, %v4013
    %v4026 = vadd.f32 %v4025, %v4014
    %v4027 = vadd.f32 %v4026, %v4015
    %v4028 = vadd.f32 %v4027, %v4016
    %v4029 = vadd.f32 %v4028, %v4017
    %v4030 = vadd.f32 %v4029, %v4018
    %v4031 = vadd.f32 %v4030, %v4019
    %v4032 = vadd.f32 %v4031, %v4020
    %v4033 = vadd.f32 %v4032, %v4021
    %v4034 = vadd.f32 %v4033, %v4022
    %v4035 = vsel %vm411, %v4023, 0.0
    %v4036 = vadd.f32 %v4034, %v4035
    %v4037 = vrot.slane %v4036, 4
    %v4038 = vadd.f32 %v4036, %v4037
    %v4039 = vrot.slane %v4038, 2
    %v4040 = vadd.f32 %v4038, %v4039
    %v4041 = vrot.slane %v4040, 1
    %v4042 = vadd.f32 %v4040, %v4041
    %v4043 = vadd.f32 %v2818, %v4042
    %v4044 = vld [vmem:[#allocation13] sm:$0xff]
    %v4045 = vld [vmem:[#allocation13 + $0x8] sm:$0xff]
    %v4046 = vld [vmem:[#allocation13 + $0x10] sm:$0xff]
    %v4047 = vld [vmem:[#allocation13 + $0x18] sm:$0xff]
    %v4048 = vld [vmem:[#allocation13 + $0x20] sm:$0xff]
    %v4049 = vld [vmem:[#allocation13 + $0x28] sm:$0xff]
    %v4050 = vld [vmem:[#allocation13 + $0x30] sm:$0xff]
    %v4051 = vld [vmem:[#allocation13 + $0x38] sm:$0xff]
    %v4052 = vld [vmem:[#allocation13 + $0x40] sm:$0xff]
    %v4053 = vld [vmem:[#allocation13 + $0x48] sm:$0xff]
    %v4054 = vld [vmem:[#allocation13 + $0x50] sm:$0xff]
    %v4055 = vld [vmem:[#allocation13 + $0x58] sm:$0xff]
    %v4056 = vld [vmem:[#allocation13 + $0x60] sm:$0xff]
    %v4057 = vld [vmem:[#allocation13 + $0x68] sm:$0xff]
    %v4058 = vld [vmem:[#allocation13 + $0x70] sm:$0xff]
    %v4059 = vld [vmem:[#allocation13 + $0x78] sm:$0xff]
    %v4060 = vld [vmem:[%s4] sm:$0x1]
    %v4062 = vlaneseq
    %v4063 = vshrl.u32 %v4062, 7
    %v4064 = vsub.s32 0, %v4063
    %v4065 = vrot.slane %v4060, %v4064
    %4067 = vmatprep.subr.mxu0 0.0
    %4068 = vmatpush1.msra.mxu0 %v4044
    %4069 = vmatprep.subr.mxu0 0.0
    %4070 = vmatpush1.msra.mxu0 %v4045
    %4071 = vmatprep.subr.mxu0 0.0
    %4072 = vmatpush1.msra.mxu0 %v4046
    %4073 = vmatprep.subr.mxu0 0.0
    %4074 = vmatpush1.msra.mxu0 %v4047
    %4075 = vmatprep.subr.mxu0 0.0
    %4076 = vmatpush1.msra.mxu0 %v4048
    %4077 = vmatprep.subr.mxu0 0.0
    %4078 = vmatpush1.msra.mxu0 %v4049
    %4079 = vmatprep.subr.mxu0 0.0
    %4080 = vmatpush1.msra.mxu0 %v4050
    %4081 = vmatprep.subr.mxu0 0.0
    %4082 = vmatpush1.msra.mxu0 %v4051
    %4083 = vmatprep.subr.mxu0 0.0
    %4084 = vmatpush1.msra.mxu0 %v4052
    %4085 = vmatprep.subr.mxu0 0.0
    %4086 = vmatpush1.msra.mxu0 %v4053
    %4087 = vmatprep.subr.mxu0 0.0
    %4088 = vmatpush1.msra.mxu0 %v4054
    %4089 = vmatprep.subr.mxu0 0.0
    %4090 = vmatpush1.msra.mxu0 %v4055
    %4091 = vmatprep.subr.mxu0 0.0
    %4092 = vmatpush1.msra.mxu0 %v4056
    %4093 = vmatprep.subr.mxu0 0.0
    %4094 = vmatpush1.msra.mxu0 %v4057
    %4095 = vmatprep.subr.mxu0 0.0
    %4096 = vmatpush1.msra.mxu0 %v4058
    %4097 = vmatprep.subr.mxu0 0.0
    %4098 = vmatpush1.msra.mxu0 %v4059
    %4099 = vmatprep.subr.mxu0 0.0
    %4100 = vmatpush1.msra.mxu0 0.0
    %4101 = vmatprep.subr.mxu0 0.0
    %4102 = vmatpush1.msra.mxu0 0.0
    %4103 = vmatprep.subr.mxu0 0.0
    %4104 = vmatpush1.msra.mxu0 0.0
    %4105 = vmatprep.subr.mxu0 0.0
    %4106 = vmatpush1.msra.mxu0 0.0
    %4107 = vmatprep.subr.mxu0 0.0
    %4108 = vmatpush1.msra.mxu0 0.0
    %4109 = vmatprep.subr.mxu0 0.0
    %4110 = vmatpush1.msra.mxu0 0.0
    %4111 = vmatprep.subr.mxu0 0.0
    %4112 = vmatpush1.msra.mxu0 0.0
    %4113 = vmatprep.subr.mxu0 0.0
    %4114 = vmatpush1.msra.mxu0 0.0
    %4115 = vmatprep.subr.mxu0 0.0
    %4116 = vmatpush1.msra.mxu0 0.0
    %4117 = vmatprep.subr.mxu0 0.0
    %4118 = vmatpush1.msra.mxu0 0.0
    %4119 = vmatprep.subr.mxu0 0.0
    %4120 = vmatpush1.msra.mxu0 0.0
    %4121 = vmatprep.subr.mxu0 0.0
    %4122 = vmatpush1.msra.mxu0 0.0
    %4123 = vmatprep.subr.mxu0 0.0
    %4124 = vmatpush1.msra.mxu0 0.0
    %4125 = vmatprep.subr.mxu0 0.0
    %4126 = vmatpush1.msra.mxu0 0.0
    %4127 = vmatprep.subr.mxu0 0.0
    %4128 = vmatpush1.msra.mxu0 0.0
    %4129 = vmatprep.subr.mxu0 0.0
    %4130 = vmatpush1.msra.mxu0 0.0
    %4131 = vmatprep.mubr.f32.mxu0 0.0
    %4132 = vmatmul.mubr.f32.gmra.mrb[0].mxu0 %v4011
    %v4133 = vpop.f32.mrb[0].mxu0
    %v4134 = vadd.f32 %v4065, %v4133
    %v4135 = vpop.f32.mrb[0].mxu0
    %4136 = vmatprep.mubr.f32.mxu0 0.0
    %4137 = vmatmul.mubr.f32.gmra.mrb[0].mxu0 %v4012
    %v4138 = vpop.f32.mrb[0].mxu0
    %v4139 = vadd.f32 %v4065, %v4138
    %v4140 = vpop.f32.mrb[0].mxu0
    %4141 = vmatprep.mubr.f32.mxu0 0.0
    %4142 = vmatmul.mubr.f32.gmra.mrb[0].mxu0 %v4013
    %v4143 = vpop.f32.mrb[0].mxu0
    %v4144 = vadd.f32 %v4065, %v4143
    %v4145 = vpop.f32.mrb[0].mxu0
    %4146 = vmatprep.mubr.f32.mxu0 0.0
    %4147 = vmatmul.mubr.f32.gmra.mrb[0].mxu0 %v4014
    %v4148 = vpop.f32.mrb[0].mxu0
    %v4149 = vadd.f32 %v4065, %v4148
    %v4150 = vpop.f32.mrb[0].mxu0
    %4151 = vmatprep.mubr.f32.mxu0 0.0
    %4152 = vmatmul.mubr.f32.gmra.mrb[0].mxu0 %v4015
    %v4153 = vpop.f32.mrb[0].mxu0
    %v4154 = vadd.f32 %v4065, %v4153
    %v4155 = vpop.f32.mrb[0].mxu0
    %4156 = vmatprep.mubr.f32.mxu0 0.0
    %4157 = vmatmul.mubr.f32.gmra.mrb[0].mxu0 %v4016
    %v4158 = vpop.f32.mrb[0].mxu0
    %v4159 = vadd.f32 %v4065, %v4158
    %v4160 = vpop.f32.mrb[0].mxu0
    %4161 = vmatprep.mubr.f32.mxu0 0.0
    %4162 = vmatmul.mubr.f32.gmra.mrb[0].mxu0 %v4017
    %v4163 = vpop.f32.mrb[0].mxu0
    %v4164 = vadd.f32 %v4065, %v4163
    %v4165 = vpop.f32.mrb[0].mxu0
    %4166 = vmatprep.mubr.f32.mxu0 0.0
    %4167 = vmatmul.mubr.f32.gmra.mrb[0].mxu0 %v4018
    %v4168 = vpop.f32.mrb[0].mxu0
    %v4169 = vadd.f32 %v4065, %v4168
    %v4170 = vpop.f32.mrb[0].mxu0
    %4171 = vmatprep.mubr.f32.mxu0 0.0
    %4172 = vmatmul.mubr.f32.gmra.mrb[0].mxu0 %v4019
    %v4173 = vpop.f32.mrb[0].mxu0
    %v4174 = vadd.f32 %v4065, %v4173
    %v4175 = vpop.f32.mrb[0].mxu0
    %4176 = vmatprep.mubr.f32.mxu0 0.0
    %4177 = vmatmul.mubr.f32.gmra.mrb[0].mxu0 %v4020
    %v4178 = vpop.f32.mrb[0].mxu0
    %v4179 = vadd.f32 %v4065, %v4178
    %v4180 = vpop.f32.mrb[0].mxu0
    %4181 = vmatprep.mubr.f32.mxu0 0.0
    %4182 = vmatmul.mubr.f32.gmra.mrb[0].mxu0 %v4021
    %v4183 = vpop.f32.mrb[0].mxu0
    %v4184 = vadd.f32 %v4065, %v4183
    %v4185 = vpop.f32.mrb[0].mxu0
    %4186 = vmatprep.mubr.f32.mxu0 0.0
    %4187 = vmatmul.mubr.f32.gmra.mrb[0].mxu0 %v4022
    %v4188 = vpop.f32.mrb[0].mxu0
    %v4189 = vadd.f32 %v4065, %v4188
    %v4190 = vpop.f32.mrb[0].mxu0
    %4191 = vmatprep.mubr.f32.mxu0 0.0
    %4192 = vmatmul.mubr.f32.gmra.mrb[0].mxu0 %v4023
    %v4193 = vpop.f32.mrb[0].mxu0
    %v4194 = vadd.f32 %v4065, %v4193
    %v4195 = vpop.f32.mrb[0].mxu0
    %4196 = vdwg.mxu0
    %v4197 = vld [vmem:[#allocation4] sm:$0xff]
    %v4198 = vld [vmem:[#allocation4 + $0x8] sm:$0xff]
    %v4199 = vld [vmem:[#allocation4 + $0x10] sm:$0xff]
    %v4200 = vld [vmem:[#allocation4 + $0x18] sm:$0xff]
    %v4201 = vld [vmem:[#allocation4 + $0x20] sm:$0xff]
    %v4202 = vld [vmem:[#allocation4 + $0x28] sm:$0xff]
    %v4203 = vld [vmem:[#allocation4 + $0x30] sm:$0xff]
    %v4204 = vld [vmem:[#allocation4 + $0x38] sm:$0xff]
    %v4205 = vld [vmem:[#allocation4 + $0x40] sm:$0xff]
    %v4206 = vld [vmem:[#allocation4 + $0x48] sm:$0xff]
    %v4207 = vld [vmem:[#allocation4 + $0x50] sm:$0xff]
    %v4208 = vld [vmem:[#allocation4 + $0x58] sm:$0xff]
    %v4209 = vld [vmem:[#allocation4 + $0x60] sm:$0xf]
    %v4210 = vadd.f32 %v4197, %v4134
    %v4211 = vadd.f32 %v4198, %v4139
    %v4212 = vadd.f32 %v4199, %v4144
    %v4213 = vadd.f32 %v4200, %v4149
    %v4214 = vadd.f32 %v4201, %v4154
    %v4215 = vadd.f32 %v4202, %v4159
    %v4216 = vadd.f32 %v4203, %v4164
    %v4217 = vadd.f32 %v4204, %v4169
    %v4218 = vadd.f32 %v4205, %v4174
    %v4219 = vadd.f32 %v4206, %v4179
    %v4220 = vadd.f32 %v4207, %v4184
    %v4221 = vadd.f32 %v4208, %v4189
    %v4222 = vadd.f32 %v4209, %v4194
    %vm4223 = vcmp.gt.f32.partialorder %v4210, 0.5
    %vm4224 = vcmp.gt.f32.partialorder %v4211, 0.5
    %vm4225 = vcmp.gt.f32.partialorder %v4212, 0.5
    %vm4226 = vcmp.gt.f32.partialorder %v4213, 0.5
    %vm4227 = vcmp.gt.f32.partialorder %v4214, 0.5
    %vm4228 = vcmp.gt.f32.partialorder %v4215, 0.5
    %vm4229 = vcmp.gt.f32.partialorder %v4216, 0.5
    %vm4230 = vcmp.gt.f32.partialorder %v4217, 0.5
    %vm4231 = vcmp.gt.f32.partialorder %v4218, 0.5
    %vm4232 = vcmp.gt.f32.partialorder %v4219, 0.5
    %vm4233 = vcmp.gt.f32.partialorder %v4220, 0.5
    %vm4234 = vcmp.gt.f32.partialorder %v4221, 0.5
    %vm4235 = vcmp.gt.f32.partialorder %v4222, 0.5
    %v4236 = vsel %vm4223, 1, 0
    %v4237 = vsel %vm4224, 1, 0
    %v4238 = vsel %vm4225, 1, 0
    %v4239 = vsel %vm4226, 1, 0
    %v4240 = vsel %vm4227, 1, 0
    %v4241 = vsel %vm4228, 1, 0
    %v4242 = vsel %vm4229, 1, 0
    %v4243 = vsel %vm4230, 1, 0
    %v4244 = vsel %vm4231, 1, 0
    %v4245 = vsel %vm4232, 1, 0
    %v4246 = vsel %vm4233, 1, 0
    %v4247 = vsel %vm4234, 1, 0
    %v4248 = vsel %vm4235, 1, 0
    %v4249 = vcvt.s32.f32 %v4236
    %v4250 = vcvt.s32.f32 %v4237
    %v4251 = vcvt.s32.f32 %v4238
    %v4252 = vcvt.s32.f32 %v4239
    %v4253 = vcvt.s32.f32 %v4240
    %v4254 = vcvt.s32.f32 %v4241
    %v4255 = vcvt.s32.f32 %v4242
    %v4256 = vcvt.s32.f32 %v4243
    %v4257 = vcvt.s32.f32 %v4244
    %v4258 = vcvt.s32.f32 %v4245
    %v4259 = vcvt.s32.f32 %v4246
    %v4260 = vcvt.s32.f32 %v4247
    %v4261 = vcvt.s32.f32 %v4248
    %v4262 = vadd.f32 %v4249, %v4250
    %v4263 = vadd.f32 %v4262, %v4251
    %v4264 = vadd.f32 %v4263, %v4252
    %v4265 = vadd.f32 %v4264, %v4253
    %v4266 = vadd.f32 %v4265, %v4254
    %v4267 = vadd.f32 %v4266, %v4255
    %v4268 = vadd.f32 %v4267, %v4256
    %v4269 = vadd.f32 %v4268, %v4257
    %v4270 = vadd.f32 %v4269, %v4258
    %v4271 = vadd.f32 %v4270, %v4259
    %v4272 = vadd.f32 %v4271, %v4260
    %v4273 = vsel %vm411, %v4261, 0.0
    %v4274 = vadd.f32 %v4272, %v4273
    %v4275 = vrot.slane %v4274, 4
    %v4276 = vadd.f32 %v4274, %v4275
    %v4277 = vrot.slane %v4276, 2
    %v4278 = vadd.f32 %v4276, %v4277
    %v4279 = vrot.slane %v4278, 1
    %v4280 = vadd.f32 %v4278, %v4279
    %v4281 = vadd.f32 %v3095, %v4280
    %v4282 = vld [vmem:[#allocation14] sm:$0xff]
    %v4283 = vld [vmem:[#allocation14 + $0x8] sm:$0xff]
    %v4284 = vld [vmem:[#allocation14 + $0x10] sm:$0xff]
    %v4285 = vld [vmem:[#allocation14 + $0x18] sm:$0xff]
    %v4286 = vld [vmem:[#allocation14 + $0x20] sm:$0xff]
    %v4287 = vld [vmem:[#allocation14 + $0x28] sm:$0xff]
    %v4288 = vld [vmem:[#allocation14 + $0x30] sm:$0xff]
    %v4289 = vld [vmem:[#allocation14 + $0x38] sm:$0xff]
    %v4290 = vld [vmem:[#allocation14 + $0x40] sm:$0xff]
    %v4291 = vld [vmem:[#allocation14 + $0x48] sm:$0xff]
    %v4292 = vld [vmem:[#allocation14 + $0x50] sm:$0xff]
    %v4293 = vld [vmem:[#allocation14 + $0x58] sm:$0xff]
    %v4294 = vld [vmem:[#allocation14 + $0x60] sm:$0xff]
    %v4295 = vld [vmem:[#allocation14 + $0x68] sm:$0xff]
    %v4296 = vld [vmem:[#allocation14 + $0x70] sm:$0xff]
    %v4297 = vld [vmem:[#allocation14 + $0x78] sm:$0xff]
    %v4298 = vld [vmem:[%s6] sm:$0x1]
    %v4300 = vlaneseq
    %v4301 = vshrl.u32 %v4300, 7
    %v4302 = vsub.s32 0, %v4301
    %v4303 = vrot.slane %v4298, %v4302
    %4305 = vmatprep.subr.mxu0 0.0
    %4306 = vmatpush1.msra.mxu0 %v4282
    %4307 = vmatprep.subr.mxu0 0.0
    %4308 = vmatpush1.msra.mxu0 %v4283
    %4309 = vmatprep.subr.mxu0 0.0
    %4310 = vmatpush1.msra.mxu0 %v4284
    %4311 = vmatprep.subr.mxu0 0.0
    %4312 = vmatpush1.msra.mxu0 %v4285
    %4313 = vmatprep.subr.mxu0 0.0
    %4314 = vmatpush1.msra.mxu0 %v4286
    %4315 = vmatprep.subr.mxu0 0.0
    %4316 = vmatpush1.msra.mxu0 %v4287
    %4317 = vmatprep.subr.mxu0 0.0
    %4318 = vmatpush1.msra.mxu0 %v4288
    %4319 = vmatprep.subr.mxu0 0.0
    %4320 = vmatpush1.msra.mxu0 %v4289
    %4321 = vmatprep.subr.mxu0 0.0
    %4322 = vmatpush1.msra.mxu0 %v4290
    %4323 = vmatprep.subr.mxu0 0.0
    %4324 = vmatpush1.msra.mxu0 %v4291
    %4325 = vmatprep.subr.mxu0 0.0
    %4326 = vmatpush1.msra.mxu0 %v4292
    %4327 = vmatprep.subr.mxu0 0.0
    %4328 = vmatpush1.msra.mxu0 %v4293
    %4329 = vmatprep.subr.mxu0 0.0
    %4330 = vmatpush1.msra.mxu0 %v4294
    %4331 = vmatprep.subr.mxu0 0.0
    %4332 = vmatpush1.msra.mxu0 %v4295
    %4333 = vmatprep.subr.mxu0 0.0
    %4334 = vmatpush1.msra.mxu0 %v4296
    %4335 = vmatprep.subr.mxu0 0.0
    %4336 = vmatpush1.msra.mxu0 %v4297
    %4337 = vmatprep.subr.mxu0 0.0
    %4338 = vmatpush1.msra.mxu0 0.0
    %4339 = vmatprep.subr.mxu0 0.0
    %4340 = vmatpush1.msra.mxu0 0.0
    %4341 = vmatprep.subr.mxu0 0.0
    %4342 = vmatpush1.msra.mxu0 0.0
    %4343 = vmatprep.subr.mxu0 0.0
    %4344 = vmatpush1.msra.mxu0 0.0
    %4345 = vmatprep.subr.mxu0 0.0
    %4346 = vmatpush1.msra.mxu0 0.0
    %4347 = vmatprep.subr.mxu0 0.0
    %4348 = vmatpush1.msra.mxu0 0.0
    %4349 = vmatprep.subr.mxu0 0.0
    %4350 = vmatpush1.msra.mxu0 0.0
    %4351 = vmatprep.subr.mxu0 0.0
    %4352 = vmatpush1.msra.mxu0 0.0
    %4353 = vmatprep.subr.mxu0 0.0
    %4354 = vmatpush1.msra.mxu0 0.0
    %4355 = vmatprep.subr.mxu0 0.0
    %4356 = vmatpush1.msra.mxu0 0.0
    %4357 = vmatprep.subr.mxu0 0.0
    %4358 = vmatpush1.msra.mxu0 0.0
    %4359 = vmatprep.subr.mxu0 0.0
    %4360 = vmatpush1.msra.mxu0 0.0
    %4361 = vmatprep.subr.mxu0 0.0
    %4362 = vmatpush1.msra.mxu0 0.0
    %4363 = vmatprep.subr.mxu0 0.0
    %4364 = vmatpush1.msra.mxu0 0.0
    %4365 = vmatprep.subr.mxu0 0.0
    %4366 = vmatpush1.msra.mxu0 0.0
    %4367 = vmatprep.subr.mxu0 0.0
    %4368 = vmatpush1.msra.mxu0 0.0
    %4369 = vmatprep.mubr.f32.mxu0 0.0
    %4370 = vmatmul.mubr.f32.gmra.mrb[0].mxu0 %v4249
    %v4371 = vpop.f32.mrb[0].mxu0
    %v4372 = vadd.f32 %v4303, %v4371
    %v4373 = vpop.f32.mrb[0].mxu0
    %4374 = vmatprep.mubr.f32.mxu0 0.0
    %4375 = vmatmul.mubr.f32.gmra.mrb[0].mxu0 %v4250
    %v4376 = vpop.f32.mrb[0].mxu0
    %v4377 = vadd.f32 %v4303, %v4376
    %v4378 = vpop.f32.mrb[0].mxu0
    %4379 = vmatprep.mubr.f32.mxu0 0.0
    %4380 = vmatmul.mubr.f32.gmra.mrb[0].mxu0 %v4251
    %v4381 = vpop.f32.mrb[0].mxu0
    %v4382 = vadd.f32 %v4303, %v4381
    %v4383 = vpop.f32.mrb[0].mxu0
    %4384 = vmatprep.mubr.f32.mxu0 0.0
    %4385 = vmatmul.mubr.f32.gmra.mrb[0].mxu0 %v4252
    %v4386 = vpop.f32.mrb[0].mxu0
    %v4387 = vadd.f32 %v4303, %v4386
    %v4388 = vpop.f32.mrb[0].mxu0
    %4389 = vmatprep.mubr.f32.mxu0 0.0
    %4390 = vmatmul.mubr.f32.gmra.mrb[0].mxu0 %v4253
    %v4391 = vpop.f32.mrb[0].mxu0
    %v4392 = vadd.f32 %v4303, %v4391
    %v4393 = vpop.f32.mrb[0].mxu0
    %4394 = vmatprep.mubr.f32.mxu0 0.0
    %4395 = vmatmul.mubr.f32.gmra.mrb[0].mxu0 %v4254
    %v4396 = vpop.f32.mrb[0].mxu0
    %v4397 = vadd.f32 %v4303, %v4396
    %v4398 = vpop.f32.mrb[0].mxu0
    %4399 = vmatprep.mubr.f32.mxu0 0.0
    %4400 = vmatmul.mubr.f32.gmra.mrb[0].mxu0 %v4255
    %v4401 = vpop.f32.mrb[0].mxu0
    %v4402 = vadd.f32 %v4303, %v4401
    %v4403 = vpop.f32.mrb[0].mxu0
    %4404 = vmatprep.mubr.f32.mxu0 0.0
    %4405 = vmatmul.mubr.f32.gmra.mrb[0].mxu0 %v4256
    %v4406 = vpop.f32.mrb[0].mxu0
    %v4407 = vadd.f32 %v4303, %v4406
    %v4408 = vpop.f32.mrb[0].mxu0
    %4409 = vmatprep.mubr.f32.mxu0 0.0
    %4410 = vmatmul.mubr.f32.gmra.mrb[0].mxu0 %v4257
    %v4411 = vpop.f32.mrb[0].mxu0
    %v4412 = vadd.f32 %v4303, %v4411
    %v4413 = vpop.f32.mrb[0].mxu0
    %4414 = vmatprep.mubr.f32.mxu0 0.0
    %4415 = vmatmul.mubr.f32.gmra.mrb[0].mxu0 %v4258
    %v4416 = vpop.f32.mrb[0].mxu0
    %v4417 = vadd.f32 %v4303, %v4416
    %v4418 = vpop.f32.mrb[0].mxu0
    %4419 = vmatprep.mubr.f32.mxu0 0.0
    %4420 = vmatmul.mubr.f32.gmra.mrb[0].mxu0 %v4259
    %v4421 = vpop.f32.mrb[0].mxu0
    %v4422 = vadd.f32 %v4303, %v4421
    %v4423 = vpop.f32.mrb[0].mxu0
    %4424 = vmatprep.mubr.f32.mxu0 0.0
    %4425 = vmatmul.mubr.f32.gmra.mrb[0].mxu0 %v4260
    %v4426 = vpop.f32.mrb[0].mxu0
    %v4427 = vadd.f32 %v4303, %v4426
    %v4428 = vpop.f32.mrb[0].mxu0
    %4429 = vmatprep.mubr.f32.mxu0 0.0
    %4430 = vmatmul.mubr.f32.gmra.mrb[0].mxu0 %v4261
    %v4431 = vpop.f32.mrb[0].mxu0
    %v4432 = vadd.f32 %v4303, %v4431
    %v4433 = vpop.f32.mrb[0].mxu0
    %4434 = vdwg.mxu0
    %v4435 = vld [vmem:[#allocation5] sm:$0xff]
    %v4436 = vld [vmem:[#allocation5 + $0x8] sm:$0xff]
    %v4437 = vld [vmem:[#allocation5 + $0x10] sm:$0xff]
    %v4438 = vld [vmem:[#allocation5 + $0x18] sm:$0xff]
    %v4439 = vld [vmem:[#allocation5 + $0x20] sm:$0xff]
    %v4440 = vld [vmem:[#allocation5 + $0x28] sm:$0xff]
    %v4441 = vld [vmem:[#allocation5 + $0x30] sm:$0xff]
    %v4442 = vld [vmem:[#allocation5 + $0x38] sm:$0xff]
    %v4443 = vld [vmem:[#allocation5 + $0x40] sm:$0xff]
    %v4444 = vld [vmem:[#allocation5 + $0x48] sm:$0xff]
    %v4445 = vld [vmem:[#allocation5 + $0x50] sm:$0xff]
    %v4446 = vld [vmem:[#allocation5 + $0x58] sm:$0xff]
    %v4447 = vld [vmem:[#allocation5 + $0x60] sm:$0xf]
    %v4448 = vadd.f32 %v4435, %v4372
    %v4449 = vadd.f32 %v4436, %v4377
    %v4450 = vadd.f32 %v4437, %v4382
    %v4451 = vadd.f32 %v4438, %v4387
    %v4452 = vadd.f32 %v4439, %v4392
    %v4453 = vadd.f32 %v4440, %v4397
    %v4454 = vadd.f32 %v4441, %v4402
    %v4455 = vadd.f32 %v4442, %v4407
    %v4456 = vadd.f32 %v4443, %v4412
    %v4457 = vadd.f32 %v4444, %v4417
    %v4458 = vadd.f32 %v4445, %v4422
    %v4459 = vadd.f32 %v4446, %v4427
    %v4460 = vadd.f32 %v4447, %v4432
    %vm4461 = vcmp.gt.f32.partialorder %v4448, 0.5
    %vm4462 = vcmp.gt.f32.partialorder %v4449, 0.5
    %vm4463 = vcmp.gt.f32.partialorder %v4450, 0.5
    %vm4464 = vcmp.gt.f32.partialorder %v4451, 0.5
    %vm4465 = vcmp.gt.f32.partialorder %v4452, 0.5
    %vm4466 = vcmp.gt.f32.partialorder %v4453, 0.5
    %vm4467 = vcmp.gt.f32.partialorder %v4454, 0.5
    %vm4468 = vcmp.gt.f32.partialorder %v4455, 0.5
    %vm4469 = vcmp.gt.f32.partialorder %v4456, 0.5
    %vm4470 = vcmp.gt.f32.partialorder %v4457, 0.5
    %vm4471 = vcmp.gt.f32.partialorder %v4458, 0.5
    %vm4472 = vcmp.gt.f32.partialorder %v4459, 0.5
    %vm4473 = vcmp.gt.f32.partialorder %v4460, 0.5
    %v4474 = vsel %vm4461, 1, 0
    %v4475 = vsel %vm4462, 1, 0
    %v4476 = vsel %vm4463, 1, 0
    %v4477 = vsel %vm4464, 1, 0
    %v4478 = vsel %vm4465, 1, 0
    %v4479 = vsel %vm4466, 1, 0
    %v4480 = vsel %vm4467, 1, 0
    %v4481 = vsel %vm4468, 1, 0
    %v4482 = vsel %vm4469, 1, 0
    %v4483 = vsel %vm4470, 1, 0
    %v4484 = vsel %vm4471, 1, 0
    %v4485 = vsel %vm4472, 1, 0
    %v4486 = vsel %vm4473, 1, 0
    %v4487 = vcvt.s32.f32 %v4474
    %v4488 = vcvt.s32.f32 %v4475
    %v4489 = vcvt.s32.f32 %v4476
    %v4490 = vcvt.s32.f32 %v4477
    %v4491 = vcvt.s32.f32 %v4478
    %v4492 = vcvt.s32.f32 %v4479
    %v4493 = vcvt.s32.f32 %v4480
    %v4494 = vcvt.s32.f32 %v4481
    %v4495 = vcvt.s32.f32 %v4482
    %v4496 = vcvt.s32.f32 %v4483
    %v4497 = vcvt.s32.f32 %v4484
    %v4498 = vcvt.s32.f32 %v4485
    %v4499 = vcvt.s32.f32 %v4486
    %v4500 = vadd.f32 %v4487, %v4488
    %v4501 = vadd.f32 %v4500, %v4489
    %v4502 = vadd.f32 %v4501, %v4490
    %v4503 = vadd.f32 %v4502, %v4491
    %v4504 = vadd.f32 %v4503, %v4492
    %v4505 = vadd.f32 %v4504, %v4493
    %v4506 = vadd.f32 %v4505, %v4494
    %v4507 = vadd.f32 %v4506, %v4495
    %v4508 = vadd.f32 %v4507, %v4496
    %v4509 = vadd.f32 %v4508, %v4497
    %v4510 = vadd.f32 %v4509, %v4498
    %v4511 = vsel %vm411, %v4499, 0.0
    %v4512 = vadd.f32 %v4510, %v4511
    %v4513 = vrot.slane %v4512, 4
    %v4514 = vadd.f32 %v4512, %v4513
    %v4515 = vrot.slane %v4514, 2
    %v4516 = vadd.f32 %v4514, %v4515
    %v4517 = vrot.slane %v4516, 1
    %v4518 = vadd.f32 %v4516, %v4517
    %v4519 = vadd.f32 %v3372, %v4518
    %v4520 = vld [vmem:[#allocation16] sm:$0xff]
    %v4521 = vld [vmem:[#allocation16 + $0x8] sm:$0xff]
    %v4522 = vld [vmem:[#allocation16 + $0x10] sm:$0xff]
    %v4523 = vld [vmem:[#allocation16 + $0x18] sm:$0xff]
    %v4524 = vld [vmem:[#allocation16 + $0x20] sm:$0xff]
    %v4525 = vld [vmem:[#allocation16 + $0x28] sm:$0xff]
    %v4526 = vld [vmem:[#allocation16 + $0x30] sm:$0xff]
    %v4527 = vld [vmem:[#allocation16 + $0x38] sm:$0xff]
    %v4528 = vld [vmem:[#allocation16 + $0x40] sm:$0xff]
    %v4529 = vld [vmem:[#allocation16 + $0x48] sm:$0xff]
    %v4530 = vld [vmem:[#allocation16 + $0x50] sm:$0xff]
    %v4531 = vld [vmem:[#allocation16 + $0x58] sm:$0xff]
    %v4532 = vld [vmem:[#allocation16 + $0x60] sm:$0xff]
    %v4533 = vld [vmem:[#allocation16 + $0x68] sm:$0xff]
    %v4534 = vld [vmem:[#allocation16 + $0x70] sm:$0xff]
    %v4535 = vld [vmem:[#allocation16 + $0x78] sm:$0xff]
    %v4536 = vld [vmem:[%s8] sm:$0x1]
    %v4538 = vlaneseq
    %v4539 = vshrl.u32 %v4538, 7
    %v4540 = vsub.s32 0, %v4539
    %v4541 = vrot.slane %v4536, %v4540
    %4543 = vmatprep.subr.mxu0 0.0
    %4544 = vmatpush1.msra.mxu0 %v4520
    %4545 = vmatprep.subr.mxu0 0.0
    %4546 = vmatpush1.msra.mxu0 %v4521
    %4547 = vmatprep.subr.mxu0 0.0
    %4548 = vmatpush1.msra.mxu0 %v4522
    %4549 = vmatprep.subr.mxu0 0.0
    %4550 = vmatpush1.msra.mxu0 %v4523
    %4551 = vmatprep.subr.mxu0 0.0
    %4552 = vmatpush1.msra.mxu0 %v4524
    %4553 = vmatprep.subr.mxu0 0.0
    %4554 = vmatpush1.msra.mxu0 %v4525
    %4555 = vmatprep.subr.mxu0 0.0
    %4556 = vmatpush1.msra.mxu0 %v4526
    %4557 = vmatprep.subr.mxu0 0.0
    %4558 = vmatpush1.msra.mxu0 %v4527
    %4559 = vmatprep.subr.mxu0 0.0
    %4560 = vmatpush1.msra.mxu0 %v4528
    %4561 = vmatprep.subr.mxu0 0.0
    %4562 = vmatpush1.msra.mxu0 %v4529
    %4563 = vmatprep.subr.mxu0 0.0
    %4564 = vmatpush1.msra.mxu0 %v4530
    %4565 = vmatprep.subr.mxu0 0.0
    %4566 = vmatpush1.msra.mxu0 %v4531
    %4567 = vmatprep.subr.mxu0 0.0
    %4568 = vmatpush1.msra.mxu0 %v4532
    %4569 = vmatprep.subr.mxu0 0.0
    %4570 = vmatpush1.msra.mxu0 %v4533
    %4571 = vmatprep.subr.mxu0 0.0
    %4572 = vmatpush1.msra.mxu0 %v4534
    %4573 = vmatprep.subr.mxu0 0.0
    %4574 = vmatpush1.msra.mxu0 %v4535
    %4575 = vmatprep.subr.mxu0 0.0
    %4576 = vmatpush1.msra.mxu0 0.0
    %4577 = vmatprep.subr.mxu0 0.0
    %4578 = vmatpush1.msra.mxu0 0.0
    %4579 = vmatprep.subr.mxu0 0.0
    %4580 = vmatpush1.msra.mxu0 0.0
    %4581 = vmatprep.subr.mxu0 0.0
    %4582 = vmatpush1.msra.mxu0 0.0
    %4583 = vmatprep.subr.mxu0 0.0
    %4584 = vmatpush1.msra.mxu0 0.0
    %4585 = vmatprep.subr.mxu0 0.0
    %4586 = vmatpush1.msra.mxu0 0.0
    %4587 = vmatprep.subr.mxu0 0.0
    %4588 = vmatpush1.msra.mxu0 0.0
    %4589 = vmatprep.subr.mxu0 0.0
    %4590 = vmatpush1.msra.mxu0 0.0
    %4591 = vmatprep.subr.mxu0 0.0
    %4592 = vmatpush1.msra.mxu0 0.0
    %4593 = vmatprep.subr.mxu0 0.0
    %4594 = vmatpush1.msra.mxu0 0.0
    %4595 = vmatprep.subr.mxu0 0.0
    %4596 = vmatpush1.msra.mxu0 0.0
    %4597 = vmatprep.subr.mxu0 0.0
    %4598 = vmatpush1.msra.mxu0 0.0
    %4599 = vmatprep.subr.mxu0 0.0
    %4600 = vmatpush1.msra.mxu0 0.0
    %4601 = vmatprep.subr.mxu0 0.0
    %4602 = vmatpush1.msra.mxu0 0.0
    %4603 = vmatprep.subr.mxu0 0.0
    %4604 = vmatpush1.msra.mxu0 0.0
    %4605 = vmatprep.subr.mxu0 0.0
    %4606 = vmatpush1.msra.mxu0 0.0
    %4607 = vmatprep.mubr.f32.mxu0 0.0
    %4608 = vmatmul.mubr.f32.gmra.mrb[0].mxu0 %v4487
    %v4609 = vpop.f32.mrb[0].mxu0
    %v4610 = vadd.f32 %v4541, %v4609
    %v4611 = vpop.f32.mrb[0].mxu0
    %4612 = vmatprep.mubr.f32.mxu0 0.0
    %4613 = vmatmul.mubr.f32.gmra.mrb[0].mxu0 %v4488
    %v4614 = vpop.f32.mrb[0].mxu0
    %v4615 = vadd.f32 %v4541, %v4614
    %v4616 = vpop.f32.mrb[0].mxu0
    %4617 = vmatprep.mubr.f32.mxu0 0.0
    %4618 = vmatmul.mubr.f32.gmra.mrb[0].mxu0 %v4489
    %v4619 = vpop.f32.mrb[0].mxu0
    %v4620 = vadd.f32 %v4541, %v4619
    %v4621 = vpop.f32.mrb[0].mxu0
    %4622 = vmatprep.mubr.f32.mxu0 0.0
    %4623 = vmatmul.mubr.f32.gmra.mrb[0].mxu0 %v4490
    %v4624 = vpop.f32.mrb[0].mxu0
    %v4625 = vadd.f32 %v4541, %v4624
    %v4626 = vpop.f32.mrb[0].mxu0
    %4627 = vmatprep.mubr.f32.mxu0 0.0
    %4628 = vmatmul.mubr.f32.gmra.mrb[0].mxu0 %v4491
    %v4629 = vpop.f32.mrb[0].mxu0
    %v4630 = vadd.f32 %v4541, %v4629
    %v4631 = vpop.f32.mrb[0].mxu0
    %4632 = vmatprep.mubr.f32.mxu0 0.0
    %4633 = vmatmul.mubr.f32.gmra.mrb[0].mxu0 %v4492
    %v4634 = vpop.f32.mrb[0].mxu0
    %v4635 = vadd.f32 %v4541, %v4634
    %v4636 = vpop.f32.mrb[0].mxu0
    %4637 = vmatprep.mubr.f32.mxu0 0.0
    %4638 = vmatmul.mubr.f32.gmra.mrb[0].mxu0 %v4493
    %v4639 = vpop.f32.mrb[0].mxu0
    %v4640 = vadd.f32 %v4541, %v4639
    %v4641 = vpop.f32.mrb[0].mxu0
    %4642 = vmatprep.mubr.f32.mxu0 0.0
    %4643 = vmatmul.mubr.f32.gmra.mrb[0].mxu0 %v4494
    %v4644 = vpop.f32.mrb[0].mxu0
    %v4645 = vadd.f32 %v4541, %v4644
    %v4646 = vpop.f32.mrb[0].mxu0
    %4647 = vmatprep.mubr.f32.mxu0 0.0
    %4648 = vmatmul.mubr.f32.gmra.mrb[0].mxu0 %v4495
    %v4649 = vpop.f32.mrb[0].mxu0
    %v4650 = vadd.f32 %v4541, %v4649
    %v4651 = vpop.f32.mrb[0].mxu0
    %4652 = vmatprep.mubr.f32.mxu0 0.0
    %4653 = vmatmul.mubr.f32.gmra.mrb[0].mxu0 %v4496
    %v4654 = vpop.f32.mrb[0].mxu0
    %v4655 = vadd.f32 %v4541, %v4654
    %v4656 = vpop.f32.mrb[0].mxu0
    %4657 = vmatprep.mubr.f32.mxu0 0.0
    %4658 = vmatmul.mubr.f32.gmra.mrb[0].mxu0 %v4497
    %v4659 = vpop.f32.mrb[0].mxu0
    %v4660 = vadd.f32 %v4541, %v4659
    %v4661 = vpop.f32.mrb[0].mxu0
    %4662 = vmatprep.mubr.f32.mxu0 0.0
    %4663 = vmatmul.mubr.f32.gmra.mrb[0].mxu0 %v4498
    %v4664 = vpop.f32.mrb[0].mxu0
    %v4665 = vadd.f32 %v4541, %v4664
    %v4666 = vpop.f32.mrb[0].mxu0
    %4667 = vmatprep.mubr.f32.mxu0 0.0
    %4668 = vmatmul.mubr.f32.gmra.mrb[0].mxu0 %v4499
    %v4669 = vpop.f32.mrb[0].mxu0
    %v4670 = vadd.f32 %v4541, %v4669
    %v4671 = vpop.f32.mrb[0].mxu0
    %4672 = vdwg.mxu0
    %v4673 = vld [vmem:[#allocation6] sm:$0xff]
    %v4674 = vld [vmem:[#allocation6 + $0x8] sm:$0xff]
    %v4675 = vld [vmem:[#allocation6 + $0x10] sm:$0xff]
    %v4676 = vld [vmem:[#allocation6 + $0x18] sm:$0xff]
    %v4677 = vld [vmem:[#allocation6 + $0x20] sm:$0xff]
    %v4678 = vld [vmem:[#allocation6 + $0x28] sm:$0xff]
    %v4679 = vld [vmem:[#allocation6 + $0x30] sm:$0xff]
    %v4680 = vld [vmem:[#allocation6 + $0x38] sm:$0xff]
    %v4681 = vld [vmem:[#allocation6 + $0x40] sm:$0xff]
    %v4682 = vld [vmem:[#allocation6 + $0x48] sm:$0xff]
    %v4683 = vld [vmem:[#allocation6 + $0x50] sm:$0xff]
    %v4684 = vld [vmem:[#allocation6 + $0x58] sm:$0xff]
    %v4685 = vld [vmem:[#allocation6 + $0x60] sm:$0xf]
    %v4686 = vadd.f32 %v4673, %v4610
    %v4687 = vadd.f32 %v4674, %v4615
    %v4688 = vadd.f32 %v4675, %v4620
    %v4689 = vadd.f32 %v4676, %v4625
    %v4690 = vadd.f32 %v4677, %v4630
    %v4691 = vadd.f32 %v4678, %v4635
    %v4692 = vadd.f32 %v4679, %v4640
    %v4693 = vadd.f32 %v4680, %v4645
    %v4694 = vadd.f32 %v4681, %v4650
    %v4695 = vadd.f32 %v4682, %v4655
    %v4696 = vadd.f32 %v4683, %v4660
    %v4697 = vadd.f32 %v4684, %v4665
    %v4698 = vadd.f32 %v4685, %v4670
    %vm4699 = vcmp.gt.f32.partialorder %v4686, 0.5
    %vm4700 = vcmp.gt.f32.partialorder %v4687, 0.5
    %vm4701 = vcmp.gt.f32.partialorder %v4688, 0.5
    %vm4702 = vcmp.gt.f32.partialorder %v4689, 0.5
    %vm4703 = vcmp.gt.f32.partialorder %v4690, 0.5
    %vm4704 = vcmp.gt.f32.partialorder %v4691, 0.5
    %vm4705 = vcmp.gt.f32.partialorder %v4692, 0.5
    %vm4706 = vcmp.gt.f32.partialorder %v4693, 0.5
    %vm4707 = vcmp.gt.f32.partialorder %v4694, 0.5
    %vm4708 = vcmp.gt.f32.partialorder %v4695, 0.5
    %vm4709 = vcmp.gt.f32.partialorder %v4696, 0.5
    %vm4710 = vcmp.gt.f32.partialorder %v4697, 0.5
    %vm4711 = vcmp.gt.f32.partialorder %v4698, 0.5
    %v4712 = vsel %vm4699, 1, 0
    %v4713 = vsel %vm4700, 1, 0
    %v4714 = vsel %vm4701, 1, 0
    %v4715 = vsel %vm4702, 1, 0
    %v4716 = vsel %vm4703, 1, 0
    %v4717 = vsel %vm4704, 1, 0
    %v4718 = vsel %vm4705, 1, 0
    %v4719 = vsel %vm4706, 1, 0
    %v4720 = vsel %vm4707, 1, 0
    %v4721 = vsel %vm4708, 1, 0
    %v4722 = vsel %vm4709, 1, 0
    %v4723 = vsel %vm4710, 1, 0
    %v4724 = vsel %vm4711, 1, 0
    %v4725 = vcvt.s32.f32 %v4712
    %v4726 = vcvt.s32.f32 %v4713
    %v4727 = vcvt.s32.f32 %v4714
    %v4728 = vcvt.s32.f32 %v4715
    %v4729 = vcvt.s32.f32 %v4716
    %v4730 = vcvt.s32.f32 %v4717
    %v4731 = vcvt.s32.f32 %v4718
    %v4732 = vcvt.s32.f32 %v4719
    %v4733 = vcvt.s32.f32 %v4720
    %v4734 = vcvt.s32.f32 %v4721
    %v4735 = vcvt.s32.f32 %v4722
    %v4736 = vcvt.s32.f32 %v4723
    %v4737 = vcvt.s32.f32 %v4724
    %v4738 = vadd.f32 %v4725, %v4726
    %v4739 = vadd.f32 %v4738, %v4727
    %v4740 = vadd.f32 %v4739, %v4728
    %v4741 = vadd.f32 %v4740, %v4729
    %v4742 = vadd.f32 %v4741, %v4730
    %v4743 = vadd.f32 %v4742, %v4731
    %v4744 = vadd.f32 %v4743, %v4732
    %v4745 = vadd.f32 %v4744, %v4733
    %v4746 = vadd.f32 %v4745, %v4734
    %v4747 = vadd.f32 %v4746, %v4735
    %v4748 = vadd.f32 %v4747, %v4736
    %v4749 = vsel %vm411, %v4737, 0.0
    %v4750 = vadd.f32 %v4748, %v4749
    %v4751 = vrot.slane %v4750, 4
    %v4752 = vadd.f32 %v4750, %v4751
    %v4753 = vrot.slane %v4752, 2
    %v4754 = vadd.f32 %v4752, %v4753
    %v4755 = vrot.slane %v4754, 1
    %v4756 = vadd.f32 %v4754, %v4755
    %v4757 = vadd.f32 %v3649, %v4756
    %v4758 = vld [vmem:[#allocation17] sm:$0xff]
    %v4759 = vld [vmem:[#allocation17 + $0x8] sm:$0xff]
    %v4760 = vld [vmem:[#allocation17 + $0x10] sm:$0xff]
    %v4761 = vld [vmem:[#allocation17 + $0x18] sm:$0xff]
    %v4762 = vld [vmem:[#allocation17 + $0x20] sm:$0xff]
    %v4763 = vld [vmem:[#allocation17 + $0x28] sm:$0xff]
    %v4764 = vld [vmem:[#allocation17 + $0x30] sm:$0xff]
    %v4765 = vld [vmem:[#allocation17 + $0x38] sm:$0xff]
    %v4766 = vld [vmem:[#allocation17 + $0x40] sm:$0xff]
    %v4767 = vld [vmem:[#allocation17 + $0x48] sm:$0xff]
    %v4768 = vld [vmem:[#allocation17 + $0x50] sm:$0xff]
    %v4769 = vld [vmem:[#allocation17 + $0x58] sm:$0xff]
    %v4770 = vld [vmem:[#allocation17 + $0x60] sm:$0xff]
    %v4771 = vld [vmem:[#allocation17 + $0x68] sm:$0xff]
    %v4772 = vld [vmem:[#allocation17 + $0x70] sm:$0xff]
    %v4773 = vld [vmem:[#allocation17 + $0x78] sm:$0xff]
    %v4774 = vld [vmem:[%s10] sm:$0x1]
    %v4776 = vlaneseq
    %v4777 = vshrl.u32 %v4776, 7
    %v4778 = vsub.s32 0, %v4777
    %v4779 = vrot.slane %v4774, %v4778
    %4781 = vmatprep.subr.mxu0 0.0
    %4782 = vmatpush1.msra.mxu0 %v4758
    %4783 = vmatprep.subr.mxu0 0.0
    %4784 = vmatpush1.msra.mxu0 %v4759
    %4785 = vmatprep.subr.mxu0 0.0
    %4786 = vmatpush1.msra.mxu0 %v4760
    %4787 = vmatprep.subr.mxu0 0.0
    %4788 = vmatpush1.msra.mxu0 %v4761
    %4789 = vmatprep.subr.mxu0 0.0
    %4790 = vmatpush1.msra.mxu0 %v4762
    %4791 = vmatprep.subr.mxu0 0.0
    %4792 = vmatpush1.msra.mxu0 %v4763
    %4793 = vmatprep.subr.mxu0 0.0
    %4794 = vmatpush1.msra.mxu0 %v4764
    %4795 = vmatprep.subr.mxu0 0.0
    %4796 = vmatpush1.msra.mxu0 %v4765
    %4797 = vmatprep.subr.mxu0 0.0
    %4798 = vmatpush1.msra.mxu0 %v4766
    %4799 = vmatprep.subr.mxu0 0.0
    %4800 = vmatpush1.msra.mxu0 %v4767
    %4801 = vmatprep.subr.mxu0 0.0
    %4802 = vmatpush1.msra.mxu0 %v4768
    %4803 = vmatprep.subr.mxu0 0.0
    %4804 = vmatpush1.msra.mxu0 %v4769
    %4805 = vmatprep.subr.mxu0 0.0
    %4806 = vmatpush1.msra.mxu0 %v4770
    %4807 = vmatprep.subr.mxu0 0.0
    %4808 = vmatpush1.msra.mxu0 %v4771
    %4809 = vmatprep.subr.mxu0 0.0
    %4810 = vmatpush1.msra.mxu0 %v4772
    %4811 = vmatprep.subr.mxu0 0.0
    %4812 = vmatpush1.msra.mxu0 %v4773
    %4813 = vmatprep.subr.mxu0 0.0
    %4814 = vmatpush1.msra.mxu0 0.0
    %4815 = vmatprep.subr.mxu0 0.0
    %4816 = vmatpush1.msra.mxu0 0.0
    %4817 = vmatprep.subr.mxu0 0.0
    %4818 = vmatpush1.msra.mxu0 0.0
    %4819 = vmatprep.subr.mxu0 0.0
    %4820 = vmatpush1.msra.mxu0 0.0
    %4821 = vmatprep.subr.mxu0 0.0
    %4822 = vmatpush1.msra.mxu0 0.0
    %4823 = vmatprep.subr.mxu0 0.0
    %4824 = vmatpush1.msra.mxu0 0.0
    %4825 = vmatprep.subr.mxu0 0.0
    %4826 = vmatpush1.msra.mxu0 0.0
    %4827 = vmatprep.subr.mxu0 0.0
    %4828 = vmatpush1.msra.mxu0 0.0
    %4829 = vmatprep.subr.mxu0 0.0
    %4830 = vmatpush1.msra.mxu0 0.0
    %4831 = vmatprep.subr.mxu0 0.0
    %4832 = vmatpush1.msra.mxu0 0.0
    %4833 = vmatprep.subr.mxu0 0.0
    %4834 = vmatpush1.msra.mxu0 0.0
    %4835 = vmatprep.subr.mxu0 0.0
    %4836 = vmatpush1.msra.mxu0 0.0
    %4837 = vmatprep.subr.mxu0 0.0
    %4838 = vmatpush1.msra.mxu0 0.0
    %4839 = vmatprep.subr.mxu0 0.0
    %4840 = vmatpush1.msra.mxu0 0.0
    %4841 = vmatprep.subr.mxu0 0.0
    %4842 = vmatpush1.msra.mxu0 0.0
    %4843 = vmatprep.subr.mxu0 0.0
    %4844 = vmatpush1.msra.mxu0 0.0
    %4845 = vmatprep.mubr.f32.mxu0 0.0
    %4846 = vmatmul.mubr.f32.gmra.mrb[0].mxu0 %v4725
    %v4847 = vpop.f32.mrb[0].mxu0
    %v4848 = vadd.f32 %v4779, %v4847
    %v4849 = vpop.f32.mrb[0].mxu0
    %4850 = vmatprep.mubr.f32.mxu0 0.0
    %4851 = vmatmul.mubr.f32.gmra.mrb[0].mxu0 %v4726
    %v4852 = vpop.f32.mrb[0].mxu0
    %v4853 = vadd.f32 %v4779, %v4852
    %v4854 = vpop.f32.mrb[0].mxu0
    %4855 = vmatprep.mubr.f32.mxu0 0.0
    %4856 = vmatmul.mubr.f32.gmra.mrb[0].mxu0 %v4727
    %v4857 = vpop.f32.mrb[0].mxu0
    %v4858 = vadd.f32 %v4779, %v4857
    %v4859 = vpop.f32.mrb[0].mxu0
    %4860 = vmatprep.mubr.f32.mxu0 0.0
    %4861 = vmatmul.mubr.f32.gmra.mrb[0].mxu0 %v4728
    %v4862 = vpop.f32.mrb[0].mxu0
    %v4863 = vadd.f32 %v4779, %v4862
    %v4864 = vpop.f32.mrb[0].mxu0
    %4865 = vmatprep.mubr.f32.mxu0 0.0
    %4866 = vmatmul.mubr.f32.gmra.mrb[0].mxu0 %v4729
    %v4867 = vpop.f32.mrb[0].mxu0
    %v4868 = vadd.f32 %v4779, %v4867
    %v4869 = vpop.f32.mrb[0].mxu0
    %4870 = vmatprep.mubr.f32.mxu0 0.0
    %4871 = vmatmul.mubr.f32.gmra.mrb[0].mxu0 %v4730
    %v4872 = vpop.f32.mrb[0].mxu0
    %v4873 = vadd.f32 %v4779, %v4872
    %v4874 = vpop.f32.mrb[0].mxu0
    %4875 = vmatprep.mubr.f32.mxu0 0.0
    %4876 = vmatmul.mubr.f32.gmra.mrb[0].mxu0 %v4731
    %v4877 = vpop.f32.mrb[0].mxu0
    %v4878 = vadd.f32 %v4779, %v4877
    %v4879 = vpop.f32.mrb[0].mxu0
    %4880 = vmatprep.mubr.f32.mxu0 0.0
    %4881 = vmatmul.mubr.f32.gmra.mrb[0].mxu0 %v4732
    %v4882 = vpop.f32.mrb[0].mxu0
    %v4883 = vadd.f32 %v4779, %v4882
    %v4884 = vpop.f32.mrb[0].mxu0
    %4885 = vmatprep.mubr.f32.mxu0 0.0
    %4886 = vmatmul.mubr.f32.gmra.mrb[0].mxu0 %v4733
    %v4887 = vpop.f32.mrb[0].mxu0
    %v4888 = vadd.f32 %v4779, %v4887
    %v4889 = vpop.f32.mrb[0].mxu0
    %4890 = vmatprep.mubr.f32.mxu0 0.0
    %4891 = vmatmul.mubr.f32.gmra.mrb[0].mxu0 %v4734
    %v4892 = vpop.f32.mrb[0].mxu0
    %v4893 = vadd.f32 %v4779, %v4892
    %v4894 = vpop.f32.mrb[0].mxu0
    %4895 = vmatprep.mubr.f32.mxu0 0.0
    %4896 = vmatmul.mubr.f32.gmra.mrb[0].mxu0 %v4735
    %v4897 = vpop.f32.mrb[0].mxu0
    %v4898 = vadd.f32 %v4779, %v4897
    %v4899 = vpop.f32.mrb[0].mxu0
    %4900 = vmatprep.mubr.f32.mxu0 0.0
    %4901 = vmatmul.mubr.f32.gmra.mrb[0].mxu0 %v4736
    %v4902 = vpop.f32.mrb[0].mxu0
    %v4903 = vadd.f32 %v4779, %v4902
    %v4904 = vpop.f32.mrb[0].mxu0
    %4905 = vmatprep.mubr.f32.mxu0 0.0
    %4906 = vmatmul.mubr.f32.gmra.mrb[0].mxu0 %v4737
    %v4907 = vpop.f32.mrb[0].mxu0
    %v4908 = vadd.f32 %v4779, %v4907
    %v4909 = vpop.f32.mrb[0].mxu0
    %4910 = vdwg.mxu0
    %v4911 = vld [vmem:[#allocation7] sm:$0xff]
    %v4912 = vld [vmem:[#allocation7 + $0x8] sm:$0xff]
    %v4913 = vld [vmem:[#allocation7 + $0x10] sm:$0xff]
    %v4914 = vld [vmem:[#allocation7 + $0x18] sm:$0xff]
    %v4915 = vld [vmem:[#allocation7 + $0x20] sm:$0xff]
    %v4916 = vld [vmem:[#allocation7 + $0x28] sm:$0xff]
    %v4917 = vld [vmem:[#allocation7 + $0x30] sm:$0xff]
    %v4918 = vld [vmem:[#allocation7 + $0x38] sm:$0xff]
    %v4919 = vld [vmem:[#allocation7 + $0x40] sm:$0xff]
    %v4920 = vld [vmem:[#allocation7 + $0x48] sm:$0xff]
    %v4921 = vld [vmem:[#allocation7 + $0x50] sm:$0xff]
    %v4922 = vld [vmem:[#allocation7 + $0x58] sm:$0xff]
    %v4923 = vld [vmem:[#allocation7 + $0x60] sm:$0xf]
    %v4924 = vadd.f32 %v4911, %v4848
    %v4925 = vadd.f32 %v4912, %v4853
    %v4926 = vadd.f32 %v4913, %v4858
    %v4927 = vadd.f32 %v4914, %v4863
    %v4928 = vadd.f32 %v4915, %v4868
    %v4929 = vadd.f32 %v4916, %v4873
    %v4930 = vadd.f32 %v4917, %v4878
    %v4931 = vadd.f32 %v4918, %v4883
    %v4932 = vadd.f32 %v4919, %v4888
    %v4933 = vadd.f32 %v4920, %v4893
    %v4934 = vadd.f32 %v4921, %v4898
    %v4935 = vadd.f32 %v4922, %v4903
    %v4936 = vadd.f32 %v4923, %v4908
    %vm4937 = vcmp.gt.f32.partialorder %v4924, 0.5
    %vm4938 = vcmp.gt.f32.partialorder %v4925, 0.5
    %vm4939 = vcmp.gt.f32.partialorder %v4926, 0.5
    %vm4940 = vcmp.gt.f32.partialorder %v4927, 0.5
    %vm4941 = vcmp.gt.f32.partialorder %v4928, 0.5
    %vm4942 = vcmp.gt.f32.partialorder %v4929, 0.5
    %vm4943 = vcmp.gt.f32.partialorder %v4930, 0.5
    %vm4944 = vcmp.gt.f32.partialorder %v4931, 0.5
    %vm4945 = vcmp.gt.f32.partialorder %v4932, 0.5
    %vm4946 = vcmp.gt.f32.partialorder %v4933, 0.5
    %vm4947 = vcmp.gt.f32.partialorder %v4934, 0.5
    %vm4948 = vcmp.gt.f32.partialorder %v4935, 0.5
    %vm4949 = vcmp.gt.f32.partialorder %v4936, 0.5
    %v4950 = vsel %vm4937, 1, 0
    %v4951 = vsel %vm4938, 1, 0
    %v4952 = vsel %vm4939, 1, 0
    %v4953 = vsel %vm4940, 1, 0
    %v4954 = vsel %vm4941, 1, 0
    %v4955 = vsel %vm4942, 1, 0
    %v4956 = vsel %vm4943, 1, 0
    %v4957 = vsel %vm4944, 1, 0
    %v4958 = vsel %vm4945, 1, 0
    %v4959 = vsel %vm4946, 1, 0
    %v4960 = vsel %vm4947, 1, 0
    %v4961 = vsel %vm4948, 1, 0
    %v4962 = vsel %vm4949, 1, 0
    %v4963 = vcvt.s32.f32 %v4950
    %v4964 = vcvt.s32.f32 %v4951
    %v4965 = vcvt.s32.f32 %v4952
    %v4966 = vcvt.s32.f32 %v4953
    %v4967 = vcvt.s32.f32 %v4954
    %v4968 = vcvt.s32.f32 %v4955
    %v4969 = vcvt.s32.f32 %v4956
    %v4970 = vcvt.s32.f32 %v4957
    %v4971 = vcvt.s32.f32 %v4958
    %v4972 = vcvt.s32.f32 %v4959
    %v4973 = vcvt.s32.f32 %v4960
    %v4974 = vcvt.s32.f32 %v4961
    %v4975 = vcvt.s32.f32 %v4962
    %v4976 = vld [vmem:[#allocation19] sm:$0xff]
    %v4977 = vld [vmem:[#allocation19 + $0x8] sm:$0xff]
    %v4978 = vld [vmem:[#allocation19 + $0x10] sm:$0xff]
    %v4979 = vld [vmem:[#allocation19 + $0x18] sm:$0xff]
    %v4980 = vld [vmem:[#allocation19 + $0x20] sm:$0xff]
    %v4981 = vld [vmem:[#allocation19 + $0x28] sm:$0xff]
    %v4982 = vld [vmem:[#allocation19 + $0x30] sm:$0xff]
    %v4983 = vld [vmem:[#allocation19 + $0x38] sm:$0xff]
    %v4984 = vld [vmem:[#allocation19 + $0x40] sm:$0xff]
    %v4985 = vld [vmem:[#allocation19 + $0x48] sm:$0xff]
    %v4986 = vld [vmem:[#allocation19 + $0x50] sm:$0xff]
    %v4987 = vld [vmem:[#allocation19 + $0x58] sm:$0xff]
    %v4988 = vld [vmem:[#allocation19 + $0x60] sm:$0xf]
    %v4989 = vadd.f32 %v4976, %v4963
    %v4990 = vadd.f32 %v4977, %v4964
    %v4991 = vadd.f32 %v4978, %v4965
    %v4992 = vadd.f32 %v4979, %v4966
    %v4993 = vadd.f32 %v4980, %v4967
    %v4994 = vadd.f32 %v4981, %v4968
    %v4995 = vadd.f32 %v4982, %v4969
    %v4996 = vadd.f32 %v4983, %v4970
    %v4997 = vadd.f32 %v4984, %v4971
    %v4998 = vadd.f32 %v4985, %v4972
    %v4999 = vadd.f32 %v4986, %v4973
    %v5000 = vadd.f32 %v4987, %v4974
    %v5001 = vadd.f32 %v4988, %v4975
    %5002 = vst [vmem:[#allocation19] sm:$0xff] %v4989
    %5003 = vst [vmem:[#allocation19 + $0x8] sm:$0xff] %v4990
    %5004 = vst [vmem:[#allocation19 + $0x10] sm:$0xff] %v4991
    %5005 = vst [vmem:[#allocation19 + $0x18] sm:$0xff] %v4992
    %5006 = vst [vmem:[#allocation19 + $0x20] sm:$0xff] %v4993
    %5007 = vst [vmem:[#allocation19 + $0x28] sm:$0xff] %v4994
    %5008 = vst [vmem:[#allocation19 + $0x30] sm:$0xff] %v4995
    %5009 = vst [vmem:[#allocation19 + $0x38] sm:$0xff] %v4996
    %5010 = vst [vmem:[#allocation19 + $0x40] sm:$0xff] %v4997
    %5011 = vst [vmem:[#allocation19 + $0x48] sm:$0xff] %v4998
    %5012 = vst [vmem:[#allocation19 + $0x50] sm:$0xff] %v4999
    %5013 = vst [vmem:[#allocation19 + $0x58] sm:$0xff] %v5000
    %5014 = vst [vmem:[#allocation19 + $0x60] sm:$0xf] %v5001
    %v5015 = vld [vmem:[#allocation19] sm:$0xff]
    %v5016 = vld [vmem:[#allocation19 + $0x8] sm:$0xff]
    %v5017 = vld [vmem:[#allocation19 + $0x10] sm:$0xff]
    %v5018 = vld [vmem:[#allocation19 + $0x18] sm:$0xff]
    %v5019 = vld [vmem:[#allocation19 + $0x20] sm:$0xff]
    %v5020 = vld [vmem:[#allocation19 + $0x28] sm:$0xff]
    %v5021 = vld [vmem:[#allocation19 + $0x30] sm:$0xff]
    %v5022 = vld [vmem:[#allocation19 + $0x38] sm:$0xff]
    %v5023 = vld [vmem:[#allocation19 + $0x40] sm:$0xff]
    %v5024 = vld [vmem:[#allocation19 + $0x48] sm:$0xff]
    %v5025 = vld [vmem:[#allocation19 + $0x50] sm:$0xff]
    %v5026 = vld [vmem:[#allocation19 + $0x58] sm:$0xff]
    %v5027 = vld [vmem:[#allocation19 + $0x60] sm:$0xf]
    %v5028 = vmul.f32 %v5015, 0.25
    %v5029 = vmul.f32 %v5016, 0.25
    %v5030 = vmul.f32 %v5017, 0.25
    %v5031 = vmul.f32 %v5018, 0.25
    %v5032 = vmul.f32 %v5019, 0.25
    %v5033 = vmul.f32 %v5020, 0.25
    %v5034 = vmul.f32 %v5021, 0.25
    %v5035 = vmul.f32 %v5022, 0.25
    %v5036 = vmul.f32 %v5023, 0.25
    %v5037 = vmul.f32 %v5024, 0.25
    %v5038 = vmul.f32 %v5025, 0.25
    %v5039 = vmul.f32 %v5026, 0.25
    %v5040 = vmul.f32 %v5027, 0.25
    %5041 = vst [vmem:[#allocation19] sm:$0xff] %v5028
    %5042 = vst [vmem:[#allocation19 + $0x8] sm:$0xff] %v5029
    %5043 = vst [vmem:[#allocation19 + $0x10] sm:$0xff] %v5030
    %5044 = vst [vmem:[#allocation19 + $0x18] sm:$0xff] %v5031
    %5045 = vst [vmem:[#allocation19 + $0x20] sm:$0xff] %v5032
    %5046 = vst [vmem:[#allocation19 + $0x28] sm:$0xff] %v5033
    %5047 = vst [vmem:[#allocation19 + $0x30] sm:$0xff] %v5034
    %5048 = vst [vmem:[#allocation19 + $0x38] sm:$0xff] %v5035
    %5049 = vst [vmem:[#allocation19 + $0x40] sm:$0xff] %v5036
    %5050 = vst [vmem:[#allocation19 + $0x48] sm:$0xff] %v5037
    %5051 = vst [vmem:[#allocation19 + $0x50] sm:$0xff] %v5038
    %5052 = vst [vmem:[#allocation19 + $0x58] sm:$0xff] %v5039
    %5053 = vst [vmem:[#allocation19 + $0x60] sm:$0xf] %v5040
    %v5054 = vadd.f32 %v5015, %v5016
    %v5055 = vadd.f32 %v5054, %v5017
    %v5056 = vadd.f32 %v5055, %v5018
    %v5057 = vadd.f32 %v5056, %v5019
    %v5058 = vadd.f32 %v5057, %v5020
    %v5059 = vadd.f32 %v5058, %v5021
    %v5060 = vadd.f32 %v5059, %v5022
    %v5061 = vadd.f32 %v5060, %v5023
    %v5062 = vadd.f32 %v5061, %v5024
    %v5063 = vadd.f32 %v5062, %v5025
    %v5064 = vadd.f32 %v5063, %v5026
    %v5065 = vsel %vm411, %v5027, 0.0
    %v5066 = vadd.f32 %v5064, %v5065
    %v5067 = vrot.slane %v5066, 4
    %v5068 = vadd.f32 %v5066, %v5067
    %v5069 = vrot.slane %v5068, 2
    %v5070 = vadd.f32 %v5068, %v5069
    %v5071 = vrot.slane %v5070, 1
    %v5072 = vadd.f32 %v5070, %v5071
    %5073 = vadd.xlane.f32.xlu0 %v4043
    %v5074 = vpop.xlane.xlu0 %5073
    %v5075 = vmul.f32 %v5074, 0.00015625
    %vm5076 = vcmask 0
    %5077 = vst.msk [vmem:[#allocation20] sm:$0x1] %vm5076, %v5075
    %5078 = vadd.xlane.f32.xlu0 %v4281
    %v5079 = vpop.xlane.xlu0 %5078
    %v5080 = vmul.f32 %v5079, 8.0645164e-05
    %5081 = vst.msk [vmem:[#allocation22] sm:$0x1] %vm5076, %v5080
    %5082 = vadd.xlane.f32.xlu0 %v4519
    %v5083 = vpop.xlane.xlu0 %5082
    %v5084 = vmul.f32 %v5083, 0.00015625
    %5085 = vst.msk [vmem:[#allocation23] sm:$0x1] %vm5076, %v5084
    %5086 = vadd.xlane.f32.xlu0 %v4757
    %v5087 = vpop.xlane.xlu0 %5086
    %v5088 = vmul.f32 %v5087, 8.0645164e-05
    %5089 = vst.msk [vmem:[#allocation25] sm:$0x1] %vm5076, %v5088
    %5090 = vadd.xlane.f32.xlu0 %v5072
    %v5091 = vpop.xlane.xlu0 %5090
    %v5092 = vmul.f32 %v5091, 0.001
    %5093 = vst.msk [vmem:[#allocation26] sm:$0x1] %vm5076, %v5092
    // Predicated region
    $region70: #{tpu_custom_call.1} parent=1 // pred_check
      _
    $region71: #{tpu_custom_call.1} parent=1 // pred_check_branch
      %5095 = sbr.rel (0) target = $region73
    $region72: #{tpu_custom_call.1} parent=1 // pred_region
      %s5097 = ssub.s32 1664, 1664
      %5098 = vsyncadd [#allocation10], %s5097
      %s5099 = sshll.u32 [#allocation19], 4
      %s5100 = int_to_ptr.vmem [resolvable:$true] %s5099
      %5105 = dma.vmem_to_hbm [thread:$0]  %s5100, 1664, %s11, [#allocation10], 128, 128, 8
    $region73: #{tpu_custom_call.1} parent=1 // pred_fallthru
      _
    // Predicated region
    $region74: #{tpu_custom_call.1} parent=1 // pred_check
      _
    $region75: #{tpu_custom_call.1} parent=1 // pred_check_branch
      %5107 = sbr.rel (0) target = $region77
    $region76: #{tpu_custom_call.1} parent=1 // pred_region
      %s5109 = ssub.s32 16, 16
      %5110 = vsyncadd [#allocation21], %s5109
      %s5112 = sshll.u32 [#allocation20], 4
      %s5113 = int_to_ptr.vmem [resolvable:$true] %s5112
      %5115 = dma.vmem_to_hbm [thread:$0]  %s5113, 16, %s12, [#allocation21]
    $region77: #{tpu_custom_call.1} parent=1 // pred_fallthru
      _
    // Predicated region
    $region78: #{tpu_custom_call.1} parent=1 // pred_check
      _
    $region79: #{tpu_custom_call.1} parent=1 // pred_check_branch
      %5117 = sbr.rel (0) target = $region81
    $region80: #{tpu_custom_call.1} parent=1 // pred_region
      %s5119 = ssub.s32 16, 16
      %5120 = vsyncadd [#allocation21], %s5119
      %s5122 = sshll.u32 [#allocation22], 4
      %s5123 = int_to_ptr.vmem [resolvable:$true] %s5122
      %5125 = dma.vmem_to_hbm [thread:$0]  %s5123, 16, %s13, [#allocation21]
    $region81: #{tpu_custom_call.1} parent=1 // pred_fallthru
      _
    // Predicated region
    $region82: #{tpu_custom_call.1} parent=1 // pred_check
      _
    $region83: #{tpu_custom_call.1} parent=1 // pred_check_branch
      %5127 = sbr.rel (0) target = $region85
    $region84: #{tpu_custom_call.1} parent=1 // pred_region
      %s5129 = ssub.s32 16, 16
      %5130 = vsyncadd [#allocation24], %s5129
      %s5132 = sshll.u32 [#allocation23], 4
      %s5133 = int_to_ptr.vmem [resolvable:$true] %s5132
      %5135 = dma.vmem_to_hbm [thread:$0]  %s5133, 16, %s14, [#allocation24]
    $region85: #{tpu_custom_call.1} parent=1 // pred_fallthru
      _
    // Predicated region
    $region86: #{tpu_custom_call.1} parent=1 // pred_check
      _
    $region87: #{tpu_custom_call.1} parent=1 // pred_check_branch
      %5137 = sbr.rel (0) target = $region89
    $region88: #{tpu_custom_call.1} parent=1 // pred_region
      %s5139 = ssub.s32 16, 16
      %5140 = vsyncadd [#allocation24], %s5139
      %s5142 = sshll.u32 [#allocation25], 4
      %s5143 = int_to_ptr.vmem [resolvable:$true] %s5142
      %5145 = dma.vmem_to_hbm [thread:$0]  %s5143, 16, %s15, [#allocation24]
    $region89: #{tpu_custom_call.1} parent=1 // pred_fallthru
      _
    // Predicated region
    $region90: #{tpu_custom_call.1} parent=1 // pred_check
      _
    $region91: #{tpu_custom_call.1} parent=1 // pred_check_branch
      %5147 = sbr.rel (0) target = $region93
    $region92: #{tpu_custom_call.1} parent=1 // pred_region
      %s5149 = ssub.s32 16, 16
      %5150 = vsyncadd [#allocation27], %s5149
      %s5152 = sshll.u32 [#allocation26], 4
      %s5153 = int_to_ptr.vmem [resolvable:$true] %s5152
      %5155 = dma.vmem_to_hbm [thread:$0]  %s5153, 16, %s16, [#allocation27]
    $region93: #{tpu_custom_call.1} parent=1 // pred_fallthru
      _
    // Predicated region
    $region94: #{tpu_custom_call.1} parent=1 // pred_check
      _
    $region95: #{tpu_custom_call.1} parent=1 // pred_check_branch
      %5157 = sbr.rel (0) target = $region97
    $region96: #{tpu_custom_call.1} parent=1 // pred_region
      %5158 = dma.done [#allocation10], 1664
    $region97: #{tpu_custom_call.1} parent=1 // pred_fallthru
      _
    // Predicated region
    $region98: #{tpu_custom_call.1} parent=1 // pred_check
      _
    $region99: #{tpu_custom_call.1} parent=1 // pred_check_branch
      %5160 = sbr.rel (0) target = $region101
    $region100: #{tpu_custom_call.1} parent=1 // pred_region
      %5161 = dma.done [#allocation21], 16
    $region101: #{tpu_custom_call.1} parent=1 // pred_fallthru
      _
    // Predicated region
    $region102: #{tpu_custom_call.1} parent=1 // pred_check
      _
    $region103: #{tpu_custom_call.1} parent=1 // pred_check_branch
      %5163 = sbr.rel (0) target = $region105
    $region104: #{tpu_custom_call.1} parent=1 // pred_region
      %5164 = dma.done [#allocation21], 16
    $region105: #{tpu_custom_call.1} parent=1 // pred_fallthru
      _
    // Predicated region
    $region106: #{tpu_custom_call.1} parent=1 // pred_check
      _
    $region107: #{tpu_custom_call.1} parent=1 // pred_check_branch
      %5166 = sbr.rel (0) target = $region109
    $region108: #{tpu_custom_call.1} parent=1 // pred_region
      %5167 = dma.done [#allocation24], 16
    $region109: #{tpu_custom_call.1} parent=1 // pred_fallthru
      _
    // Predicated region
    $region110: #{tpu_custom_call.1} parent=1 // pred_check
      _
    $region111: #{tpu_custom_call.1} parent=1 // pred_check_branch
      %5169 = sbr.rel (0) target = $region113
    $region112: #{tpu_custom_call.1} parent=1 // pred_region
      %5170 = dma.done [#allocation24], 16
    $region113: #{tpu_custom_call.1} parent=1 // pred_fallthru
      _
    // Predicated region
    $region114: #{tpu_custom_call.1} parent=1 // pred_check
      _
    $region115: #{tpu_custom_call.1} parent=1 // pred_check_branch
      %5172 = sbr.rel (0) target = $region117
    $region116: #{tpu_custom_call.1} parent=1 // pred_region
      %5173 = dma.done [#allocation27], 16
    $region117: #{tpu_custom_call.1} parent=1 // pred_fallthru
      _
    %5174 = vsyncpa [#allocation9], 1
    %5175 = vsyncpa [#allocation12], 1
    %5176 = vsyncpa [#allocation15], 1
    %5177 = vsyncpa [#allocation18], 1
    %5178 = vsyncpa [#allocation10], 1
    %5179 = vsyncpa [#allocation21], 1
    %5180 = vsyncpa [#allocation24], 1
    %5181 = vsyncpa [#allocation27], 1

</llo_original>
